<compile_context>
chip_gen: v7x
topology: tpu7x:2x2x1
jax: 0.10.0
libtpu: 0.0.40
codegen_flags: <defaults>
</compile_context>

<pallas_src>
import numpy as np
import jax
import jax.numpy as jnp
from jax import lax
from jax.experimental import pallas as pl
from jax.experimental.pallas import tpu as pltpu

# ----------------------------- config (small) --------------------------------
BATCH = 2
IN_CH = 3
IMG = 16          # input spatial size (Swin-Tiny uses 224; scaled down)
PATCH = 4
EMBED = 16        # embed_dim (Swin-Tiny uses 96; scaled down)
DEPTHS = (2, 2)   # (Swin-Tiny uses (2, 2, 6, 2))
HEADS = (2, 4)
WINDOW = 2        # (Swin-Tiny uses 7)
MLP_RATIO = 4
EMB_SIZE = 32     # projection embedding_size (module default 512; scaled down)
NUM_FEATURES = EMBED * 2 ** (len(DEPTHS) - 1)
LN_EPS = 1e-5
NEG_INF = -1e9

HW0 = IMG // PATCH          # 4  (patch grid, stage 0)
L0 = HW0 * HW0              # 16 tokens / image
T0 = BATCH * L0             # 32 tokens total
HW1 = HW0 // 2              # 2  (after patch merging)
L1 = HW1 * HW1              # 4
T1 = BATCH * L1             # 8
C0 = EMBED                  # 16
C1 = 2 * EMBED              # 32

_VMEM = pl.BlockSpec(memory_space=pltpu.MemorySpace.VMEM)

# ------------------------- small in-kernel helpers ----------------------------
_SQRT_HALF = 0.7071067811865476


def _erf_approx(x):
    # Abramowitz & Stegun 7.1.26 (|err| <= 1.5e-7) == torch's exact-erf GELU at f32.
    a1, a2, a3, a4, a5 = (0.254829592, -0.284496736, 1.421413741,
                          -1.453152027, 1.061405429)
    p = 0.3275911
    ax = jnp.abs(x)
    t = 1.0 / (1.0 + p * ax)
    poly = ((((a5 * t + a4) * t + a3) * t + a2) * t + a1) * t
    y = 1.0 - poly * jnp.exp(-ax * ax)
    return jnp.where(x >= 0, y, -y)


def _gelu_exact(x):
    return 0.5 * x * (1.0 + _erf_approx(x * _SQRT_HALF))


def _layernorm(x, g, b):
    mu = jnp.mean(x, axis=-1, keepdims=True)
    var = jnp.mean(jnp.square(x - mu), axis=-1, keepdims=True)
    return (x - mu) * lax.rsqrt(var + LN_EPS) * g + b


def _swin_block(x, mat, fc2_w, vec, bias, *, c, heads):
    """One Swin block on image-major tokens x [T, c] (all values VMEM-resident).

    mat   : [c, 8c]  = [Wq*scale | Wk | Wv | Wproj | W_fc1(4c)]
    fc2_w : [4c, c]
    vec   : [8, 4c]  rows: n1_g, n1_b, qkv_b(3c, q-part pre-scaled), proj_b,
                           n2_g, n2_b, fc1_b(4c), fc2_b
    bias  : [heads, T, T]  rel-pos bias + shifted-window mask + cross-image mask
    """
    hd = c // heads
    xn = _layernorm(x, vec[0:1, :c], vec[1:2, :c])
    qkv = jnp.dot(xn, mat[:, :3 * c],
                  preferred_element_type=jnp.float32) + vec[2:3, :3 * c]

    attn_proj = vec[3:4, :c]                          # accumulate proj(attn) + bias
    for h in range(heads):                            # static unroll (2 or 4 heads)
        qh = qkv[:, h * hd:(h + 1) * hd]              # [T, hd] (scale already folded)
        kh = qkv[:, c + h * hd:c + (h + 1) * hd]
        vh = qkv[:, 2 * c + h * hd:2 * c + (h + 1) * hd]
        s = lax.dot_general(qh, kh, (((1,), (1,)), ((), ())),
                            preferred_element_type=jnp.float32)       # [T, T]
        s = s + bias[h]
        s = s - jnp.max(s, axis=-1, keepdims=True)
        p = jnp.exp(s)
        p = p * pl.reciprocal(jnp.sum(p, axis=-1, keepdims=True), approx=True)
        oh = jnp.dot(p, vh, preferred_element_type=jnp.float32)       # [T, hd]
        attn_proj = attn_proj + jnp.dot(
            oh, mat[h * hd:(h + 1) * hd, 3 * c:4 * c],
            preferred_element_type=jnp.float32)
    y = x + attn_proj

    yn = _layernorm(y, vec[4:5, :c], vec[5:6, :c])
    hmid = jnp.dot(yn, mat[:, 4 * c:8 * c],
                   preferred_element_type=jnp.float32) + vec[6:7, :]
    hmid = _gelu_exact(hmid)
    z = jnp.dot(hmid, fc2_w, preferred_element_type=jnp.float32) + vec[7:8, :c]
    return y + z


# ------------------------------ the fused kernel -------------------------------
def _swin_forward_kernel(
        xp_ref, pe_w_ref, pe_vec_ref,
        s0_mat_ref, s0_fc2_ref, s0_vec_ref, s0_bias_ref,
        mg_sel_ref, mg_vec_ref, mg_red_ref,
        s1_mat_ref, s1_fc2_ref, s1_vec_ref, s1_bias_ref,
        pool_ref, tail_vec_ref, head_w_ref,
        o_ref):
    # ---- patch embed (non-overlapping conv as matmul) + LN ----
    pe_vec = pe_vec_ref[...]
    x = jnp.dot(xp_ref[...], pe_w_ref[...],
                preferred_element_type=jnp.float32) + pe_vec[0:1, :]
    x = _layernorm(x, pe_vec[1:2, :], pe_vec[2:3, :])              # [T0, C0]

    # ---- stage 0 (2 blocks, W-MSA then SW-MSA, both via precomputed bias) ----
    for d in range(DEPTHS[0]):
        x = _swin_block(x, s0_mat_ref[d], s0_fc2_ref[d], s0_vec_ref[d],
                        s0_bias_ref[d], c=C0, heads=HEADS[0])

    # ---- patch merging: constant selection matmul -> LN(4C) -> reduction ----
    big = jnp.dot(mg_sel_ref[...], x, preferred_element_type=jnp.float32)  # [4*T1, C0]
    mg_vec = mg_vec_ref[...]
    pieces = [big[k * T1:(k + 1) * T1, :] for k in range(4)]
    mu = sum(jnp.sum(pk, axis=-1, keepdims=True) for pk in pieces) / (4.0 * C0)
    var = sum(jnp.sum(jnp.square(pk - mu), axis=-1, keepdims=True)
              for pk in pieces) / (4.0 * C0)
    rstd = lax.rsqrt(var + LN_EPS)
    x = sum(
        jnp.dot((pieces[k] - mu) * rstd * mg_vec[0:1, k * C0:(k + 1) * C0]
                + mg_vec[1:2, k * C0:(k + 1) * C0],
                mg_red_ref[k * C0:(k + 1) * C0, :],
                preferred_element_type=jnp.float32)
        for k in range(4))                                          # [T1, C1]

    # ---- stage 1 (2 blocks; resolution == window -> shift = 0) ----
    for d in range(DEPTHS[1]):
        x = _swin_block(x, s1_mat_ref[d], s1_fc2_ref[d], s1_vec_ref[d],
                        s1_bias_ref[d], c=C1, heads=HEADS[1])

    # ---- final LN + token mean pool + projection head + L2 normalize ----
    tv = tail_vec_ref[...]
    xn = _layernorm(x, tv[0:1, :C1], tv[1:2, :C1])
    pooled = jnp.dot(pool_ref[...], xn, preferred_element_type=jnp.float32)  # [B, C1]
    y = jnp.dot(pooled, head_w_ref[...],
                preferred_element_type=jnp.float32) + tv[2:3, :EMB_SIZE]
    nrm = jnp.sqrt(jnp.sum(y * y, axis=-1, keepdims=True))
    o_ref[...] = y / jnp.maximum(nrm, 1e-12)          # F.normalize(p=2, eps=1e-12)


@jax.jit
def swin_feature_extractor(x_nchw, params):
    assert x_nchw.shape == (BATCH, IN_CH, IMG, IMG)
    # Raw-input layout prep (NCHW -> per-patch pixel rows).  Everything downstream
    # runs inside ONE grid-less, VMEM-resident pallas_call.
    xp = x_nchw.reshape(BATCH, IN_CH, HW0, PATCH, HW0, PATCH)
    xp = jnp.transpose(xp, (0, 2, 4, 1, 3, 5)).reshape(
        BATCH * HW0 * HW0, IN_CH * PATCH * PATCH)

    args = (xp,
            params["pe_w"], params["pe_vec"],
            params["s0_mat"], params["s0_fc2"], params["s0_vec"], params["s0_bias"],
            params["mg_sel"], params["mg_vec"], params["mg_red"],
            params["s1_mat"], params["s1_fc2"], params["s1_vec"], params["s1_bias"],
            params["pool"], params["tail_vec"], params["head_w"])
    return pl.pallas_call(
        _swin_forward_kernel,
        out_shape=jax.ShapeDtypeStruct((BATCH, EMB_SIZE), jnp.float32),
        in_specs=[_VMEM] * len(args),
        out_specs=_VMEM,
    )(*args)


# ----------------------------- static precomputes ------------------------------
def make_rel_pos_index(ws):
    coords = np.stack(np.meshgrid(np.arange(ws), np.arange(ws), indexing="ij"))
    cf = coords.reshape(2, -1)
    rel = (cf[:, :, None] - cf[:, None, :]).transpose(1, 2, 0).astype(np.int64)
    rel[..., 0] += ws - 1
    rel[..., 1] += ws - 1
    rel[..., 0] *= 2 * ws - 1
    return rel.sum(-1)                                  # [ws*ws, ws*ws]


def make_full_attn_bias(rel_table, hh, ww, ws, shift, batch):
    """Additive attention bias over full image-major token axes.

    Per head: relative-position bias within each (shifted) window, the SW-MSA
    -100 mask between wrapped regions, and -1e9 between tokens of different
    (shifted) windows / different images.  Shape [heads, batch*hh*ww, batch*hh*ww].
    Full attention + this bias is numerically identical to windowed attention.
    """
    heads = rel_table.shape[1]
    L = hh * ww
    rgrid, cgrid = np.meshgrid(np.arange(hh), np.arange(ww), indexing="ij")
    rr = (rgrid - shift) % hh            # coords after torch.roll(-shift)
    rc = (cgrid - shift) % ww
    win = (rr // ws) * (ww // ws) + (rc // ws)           # shifted-window id
    pos = (rr % ws) * ws + (rc % ws)                     # in-window position
    if shift > 0:
        img_mask = np.zeros((hh, ww), np.int32)
        cnt = 0
        for hs in (slice(0, -ws), slice(-ws, -shift), slice(-shift, None)):
            for wsl in (slice(0, -ws), slice(-ws, -shift), slice(-shift, None)):
                img_mask[hs, wsl] = cnt
                cnt += 1
        region = img_mask[rr, rc]
    else:
        region = np.zeros((hh, ww), np.int32)
    win, pos, region = win.reshape(-1), pos.reshape(-1), region.reshape(-1)
    same_win = win[:, None] == win[None, :]
    same_reg = region[:, None] == region[None, :]
    mask = np.where(same_win, np.where(same_reg, 0.0, -100.0), NEG_INF)
    mask = mask.astype(np.float32)
    rel_idx = make_rel_pos_index(ws)
    ridx = rel_idx[pos[:, None], pos[None, :]]           # [L, L]
    bias = jnp.transpose(rel_table[ridx.reshape(-1)].reshape(L, L, heads), (2, 0, 1))
    per_img = bias + jnp.asarray(mask)[None]             # [heads, L, L]
    t = batch * L
    full = jnp.full((heads, t, t), NEG_INF, jnp.float32)
    for b in range(batch):
        full = full.at[:, b * L:(b + 1) * L, b * L:(b + 1) * L].set(per_img)
    return full


def make_merge_select(batch, hh, ww):
    # 0/1 matrix implementing torch PatchMerging's x0..x3 strided gathers as a matmul.
    h2, w2 = hh // 2, ww // 2
    t_out = batch * h2 * w2
    t_in = batch * hh * ww
    sel = np.zeros((4 * t_out, t_in), np.float32)
    offsets = ((0, 0), (1, 0), (0, 1), (1, 1))           # x0, x1, x2, x3
    for k, (di, dj) in enumerate(offsets):
        for b in range(batch):
            for i in range(h2):
                for j in range(w2):
                    ro = k * t_out + b * h2 * w2 + i * w2 + j
                    ci = b * hh * ww + (2 * i + di) * ww + (2 * j + dj)
                    sel[ro, ci] = 1.0
    return sel


# ----------------------------- parameter init ---------------------------------
def init_params(key):
    keys = iter(jax.random.split(key, 64))

    def nrm(shape, std=0.02):
        return (std * jax.random.normal(next(keys), shape)).astype(jnp.float32)

    zeros = lambda *s: jnp.zeros(s, jnp.float32)
    ones = lambda *s: jnp.ones(s, jnp.float32)

    params = {
        "pe_w": nrm((IN_CH * PATCH * PATCH, EMBED)),
        "pe_vec": jnp.stack([zeros(EMBED), ones(EMBED), zeros(EMBED)], axis=0),
    }

    res = [(HW0, HW0), (HW1, HW1)]
    stage_c = [C0, C1]
    for s in range(len(DEPTHS)):
        c = stage_c[s]
        heads = HEADS[s]
        hd = c // heads
        scale = hd ** -0.5
        hh, ww = res[s]
        mats, fc2s, vecs, biases = [], [], [], []
        for d in range(DEPTHS[s]):
            shift = 0 if d % 2 == 0 else WINDOW // 2
            if min(hh, ww) <= WINDOW:
                shift = 0
            wq, wk, wv = nrm((c, c)), nrm((c, c)), nrm((c, c))
            wproj = nrm((c, c))
            w1 = nrm((c, MLP_RATIO * c))
            w2 = nrm((MLP_RATIO * c, c))
            # fold the attention scale into the Q projection (review item)
            mats.append(jnp.concatenate([wq * scale, wk, wv, wproj, w1], axis=1))
            fc2s.append(w2)

            def row(v, width=MLP_RATIO * c):
                return jnp.zeros((width,), jnp.float32).at[:v.shape[0]].set(v)

            bq, bk, bv = zeros(c), zeros(c), zeros(c)
            qkv_b = jnp.concatenate([bq * scale, bk, bv])
            vecs.append(jnp.stack([
                row(ones(c)),               # norm1 gamma
                row(zeros(c)),              # norm1 beta
                row(qkv_b),                 # qkv bias (q part pre-scaled)
                row(zeros(c)),              # proj bias
                row(ones(c)),               # norm2 gamma
                row(zeros(c)),              # norm2 beta
                row(zeros(MLP_RATIO * c)),  # fc1 bias
                row(zeros(c)),              # fc2 bias
            ], axis=0))

            rel_table = nrm(((2 * WINDOW - 1) ** 2, heads))
            biases.append(make_full_attn_bias(rel_table, hh, ww, WINDOW, shift, BATCH))
        params[f"s{s}_mat"] = jnp.stack(mats)
        params[f"s{s}_fc2"] = jnp.stack(fc2s)
        params[f"s{s}_vec"] = jnp.stack(vecs)
        params[f"s{s}_bias"] = jnp.stack(biases)

    # patch merging (norm over 4C then bias-free reduction to 2C)
    params["mg_sel"] = jnp.asarray(make_merge_select(BATCH, HW0, HW0))
    params["mg_vec"] = jnp.stack([ones(4 * C0), zeros(4 * C0)], axis=0)
    params["mg_red"] = nrm((4 * C0, 2 * C0))

    # tail: final LN, mean-pool matrix, projection head
    pool = np.zeros((BATCH, T1), np.float32)
    for b in range(BATCH):
        pool[b, b * L1:(b + 1) * L1] = 1.0 / L1
    params["pool"] = jnp.asarray(pool)
    tw = max(NUM_FEATURES, EMB_SIZE)

    def trow(v):
        return jnp.zeros((tw,), jnp.float32).at[:v.shape[0]].set(v)

    params["tail_vec"] = jnp.stack(
        [trow(ones(NUM_FEATURES)), trow(zeros(NUM_FEATURES)), trow(zeros(EMB_SIZE))],
        axis=0)
    params["head_w"] = nrm((NUM_FEATURES, EMB_SIZE))
    return params


# TODO(synk): pretrained swin_tiny checkpoint loading + the layer-matching report in
# __init__ is file-I/O only and intentionally omitted; weights are synthetic & deterministic.

if __name__ == "__main__":
    root = jax.random.PRNGKey(0)
    pkey, xkey = jax.random.split(root)
    params = init_params(pkey)
    x = jax.random.normal(xkey, (BATCH, IN_CH, IMG, IMG), dtype=jnp.float32)

    out = jax.block_until_ready(swin_feature_extractor(x, params))

    assert out.shape == (BATCH, EMB_SIZE), out.shape
    assert bool(jnp.all(jnp.isfinite(out)))
    norms = jnp.linalg.norm(out, axis=1)          # output rows must be unit L2 norm
    assert bool(jnp.all(jnp.abs(norms - 1.0) < 1e-3)), norms
    print("KERNEL_OK")
</pallas_src>

<mosaic_0001>
module attributes {stable_mosaic.version = 11 : i64} {
  func.func @_swin_forward_kernel(%arg0: memref<32x48xf32, #tpu.memory_space<vmem>>, %arg1: memref<48x16xf32, #tpu.memory_space<vmem>>, %arg2: memref<3x16xf32, #tpu.memory_space<vmem>>, %arg3: memref<2x16x128xf32, #tpu.memory_space<vmem>>, %arg4: memref<2x64x16xf32, #tpu.memory_space<vmem>>, %arg5: memref<2x8x64xf32, #tpu.memory_space<vmem>>, %arg6: memref<2x2x32x32xf32, #tpu.memory_space<vmem>>, %arg7: memref<32x32xf32, #tpu.memory_space<vmem>>, %arg8: memref<2x64xf32, #tpu.memory_space<vmem>>, %arg9: memref<64x32xf32, #tpu.memory_space<vmem>>, %arg10: memref<2x32x256xf32, #tpu.memory_space<vmem>>, %arg11: memref<2x128x32xf32, #tpu.memory_space<vmem>>, %arg12: memref<2x8x128xf32, #tpu.memory_space<vmem>>, %arg13: memref<2x4x8x8xf32, #tpu.memory_space<vmem>>, %arg14: memref<2x8xf32, #tpu.memory_space<vmem>>, %arg15: memref<3x32xf32, #tpu.memory_space<vmem>>, %arg16: memref<32x32xf32, #tpu.memory_space<vmem>>, %arg17: memref<2x32xf32, #tpu.memory_space<vmem>>) attributes {dimension_semantics = [], scalar_prefetch = 0 : i64, scratch_operands = 0 : i64, tpu.core_type = #tpu.core_type<tc>} {
    %c0 = arith.constant 0 : index
    %c0_0 = arith.constant 0 : index
    %0 = vector.load %arg2[%c0, %c0_0] : memref<3x16xf32, #tpu.memory_space<vmem>>, vector<3x16xf32>
    %c0_1 = arith.constant 0 : index
    %c0_2 = arith.constant 0 : index
    %1 = vector.load %arg0[%c0_1, %c0_2] : memref<32x48xf32, #tpu.memory_space<vmem>>, vector<32x48xf32>
    %c0_3 = arith.constant 0 : index
    %c0_4 = arith.constant 0 : index
    %2 = vector.load %arg1[%c0_3, %c0_4] : memref<48x16xf32, #tpu.memory_space<vmem>>, vector<48x16xf32>
    %cst = arith.constant dense<0.000000e+00> : vector<32x16xf32>
    %3 = tpu.matmul %1, %2, %cst {dimension_numbers = #tpu.dot_dimension_numbers<[1], [0], [0], [1], [0, 0, 1, 1], [], []>} : vector<32x48xf32>, vector<48x16xf32>, vector<32x16xf32> -> vector<32x16xf32>
    %4 = vector.extract_strided_slice %0 {offsets = [0, 0], sizes = [1, 16], strides = [1, 1]} : vector<3x16xf32> to vector<1x16xf32>
    %5 = vector.broadcast %4 : vector<1x16xf32> to vector<32x16xf32>
    %6 = arith.addf %3, %5 : vector<32x16xf32>
    %7 = vector.extract_strided_slice %0 {offsets = [1, 0], sizes = [1, 16], strides = [1, 1]} : vector<3x16xf32> to vector<1x16xf32>
    %8 = vector.extract_strided_slice %0 {offsets = [2, 0], sizes = [1, 16], strides = [1, 1]} : vector<3x16xf32> to vector<1x16xf32>
    %cst_5 = arith.constant dense<0.000000e+00> : vector<32xf32>
    %9 = vector.multi_reduction <add>, %6, %cst_5 [1] : vector<32x16xf32> to vector<32xf32>
    %10 = vector.shape_cast %9 : vector<32xf32> to vector<32x1xf32>
    %cst_6 = arith.constant 1.600000e+01 : f32
    %11 = vector.broadcast %cst_6 : f32 to vector<32x1xf32>
    %12 = arith.divf %10, %11 : vector<32x1xf32>
    %13 = vector.broadcast %12 : vector<32x1xf32> to vector<32x16xf32>
    %14 = arith.subf %6, %13 : vector<32x16xf32>
    %15 = arith.mulf %14, %14 : vector<32x16xf32>
    %cst_7 = arith.constant dense<0.000000e+00> : vector<32xf32>
    %16 = vector.multi_reduction <add>, %15, %cst_7 [1] : vector<32x16xf32> to vector<32xf32>
    %17 = vector.shape_cast %16 : vector<32xf32> to vector<32x1xf32>
    %cst_8 = arith.constant 1.600000e+01 : f32
    %18 = vector.broadcast %cst_8 : f32 to vector<32x1xf32>
    %19 = arith.divf %17, %18 : vector<32x1xf32>
    %20 = vector.broadcast %12 : vector<32x1xf32> to vector<32x16xf32>
    %21 = arith.subf %6, %20 : vector<32x16xf32>
    %cst_9 = arith.constant 9.99999974E-6 : f32
    %22 = vector.broadcast %cst_9 : f32 to vector<32x1xf32>
    %23 = arith.addf %19, %22 : vector<32x1xf32>
    %24 = math.rsqrt %23 : vector<32x1xf32>
    %25 = vector.broadcast %24 : vector<32x1xf32> to vector<32x16xf32>
    %26 = arith.mulf %21, %25 : vector<32x16xf32>
    %27 = vector.broadcast %7 : vector<1x16xf32> to vector<32x16xf32>
    %28 = arith.mulf %26, %27 : vector<32x16xf32>
    %29 = vector.broadcast %8 : vector<1x16xf32> to vector<32x16xf32>
    %30 = arith.addf %28, %29 : vector<32x16xf32>
    %c0_10 = arith.constant 0 : index
    %c0_11 = arith.constant 0 : index
    %c0_12 = arith.constant 0 : index
    %31 = vector.load %arg3[%c0_10, %c0_11, %c0_12] : memref<2x16x128xf32, #tpu.memory_space<vmem>>, vector<1x16x128xf32>
    %32 = vector.shape_cast %31 : vector<1x16x128xf32> to vector<16x128xf32>
    %c0_13 = arith.constant 0 : index
    %c0_14 = arith.constant 0 : index
    %c0_15 = arith.constant 0 : index
    %33 = vector.load %arg4[%c0_13, %c0_14, %c0_15] : memref<2x64x16xf32, #tpu.memory_space<vmem>>, vector<1x64x16xf32>
    %34 = vector.shape_cast %33 : vector<1x64x16xf32> to vector<64x16xf32>
    %c0_16 = arith.constant 0 : index
    %c0_17 = arith.constant 0 : index
    %c0_18 = arith.constant 0 : index
    %35 = vector.load %arg5[%c0_16, %c0_17, %c0_18] : memref<2x8x64xf32, #tpu.memory_space<vmem>>, vector<1x8x64xf32>
    %36 = vector.shape_cast %35 : vector<1x8x64xf32> to vector<8x64xf32>
    %c0_19 = arith.constant 0 : index
    %c0_20 = arith.constant 0 : index
    %c0_21 = arith.constant 0 : index
    %c0_22 = arith.constant 0 : index
    %37 = vector.load %arg6[%c0_19, %c0_20, %c0_21, %c0_22] : memref<2x2x32x32xf32, #tpu.memory_space<vmem>>, vector<1x2x32x32xf32>
    %38 = vector.shape_cast %37 : vector<1x2x32x32xf32> to vector<2x32x32xf32>
    %39 = vector.extract_strided_slice %36 {offsets = [0, 0], sizes = [1, 16], strides = [1, 1]} : vector<8x64xf32> to vector<1x16xf32>
    %40 = vector.extract_strided_slice %36 {offsets = [1, 0], sizes = [1, 16], strides = [1, 1]} : vector<8x64xf32> to vector<1x16xf32>
    %cst_23 = arith.constant dense<0.000000e+00> : vector<32xf32>
    %41 = vector.multi_reduction <add>, %30, %cst_23 [1] : vector<32x16xf32> to vector<32xf32>
    %42 = vector.shape_cast %41 : vector<32xf32> to vector<32x1xf32>
    %cst_24 = arith.constant 1.600000e+01 : f32
    %43 = vector.broadcast %cst_24 : f32 to vector<32x1xf32>
    %44 = arith.divf %42, %43 : vector<32x1xf32>
    %45 = vector.broadcast %44 : vector<32x1xf32> to vector<32x16xf32>
    %46 = arith.subf %30, %45 : vector<32x16xf32>
    %47 = arith.mulf %46, %46 : vector<32x16xf32>
    %cst_25 = arith.constant dense<0.000000e+00> : vector<32xf32>
    %48 = vector.multi_reduction <add>, %47, %cst_25 [1] : vector<32x16xf32> to vector<32xf32>
    %49 = vector.shape_cast %48 : vector<32xf32> to vector<32x1xf32>
    %cst_26 = arith.constant 1.600000e+01 : f32
    %50 = vector.broadcast %cst_26 : f32 to vector<32x1xf32>
    %51 = arith.divf %49, %50 : vector<32x1xf32>
    %52 = vector.broadcast %44 : vector<32x1xf32> to vector<32x16xf32>
    %53 = arith.subf %30, %52 : vector<32x16xf32>
    %cst_27 = arith.constant 9.99999974E-6 : f32
    %54 = vector.broadcast %cst_27 : f32 to vector<32x1xf32>
    %55 = arith.addf %51, %54 : vector<32x1xf32>
    %56 = math.rsqrt %55 : vector<32x1xf32>
    %57 = vector.broadcast %56 : vector<32x1xf32> to vector<32x16xf32>
    %58 = arith.mulf %53, %57 : vector<32x16xf32>
    %59 = vector.broadcast %39 : vector<1x16xf32> to vector<32x16xf32>
    %60 = arith.mulf %58, %59 : vector<32x16xf32>
    %61 = vector.broadcast %40 : vector<1x16xf32> to vector<32x16xf32>
    %62 = arith.addf %60, %61 : vector<32x16xf32>
    %63 = vector.extract_strided_slice %32 {offsets = [0, 0], sizes = [16, 48], strides = [1, 1]} : vector<16x128xf32> to vector<16x48xf32>
    %cst_28 = arith.constant dense<0.000000e+00> : vector<32x48xf32>
    %64 = tpu.matmul %62, %63, %cst_28 {dimension_numbers = #tpu.dot_dimension_numbers<[1], [0], [0], [1], [0, 0, 1, 1], [], []>} : vector<32x16xf32>, vector<16x48xf32>, vector<32x48xf32> -> vector<32x48xf32>
    %65 = vector.extract_strided_slice %36 {offsets = [2, 0], sizes = [1, 48], strides = [1, 1]} : vector<8x64xf32> to vector<1x48xf32>
    %66 = vector.broadcast %65 : vector<1x48xf32> to vector<32x48xf32>
    %67 = arith.addf %64, %66 : vector<32x48xf32>
    %68 = vector.extract_strided_slice %36 {offsets = [3, 0], sizes = [1, 16], strides = [1, 1]} : vector<8x64xf32> to vector<1x16xf32>
    %69 = vector.extract_strided_slice %67 {offsets = [0, 0], sizes = [32, 8], strides = [1, 1]} : vector<32x48xf32> to vector<32x8xf32>
    %70 = vector.extract_strided_slice %67 {offsets = [0, 16], sizes = [32, 8], strides = [1, 1]} : vector<32x48xf32> to vector<32x8xf32>
    %71 = vector.extract_strided_slice %67 {offsets = [0, 32], sizes = [32, 8], strides = [1, 1]} : vector<32x48xf32> to vector<32x8xf32>
    %cst_29 = arith.constant dense<0.000000e+00> : vector<32x32xf32>
    %72 = tpu.matmul %69, %70, %cst_29 {dimension_numbers = #tpu.dot_dimension_numbers<[1], [1], [0], [0], [0, 0, 1, 0], [], []>} : vector<32x8xf32>, vector<32x8xf32>, vector<32x32xf32> -> vector<32x32xf32>
    %73 = vector.extract_strided_slice %38 {offsets = [0, 0, 0], sizes = [1, 32, 32], strides = [1, 1, 1]} : vector<2x32x32xf32> to vector<1x32x32xf32>
    %74 = vector.shape_cast %73 : vector<1x32x32xf32> to vector<32x32xf32>
    %75 = arith.addf %72, %74 : vector<32x32xf32>
    %cst_30 = arith.constant dense<0xFF800000> : vector<32xf32>
    %76 = vector.multi_reduction <maximumf>, %75, %cst_30 [1] : vector<32x32xf32> to vector<32xf32>
    %77 = vector.shape_cast %76 : vector<32xf32> to vector<32x1xf32>
    %78 = vector.broadcast %77 : vector<32x1xf32> to vector<32x32xf32>
    %79 = arith.subf %75, %78 : vector<32x32xf32>
    %80 = math.exp %79 : vector<32x32xf32>
    %cst_31 = arith.constant dense<0.000000e+00> : vector<32xf32>
    %81 = vector.multi_reduction <add>, %80, %cst_31 [1] : vector<32x32xf32> to vector<32xf32>
    %82 = vector.shape_cast %81 : vector<32xf32> to vector<32x1xf32>
    %83 = tpu.reciprocal %82 {approx = true} : vector<32x1xf32> -> vector<32x1xf32>
    %84 = vector.broadcast %83 : vector<32x1xf32> to vector<32x32xf32>
    %85 = arith.mulf %80, %84 : vector<32x32xf32>
    %cst_32 = arith.constant dense<0.000000e+00> : vector<32x8xf32>
    %86 = tpu.matmul %85, %71, %cst_32 {dimension_numbers = #tpu.dot_dimension_numbers<[1], [0], [0], [1], [0, 0, 1, 1], [], []>} : vector<32x32xf32>, vector<32x8xf32>, vector<32x8xf32> -> vector<32x8xf32>
    %87 = vector.extract_strided_slice %32 {offsets = [0, 48], sizes = [8, 16], strides = [1, 1]} : vector<16x128xf32> to vector<8x16xf32>
    %cst_33 = arith.constant dense<0.000000e+00> : vector<32x16xf32>
    %88 = tpu.matmul %86, %87, %cst_33 {dimension_numbers = #tpu.dot_dimension_numbers<[1], [0], [0], [1], [0, 0, 1, 1], [], []>} : vector<32x8xf32>, vector<8x16xf32>, vector<32x16xf32> -> vector<32x16xf32>
    %89 = vector.broadcast %68 : vector<1x16xf32> to vector<32x16xf32>
    %90 = arith.addf %89, %88 : vector<32x16xf32>
    %91 = vector.extract_strided_slice %67 {offsets = [0, 8], sizes = [32, 8], strides = [1, 1]} : vector<32x48xf32> to vector<32x8xf32>
    %92 = vector.extract_strided_slice %67 {offsets = [0, 24], sizes = [32, 8], strides = [1, 1]} : vector<32x48xf32> to vector<32x8xf32>
    %93 = vector.extract_strided_slice %67 {offsets = [0, 40], sizes = [32, 8], strides = [1, 1]} : vector<32x48xf32> to vector<32x8xf32>
    %cst_34 = arith.constant dense<0.000000e+00> : vector<32x32xf32>
    %94 = tpu.matmul %91, %92, %cst_34 {dimension_numbers = #tpu.dot_dimension_numbers<[1], [1], [0], [0], [0, 0, 1, 0], [], []>} : vector<32x8xf32>, vector<32x8xf32>, vector<32x32xf32> -> vector<32x32xf32>
    %95 = vector.extract_strided_slice %38 {offsets = [1, 0, 0], sizes = [1, 32, 32], strides = [1, 1, 1]} : vector<2x32x32xf32> to vector<1x32x32xf32>
    %96 = vector.shape_cast %95 : vector<1x32x32xf32> to vector<32x32xf32>
    %97 = arith.addf %94, %96 : vector<32x32xf32>
    %cst_35 = arith.constant dense<0xFF800000> : vector<32xf32>
    %98 = vector.multi_reduction <maximumf>, %97, %cst_35 [1] : vector<32x32xf32> to vector<32xf32>
    %99 = vector.shape_cast %98 : vector<32xf32> to vector<32x1xf32>
    %100 = vector.broadcast %99 : vector<32x1xf32> to vector<32x32xf32>
    %101 = arith.subf %97, %100 : vector<32x32xf32>
    %102 = math.exp %101 : vector<32x32xf32>
    %cst_36 = arith.constant dense<0.000000e+00> : vector<32xf32>
    %103 = vector.multi_reduction <add>, %102, %cst_36 [1] : vector<32x32xf32> to vector<32xf32>
    %104 = vector.shape_cast %103 : vector<32xf32> to vector<32x1xf32>
    %105 = tpu.reciprocal %104 {approx = true} : vector<32x1xf32> -> vector<32x1xf32>
    %106 = vector.broadcast %105 : vector<32x1xf32> to vector<32x32xf32>
    %107 = arith.mulf %102, %106 : vector<32x32xf32>
    %cst_37 = arith.constant dense<0.000000e+00> : vector<32x8xf32>
    %108 = tpu.matmul %107, %93, %cst_37 {dimension_numbers = #tpu.dot_dimension_numbers<[1], [0], [0], [1], [0, 0, 1, 1], [], []>} : vector<32x32xf32>, vector<32x8xf32>, vector<32x8xf32> -> vector<32x8xf32>
    %109 = vector.extract_strided_slice %32 {offsets = [8, 48], sizes = [8, 16], strides = [1, 1]} : vector<16x128xf32> to vector<8x16xf32>
    %cst_38 = arith.constant dense<0.000000e+00> : vector<32x16xf32>
    %110 = tpu.matmul %108, %109, %cst_38 {dimension_numbers = #tpu.dot_dimension_numbers<[1], [0], [0], [1], [0, 0, 1, 1], [], []>} : vector<32x8xf32>, vector<8x16xf32>, vector<32x16xf32> -> vector<32x16xf32>
    %111 = arith.addf %90, %110 : vector<32x16xf32>
    %112 = arith.addf %30, %111 : vector<32x16xf32>
    %113 = vector.extract_strided_slice %36 {offsets = [4, 0], sizes = [1, 16], strides = [1, 1]} : vector<8x64xf32> to vector<1x16xf32>
    %114 = vector.extract_strided_slice %36 {offsets = [5, 0], sizes = [1, 16], strides = [1, 1]} : vector<8x64xf32> to vector<1x16xf32>
    %cst_39 = arith.constant dense<0.000000e+00> : vector<32xf32>
    %115 = vector.multi_reduction <add>, %112, %cst_39 [1] : vector<32x16xf32> to vector<32xf32>
    %116 = vector.shape_cast %115 : vector<32xf32> to vector<32x1xf32>
    %cst_40 = arith.constant 1.600000e+01 : f32
    %117 = vector.broadcast %cst_40 : f32 to vector<32x1xf32>
    %118 = arith.divf %116, %117 : vector<32x1xf32>
    %119 = vector.broadcast %118 : vector<32x1xf32> to vector<32x16xf32>
    %120 = arith.subf %112, %119 : vector<32x16xf32>
    %121 = arith.mulf %120, %120 : vector<32x16xf32>
    %cst_41 = arith.constant dense<0.000000e+00> : vector<32xf32>
    %122 = vector.multi_reduction <add>, %121, %cst_41 [1] : vector<32x16xf32> to vector<32xf32>
    %123 = vector.shape_cast %122 : vector<32xf32> to vector<32x1xf32>
    %cst_42 = arith.constant 1.600000e+01 : f32
    %124 = vector.broadcast %cst_42 : f32 to vector<32x1xf32>
    %125 = arith.divf %123, %124 : vector<32x1xf32>
    %126 = vector.broadcast %118 : vector<32x1xf32> to vector<32x16xf32>
    %127 = arith.subf %112, %126 : vector<32x16xf32>
    %cst_43 = arith.constant 9.99999974E-6 : f32
    %128 = vector.broadcast %cst_43 : f32 to vector<32x1xf32>
    %129 = arith.addf %125, %128 : vector<32x1xf32>
    %130 = math.rsqrt %129 : vector<32x1xf32>
    %131 = vector.broadcast %130 : vector<32x1xf32> to vector<32x16xf32>
    %132 = arith.mulf %127, %131 : vector<32x16xf32>
    %133 = vector.broadcast %113 : vector<1x16xf32> to vector<32x16xf32>
    %134 = arith.mulf %132, %133 : vector<32x16xf32>
    %135 = vector.broadcast %114 : vector<1x16xf32> to vector<32x16xf32>
    %136 = arith.addf %134, %135 : vector<32x16xf32>
    %137 = vector.extract_strided_slice %32 {offsets = [0, 64], sizes = [16, 64], strides = [1, 1]} : vector<16x128xf32> to vector<16x64xf32>
    %cst_44 = arith.constant dense<0.000000e+00> : vector<32x64xf32>
    %138 = tpu.matmul %136, %137, %cst_44 {dimension_numbers = #tpu.dot_dimension_numbers<[1], [0], [0], [1], [0, 0, 1, 1], [], []>} : vector<32x16xf32>, vector<16x64xf32>, vector<32x64xf32> -> vector<32x64xf32>
    %139 = vector.extract_strided_slice %36 {offsets = [6, 0], sizes = [1, 64], strides = [1, 1]} : vector<8x64xf32> to vector<1x64xf32>
    %140 = vector.broadcast %139 : vector<1x64xf32> to vector<32x64xf32>
    %141 = arith.addf %138, %140 : vector<32x64xf32>
    %cst_45 = arith.constant 5.000000e-01 : f32
    %142 = vector.broadcast %cst_45 : f32 to vector<32x64xf32>
    %143 = arith.mulf %142, %141 : vector<32x64xf32>
    %cst_46 = arith.constant 0.707106769 : f32
    %144 = vector.broadcast %cst_46 : f32 to vector<32x64xf32>
    %145 = arith.mulf %141, %144 : vector<32x64xf32>
    %146 = math.absf %145 : vector<32x64xf32>
    %cst_47 = arith.constant 0.327591091 : f32
    %147 = vector.broadcast %cst_47 : f32 to vector<32x64xf32>
    %148 = arith.mulf %147, %146 : vector<32x64xf32>
    %cst_48 = arith.constant 1.000000e+00 : f32
    %149 = vector.broadcast %cst_48 : f32 to vector<32x64xf32>
    %150 = arith.addf %149, %148 : vector<32x64xf32>
    %cst_49 = arith.constant 1.000000e+00 : f32
    %151 = vector.broadcast %cst_49 : f32 to vector<32x64xf32>
    %152 = arith.divf %151, %150 : vector<32x64xf32>
    %cst_50 = arith.constant 1.06140542 : f32
    %153 = vector.broadcast %cst_50 : f32 to vector<32x64xf32>
    %154 = arith.mulf %153, %152 : vector<32x64xf32>
    %cst_51 = arith.constant -1.45315206 : f32
    %155 = vector.broadcast %cst_51 : f32 to vector<32x64xf32>
    %156 = arith.addf %154, %155 : vector<32x64xf32>
    %157 = arith.mulf %156, %152 : vector<32x64xf32>
    %cst_52 = arith.constant 1.42141378 : f32
    %158 = vector.broadcast %cst_52 : f32 to vector<32x64xf32>
    %159 = arith.addf %157, %158 : vector<32x64xf32>
    %160 = arith.mulf %159, %152 : vector<32x64xf32>
    %cst_53 = arith.constant -0.284496725 : f32
    %161 = vector.broadcast %cst_53 : f32 to vector<32x64xf32>
    %162 = arith.addf %160, %161 : vector<32x64xf32>
    %163 = arith.mulf %162, %152 : vector<32x64xf32>
    %cst_54 = arith.constant 0.254829586 : f32
    %164 = vector.broadcast %cst_54 : f32 to vector<32x64xf32>
    %165 = arith.addf %163, %164 : vector<32x64xf32>
    %166 = arith.mulf %165, %152 : vector<32x64xf32>
    %cst_55 = arith.constant 0.000000e+00 : f32
    %167 = vector.broadcast %cst_55 : f32 to vector<32x64xf32>
    %168 = arith.subf %167, %146 : vector<32x64xf32>
    %169 = arith.mulf %168, %146 : vector<32x64xf32>
    %170 = math.exp %169 : vector<32x64xf32>
    %171 = arith.mulf %166, %170 : vector<32x64xf32>
    %cst_56 = arith.constant 1.000000e+00 : f32
    %172 = vector.broadcast %cst_56 : f32 to vector<32x64xf32>
    %173 = arith.subf %172, %171 : vector<32x64xf32>
    %cst_57 = arith.constant 0.000000e+00 : f32
    %174 = vector.broadcast %cst_57 : f32 to vector<32x64xf32>
    %175 = arith.cmpf oge, %145, %174 : vector<32x64xf32>
    %cst_58 = arith.constant 0.000000e+00 : f32
    %176 = vector.broadcast %cst_58 : f32 to vector<32x64xf32>
    %177 = arith.subf %176, %173 : vector<32x64xf32>
    %178 = arith.select %175, %173, %177 : vector<32x64xi1>, vector<32x64xf32>
    %cst_59 = arith.constant 1.000000e+00 : f32
    %179 = vector.broadcast %cst_59 : f32 to vector<32x64xf32>
    %180 = arith.addf %179, %178 : vector<32x64xf32>
    %181 = arith.mulf %143, %180 : vector<32x64xf32>
    %cst_60 = arith.constant dense<0.000000e+00> : vector<32x16xf32>
    %182 = tpu.matmul %181, %34, %cst_60 {dimension_numbers = #tpu.dot_dimension_numbers<[1], [0], [0], [1], [0, 0, 1, 1], [], []>} : vector<32x64xf32>, vector<64x16xf32>, vector<32x16xf32> -> vector<32x16xf32>
    %183 = vector.extract_strided_slice %36 {offsets = [7, 0], sizes = [1, 16], strides = [1, 1]} : vector<8x64xf32> to vector<1x16xf32>
    %184 = vector.broadcast %183 : vector<1x16xf32> to vector<32x16xf32>
    %185 = arith.addf %182, %184 : vector<32x16xf32>
    %186 = arith.addf %112, %185 : vector<32x16xf32>
    %c1 = arith.constant 1 : index
    %c0_61 = arith.constant 0 : index
    %c0_62 = arith.constant 0 : index
    %187 = vector.load %arg3[%c1, %c0_61, %c0_62] : memref<2x16x128xf32, #tpu.memory_space<vmem>>, vector<1x16x128xf32>
    %188 = vector.shape_cast %187 : vector<1x16x128xf32> to vector<16x128xf32>
    %c1_63 = arith.constant 1 : index
    %c0_64 = arith.constant 0 : index
    %c0_65 = arith.constant 0 : index
    %189 = vector.load %arg4[%c1_63, %c0_64, %c0_65] : memref<2x64x16xf32, #tpu.memory_space<vmem>>, vector<1x64x16xf32>
    %190 = vector.shape_cast %189 : vector<1x64x16xf32> to vector<64x16xf32>
    %c1_66 = arith.constant 1 : index
    %c0_67 = arith.constant 0 : index
    %c0_68 = arith.constant 0 : index
    %191 = vector.load %arg5[%c1_66, %c0_67, %c0_68] : memref<2x8x64xf32, #tpu.memory_space<vmem>>, vector<1x8x64xf32>
    %192 = vector.shape_cast %191 : vector<1x8x64xf32> to vector<8x64xf32>
    %c1_69 = arith.constant 1 : index
    %c0_70 = arith.constant 0 : index
    %c0_71 = arith.constant 0 : index
    %c0_72 = arith.constant 0 : index
    %193 = vector.load %arg6[%c1_69, %c0_70, %c0_71, %c0_72] : memref<2x2x32x32xf32, #tpu.memory_space<vmem>>, vector<1x2x32x32xf32>
    %194 = vector.shape_cast %193 : vector<1x2x32x32xf32> to vector<2x32x32xf32>
    %195 = vector.extract_strided_slice %192 {offsets = [0, 0], sizes = [1, 16], strides = [1, 1]} : vector<8x64xf32> to vector<1x16xf32>
    %196 = vector.extract_strided_slice %192 {offsets = [1, 0], sizes = [1, 16], strides = [1, 1]} : vector<8x64xf32> to vector<1x16xf32>
    %cst_73 = arith.constant dense<0.000000e+00> : vector<32xf32>
    %197 = vector.multi_reduction <add>, %186, %cst_73 [1] : vector<32x16xf32> to vector<32xf32>
    %198 = vector.shape_cast %197 : vector<32xf32> to vector<32x1xf32>
    %cst_74 = arith.constant 1.600000e+01 : f32
    %199 = vector.broadcast %cst_74 : f32 to vector<32x1xf32>
    %200 = arith.divf %198, %199 : vector<32x1xf32>
    %201 = vector.broadcast %200 : vector<32x1xf32> to vector<32x16xf32>
    %202 = arith.subf %186, %201 : vector<32x16xf32>
    %203 = arith.mulf %202, %202 : vector<32x16xf32>
    %cst_75 = arith.constant dense<0.000000e+00> : vector<32xf32>
    %204 = vector.multi_reduction <add>, %203, %cst_75 [1] : vector<32x16xf32> to vector<32xf32>
    %205 = vector.shape_cast %204 : vector<32xf32> to vector<32x1xf32>
    %cst_76 = arith.constant 1.600000e+01 : f32
    %206 = vector.broadcast %cst_76 : f32 to vector<32x1xf32>
    %207 = arith.divf %205, %206 : vector<32x1xf32>
    %208 = vector.broadcast %200 : vector<32x1xf32> to vector<32x16xf32>
    %209 = arith.subf %186, %208 : vector<32x16xf32>
    %cst_77 = arith.constant 9.99999974E-6 : f32
    %210 = vector.broadcast %cst_77 : f32 to vector<32x1xf32>
    %211 = arith.addf %207, %210 : vector<32x1xf32>
    %212 = math.rsqrt %211 : vector<32x1xf32>
    %213 = vector.broadcast %212 : vector<32x1xf32> to vector<32x16xf32>
    %214 = arith.mulf %209, %213 : vector<32x16xf32>
    %215 = vector.broadcast %195 : vector<1x16xf32> to vector<32x16xf32>
    %216 = arith.mulf %214, %215 : vector<32x16xf32>
    %217 = vector.broadcast %196 : vector<1x16xf32> to vector<32x16xf32>
    %218 = arith.addf %216, %217 : vector<32x16xf32>
    %219 = vector.extract_strided_slice %188 {offsets = [0, 0], sizes = [16, 48], strides = [1, 1]} : vector<16x128xf32> to vector<16x48xf32>
    %cst_78 = arith.constant dense<0.000000e+00> : vector<32x48xf32>
    %220 = tpu.matmul %218, %219, %cst_78 {dimension_numbers = #tpu.dot_dimension_numbers<[1], [0], [0], [1], [0, 0, 1, 1], [], []>} : vector<32x16xf32>, vector<16x48xf32>, vector<32x48xf32> -> vector<32x48xf32>
    %221 = vector.extract_strided_slice %192 {offsets = [2, 0], sizes = [1, 48], strides = [1, 1]} : vector<8x64xf32> to vector<1x48xf32>
    %222 = vector.broadcast %221 : vector<1x48xf32> to vector<32x48xf32>
    %223 = arith.addf %220, %222 : vector<32x48xf32>
    %224 = vector.extract_strided_slice %192 {offsets = [3, 0], sizes = [1, 16], strides = [1, 1]} : vector<8x64xf32> to vector<1x16xf32>
    %225 = vector.extract_strided_slice %223 {offsets = [0, 0], sizes = [32, 8], strides = [1, 1]} : vector<32x48xf32> to vector<32x8xf32>
    %226 = vector.extract_strided_slice %223 {offsets = [0, 16], sizes = [32, 8], strides = [1, 1]} : vector<32x48xf32> to vector<32x8xf32>
    %227 = vector.extract_strided_slice %223 {offsets = [0, 32], sizes = [32, 8], strides = [1, 1]} : vector<32x48xf32> to vector<32x8xf32>
    %cst_79 = arith.constant dense<0.000000e+00> : vector<32x32xf32>
    %228 = tpu.matmul %225, %226, %cst_79 {dimension_numbers = #tpu.dot_dimension_numbers<[1], [1], [0], [0], [0, 0, 1, 0], [], []>} : vector<32x8xf32>, vector<32x8xf32>, vector<32x32xf32> -> vector<32x32xf32>
    %229 = vector.extract_strided_slice %194 {offsets = [0, 0, 0], sizes = [1, 32, 32], strides = [1, 1, 1]} : vector<2x32x32xf32> to vector<1x32x32xf32>
    %230 = vector.shape_cast %229 : vector<1x32x32xf32> to vector<32x32xf32>
    %231 = arith.addf %228, %230 : vector<32x32xf32>
    %cst_80 = arith.constant dense<0xFF800000> : vector<32xf32>
    %232 = vector.multi_reduction <maximumf>, %231, %cst_80 [1] : vector<32x32xf32> to vector<32xf32>
    %233 = vector.shape_cast %232 : vector<32xf32> to vector<32x1xf32>
    %234 = vector.broadcast %233 : vector<32x1xf32> to vector<32x32xf32>
    %235 = arith.subf %231, %234 : vector<32x32xf32>
    %236 = math.exp %235 : vector<32x32xf32>
    %cst_81 = arith.constant dense<0.000000e+00> : vector<32xf32>
    %237 = vector.multi_reduction <add>, %236, %cst_81 [1] : vector<32x32xf32> to vector<32xf32>
    %238 = vector.shape_cast %237 : vector<32xf32> to vector<32x1xf32>
    %239 = tpu.reciprocal %238 {approx = true} : vector<32x1xf32> -> vector<32x1xf32>
    %240 = vector.broadcast %239 : vector<32x1xf32> to vector<32x32xf32>
    %241 = arith.mulf %236, %240 : vector<32x32xf32>
    %cst_82 = arith.constant dense<0.000000e+00> : vector<32x8xf32>
    %242 = tpu.matmul %241, %227, %cst_82 {dimension_numbers = #tpu.dot_dimension_numbers<[1], [0], [0], [1], [0, 0, 1, 1], [], []>} : vector<32x32xf32>, vector<32x8xf32>, vector<32x8xf32> -> vector<32x8xf32>
    %243 = vector.extract_strided_slice %188 {offsets = [0, 48], sizes = [8, 16], strides = [1, 1]} : vector<16x128xf32> to vector<8x16xf32>
    %cst_83 = arith.constant dense<0.000000e+00> : vector<32x16xf32>
    %244 = tpu.matmul %242, %243, %cst_83 {dimension_numbers = #tpu.dot_dimension_numbers<[1], [0], [0], [1], [0, 0, 1, 1], [], []>} : vector<32x8xf32>, vector<8x16xf32>, vector<32x16xf32> -> vector<32x16xf32>
    %245 = vector.broadcast %224 : vector<1x16xf32> to vector<32x16xf32>
    %246 = arith.addf %245, %244 : vector<32x16xf32>
    %247 = vector.extract_strided_slice %223 {offsets = [0, 8], sizes = [32, 8], strides = [1, 1]} : vector<32x48xf32> to vector<32x8xf32>
    %248 = vector.extract_strided_slice %223 {offsets = [0, 24], sizes = [32, 8], strides = [1, 1]} : vector<32x48xf32> to vector<32x8xf32>
    %249 = vector.extract_strided_slice %223 {offsets = [0, 40], sizes = [32, 8], strides = [1, 1]} : vector<32x48xf32> to vector<32x8xf32>
    %cst_84 = arith.constant dense<0.000000e+00> : vector<32x32xf32>
    %250 = tpu.matmul %247, %248, %cst_84 {dimension_numbers = #tpu.dot_dimension_numbers<[1], [1], [0], [0], [0, 0, 1, 0], [], []>} : vector<32x8xf32>, vector<32x8xf32>, vector<32x32xf32> -> vector<32x32xf32>
    %251 = vector.extract_strided_slice %194 {offsets = [1, 0, 0], sizes = [1, 32, 32], strides = [1, 1, 1]} : vector<2x32x32xf32> to vector<1x32x32xf32>
    %252 = vector.shape_cast %251 : vector<1x32x32xf32> to vector<32x32xf32>
    %253 = arith.addf %250, %252 : vector<32x32xf32>
    %cst_85 = arith.constant dense<0xFF800000> : vector<32xf32>
    %254 = vector.multi_reduction <maximumf>, %253, %cst_85 [1] : vector<32x32xf32> to vector<32xf32>
    %255 = vector.shape_cast %254 : vector<32xf32> to vector<32x1xf32>
    %256 = vector.broadcast %255 : vector<32x1xf32> to vector<32x32xf32>
    %257 = arith.subf %253, %256 : vector<32x32xf32>
    %258 = math.exp %257 : vector<32x32xf32>
    %cst_86 = arith.constant dense<0.000000e+00> : vector<32xf32>
    %259 = vector.multi_reduction <add>, %258, %cst_86 [1] : vector<32x32xf32> to vector<32xf32>
    %260 = vector.shape_cast %259 : vector<32xf32> to vector<32x1xf32>
    %261 = tpu.reciprocal %260 {approx = true} : vector<32x1xf32> -> vector<32x1xf32>
    %262 = vector.broadcast %261 : vector<32x1xf32> to vector<32x32xf32>
    %263 = arith.mulf %258, %262 : vector<32x32xf32>
    %cst_87 = arith.constant dense<0.000000e+00> : vector<32x8xf32>
    %264 = tpu.matmul %263, %249, %cst_87 {dimension_numbers = #tpu.dot_dimension_numbers<[1], [0], [0], [1], [0, 0, 1, 1], [], []>} : vector<32x32xf32>, vector<32x8xf32>, vector<32x8xf32> -> vector<32x8xf32>
    %265 = vector.extract_strided_slice %188 {offsets = [8, 48], sizes = [8, 16], strides = [1, 1]} : vector<16x128xf32> to vector<8x16xf32>
    %cst_88 = arith.constant dense<0.000000e+00> : vector<32x16xf32>
    %266 = tpu.matmul %264, %265, %cst_88 {dimension_numbers = #tpu.dot_dimension_numbers<[1], [0], [0], [1], [0, 0, 1, 1], [], []>} : vector<32x8xf32>, vector<8x16xf32>, vector<32x16xf32> -> vector<32x16xf32>
    %267 = arith.addf %246, %266 : vector<32x16xf32>
    %268 = arith.addf %186, %267 : vector<32x16xf32>
    %269 = vector.extract_strided_slice %192 {offsets = [4, 0], sizes = [1, 16], strides = [1, 1]} : vector<8x64xf32> to vector<1x16xf32>
    %270 = vector.extract_strided_slice %192 {offsets = [5, 0], sizes = [1, 16], strides = [1, 1]} : vector<8x64xf32> to vector<1x16xf32>
    %cst_89 = arith.constant dense<0.000000e+00> : vector<32xf32>
    %271 = vector.multi_reduction <add>, %268, %cst_89 [1] : vector<32x16xf32> to vector<32xf32>
    %272 = vector.shape_cast %271 : vector<32xf32> to vector<32x1xf32>
    %cst_90 = arith.constant 1.600000e+01 : f32
    %273 = vector.broadcast %cst_90 : f32 to vector<32x1xf32>
    %274 = arith.divf %272, %273 : vector<32x1xf32>
    %275 = vector.broadcast %274 : vector<32x1xf32> to vector<32x16xf32>
    %276 = arith.subf %268, %275 : vector<32x16xf32>
    %277 = arith.mulf %276, %276 : vector<32x16xf32>
    %cst_91 = arith.constant dense<0.000000e+00> : vector<32xf32>
    %278 = vector.multi_reduction <add>, %277, %cst_91 [1] : vector<32x16xf32> to vector<32xf32>
    %279 = vector.shape_cast %278 : vector<32xf32> to vector<32x1xf32>
    %cst_92 = arith.constant 1.600000e+01 : f32
    %280 = vector.broadcast %cst_92 : f32 to vector<32x1xf32>
    %281 = arith.divf %279, %280 : vector<32x1xf32>
    %282 = vector.broadcast %274 : vector<32x1xf32> to vector<32x16xf32>
    %283 = arith.subf %268, %282 : vector<32x16xf32>
    %cst_93 = arith.constant 9.99999974E-6 : f32
    %284 = vector.broadcast %cst_93 : f32 to vector<32x1xf32>
    %285 = arith.addf %281, %284 : vector<32x1xf32>
    %286 = math.rsqrt %285 : vector<32x1xf32>
    %287 = vector.broadcast %286 : vector<32x1xf32> to vector<32x16xf32>
    %288 = arith.mulf %283, %287 : vector<32x16xf32>
    %289 = vector.broadcast %269 : vector<1x16xf32> to vector<32x16xf32>
    %290 = arith.mulf %288, %289 : vector<32x16xf32>
    %291 = vector.broadcast %270 : vector<1x16xf32> to vector<32x16xf32>
    %292 = arith.addf %290, %291 : vector<32x16xf32>
    %293 = vector.extract_strided_slice %188 {offsets = [0, 64], sizes = [16, 64], strides = [1, 1]} : vector<16x128xf32> to vector<16x64xf32>
    %cst_94 = arith.constant dense<0.000000e+00> : vector<32x64xf32>
    %294 = tpu.matmul %292, %293, %cst_94 {dimension_numbers = #tpu.dot_dimension_numbers<[1], [0], [0], [1], [0, 0, 1, 1], [], []>} : vector<32x16xf32>, vector<16x64xf32>, vector<32x64xf32> -> vector<32x64xf32>
    %295 = vector.extract_strided_slice %192 {offsets = [6, 0], sizes = [1, 64], strides = [1, 1]} : vector<8x64xf32> to vector<1x64xf32>
    %296 = vector.broadcast %295 : vector<1x64xf32> to vector<32x64xf32>
    %297 = arith.addf %294, %296 : vector<32x64xf32>
    %cst_95 = arith.constant 5.000000e-01 : f32
    %298 = vector.broadcast %cst_95 : f32 to vector<32x64xf32>
    %299 = arith.mulf %298, %297 : vector<32x64xf32>
    %cst_96 = arith.constant 0.707106769 : f32
    %300 = vector.broadcast %cst_96 : f32 to vector<32x64xf32>
    %301 = arith.mulf %297, %300 : vector<32x64xf32>
    %302 = math.absf %301 : vector<32x64xf32>
    %cst_97 = arith.constant 0.327591091 : f32
    %303 = vector.broadcast %cst_97 : f32 to vector<32x64xf32>
    %304 = arith.mulf %303, %302 : vector<32x64xf32>
    %cst_98 = arith.constant 1.000000e+00 : f32
    %305 = vector.broadcast %cst_98 : f32 to vector<32x64xf32>
    %306 = arith.addf %305, %304 : vector<32x64xf32>
    %cst_99 = arith.constant 1.000000e+00 : f32
    %307 = vector.broadcast %cst_99 : f32 to vector<32x64xf32>
    %308 = arith.divf %307, %306 : vector<32x64xf32>
    %cst_100 = arith.constant 1.06140542 : f32
    %309 = vector.broadcast %cst_100 : f32 to vector<32x64xf32>
    %310 = arith.mulf %309, %308 : vector<32x64xf32>
    %cst_101 = arith.constant -1.45315206 : f32
    %311 = vector.broadcast %cst_101 : f32 to vector<32x64xf32>
    %312 = arith.addf %310, %311 : vector<32x64xf32>
    %313 = arith.mulf %312, %308 : vector<32x64xf32>
    %cst_102 = arith.constant 1.42141378 : f32
    %314 = vector.broadcast %cst_102 : f32 to vector<32x64xf32>
    %315 = arith.addf %313, %314 : vector<32x64xf32>
    %316 = arith.mulf %315, %308 : vector<32x64xf32>
    %cst_103 = arith.constant -0.284496725 : f32
    %317 = vector.broadcast %cst_103 : f32 to vector<32x64xf32>
    %318 = arith.addf %316, %317 : vector<32x64xf32>
    %319 = arith.mulf %318, %308 : vector<32x64xf32>
    %cst_104 = arith.constant 0.254829586 : f32
    %320 = vector.broadcast %cst_104 : f32 to vector<32x64xf32>
    %321 = arith.addf %319, %320 : vector<32x64xf32>
    %322 = arith.mulf %321, %308 : vector<32x64xf32>
    %cst_105 = arith.constant 0.000000e+00 : f32
    %323 = vector.broadcast %cst_105 : f32 to vector<32x64xf32>
    %324 = arith.subf %323, %302 : vector<32x64xf32>
    %325 = arith.mulf %324, %302 : vector<32x64xf32>
    %326 = math.exp %325 : vector<32x64xf32>
    %327 = arith.mulf %322, %326 : vector<32x64xf32>
    %cst_106 = arith.constant 1.000000e+00 : f32
    %328 = vector.broadcast %cst_106 : f32 to vector<32x64xf32>
    %329 = arith.subf %328, %327 : vector<32x64xf32>
    %cst_107 = arith.constant 0.000000e+00 : f32
    %330 = vector.broadcast %cst_107 : f32 to vector<32x64xf32>
    %331 = arith.cmpf oge, %301, %330 : vector<32x64xf32>
    %cst_108 = arith.constant 0.000000e+00 : f32
    %332 = vector.broadcast %cst_108 : f32 to vector<32x64xf32>
    %333 = arith.subf %332, %329 : vector<32x64xf32>
    %334 = arith.select %331, %329, %333 : vector<32x64xi1>, vector<32x64xf32>
    %cst_109 = arith.constant 1.000000e+00 : f32
    %335 = vector.broadcast %cst_109 : f32 to vector<32x64xf32>
    %336 = arith.addf %335, %334 : vector<32x64xf32>
    %337 = arith.mulf %299, %336 : vector<32x64xf32>
    %cst_110 = arith.constant dense<0.000000e+00> : vector<32x16xf32>
    %338 = tpu.matmul %337, %190, %cst_110 {dimension_numbers = #tpu.dot_dimension_numbers<[1], [0], [0], [1], [0, 0, 1, 1], [], []>} : vector<32x64xf32>, vector<64x16xf32>, vector<32x16xf32> -> vector<32x16xf32>
    %339 = vector.extract_strided_slice %192 {offsets = [7, 0], sizes = [1, 16], strides = [1, 1]} : vector<8x64xf32> to vector<1x16xf32>
    %340 = vector.broadcast %339 : vector<1x16xf32> to vector<32x16xf32>
    %341 = arith.addf %338, %340 : vector<32x16xf32>
    %342 = arith.addf %268, %341 : vector<32x16xf32>
    %c0_111 = arith.constant 0 : index
    %c0_112 = arith.constant 0 : index
    %343 = vector.load %arg7[%c0_111, %c0_112] : memref<32x32xf32, #tpu.memory_space<vmem>>, vector<32x32xf32>
    %cst_113 = arith.constant dense<0.000000e+00> : vector<32x16xf32>
    %344 = tpu.matmul %343, %342, %cst_113 {dimension_numbers = #tpu.dot_dimension_numbers<[1], [0], [0], [1], [0, 0, 1, 1], [], []>} : vector<32x32xf32>, vector<32x16xf32>, vector<32x16xf32> -> vector<32x16xf32>
    %c0_114 = arith.constant 0 : index
    %c0_115 = arith.constant 0 : index
    %345 = vector.load %arg8[%c0_114, %c0_115] : memref<2x64xf32, #tpu.memory_space<vmem>>, vector<2x64xf32>
    %346 = vector.extract_strided_slice %344 {offsets = [0, 0], sizes = [8, 16], strides = [1, 1]} : vector<32x16xf32> to vector<8x16xf32>
    %347 = vector.extract_strided_slice %344 {offsets = [8, 0], sizes = [8, 16], strides = [1, 1]} : vector<32x16xf32> to vector<8x16xf32>
    %348 = vector.extract_strided_slice %344 {offsets = [16, 0], sizes = [8, 16], strides = [1, 1]} : vector<32x16xf32> to vector<8x16xf32>
    %349 = vector.extract_strided_slice %344 {offsets = [24, 0], sizes = [8, 16], strides = [1, 1]} : vector<32x16xf32> to vector<8x16xf32>
    %cst_116 = arith.constant dense<0.000000e+00> : vector<8xf32>
    %350 = vector.multi_reduction <add>, %346, %cst_116 [1] : vector<8x16xf32> to vector<8xf32>
    %351 = vector.shape_cast %350 : vector<8xf32> to vector<8x1xf32>
    %cst_117 = arith.constant 0.000000e+00 : f32
    %352 = vector.broadcast %cst_117 : f32 to vector<8x1xf32>
    %353 = arith.addf %352, %351 : vector<8x1xf32>
    %cst_118 = arith.constant dense<0.000000e+00> : vector<8xf32>
    %354 = vector.multi_reduction <add>, %347, %cst_118 [1] : vector<8x16xf32> to vector<8xf32>
    %355 = vector.shape_cast %354 : vector<8xf32> to vector<8x1xf32>
    %356 = arith.addf %353, %355 : vector<8x1xf32>
    %cst_119 = arith.constant dense<0.000000e+00> : vector<8xf32>
    %357 = vector.multi_reduction <add>, %348, %cst_119 [1] : vector<8x16xf32> to vector<8xf32>
    %358 = vector.shape_cast %357 : vector<8xf32> to vector<8x1xf32>
    %359 = arith.addf %356, %358 : vector<8x1xf32>
    %cst_120 = arith.constant dense<0.000000e+00> : vector<8xf32>
    %360 = vector.multi_reduction <add>, %349, %cst_120 [1] : vector<8x16xf32> to vector<8xf32>
    %361 = vector.shape_cast %360 : vector<8xf32> to vector<8x1xf32>
    %362 = arith.addf %359, %361 : vector<8x1xf32>
    %cst_121 = arith.constant 6.400000e+01 : f32
    %363 = vector.broadcast %cst_121 : f32 to vector<8x1xf32>
    %364 = arith.divf %362, %363 : vector<8x1xf32>
    %365 = vector.broadcast %364 : vector<8x1xf32> to vector<8x16xf32>
    %366 = arith.subf %346, %365 : vector<8x16xf32>
    %367 = arith.mulf %366, %366 : vector<8x16xf32>
    %cst_122 = arith.constant dense<0.000000e+00> : vector<8xf32>
    %368 = vector.multi_reduction <add>, %367, %cst_122 [1] : vector<8x16xf32> to vector<8xf32>
    %369 = vector.shape_cast %368 : vector<8xf32> to vector<8x1xf32>
    %cst_123 = arith.constant 0.000000e+00 : f32
    %370 = vector.broadcast %cst_123 : f32 to vector<8x1xf32>
    %371 = arith.addf %370, %369 : vector<8x1xf32>
    %372 = vector.broadcast %364 : vector<8x1xf32> to vector<8x16xf32>
    %373 = arith.subf %347, %372 : vector<8x16xf32>
    %374 = arith.mulf %373, %373 : vector<8x16xf32>
    %cst_124 = arith.constant dense<0.000000e+00> : vector<8xf32>
    %375 = vector.multi_reduction <add>, %374, %cst_124 [1] : vector<8x16xf32> to vector<8xf32>
    %376 = vector.shape_cast %375 : vector<8xf32> to vector<8x1xf32>
    %377 = arith.addf %371, %376 : vector<8x1xf32>
    %378 = vector.broadcast %364 : vector<8x1xf32> to vector<8x16xf32>
    %379 = arith.subf %348, %378 : vector<8x16xf32>
    %380 = arith.mulf %379, %379 : vector<8x16xf32>
    %cst_125 = arith.constant dense<0.000000e+00> : vector<8xf32>
    %381 = vector.multi_reduction <add>, %380, %cst_125 [1] : vector<8x16xf32> to vector<8xf32>
    %382 = vector.shape_cast %381 : vector<8xf32> to vector<8x1xf32>
    %383 = arith.addf %377, %382 : vector<8x1xf32>
    %384 = vector.broadcast %364 : vector<8x1xf32> to vector<8x16xf32>
    %385 = arith.subf %349, %384 : vector<8x16xf32>
    %386 = arith.mulf %385, %385 : vector<8x16xf32>
    %cst_126 = arith.constant dense<0.000000e+00> : vector<8xf32>
    %387 = vector.multi_reduction <add>, %386, %cst_126 [1] : vector<8x16xf32> to vector<8xf32>
    %388 = vector.shape_cast %387 : vector<8xf32> to vector<8x1xf32>
    %389 = arith.addf %383, %388 : vector<8x1xf32>
    %cst_127 = arith.constant 6.400000e+01 : f32
    %390 = vector.broadcast %cst_127 : f32 to vector<8x1xf32>
    %391 = arith.divf %389, %390 : vector<8x1xf32>
    %cst_128 = arith.constant 9.99999974E-6 : f32
    %392 = vector.broadcast %cst_128 : f32 to vector<8x1xf32>
    %393 = arith.addf %391, %392 : vector<8x1xf32>
    %394 = math.rsqrt %393 : vector<8x1xf32>
    %395 = vector.broadcast %364 : vector<8x1xf32> to vector<8x16xf32>
    %396 = arith.subf %346, %395 : vector<8x16xf32>
    %397 = vector.broadcast %394 : vector<8x1xf32> to vector<8x16xf32>
    %398 = arith.mulf %396, %397 : vector<8x16xf32>
    %399 = vector.extract_strided_slice %345 {offsets = [0, 0], sizes = [1, 16], strides = [1, 1]} : vector<2x64xf32> to vector<1x16xf32>
    %400 = vector.broadcast %399 : vector<1x16xf32> to vector<8x16xf32>
    %401 = arith.mulf %398, %400 : vector<8x16xf32>
    %402 = vector.extract_strided_slice %345 {offsets = [1, 0], sizes = [1, 16], strides = [1, 1]} : vector<2x64xf32> to vector<1x16xf32>
    %403 = vector.broadcast %402 : vector<1x16xf32> to vector<8x16xf32>
    %404 = arith.addf %401, %403 : vector<8x16xf32>
    %c0_129 = arith.constant 0 : index
    %c0_130 = arith.constant 0 : index
    %405 = vector.load %arg9[%c0_129, %c0_130] : memref<64x32xf32, #tpu.memory_space<vmem>>, vector<16x32xf32>
    %cst_131 = arith.constant dense<0.000000e+00> : vector<8x32xf32>
    %406 = tpu.matmul %404, %405, %cst_131 {dimension_numbers = #tpu.dot_dimension_numbers<[1], [0], [0], [1], [0, 0, 1, 1], [], []>} : vector<8x16xf32>, vector<16x32xf32>, vector<8x32xf32> -> vector<8x32xf32>
    %cst_132 = arith.constant 0.000000e+00 : f32
    %407 = vector.broadcast %cst_132 : f32 to vector<8x32xf32>
    %408 = arith.addf %407, %406 : vector<8x32xf32>
    %409 = vector.broadcast %364 : vector<8x1xf32> to vector<8x16xf32>
    %410 = arith.subf %347, %409 : vector<8x16xf32>
    %411 = vector.broadcast %394 : vector<8x1xf32> to vector<8x16xf32>
    %412 = arith.mulf %410, %411 : vector<8x16xf32>
    %413 = vector.extract_strided_slice %345 {offsets = [0, 16], sizes = [1, 16], strides = [1, 1]} : vector<2x64xf32> to vector<1x16xf32>
    %414 = vector.broadcast %413 : vector<1x16xf32> to vector<8x16xf32>
    %415 = arith.mulf %412, %414 : vector<8x16xf32>
    %416 = vector.extract_strided_slice %345 {offsets = [1, 16], sizes = [1, 16], strides = [1, 1]} : vector<2x64xf32> to vector<1x16xf32>
    %417 = vector.broadcast %416 : vector<1x16xf32> to vector<8x16xf32>
    %418 = arith.addf %415, %417 : vector<8x16xf32>
    %c16 = arith.constant 16 : index
    %c0_133 = arith.constant 0 : index
    %419 = vector.load %arg9[%c16, %c0_133] : memref<64x32xf32, #tpu.memory_space<vmem>>, vector<16x32xf32>
    %cst_134 = arith.constant dense<0.000000e+00> : vector<8x32xf32>
    %420 = tpu.matmul %418, %419, %cst_134 {dimension_numbers = #tpu.dot_dimension_numbers<[1], [0], [0], [1], [0, 0, 1, 1], [], []>} : vector<8x16xf32>, vector<16x32xf32>, vector<8x32xf32> -> vector<8x32xf32>
    %421 = arith.addf %408, %420 : vector<8x32xf32>
    %422 = vector.broadcast %364 : vector<8x1xf32> to vector<8x16xf32>
    %423 = arith.subf %348, %422 : vector<8x16xf32>
    %424 = vector.broadcast %394 : vector<8x1xf32> to vector<8x16xf32>
    %425 = arith.mulf %423, %424 : vector<8x16xf32>
    %426 = vector.extract_strided_slice %345 {offsets = [0, 32], sizes = [1, 16], strides = [1, 1]} : vector<2x64xf32> to vector<1x16xf32>
    %427 = vector.broadcast %426 : vector<1x16xf32> to vector<8x16xf32>
    %428 = arith.mulf %425, %427 : vector<8x16xf32>
    %429 = vector.extract_strided_slice %345 {offsets = [1, 32], sizes = [1, 16], strides = [1, 1]} : vector<2x64xf32> to vector<1x16xf32>
    %430 = vector.broadcast %429 : vector<1x16xf32> to vector<8x16xf32>
    %431 = arith.addf %428, %430 : vector<8x16xf32>
    %c32 = arith.constant 32 : index
    %c0_135 = arith.constant 0 : index
    %432 = vector.load %arg9[%c32, %c0_135] : memref<64x32xf32, #tpu.memory_space<vmem>>, vector<16x32xf32>
    %cst_136 = arith.constant dense<0.000000e+00> : vector<8x32xf32>
    %433 = tpu.matmul %431, %432, %cst_136 {dimension_numbers = #tpu.dot_dimension_numbers<[1], [0], [0], [1], [0, 0, 1, 1], [], []>} : vector<8x16xf32>, vector<16x32xf32>, vector<8x32xf32> -> vector<8x32xf32>
    %434 = arith.addf %421, %433 : vector<8x32xf32>
    %435 = vector.broadcast %364 : vector<8x1xf32> to vector<8x16xf32>
    %436 = arith.subf %349, %435 : vector<8x16xf32>
    %437 = vector.broadcast %394 : vector<8x1xf32> to vector<8x16xf32>
    %438 = arith.mulf %436, %437 : vector<8x16xf32>
    %439 = vector.extract_strided_slice %345 {offsets = [0, 48], sizes = [1, 16], strides = [1, 1]} : vector<2x64xf32> to vector<1x16xf32>
    %440 = vector.broadcast %439 : vector<1x16xf32> to vector<8x16xf32>
    %441 = arith.mulf %438, %440 : vector<8x16xf32>
    %442 = vector.extract_strided_slice %345 {offsets = [1, 48], sizes = [1, 16], strides = [1, 1]} : vector<2x64xf32> to vector<1x16xf32>
    %443 = vector.broadcast %442 : vector<1x16xf32> to vector<8x16xf32>
    %444 = arith.addf %441, %443 : vector<8x16xf32>
    %c48 = arith.constant 48 : index
    %c0_137 = arith.constant 0 : index
    %445 = vector.load %arg9[%c48, %c0_137] : memref<64x32xf32, #tpu.memory_space<vmem>>, vector<16x32xf32>
    %cst_138 = arith.constant dense<0.000000e+00> : vector<8x32xf32>
    %446 = tpu.matmul %444, %445, %cst_138 {dimension_numbers = #tpu.dot_dimension_numbers<[1], [0], [0], [1], [0, 0, 1, 1], [], []>} : vector<8x16xf32>, vector<16x32xf32>, vector<8x32xf32> -> vector<8x32xf32>
    %447 = arith.addf %434, %446 : vector<8x32xf32>
    %c0_139 = arith.constant 0 : index
    %c0_140 = arith.constant 0 : index
    %c0_141 = arith.constant 0 : index
    %448 = vector.load %arg10[%c0_139, %c0_140, %c0_141] : memref<2x32x256xf32, #tpu.memory_space<vmem>>, vector<1x32x256xf32>
    %449 = vector.shape_cast %448 : vector<1x32x256xf32> to vector<32x256xf32>
    %c0_142 = arith.constant 0 : index
    %c0_143 = arith.constant 0 : index
    %c0_144 = arith.constant 0 : index
    %450 = vector.load %arg11[%c0_142, %c0_143, %c0_144] : memref<2x128x32xf32, #tpu.memory_space<vmem>>, vector<1x128x32xf32>
    %451 = vector.shape_cast %450 : vector<1x128x32xf32> to vector<128x32xf32>
    %c0_145 = arith.constant 0 : index
    %c0_146 = arith.constant 0 : index
    %c0_147 = arith.constant 0 : index
    %452 = vector.load %arg12[%c0_145, %c0_146, %c0_147] : memref<2x8x128xf32, #tpu.memory_space<vmem>>, vector<1x8x128xf32>
    %453 = vector.shape_cast %452 : vector<1x8x128xf32> to vector<8x128xf32>
    %c0_148 = arith.constant 0 : index
    %c0_149 = arith.constant 0 : index
    %c0_150 = arith.constant 0 : index
    %c0_151 = arith.constant 0 : index
    %454 = vector.load %arg13[%c0_148, %c0_149, %c0_150, %c0_151] : memref<2x4x8x8xf32, #tpu.memory_space<vmem>>, vector<1x4x8x8xf32>
    %455 = vector.shape_cast %454 : vector<1x4x8x8xf32> to vector<4x8x8xf32>
    %456 = vector.extract_strided_slice %453 {offsets = [0, 0], sizes = [1, 32], strides = [1, 1]} : vector<8x128xf32> to vector<1x32xf32>
    %457 = vector.extract_strided_slice %453 {offsets = [1, 0], sizes = [1, 32], strides = [1, 1]} : vector<8x128xf32> to vector<1x32xf32>
    %cst_152 = arith.constant dense<0.000000e+00> : vector<8xf32>
    %458 = vector.multi_reduction <add>, %447, %cst_152 [1] : vector<8x32xf32> to vector<8xf32>
    %459 = vector.shape_cast %458 : vector<8xf32> to vector<8x1xf32>
    %cst_153 = arith.constant 3.200000e+01 : f32
    %460 = vector.broadcast %cst_153 : f32 to vector<8x1xf32>
    %461 = arith.divf %459, %460 : vector<8x1xf32>
    %462 = vector.broadcast %461 : vector<8x1xf32> to vector<8x32xf32>
    %463 = arith.subf %447, %462 : vector<8x32xf32>
    %464 = arith.mulf %463, %463 : vector<8x32xf32>
    %cst_154 = arith.constant dense<0.000000e+00> : vector<8xf32>
    %465 = vector.multi_reduction <add>, %464, %cst_154 [1] : vector<8x32xf32> to vector<8xf32>
    %466 = vector.shape_cast %465 : vector<8xf32> to vector<8x1xf32>
    %cst_155 = arith.constant 3.200000e+01 : f32
    %467 = vector.broadcast %cst_155 : f32 to vector<8x1xf32>
    %468 = arith.divf %466, %467 : vector<8x1xf32>
    %469 = vector.broadcast %461 : vector<8x1xf32> to vector<8x32xf32>
    %470 = arith.subf %447, %469 : vector<8x32xf32>
    %cst_156 = arith.constant 9.99999974E-6 : f32
    %471 = vector.broadcast %cst_156 : f32 to vector<8x1xf32>
    %472 = arith.addf %468, %471 : vector<8x1xf32>
    %473 = math.rsqrt %472 : vector<8x1xf32>
    %474 = vector.broadcast %473 : vector<8x1xf32> to vector<8x32xf32>
    %475 = arith.mulf %470, %474 : vector<8x32xf32>
    %476 = vector.broadcast %456 : vector<1x32xf32> to vector<8x32xf32>
    %477 = arith.mulf %475, %476 : vector<8x32xf32>
    %478 = vector.broadcast %457 : vector<1x32xf32> to vector<8x32xf32>
    %479 = arith.addf %477, %478 : vector<8x32xf32>
    %480 = vector.extract_strided_slice %449 {offsets = [0, 0], sizes = [32, 96], strides = [1, 1]} : vector<32x256xf32> to vector<32x96xf32>
    %cst_157 = arith.constant dense<0.000000e+00> : vector<8x96xf32>
    %481 = tpu.matmul %479, %480, %cst_157 {dimension_numbers = #tpu.dot_dimension_numbers<[1], [0], [0], [1], [0, 0, 1, 1], [], []>} : vector<8x32xf32>, vector<32x96xf32>, vector<8x96xf32> -> vector<8x96xf32>
    %482 = vector.extract_strided_slice %453 {offsets = [2, 0], sizes = [1, 96], strides = [1, 1]} : vector<8x128xf32> to vector<1x96xf32>
    %483 = vector.broadcast %482 : vector<1x96xf32> to vector<8x96xf32>
    %484 = arith.addf %481, %483 : vector<8x96xf32>
    %485 = vector.extract_strided_slice %453 {offsets = [3, 0], sizes = [1, 32], strides = [1, 1]} : vector<8x128xf32> to vector<1x32xf32>
    %486 = vector.extract_strided_slice %484 {offsets = [0, 0], sizes = [8, 8], strides = [1, 1]} : vector<8x96xf32> to vector<8x8xf32>
    %487 = vector.extract_strided_slice %484 {offsets = [0, 32], sizes = [8, 8], strides = [1, 1]} : vector<8x96xf32> to vector<8x8xf32>
    %488 = vector.extract_strided_slice %484 {offsets = [0, 64], sizes = [8, 8], strides = [1, 1]} : vector<8x96xf32> to vector<8x8xf32>
    %cst_158 = arith.constant dense<0.000000e+00> : vector<8x8xf32>
    %489 = tpu.matmul %486, %487, %cst_158 {dimension_numbers = #tpu.dot_dimension_numbers<[1], [1], [0], [0], [0, 0, 1, 0], [], []>} : vector<8x8xf32>, vector<8x8xf32>, vector<8x8xf32> -> vector<8x8xf32>
    %490 = vector.extract_strided_slice %455 {offsets = [0, 0, 0], sizes = [1, 8, 8], strides = [1, 1, 1]} : vector<4x8x8xf32> to vector<1x8x8xf32>
    %491 = vector.shape_cast %490 : vector<1x8x8xf32> to vector<8x8xf32>
    %492 = arith.addf %489, %491 : vector<8x8xf32>
    %cst_159 = arith.constant dense<0xFF800000> : vector<8xf32>
    %493 = vector.multi_reduction <maximumf>, %492, %cst_159 [1] : vector<8x8xf32> to vector<8xf32>
    %494 = vector.shape_cast %493 : vector<8xf32> to vector<8x1xf32>
    %495 = vector.broadcast %494 : vector<8x1xf32> to vector<8x8xf32>
    %496 = arith.subf %492, %495 : vector<8x8xf32>
    %497 = math.exp %496 : vector<8x8xf32>
    %cst_160 = arith.constant dense<0.000000e+00> : vector<8xf32>
    %498 = vector.multi_reduction <add>, %497, %cst_160 [1] : vector<8x8xf32> to vector<8xf32>
    %499 = vector.shape_cast %498 : vector<8xf32> to vector<8x1xf32>
    %500 = tpu.reciprocal %499 {approx = true} : vector<8x1xf32> -> vector<8x1xf32>
    %501 = vector.broadcast %500 : vector<8x1xf32> to vector<8x8xf32>
    %502 = arith.mulf %497, %501 : vector<8x8xf32>
    %cst_161 = arith.constant dense<0.000000e+00> : vector<8x8xf32>
    %503 = tpu.matmul %502, %488, %cst_161 {dimension_numbers = #tpu.dot_dimension_numbers<[1], [0], [0], [1], [0, 0, 1, 1], [], []>} : vector<8x8xf32>, vector<8x8xf32>, vector<8x8xf32> -> vector<8x8xf32>
    %504 = vector.extract_strided_slice %449 {offsets = [0, 96], sizes = [8, 32], strides = [1, 1]} : vector<32x256xf32> to vector<8x32xf32>
    %cst_162 = arith.constant dense<0.000000e+00> : vector<8x32xf32>
    %505 = tpu.matmul %503, %504, %cst_162 {dimension_numbers = #tpu.dot_dimension_numbers<[1], [0], [0], [1], [0, 0, 1, 1], [], []>} : vector<8x8xf32>, vector<8x32xf32>, vector<8x32xf32> -> vector<8x32xf32>
    %506 = vector.broadcast %485 : vector<1x32xf32> to vector<8x32xf32>
    %507 = arith.addf %506, %505 : vector<8x32xf32>
    %508 = vector.extract_strided_slice %484 {offsets = [0, 8], sizes = [8, 8], strides = [1, 1]} : vector<8x96xf32> to vector<8x8xf32>
    %509 = vector.extract_strided_slice %484 {offsets = [0, 40], sizes = [8, 8], strides = [1, 1]} : vector<8x96xf32> to vector<8x8xf32>
    %510 = vector.extract_strided_slice %484 {offsets = [0, 72], sizes = [8, 8], strides = [1, 1]} : vector<8x96xf32> to vector<8x8xf32>
    %cst_163 = arith.constant dense<0.000000e+00> : vector<8x8xf32>
    %511 = tpu.matmul %508, %509, %cst_163 {dimension_numbers = #tpu.dot_dimension_numbers<[1], [1], [0], [0], [0, 0, 1, 0], [], []>} : vector<8x8xf32>, vector<8x8xf32>, vector<8x8xf32> -> vector<8x8xf32>
    %512 = vector.extract_strided_slice %455 {offsets = [1, 0, 0], sizes = [1, 8, 8], strides = [1, 1, 1]} : vector<4x8x8xf32> to vector<1x8x8xf32>
    %513 = vector.shape_cast %512 : vector<1x8x8xf32> to vector<8x8xf32>
    %514 = arith.addf %511, %513 : vector<8x8xf32>
    %cst_164 = arith.constant dense<0xFF800000> : vector<8xf32>
    %515 = vector.multi_reduction <maximumf>, %514, %cst_164 [1] : vector<8x8xf32> to vector<8xf32>
    %516 = vector.shape_cast %515 : vector<8xf32> to vector<8x1xf32>
    %517 = vector.broadcast %516 : vector<8x1xf32> to vector<8x8xf32>
    %518 = arith.subf %514, %517 : vector<8x8xf32>
    %519 = math.exp %518 : vector<8x8xf32>
    %cst_165 = arith.constant dense<0.000000e+00> : vector<8xf32>
    %520 = vector.multi_reduction <add>, %519, %cst_165 [1] : vector<8x8xf32> to vector<8xf32>
    %521 = vector.shape_cast %520 : vector<8xf32> to vector<8x1xf32>
    %522 = tpu.reciprocal %521 {approx = true} : vector<8x1xf32> -> vector<8x1xf32>
    %523 = vector.broadcast %522 : vector<8x1xf32> to vector<8x8xf32>
    %524 = arith.mulf %519, %523 : vector<8x8xf32>
    %cst_166 = arith.constant dense<0.000000e+00> : vector<8x8xf32>
    %525 = tpu.matmul %524, %510, %cst_166 {dimension_numbers = #tpu.dot_dimension_numbers<[1], [0], [0], [1], [0, 0, 1, 1], [], []>} : vector<8x8xf32>, vector<8x8xf32>, vector<8x8xf32> -> vector<8x8xf32>
    %526 = vector.extract_strided_slice %449 {offsets = [8, 96], sizes = [8, 32], strides = [1, 1]} : vector<32x256xf32> to vector<8x32xf32>
    %cst_167 = arith.constant dense<0.000000e+00> : vector<8x32xf32>
    %527 = tpu.matmul %525, %526, %cst_167 {dimension_numbers = #tpu.dot_dimension_numbers<[1], [0], [0], [1], [0, 0, 1, 1], [], []>} : vector<8x8xf32>, vector<8x32xf32>, vector<8x32xf32> -> vector<8x32xf32>
    %528 = arith.addf %507, %527 : vector<8x32xf32>
    %529 = vector.extract_strided_slice %484 {offsets = [0, 16], sizes = [8, 8], strides = [1, 1]} : vector<8x96xf32> to vector<8x8xf32>
    %530 = vector.extract_strided_slice %484 {offsets = [0, 48], sizes = [8, 8], strides = [1, 1]} : vector<8x96xf32> to vector<8x8xf32>
    %531 = vector.extract_strided_slice %484 {offsets = [0, 80], sizes = [8, 8], strides = [1, 1]} : vector<8x96xf32> to vector<8x8xf32>
    %cst_168 = arith.constant dense<0.000000e+00> : vector<8x8xf32>
    %532 = tpu.matmul %529, %530, %cst_168 {dimension_numbers = #tpu.dot_dimension_numbers<[1], [1], [0], [0], [0, 0, 1, 0], [], []>} : vector<8x8xf32>, vector<8x8xf32>, vector<8x8xf32> -> vector<8x8xf32>
    %533 = vector.extract_strided_slice %455 {offsets = [2, 0, 0], sizes = [1, 8, 8], strides = [1, 1, 1]} : vector<4x8x8xf32> to vector<1x8x8xf32>
    %534 = vector.shape_cast %533 : vector<1x8x8xf32> to vector<8x8xf32>
    %535 = arith.addf %532, %534 : vector<8x8xf32>
    %cst_169 = arith.constant dense<0xFF800000> : vector<8xf32>
    %536 = vector.multi_reduction <maximumf>, %535, %cst_169 [1] : vector<8x8xf32> to vector<8xf32>
    %537 = vector.shape_cast %536 : vector<8xf32> to vector<8x1xf32>
    %538 = vector.broadcast %537 : vector<8x1xf32> to vector<8x8xf32>
    %539 = arith.subf %535, %538 : vector<8x8xf32>
    %540 = math.exp %539 : vector<8x8xf32>
    %cst_170 = arith.constant dense<0.000000e+00> : vector<8xf32>
    %541 = vector.multi_reduction <add>, %540, %cst_170 [1] : vector<8x8xf32> to vector<8xf32>
    %542 = vector.shape_cast %541 : vector<8xf32> to vector<8x1xf32>
    %543 = tpu.reciprocal %542 {approx = true} : vector<8x1xf32> -> vector<8x1xf32>
    %544 = vector.broadcast %543 : vector<8x1xf32> to vector<8x8xf32>
    %545 = arith.mulf %540, %544 : vector<8x8xf32>
    %cst_171 = arith.constant dense<0.000000e+00> : vector<8x8xf32>
    %546 = tpu.matmul %545, %531, %cst_171 {dimension_numbers = #tpu.dot_dimension_numbers<[1], [0], [0], [1], [0, 0, 1, 1], [], []>} : vector<8x8xf32>, vector<8x8xf32>, vector<8x8xf32> -> vector<8x8xf32>
    %547 = vector.extract_strided_slice %449 {offsets = [16, 96], sizes = [8, 32], strides = [1, 1]} : vector<32x256xf32> to vector<8x32xf32>
    %cst_172 = arith.constant dense<0.000000e+00> : vector<8x32xf32>
    %548 = tpu.matmul %546, %547, %cst_172 {dimension_numbers = #tpu.dot_dimension_numbers<[1], [0], [0], [1], [0, 0, 1, 1], [], []>} : vector<8x8xf32>, vector<8x32xf32>, vector<8x32xf32> -> vector<8x32xf32>
    %549 = arith.addf %528, %548 : vector<8x32xf32>
    %550 = vector.extract_strided_slice %484 {offsets = [0, 24], sizes = [8, 8], strides = [1, 1]} : vector<8x96xf32> to vector<8x8xf32>
    %551 = vector.extract_strided_slice %484 {offsets = [0, 56], sizes = [8, 8], strides = [1, 1]} : vector<8x96xf32> to vector<8x8xf32>
    %552 = vector.extract_strided_slice %484 {offsets = [0, 88], sizes = [8, 8], strides = [1, 1]} : vector<8x96xf32> to vector<8x8xf32>
    %cst_173 = arith.constant dense<0.000000e+00> : vector<8x8xf32>
    %553 = tpu.matmul %550, %551, %cst_173 {dimension_numbers = #tpu.dot_dimension_numbers<[1], [1], [0], [0], [0, 0, 1, 0], [], []>} : vector<8x8xf32>, vector<8x8xf32>, vector<8x8xf32> -> vector<8x8xf32>
    %554 = vector.extract_strided_slice %455 {offsets = [3, 0, 0], sizes = [1, 8, 8], strides = [1, 1, 1]} : vector<4x8x8xf32> to vector<1x8x8xf32>
    %555 = vector.shape_cast %554 : vector<1x8x8xf32> to vector<8x8xf32>
    %556 = arith.addf %553, %555 : vector<8x8xf32>
    %cst_174 = arith.constant dense<0xFF800000> : vector<8xf32>
    %557 = vector.multi_reduction <maximumf>, %556, %cst_174 [1] : vector<8x8xf32> to vector<8xf32>
    %558 = vector.shape_cast %557 : vector<8xf32> to vector<8x1xf32>
    %559 = vector.broadcast %558 : vector<8x1xf32> to vector<8x8xf32>
    %560 = arith.subf %556, %559 : vector<8x8xf32>
    %561 = math.exp %560 : vector<8x8xf32>
    %cst_175 = arith.constant dense<0.000000e+00> : vector<8xf32>
    %562 = vector.multi_reduction <add>, %561, %cst_175 [1] : vector<8x8xf32> to vector<8xf32>
    %563 = vector.shape_cast %562 : vector<8xf32> to vector<8x1xf32>
    %564 = tpu.reciprocal %563 {approx = true} : vector<8x1xf32> -> vector<8x1xf32>
    %565 = vector.broadcast %564 : vector<8x1xf32> to vector<8x8xf32>
    %566 = arith.mulf %561, %565 : vector<8x8xf32>
    %cst_176 = arith.constant dense<0.000000e+00> : vector<8x8xf32>
    %567 = tpu.matmul %566, %552, %cst_176 {dimension_numbers = #tpu.dot_dimension_numbers<[1], [0], [0], [1], [0, 0, 1, 1], [], []>} : vector<8x8xf32>, vector<8x8xf32>, vector<8x8xf32> -> vector<8x8xf32>
    %568 = vector.extract_strided_slice %449 {offsets = [24, 96], sizes = [8, 32], strides = [1, 1]} : vector<32x256xf32> to vector<8x32xf32>
    %cst_177 = arith.constant dense<0.000000e+00> : vector<8x32xf32>
    %569 = tpu.matmul %567, %568, %cst_177 {dimension_numbers = #tpu.dot_dimension_numbers<[1], [0], [0], [1], [0, 0, 1, 1], [], []>} : vector<8x8xf32>, vector<8x32xf32>, vector<8x32xf32> -> vector<8x32xf32>
    %570 = arith.addf %549, %569 : vector<8x32xf32>
    %571 = arith.addf %447, %570 : vector<8x32xf32>
    %572 = vector.extract_strided_slice %453 {offsets = [4, 0], sizes = [1, 32], strides = [1, 1]} : vector<8x128xf32> to vector<1x32xf32>
    %573 = vector.extract_strided_slice %453 {offsets = [5, 0], sizes = [1, 32], strides = [1, 1]} : vector<8x128xf32> to vector<1x32xf32>
    %cst_178 = arith.constant dense<0.000000e+00> : vector<8xf32>
    %574 = vector.multi_reduction <add>, %571, %cst_178 [1] : vector<8x32xf32> to vector<8xf32>
    %575 = vector.shape_cast %574 : vector<8xf32> to vector<8x1xf32>
    %cst_179 = arith.constant 3.200000e+01 : f32
    %576 = vector.broadcast %cst_179 : f32 to vector<8x1xf32>
    %577 = arith.divf %575, %576 : vector<8x1xf32>
    %578 = vector.broadcast %577 : vector<8x1xf32> to vector<8x32xf32>
    %579 = arith.subf %571, %578 : vector<8x32xf32>
    %580 = arith.mulf %579, %579 : vector<8x32xf32>
    %cst_180 = arith.constant dense<0.000000e+00> : vector<8xf32>
    %581 = vector.multi_reduction <add>, %580, %cst_180 [1] : vector<8x32xf32> to vector<8xf32>
    %582 = vector.shape_cast %581 : vector<8xf32> to vector<8x1xf32>
    %cst_181 = arith.constant 3.200000e+01 : f32
    %583 = vector.broadcast %cst_181 : f32 to vector<8x1xf32>
    %584 = arith.divf %582, %583 : vector<8x1xf32>
    %585 = vector.broadcast %577 : vector<8x1xf32> to vector<8x32xf32>
    %586 = arith.subf %571, %585 : vector<8x32xf32>
    %cst_182 = arith.constant 9.99999974E-6 : f32
    %587 = vector.broadcast %cst_182 : f32 to vector<8x1xf32>
    %588 = arith.addf %584, %587 : vector<8x1xf32>
    %589 = math.rsqrt %588 : vector<8x1xf32>
    %590 = vector.broadcast %589 : vector<8x1xf32> to vector<8x32xf32>
    %591 = arith.mulf %586, %590 : vector<8x32xf32>
    %592 = vector.broadcast %572 : vector<1x32xf32> to vector<8x32xf32>
    %593 = arith.mulf %591, %592 : vector<8x32xf32>
    %594 = vector.broadcast %573 : vector<1x32xf32> to vector<8x32xf32>
    %595 = arith.addf %593, %594 : vector<8x32xf32>
    %596 = vector.extract_strided_slice %449 {offsets = [0, 128], sizes = [32, 128], strides = [1, 1]} : vector<32x256xf32> to vector<32x128xf32>
    %cst_183 = arith.constant dense<0.000000e+00> : vector<8x128xf32>
    %597 = tpu.matmul %595, %596, %cst_183 {dimension_numbers = #tpu.dot_dimension_numbers<[1], [0], [0], [1], [0, 0, 1, 1], [], []>} : vector<8x32xf32>, vector<32x128xf32>, vector<8x128xf32> -> vector<8x128xf32>
    %598 = vector.extract_strided_slice %453 {offsets = [6, 0], sizes = [1, 128], strides = [1, 1]} : vector<8x128xf32> to vector<1x128xf32>
    %599 = vector.broadcast %598 : vector<1x128xf32> to vector<8x128xf32>
    %600 = arith.addf %597, %599 : vector<8x128xf32>
    %cst_184 = arith.constant 5.000000e-01 : f32
    %601 = vector.broadcast %cst_184 : f32 to vector<8x128xf32>
    %602 = arith.mulf %601, %600 : vector<8x128xf32>
    %cst_185 = arith.constant 0.707106769 : f32
    %603 = vector.broadcast %cst_185 : f32 to vector<8x128xf32>
    %604 = arith.mulf %600, %603 : vector<8x128xf32>
    %605 = math.absf %604 : vector<8x128xf32>
    %cst_186 = arith.constant 0.327591091 : f32
    %606 = vector.broadcast %cst_186 : f32 to vector<8x128xf32>
    %607 = arith.mulf %606, %605 : vector<8x128xf32>
    %cst_187 = arith.constant 1.000000e+00 : f32
    %608 = vector.broadcast %cst_187 : f32 to vector<8x128xf32>
    %609 = arith.addf %608, %607 : vector<8x128xf32>
    %cst_188 = arith.constant 1.000000e+00 : f32
    %610 = vector.broadcast %cst_188 : f32 to vector<8x128xf32>
    %611 = arith.divf %610, %609 : vector<8x128xf32>
    %cst_189 = arith.constant 1.06140542 : f32
    %612 = vector.broadcast %cst_189 : f32 to vector<8x128xf32>
    %613 = arith.mulf %612, %611 : vector<8x128xf32>
    %cst_190 = arith.constant -1.45315206 : f32
    %614 = vector.broadcast %cst_190 : f32 to vector<8x128xf32>
    %615 = arith.addf %613, %614 : vector<8x128xf32>
    %616 = arith.mulf %615, %611 : vector<8x128xf32>
    %cst_191 = arith.constant 1.42141378 : f32
    %617 = vector.broadcast %cst_191 : f32 to vector<8x128xf32>
    %618 = arith.addf %616, %617 : vector<8x128xf32>
    %619 = arith.mulf %618, %611 : vector<8x128xf32>
    %cst_192 = arith.constant -0.284496725 : f32
    %620 = vector.broadcast %cst_192 : f32 to vector<8x128xf32>
    %621 = arith.addf %619, %620 : vector<8x128xf32>
    %622 = arith.mulf %621, %611 : vector<8x128xf32>
    %cst_193 = arith.constant 0.254829586 : f32
    %623 = vector.broadcast %cst_193 : f32 to vector<8x128xf32>
    %624 = arith.addf %622, %623 : vector<8x128xf32>
    %625 = arith.mulf %624, %611 : vector<8x128xf32>
    %cst_194 = arith.constant 0.000000e+00 : f32
    %626 = vector.broadcast %cst_194 : f32 to vector<8x128xf32>
    %627 = arith.subf %626, %605 : vector<8x128xf32>
    %628 = arith.mulf %627, %605 : vector<8x128xf32>
    %629 = math.exp %628 : vector<8x128xf32>
    %630 = arith.mulf %625, %629 : vector<8x128xf32>
    %cst_195 = arith.constant 1.000000e+00 : f32
    %631 = vector.broadcast %cst_195 : f32 to vector<8x128xf32>
    %632 = arith.subf %631, %630 : vector<8x128xf32>
    %cst_196 = arith.constant 0.000000e+00 : f32
    %633 = vector.broadcast %cst_196 : f32 to vector<8x128xf32>
    %634 = arith.cmpf oge, %604, %633 : vector<8x128xf32>
    %cst_197 = arith.constant 0.000000e+00 : f32
    %635 = vector.broadcast %cst_197 : f32 to vector<8x128xf32>
    %636 = arith.subf %635, %632 : vector<8x128xf32>
    %637 = arith.select %634, %632, %636 : vector<8x128xi1>, vector<8x128xf32>
    %cst_198 = arith.constant 1.000000e+00 : f32
    %638 = vector.broadcast %cst_198 : f32 to vector<8x128xf32>
    %639 = arith.addf %638, %637 : vector<8x128xf32>
    %640 = arith.mulf %602, %639 : vector<8x128xf32>
    %cst_199 = arith.constant dense<0.000000e+00> : vector<8x32xf32>
    %641 = tpu.matmul %640, %451, %cst_199 {dimension_numbers = #tpu.dot_dimension_numbers<[1], [0], [0], [1], [0, 0, 1, 1], [], []>} : vector<8x128xf32>, vector<128x32xf32>, vector<8x32xf32> -> vector<8x32xf32>
    %642 = vector.extract_strided_slice %453 {offsets = [7, 0], sizes = [1, 32], strides = [1, 1]} : vector<8x128xf32> to vector<1x32xf32>
    %643 = vector.broadcast %642 : vector<1x32xf32> to vector<8x32xf32>
    %644 = arith.addf %641, %643 : vector<8x32xf32>
    %645 = arith.addf %571, %644 : vector<8x32xf32>
    %c1_200 = arith.constant 1 : index
    %c0_201 = arith.constant 0 : index
    %c0_202 = arith.constant 0 : index
    %646 = vector.load %arg10[%c1_200, %c0_201, %c0_202] : memref<2x32x256xf32, #tpu.memory_space<vmem>>, vector<1x32x256xf32>
    %647 = vector.shape_cast %646 : vector<1x32x256xf32> to vector<32x256xf32>
    %c1_203 = arith.constant 1 : index
    %c0_204 = arith.constant 0 : index
    %c0_205 = arith.constant 0 : index
    %648 = vector.load %arg11[%c1_203, %c0_204, %c0_205] : memref<2x128x32xf32, #tpu.memory_space<vmem>>, vector<1x128x32xf32>
    %649 = vector.shape_cast %648 : vector<1x128x32xf32> to vector<128x32xf32>
    %c1_206 = arith.constant 1 : index
    %c0_207 = arith.constant 0 : index
    %c0_208 = arith.constant 0 : index
    %650 = vector.load %arg12[%c1_206, %c0_207, %c0_208] : memref<2x8x128xf32, #tpu.memory_space<vmem>>, vector<1x8x128xf32>
    %651 = vector.shape_cast %650 : vector<1x8x128xf32> to vector<8x128xf32>
    %c1_209 = arith.constant 1 : index
    %c0_210 = arith.constant 0 : index
    %c0_211 = arith.constant 0 : index
    %c0_212 = arith.constant 0 : index
    %652 = vector.load %arg13[%c1_209, %c0_210, %c0_211, %c0_212] : memref<2x4x8x8xf32, #tpu.memory_space<vmem>>, vector<1x4x8x8xf32>
    %653 = vector.shape_cast %652 : vector<1x4x8x8xf32> to vector<4x8x8xf32>
    %654 = vector.extract_strided_slice %651 {offsets = [0, 0], sizes = [1, 32], strides = [1, 1]} : vector<8x128xf32> to vector<1x32xf32>
    %655 = vector.extract_strided_slice %651 {offsets = [1, 0], sizes = [1, 32], strides = [1, 1]} : vector<8x128xf32> to vector<1x32xf32>
    %cst_213 = arith.constant dense<0.000000e+00> : vector<8xf32>
    %656 = vector.multi_reduction <add>, %645, %cst_213 [1] : vector<8x32xf32> to vector<8xf32>
    %657 = vector.shape_cast %656 : vector<8xf32> to vector<8x1xf32>
    %cst_214 = arith.constant 3.200000e+01 : f32
    %658 = vector.broadcast %cst_214 : f32 to vector<8x1xf32>
    %659 = arith.divf %657, %658 : vector<8x1xf32>
    %660 = vector.broadcast %659 : vector<8x1xf32> to vector<8x32xf32>
    %661 = arith.subf %645, %660 : vector<8x32xf32>
    %662 = arith.mulf %661, %661 : vector<8x32xf32>
    %cst_215 = arith.constant dense<0.000000e+00> : vector<8xf32>
    %663 = vector.multi_reduction <add>, %662, %cst_215 [1] : vector<8x32xf32> to vector<8xf32>
    %664 = vector.shape_cast %663 : vector<8xf32> to vector<8x1xf32>
    %cst_216 = arith.constant 3.200000e+01 : f32
    %665 = vector.broadcast %cst_216 : f32 to vector<8x1xf32>
    %666 = arith.divf %664, %665 : vector<8x1xf32>
    %667 = vector.broadcast %659 : vector<8x1xf32> to vector<8x32xf32>
    %668 = arith.subf %645, %667 : vector<8x32xf32>
    %cst_217 = arith.constant 9.99999974E-6 : f32
    %669 = vector.broadcast %cst_217 : f32 to vector<8x1xf32>
    %670 = arith.addf %666, %669 : vector<8x1xf32>
    %671 = math.rsqrt %670 : vector<8x1xf32>
    %672 = vector.broadcast %671 : vector<8x1xf32> to vector<8x32xf32>
    %673 = arith.mulf %668, %672 : vector<8x32xf32>
    %674 = vector.broadcast %654 : vector<1x32xf32> to vector<8x32xf32>
    %675 = arith.mulf %673, %674 : vector<8x32xf32>
    %676 = vector.broadcast %655 : vector<1x32xf32> to vector<8x32xf32>
    %677 = arith.addf %675, %676 : vector<8x32xf32>
    %678 = vector.extract_strided_slice %647 {offsets = [0, 0], sizes = [32, 96], strides = [1, 1]} : vector<32x256xf32> to vector<32x96xf32>
    %cst_218 = arith.constant dense<0.000000e+00> : vector<8x96xf32>
    %679 = tpu.matmul %677, %678, %cst_218 {dimension_numbers = #tpu.dot_dimension_numbers<[1], [0], [0], [1], [0, 0, 1, 1], [], []>} : vector<8x32xf32>, vector<32x96xf32>, vector<8x96xf32> -> vector<8x96xf32>
    %680 = vector.extract_strided_slice %651 {offsets = [2, 0], sizes = [1, 96], strides = [1, 1]} : vector<8x128xf32> to vector<1x96xf32>
    %681 = vector.broadcast %680 : vector<1x96xf32> to vector<8x96xf32>
    %682 = arith.addf %679, %681 : vector<8x96xf32>
    %683 = vector.extract_strided_slice %651 {offsets = [3, 0], sizes = [1, 32], strides = [1, 1]} : vector<8x128xf32> to vector<1x32xf32>
    %684 = vector.extract_strided_slice %682 {offsets = [0, 0], sizes = [8, 8], strides = [1, 1]} : vector<8x96xf32> to vector<8x8xf32>
    %685 = vector.extract_strided_slice %682 {offsets = [0, 32], sizes = [8, 8], strides = [1, 1]} : vector<8x96xf32> to vector<8x8xf32>
    %686 = vector.extract_strided_slice %682 {offsets = [0, 64], sizes = [8, 8], strides = [1, 1]} : vector<8x96xf32> to vector<8x8xf32>
    %cst_219 = arith.constant dense<0.000000e+00> : vector<8x8xf32>
    %687 = tpu.matmul %684, %685, %cst_219 {dimension_numbers = #tpu.dot_dimension_numbers<[1], [1], [0], [0], [0, 0, 1, 0], [], []>} : vector<8x8xf32>, vector<8x8xf32>, vector<8x8xf32> -> vector<8x8xf32>
    %688 = vector.extract_strided_slice %653 {offsets = [0, 0, 0], sizes = [1, 8, 8], strides = [1, 1, 1]} : vector<4x8x8xf32> to vector<1x8x8xf32>
    %689 = vector.shape_cast %688 : vector<1x8x8xf32> to vector<8x8xf32>
    %690 = arith.addf %687, %689 : vector<8x8xf32>
    %cst_220 = arith.constant dense<0xFF800000> : vector<8xf32>
    %691 = vector.multi_reduction <maximumf>, %690, %cst_220 [1] : vector<8x8xf32> to vector<8xf32>
    %692 = vector.shape_cast %691 : vector<8xf32> to vector<8x1xf32>
    %693 = vector.broadcast %692 : vector<8x1xf32> to vector<8x8xf32>
    %694 = arith.subf %690, %693 : vector<8x8xf32>
    %695 = math.exp %694 : vector<8x8xf32>
    %cst_221 = arith.constant dense<0.000000e+00> : vector<8xf32>
    %696 = vector.multi_reduction <add>, %695, %cst_221 [1] : vector<8x8xf32> to vector<8xf32>
    %697 = vector.shape_cast %696 : vector<8xf32> to vector<8x1xf32>
    %698 = tpu.reciprocal %697 {approx = true} : vector<8x1xf32> -> vector<8x1xf32>
    %699 = vector.broadcast %698 : vector<8x1xf32> to vector<8x8xf32>
    %700 = arith.mulf %695, %699 : vector<8x8xf32>
    %cst_222 = arith.constant dense<0.000000e+00> : vector<8x8xf32>
    %701 = tpu.matmul %700, %686, %cst_222 {dimension_numbers = #tpu.dot_dimension_numbers<[1], [0], [0], [1], [0, 0, 1, 1], [], []>} : vector<8x8xf32>, vector<8x8xf32>, vector<8x8xf32> -> vector<8x8xf32>
    %702 = vector.extract_strided_slice %647 {offsets = [0, 96], sizes = [8, 32], strides = [1, 1]} : vector<32x256xf32> to vector<8x32xf32>
    %cst_223 = arith.constant dense<0.000000e+00> : vector<8x32xf32>
    %703 = tpu.matmul %701, %702, %cst_223 {dimension_numbers = #tpu.dot_dimension_numbers<[1], [0], [0], [1], [0, 0, 1, 1], [], []>} : vector<8x8xf32>, vector<8x32xf32>, vector<8x32xf32> -> vector<8x32xf32>
    %704 = vector.broadcast %683 : vector<1x32xf32> to vector<8x32xf32>
    %705 = arith.addf %704, %703 : vector<8x32xf32>
    %706 = vector.extract_strided_slice %682 {offsets = [0, 8], sizes = [8, 8], strides = [1, 1]} : vector<8x96xf32> to vector<8x8xf32>
    %707 = vector.extract_strided_slice %682 {offsets = [0, 40], sizes = [8, 8], strides = [1, 1]} : vector<8x96xf32> to vector<8x8xf32>
    %708 = vector.extract_strided_slice %682 {offsets = [0, 72], sizes = [8, 8], strides = [1, 1]} : vector<8x96xf32> to vector<8x8xf32>
    %cst_224 = arith.constant dense<0.000000e+00> : vector<8x8xf32>
    %709 = tpu.matmul %706, %707, %cst_224 {dimension_numbers = #tpu.dot_dimension_numbers<[1], [1], [0], [0], [0, 0, 1, 0], [], []>} : vector<8x8xf32>, vector<8x8xf32>, vector<8x8xf32> -> vector<8x8xf32>
    %710 = vector.extract_strided_slice %653 {offsets = [1, 0, 0], sizes = [1, 8, 8], strides = [1, 1, 1]} : vector<4x8x8xf32> to vector<1x8x8xf32>
    %711 = vector.shape_cast %710 : vector<1x8x8xf32> to vector<8x8xf32>
    %712 = arith.addf %709, %711 : vector<8x8xf32>
    %cst_225 = arith.constant dense<0xFF800000> : vector<8xf32>
    %713 = vector.multi_reduction <maximumf>, %712, %cst_225 [1] : vector<8x8xf32> to vector<8xf32>
    %714 = vector.shape_cast %713 : vector<8xf32> to vector<8x1xf32>
    %715 = vector.broadcast %714 : vector<8x1xf32> to vector<8x8xf32>
    %716 = arith.subf %712, %715 : vector<8x8xf32>
    %717 = math.exp %716 : vector<8x8xf32>
    %cst_226 = arith.constant dense<0.000000e+00> : vector<8xf32>
    %718 = vector.multi_reduction <add>, %717, %cst_226 [1] : vector<8x8xf32> to vector<8xf32>
    %719 = vector.shape_cast %718 : vector<8xf32> to vector<8x1xf32>
    %720 = tpu.reciprocal %719 {approx = true} : vector<8x1xf32> -> vector<8x1xf32>
    %721 = vector.broadcast %720 : vector<8x1xf32> to vector<8x8xf32>
    %722 = arith.mulf %717, %721 : vector<8x8xf32>
    %cst_227 = arith.constant dense<0.000000e+00> : vector<8x8xf32>
    %723 = tpu.matmul %722, %708, %cst_227 {dimension_numbers = #tpu.dot_dimension_numbers<[1], [0], [0], [1], [0, 0, 1, 1], [], []>} : vector<8x8xf32>, vector<8x8xf32>, vector<8x8xf32> -> vector<8x8xf32>
    %724 = vector.extract_strided_slice %647 {offsets = [8, 96], sizes = [8, 32], strides = [1, 1]} : vector<32x256xf32> to vector<8x32xf32>
    %cst_228 = arith.constant dense<0.000000e+00> : vector<8x32xf32>
    %725 = tpu.matmul %723, %724, %cst_228 {dimension_numbers = #tpu.dot_dimension_numbers<[1], [0], [0], [1], [0, 0, 1, 1], [], []>} : vector<8x8xf32>, vector<8x32xf32>, vector<8x32xf32> -> vector<8x32xf32>
    %726 = arith.addf %705, %725 : vector<8x32xf32>
    %727 = vector.extract_strided_slice %682 {offsets = [0, 16], sizes = [8, 8], strides = [1, 1]} : vector<8x96xf32> to vector<8x8xf32>
    %728 = vector.extract_strided_slice %682 {offsets = [0, 48], sizes = [8, 8], strides = [1, 1]} : vector<8x96xf32> to vector<8x8xf32>
    %729 = vector.extract_strided_slice %682 {offsets = [0, 80], sizes = [8, 8], strides = [1, 1]} : vector<8x96xf32> to vector<8x8xf32>
    %cst_229 = arith.constant dense<0.000000e+00> : vector<8x8xf32>
    %730 = tpu.matmul %727, %728, %cst_229 {dimension_numbers = #tpu.dot_dimension_numbers<[1], [1], [0], [0], [0, 0, 1, 0], [], []>} : vector<8x8xf32>, vector<8x8xf32>, vector<8x8xf32> -> vector<8x8xf32>
    %731 = vector.extract_strided_slice %653 {offsets = [2, 0, 0], sizes = [1, 8, 8], strides = [1, 1, 1]} : vector<4x8x8xf32> to vector<1x8x8xf32>
    %732 = vector.shape_cast %731 : vector<1x8x8xf32> to vector<8x8xf32>
    %733 = arith.addf %730, %732 : vector<8x8xf32>
    %cst_230 = arith.constant dense<0xFF800000> : vector<8xf32>
    %734 = vector.multi_reduction <maximumf>, %733, %cst_230 [1] : vector<8x8xf32> to vector<8xf32>
    %735 = vector.shape_cast %734 : vector<8xf32> to vector<8x1xf32>
    %736 = vector.broadcast %735 : vector<8x1xf32> to vector<8x8xf32>
    %737 = arith.subf %733, %736 : vector<8x8xf32>
    %738 = math.exp %737 : vector<8x8xf32>
    %cst_231 = arith.constant dense<0.000000e+00> : vector<8xf32>
    %739 = vector.multi_reduction <add>, %738, %cst_231 [1] : vector<8x8xf32> to vector<8xf32>
    %740 = vector.shape_cast %739 : vector<8xf32> to vector<8x1xf32>
    %741 = tpu.reciprocal %740 {approx = true} : vector<8x1xf32> -> vector<8x1xf32>
    %742 = vector.broadcast %741 : vector<8x1xf32> to vector<8x8xf32>
    %743 = arith.mulf %738, %742 : vector<8x8xf32>
    %cst_232 = arith.constant dense<0.000000e+00> : vector<8x8xf32>
    %744 = tpu.matmul %743, %729, %cst_232 {dimension_numbers = #tpu.dot_dimension_numbers<[1], [0], [0], [1], [0, 0, 1, 1], [], []>} : vector<8x8xf32>, vector<8x8xf32>, vector<8x8xf32> -> vector<8x8xf32>
    %745 = vector.extract_strided_slice %647 {offsets = [16, 96], sizes = [8, 32], strides = [1, 1]} : vector<32x256xf32> to vector<8x32xf32>
    %cst_233 = arith.constant dense<0.000000e+00> : vector<8x32xf32>
    %746 = tpu.matmul %744, %745, %cst_233 {dimension_numbers = #tpu.dot_dimension_numbers<[1], [0], [0], [1], [0, 0, 1, 1], [], []>} : vector<8x8xf32>, vector<8x32xf32>, vector<8x32xf32> -> vector<8x32xf32>
    %747 = arith.addf %726, %746 : vector<8x32xf32>
    %748 = vector.extract_strided_slice %682 {offsets = [0, 24], sizes = [8, 8], strides = [1, 1]} : vector<8x96xf32> to vector<8x8xf32>
    %749 = vector.extract_strided_slice %682 {offsets = [0, 56], sizes = [8, 8], strides = [1, 1]} : vector<8x96xf32> to vector<8x8xf32>
    %750 = vector.extract_strided_slice %682 {offsets = [0, 88], sizes = [8, 8], strides = [1, 1]} : vector<8x96xf32> to vector<8x8xf32>
    %cst_234 = arith.constant dense<0.000000e+00> : vector<8x8xf32>
    %751 = tpu.matmul %748, %749, %cst_234 {dimension_numbers = #tpu.dot_dimension_numbers<[1], [1], [0], [0], [0, 0, 1, 0], [], []>} : vector<8x8xf32>, vector<8x8xf32>, vector<8x8xf32> -> vector<8x8xf32>
    %752 = vector.extract_strided_slice %653 {offsets = [3, 0, 0], sizes = [1, 8, 8], strides = [1, 1, 1]} : vector<4x8x8xf32> to vector<1x8x8xf32>
    %753 = vector.shape_cast %752 : vector<1x8x8xf32> to vector<8x8xf32>
    %754 = arith.addf %751, %753 : vector<8x8xf32>
    %cst_235 = arith.constant dense<0xFF800000> : vector<8xf32>
    %755 = vector.multi_reduction <maximumf>, %754, %cst_235 [1] : vector<8x8xf32> to vector<8xf32>
    %756 = vector.shape_cast %755 : vector<8xf32> to vector<8x1xf32>
    %757 = vector.broadcast %756 : vector<8x1xf32> to vector<8x8xf32>
    %758 = arith.subf %754, %757 : vector<8x8xf32>
    %759 = math.exp %758 : vector<8x8xf32>
    %cst_236 = arith.constant dense<0.000000e+00> : vector<8xf32>
    %760 = vector.multi_reduction <add>, %759, %cst_236 [1] : vector<8x8xf32> to vector<8xf32>
    %761 = vector.shape_cast %760 : vector<8xf32> to vector<8x1xf32>
    %762 = tpu.reciprocal %761 {approx = true} : vector<8x1xf32> -> vector<8x1xf32>
    %763 = vector.broadcast %762 : vector<8x1xf32> to vector<8x8xf32>
    %764 = arith.mulf %759, %763 : vector<8x8xf32>
    %cst_237 = arith.constant dense<0.000000e+00> : vector<8x8xf32>
    %765 = tpu.matmul %764, %750, %cst_237 {dimension_numbers = #tpu.dot_dimension_numbers<[1], [0], [0], [1], [0, 0, 1, 1], [], []>} : vector<8x8xf32>, vector<8x8xf32>, vector<8x8xf32> -> vector<8x8xf32>
    %766 = vector.extract_strided_slice %647 {offsets = [24, 96], sizes = [8, 32], strides = [1, 1]} : vector<32x256xf32> to vector<8x32xf32>
    %cst_238 = arith.constant dense<0.000000e+00> : vector<8x32xf32>
    %767 = tpu.matmul %765, %766, %cst_238 {dimension_numbers = #tpu.dot_dimension_numbers<[1], [0], [0], [1], [0, 0, 1, 1], [], []>} : vector<8x8xf32>, vector<8x32xf32>, vector<8x32xf32> -> vector<8x32xf32>
    %768 = arith.addf %747, %767 : vector<8x32xf32>
    %769 = arith.addf %645, %768 : vector<8x32xf32>
    %770 = vector.extract_strided_slice %651 {offsets = [4, 0], sizes = [1, 32], strides = [1, 1]} : vector<8x128xf32> to vector<1x32xf32>
    %771 = vector.extract_strided_slice %651 {offsets = [5, 0], sizes = [1, 32], strides = [1, 1]} : vector<8x128xf32> to vector<1x32xf32>
    %cst_239 = arith.constant dense<0.000000e+00> : vector<8xf32>
    %772 = vector.multi_reduction <add>, %769, %cst_239 [1] : vector<8x32xf32> to vector<8xf32>
    %773 = vector.shape_cast %772 : vector<8xf32> to vector<8x1xf32>
    %cst_240 = arith.constant 3.200000e+01 : f32
    %774 = vector.broadcast %cst_240 : f32 to vector<8x1xf32>
    %775 = arith.divf %773, %774 : vector<8x1xf32>
    %776 = vector.broadcast %775 : vector<8x1xf32> to vector<8x32xf32>
    %777 = arith.subf %769, %776 : vector<8x32xf32>
    %778 = arith.mulf %777, %777 : vector<8x32xf32>
    %cst_241 = arith.constant dense<0.000000e+00> : vector<8xf32>
    %779 = vector.multi_reduction <add>, %778, %cst_241 [1] : vector<8x32xf32> to vector<8xf32>
    %780 = vector.shape_cast %779 : vector<8xf32> to vector<8x1xf32>
    %cst_242 = arith.constant 3.200000e+01 : f32
    %781 = vector.broadcast %cst_242 : f32 to vector<8x1xf32>
    %782 = arith.divf %780, %781 : vector<8x1xf32>
    %783 = vector.broadcast %775 : vector<8x1xf32> to vector<8x32xf32>
    %784 = arith.subf %769, %783 : vector<8x32xf32>
    %cst_243 = arith.constant 9.99999974E-6 : f32
    %785 = vector.broadcast %cst_243 : f32 to vector<8x1xf32>
    %786 = arith.addf %782, %785 : vector<8x1xf32>
    %787 = math.rsqrt %786 : vector<8x1xf32>
    %788 = vector.broadcast %787 : vector<8x1xf32> to vector<8x32xf32>
    %789 = arith.mulf %784, %788 : vector<8x32xf32>
    %790 = vector.broadcast %770 : vector<1x32xf32> to vector<8x32xf32>
    %791 = arith.mulf %789, %790 : vector<8x32xf32>
    %792 = vector.broadcast %771 : vector<1x32xf32> to vector<8x32xf32>
    %793 = arith.addf %791, %792 : vector<8x32xf32>
    %794 = vector.extract_strided_slice %647 {offsets = [0, 128], sizes = [32, 128], strides = [1, 1]} : vector<32x256xf32> to vector<32x128xf32>
    %cst_244 = arith.constant dense<0.000000e+00> : vector<8x128xf32>
    %795 = tpu.matmul %793, %794, %cst_244 {dimension_numbers = #tpu.dot_dimension_numbers<[1], [0], [0], [1], [0, 0, 1, 1], [], []>} : vector<8x32xf32>, vector<32x128xf32>, vector<8x128xf32> -> vector<8x128xf32>
    %796 = vector.extract_strided_slice %651 {offsets = [6, 0], sizes = [1, 128], strides = [1, 1]} : vector<8x128xf32> to vector<1x128xf32>
    %797 = vector.broadcast %796 : vector<1x128xf32> to vector<8x128xf32>
    %798 = arith.addf %795, %797 : vector<8x128xf32>
    %cst_245 = arith.constant 5.000000e-01 : f32
    %799 = vector.broadcast %cst_245 : f32 to vector<8x128xf32>
    %800 = arith.mulf %799, %798 : vector<8x128xf32>
    %cst_246 = arith.constant 0.707106769 : f32
    %801 = vector.broadcast %cst_246 : f32 to vector<8x128xf32>
    %802 = arith.mulf %798, %801 : vector<8x128xf32>
    %803 = math.absf %802 : vector<8x128xf32>
    %cst_247 = arith.constant 0.327591091 : f32
    %804 = vector.broadcast %cst_247 : f32 to vector<8x128xf32>
    %805 = arith.mulf %804, %803 : vector<8x128xf32>
    %cst_248 = arith.constant 1.000000e+00 : f32
    %806 = vector.broadcast %cst_248 : f32 to vector<8x128xf32>
    %807 = arith.addf %806, %805 : vector<8x128xf32>
    %cst_249 = arith.constant 1.000000e+00 : f32
    %808 = vector.broadcast %cst_249 : f32 to vector<8x128xf32>
    %809 = arith.divf %808, %807 : vector<8x128xf32>
    %cst_250 = arith.constant 1.06140542 : f32
    %810 = vector.broadcast %cst_250 : f32 to vector<8x128xf32>
    %811 = arith.mulf %810, %809 : vector<8x128xf32>
    %cst_251 = arith.constant -1.45315206 : f32
    %812 = vector.broadcast %cst_251 : f32 to vector<8x128xf32>
    %813 = arith.addf %811, %812 : vector<8x128xf32>
    %814 = arith.mulf %813, %809 : vector<8x128xf32>
    %cst_252 = arith.constant 1.42141378 : f32
    %815 = vector.broadcast %cst_252 : f32 to vector<8x128xf32>
    %816 = arith.addf %814, %815 : vector<8x128xf32>
    %817 = arith.mulf %816, %809 : vector<8x128xf32>
    %cst_253 = arith.constant -0.284496725 : f32
    %818 = vector.broadcast %cst_253 : f32 to vector<8x128xf32>
    %819 = arith.addf %817, %818 : vector<8x128xf32>
    %820 = arith.mulf %819, %809 : vector<8x128xf32>
    %cst_254 = arith.constant 0.254829586 : f32
    %821 = vector.broadcast %cst_254 : f32 to vector<8x128xf32>
    %822 = arith.addf %820, %821 : vector<8x128xf32>
    %823 = arith.mulf %822, %809 : vector<8x128xf32>
    %cst_255 = arith.constant 0.000000e+00 : f32
    %824 = vector.broadcast %cst_255 : f32 to vector<8x128xf32>
    %825 = arith.subf %824, %803 : vector<8x128xf32>
    %826 = arith.mulf %825, %803 : vector<8x128xf32>
    %827 = math.exp %826 : vector<8x128xf32>
    %828 = arith.mulf %823, %827 : vector<8x128xf32>
    %cst_256 = arith.constant 1.000000e+00 : f32
    %829 = vector.broadcast %cst_256 : f32 to vector<8x128xf32>
    %830 = arith.subf %829, %828 : vector<8x128xf32>
    %cst_257 = arith.constant 0.000000e+00 : f32
    %831 = vector.broadcast %cst_257 : f32 to vector<8x128xf32>
    %832 = arith.cmpf oge, %802, %831 : vector<8x128xf32>
    %cst_258 = arith.constant 0.000000e+00 : f32
    %833 = vector.broadcast %cst_258 : f32 to vector<8x128xf32>
    %834 = arith.subf %833, %830 : vector<8x128xf32>
    %835 = arith.select %832, %830, %834 : vector<8x128xi1>, vector<8x128xf32>
    %cst_259 = arith.constant 1.000000e+00 : f32
    %836 = vector.broadcast %cst_259 : f32 to vector<8x128xf32>
    %837 = arith.addf %836, %835 : vector<8x128xf32>
    %838 = arith.mulf %800, %837 : vector<8x128xf32>
    %cst_260 = arith.constant dense<0.000000e+00> : vector<8x32xf32>
    %839 = tpu.matmul %838, %649, %cst_260 {dimension_numbers = #tpu.dot_dimension_numbers<[1], [0], [0], [1], [0, 0, 1, 1], [], []>} : vector<8x128xf32>, vector<128x32xf32>, vector<8x32xf32> -> vector<8x32xf32>
    %840 = vector.extract_strided_slice %651 {offsets = [7, 0], sizes = [1, 32], strides = [1, 1]} : vector<8x128xf32> to vector<1x32xf32>
    %841 = vector.broadcast %840 : vector<1x32xf32> to vector<8x32xf32>
    %842 = arith.addf %839, %841 : vector<8x32xf32>
    %843 = arith.addf %769, %842 : vector<8x32xf32>
    %c0_261 = arith.constant 0 : index
    %c0_262 = arith.constant 0 : index
    %844 = vector.load %arg15[%c0_261, %c0_262] : memref<3x32xf32, #tpu.memory_space<vmem>>, vector<3x32xf32>
    %845 = vector.extract_strided_slice %844 {offsets = [0, 0], sizes = [1, 32], strides = [1, 1]} : vector<3x32xf32> to vector<1x32xf32>
    %846 = vector.extract_strided_slice %844 {offsets = [1, 0], sizes = [1, 32], strides = [1, 1]} : vector<3x32xf32> to vector<1x32xf32>
    %cst_263 = arith.constant dense<0.000000e+00> : vector<8xf32>
    %847 = vector.multi_reduction <add>, %843, %cst_263 [1] : vector<8x32xf32> to vector<8xf32>
    %848 = vector.shape_cast %847 : vector<8xf32> to vector<8x1xf32>
    %cst_264 = arith.constant 3.200000e+01 : f32
    %849 = vector.broadcast %cst_264 : f32 to vector<8x1xf32>
    %850 = arith.divf %848, %849 : vector<8x1xf32>
    %851 = vector.broadcast %850 : vector<8x1xf32> to vector<8x32xf32>
    %852 = arith.subf %843, %851 : vector<8x32xf32>
    %853 = arith.mulf %852, %852 : vector<8x32xf32>
    %cst_265 = arith.constant dense<0.000000e+00> : vector<8xf32>
    %854 = vector.multi_reduction <add>, %853, %cst_265 [1] : vector<8x32xf32> to vector<8xf32>
    %855 = vector.shape_cast %854 : vector<8xf32> to vector<8x1xf32>
    %cst_266 = arith.constant 3.200000e+01 : f32
    %856 = vector.broadcast %cst_266 : f32 to vector<8x1xf32>
    %857 = arith.divf %855, %856 : vector<8x1xf32>
    %858 = vector.broadcast %850 : vector<8x1xf32> to vector<8x32xf32>
    %859 = arith.subf %843, %858 : vector<8x32xf32>
    %cst_267 = arith.constant 9.99999974E-6 : f32
    %860 = vector.broadcast %cst_267 : f32 to vector<8x1xf32>
    %861 = arith.addf %857, %860 : vector<8x1xf32>
    %862 = math.rsqrt %861 : vector<8x1xf32>
    %863 = vector.broadcast %862 : vector<8x1xf32> to vector<8x32xf32>
    %864 = arith.mulf %859, %863 : vector<8x32xf32>
    %865 = vector.broadcast %845 : vector<1x32xf32> to vector<8x32xf32>
    %866 = arith.mulf %864, %865 : vector<8x32xf32>
    %867 = vector.broadcast %846 : vector<1x32xf32> to vector<8x32xf32>
    %868 = arith.addf %866, %867 : vector<8x32xf32>
    %c0_268 = arith.constant 0 : index
    %c0_269 = arith.constant 0 : index
    %869 = vector.load %arg14[%c0_268, %c0_269] : memref<2x8xf32, #tpu.memory_space<vmem>>, vector<2x8xf32>
    %cst_270 = arith.constant dense<0.000000e+00> : vector<2x32xf32>
    %870 = tpu.matmul %869, %868, %cst_270 {dimension_numbers = #tpu.dot_dimension_numbers<[1], [0], [0], [1], [0, 0, 1, 1], [], []>} : vector<2x8xf32>, vector<8x32xf32>, vector<2x32xf32> -> vector<2x32xf32>
    %c0_271 = arith.constant 0 : index
    %c0_272 = arith.constant 0 : index
    %871 = vector.load %arg16[%c0_271, %c0_272] : memref<32x32xf32, #tpu.memory_space<vmem>>, vector<32x32xf32>
    %cst_273 = arith.constant dense<0.000000e+00> : vector<2x32xf32>
    %872 = tpu.matmul %870, %871, %cst_273 {dimension_numbers = #tpu.dot_dimension_numbers<[1], [0], [0], [1], [0, 0, 1, 1], [], []>} : vector<2x32xf32>, vector<32x32xf32>, vector<2x32xf32> -> vector<2x32xf32>
    %873 = vector.extract_strided_slice %844 {offsets = [2, 0], sizes = [1, 32], strides = [1, 1]} : vector<3x32xf32> to vector<1x32xf32>
    %874 = vector.broadcast %873 : vector<1x32xf32> to vector<2x32xf32>
    %875 = arith.addf %872, %874 : vector<2x32xf32>
    %876 = arith.mulf %875, %875 : vector<2x32xf32>
    %cst_274 = arith.constant dense<0.000000e+00> : vector<2xf32>
    %877 = vector.multi_reduction <add>, %876, %cst_274 [1] : vector<2x32xf32> to vector<2xf32>
    %878 = vector.shape_cast %877 : vector<2xf32> to vector<2x1xf32>
    %879 = math.sqrt %878 : vector<2x1xf32>
    %cst_275 = arith.constant 9.99999996E-13 : f32
    %880 = vector.broadcast %cst_275 : f32 to vector<2x1xf32>
    %881 = arith.maximumf %879, %880 : vector<2x1xf32>
    %882 = vector.broadcast %881 : vector<2x1xf32> to vector<2x32xf32>
    %883 = arith.divf %875, %882 : vector<2x32xf32>
    %c0_276 = arith.constant 0 : index
    %c0_277 = arith.constant 0 : index
    %884 = vector.load %arg17[%c0_276, %c0_277] : memref<2x32xf32, #tpu.memory_space<vmem>>, vector<2x32xf32>
    tpu.vector_store %arg17[%c0_276, %c0_277], %883 {strides = array<i32>} : memref<2x32xf32, #tpu.memory_space<vmem>>, vector<2x32xf32>,
    return
  }
}

</mosaic_0001>

<llo_original>
// kernel: swin_feature_extractor.1
$region0: #{swin_feature_extractor.1}
  #allocation0 [shape = 'u32[]', space=smem, size = 0x4, offset = 0x4, fixed_abs, tag = 'smem constant byte address 0x4 - core index']
  #allocation1 [shape = 'u32[144,128]{1,0:T(1,128)}', space=vmem, size = 0x12000, scoped, tag = 'internal scratch']
  %s0 = inlined_call_operand.vmem [shape: f32[32,48], index: 0, kind: input, shape index: {}]
  %s1 = inlined_call_operand.vmem [shape: f32[48,16], index: 1, kind: input, shape index: {}]
  %s2 = inlined_call_operand.vmem [shape: f32[3,16], index: 2, kind: input, shape index: {}]
  %s3 = inlined_call_operand.vmem [shape: f32[2,16,128], index: 3, kind: input, shape index: {}]
  %s4 = inlined_call_operand.vmem [shape: f32[2,64,16], index: 4, kind: input, shape index: {}]
  %s5 = inlined_call_operand.vmem [shape: f32[2,8,64], index: 5, kind: input, shape index: {}]
  %s6 = inlined_call_operand.vmem [shape: f32[2,2,32,32], index: 6, kind: input, shape index: {}]
  %s7 = inlined_call_operand.vmem [shape: f32[32,32], index: 7, kind: input, shape index: {}]
  %s8 = inlined_call_operand.vmem [shape: f32[2,64], index: 8, kind: input, shape index: {}]
  %s9 = inlined_call_operand.vmem [shape: f32[64,32], index: 9, kind: input, shape index: {}]
  %s10 = inlined_call_operand.vmem [shape: f32[2,32,256], index: 10, kind: input, shape index: {}]
  %s11 = inlined_call_operand.vmem [shape: f32[2,128,32], index: 11, kind: input, shape index: {}]
  %s12 = inlined_call_operand.vmem [shape: f32[2,8,128], index: 12, kind: input, shape index: {}]
  %s13 = inlined_call_operand.vmem [shape: f32[2,4,8,8], index: 13, kind: input, shape index: {}]
  %s14 = inlined_call_operand.vmem [shape: f32[2,8], index: 14, kind: input, shape index: {}]
  %s15 = inlined_call_operand.vmem [shape: f32[3,32], index: 15, kind: input, shape index: {}]
  %s16 = inlined_call_operand.vmem [shape: f32[32,32], index: 16, kind: input, shape index: {}]
  %s17 = inlined_call_operand.hbm [shape: f32[2,32], index: 17, kind: output, shape index: {}]
  %s18 = sld [smem:[#allocation0]]
  $region78: #{swin_feature_extractor.1} parent=0
    _
  %s20 = ssub.s32 1, %s18
  %s21 = scalar_select 0, %s20, %s18
  $region1: #{swin_feature_extractor.1} parent=0
    #allocation2 [shape = 'u8[1024]{0}', space=vmem, size = 0x400, scoped, tag = 'output window, operand 0, single buffered']
    #allocation3 [shape = 's32[1]{0}', space=sflag, size = 0x4, scoped, tag = 'scoped memory for swin_feature_extractor.1']
    %22 = vsyncpa [#allocation3], 0
    // Predicated region
    $region2: #{swin_feature_extractor.1} parent=1 // pred_check
      _
    $region3: #{swin_feature_extractor.1} parent=1 // pred_check_branch
      %24 = sbr.rel (0) target = $region5
    $region4: #{swin_feature_extractor.1} parent=1 // pred_region
      _
    $region5: #{swin_feature_extractor.1} parent=1 // pred_fallthru
      _
    // Predicated region
    $region6: #{swin_feature_extractor.1} parent=1 // pred_check
      _
    $region7: #{swin_feature_extractor.1} parent=1 // pred_check_branch
      %26 = sbr.rel (0) target = $region9
    $region8: #{swin_feature_extractor.1} parent=1 // pred_region
      _
    $region9: #{swin_feature_extractor.1} parent=1 // pred_fallthru
      _
    // Predicated region
    $region10: #{swin_feature_extractor.1} parent=1 // pred_check
      _
    $region11: #{swin_feature_extractor.1} parent=1 // pred_check_branch
      %28 = sbr.rel (0) target = $region13
    $region12: #{swin_feature_extractor.1} parent=1 // pred_region
      _
    $region13: #{swin_feature_extractor.1} parent=1 // pred_fallthru
      _
    // Predicated region
    $region14: #{swin_feature_extractor.1} parent=1 // pred_check
      _
    $region15: #{swin_feature_extractor.1} parent=1 // pred_check_branch
      %30 = sbr.rel (0) target = $region17
    $region16: #{swin_feature_extractor.1} parent=1 // pred_region
      _
    $region17: #{swin_feature_extractor.1} parent=1 // pred_fallthru
      _
    // Predicated region
    $region18: #{swin_feature_extractor.1} parent=1 // pred_check
      _
    $region19: #{swin_feature_extractor.1} parent=1 // pred_check_branch
      %32 = sbr.rel (0) target = $region21
    $region20: #{swin_feature_extractor.1} parent=1 // pred_region
      _
    $region21: #{swin_feature_extractor.1} parent=1 // pred_fallthru
      _
    // Predicated region
    $region22: #{swin_feature_extractor.1} parent=1 // pred_check
      _
    $region23: #{swin_feature_extractor.1} parent=1 // pred_check_branch
      %34 = sbr.rel (0) target = $region25
    $region24: #{swin_feature_extractor.1} parent=1 // pred_region
      _
    $region25: #{swin_feature_extractor.1} parent=1 // pred_fallthru
      _
    // Predicated region
    $region26: #{swin_feature_extractor.1} parent=1 // pred_check
      _
    $region27: #{swin_feature_extractor.1} parent=1 // pred_check_branch
      %36 = sbr.rel (0) target = $region29
    $region28: #{swin_feature_extractor.1} parent=1 // pred_region
      _
    $region29: #{swin_feature_extractor.1} parent=1 // pred_fallthru
      _
    // Predicated region
    $region30: #{swin_feature_extractor.1} parent=1 // pred_check
      _
    $region31: #{swin_feature_extractor.1} parent=1 // pred_check_branch
      %38 = sbr.rel (0) target = $region33
    $region32: #{swin_feature_extractor.1} parent=1 // pred_region
      _
    $region33: #{swin_feature_extractor.1} parent=1 // pred_fallthru
      _
    // Predicated region
    $region34: #{swin_feature_extractor.1} parent=1 // pred_check
      _
    $region35: #{swin_feature_extractor.1} parent=1 // pred_check_branch
      %40 = sbr.rel (0) target = $region37
    $region36: #{swin_feature_extractor.1} parent=1 // pred_region
      _
    $region37: #{swin_feature_extractor.1} parent=1 // pred_fallthru
      _
    // Predicated region
    $region38: #{swin_feature_extractor.1} parent=1 // pred_check
      _
    $region39: #{swin_feature_extractor.1} parent=1 // pred_check_branch
      %42 = sbr.rel (0) target = $region41
    $region40: #{swin_feature_extractor.1} parent=1 // pred_region
      _
    $region41: #{swin_feature_extractor.1} parent=1 // pred_fallthru
      _
    // Predicated region
    $region42: #{swin_feature_extractor.1} parent=1 // pred_check
      _
    $region43: #{swin_feature_extractor.1} parent=1 // pred_check_branch
      %44 = sbr.rel (0) target = $region45
    $region44: #{swin_feature_extractor.1} parent=1 // pred_region
      _
    $region45: #{swin_feature_extractor.1} parent=1 // pred_fallthru
      _
    // Predicated region
    $region46: #{swin_feature_extractor.1} parent=1 // pred_check
      _
    $region47: #{swin_feature_extractor.1} parent=1 // pred_check_branch
      %46 = sbr.rel (0) target = $region49
    $region48: #{swin_feature_extractor.1} parent=1 // pred_region
      _
    $region49: #{swin_feature_extractor.1} parent=1 // pred_fallthru
      _
    // Predicated region
    $region50: #{swin_feature_extractor.1} parent=1 // pred_check
      _
    $region51: #{swin_feature_extractor.1} parent=1 // pred_check_branch
      %48 = sbr.rel (0) target = $region53
    $region52: #{swin_feature_extractor.1} parent=1 // pred_region
      _
    $region53: #{swin_feature_extractor.1} parent=1 // pred_fallthru
      _
    // Predicated region
    $region54: #{swin_feature_extractor.1} parent=1 // pred_check
      _
    $region55: #{swin_feature_extractor.1} parent=1 // pred_check_branch
      %50 = sbr.rel (0) target = $region57
    $region56: #{swin_feature_extractor.1} parent=1 // pred_region
      _
    $region57: #{swin_feature_extractor.1} parent=1 // pred_fallthru
      _
    // Predicated region
    $region58: #{swin_feature_extractor.1} parent=1 // pred_check
      _
    $region59: #{swin_feature_extractor.1} parent=1 // pred_check_branch
      %52 = sbr.rel (0) target = $region61
    $region60: #{swin_feature_extractor.1} parent=1 // pred_region
      _
    $region61: #{swin_feature_extractor.1} parent=1 // pred_fallthru
      _
    // Predicated region
    $region62: #{swin_feature_extractor.1} parent=1 // pred_check
      _
    $region63: #{swin_feature_extractor.1} parent=1 // pred_check_branch
      %54 = sbr.rel (0) target = $region65
    $region64: #{swin_feature_extractor.1} parent=1 // pred_region
      _
    $region65: #{swin_feature_extractor.1} parent=1 // pred_fallthru
      _
    // Predicated region
    $region66: #{swin_feature_extractor.1} parent=1 // pred_check
      _
    $region67: #{swin_feature_extractor.1} parent=1 // pred_check_branch
      %56 = sbr.rel (0) target = $region69
    $region68: #{swin_feature_extractor.1} parent=1 // pred_region
      _
    $region69: #{swin_feature_extractor.1} parent=1 // pred_fallthru
      _
    %v57 = vld [vmem:[%s2] sm:$0x7]
    %v58 = vld [vmem:[%s0] sm:$0xff]
    %v59 = vld [vmem:[%s0 + $0x8] sm:$0xff]
    %v60 = vld [vmem:[%s0 + $0x10] sm:$0xff]
    %v61 = vld [vmem:[%s0 + $0x18] sm:$0xff]
    %v62 = vld [vmem:[%s1] sm:$0xff]
    %v63 = vld [vmem:[%s1 + $0x8] sm:$0xff]
    %v64 = vld [vmem:[%s1 + $0x10] sm:$0xff]
    %v65 = vld [vmem:[%s1 + $0x18] sm:$0xff]
    %v66 = vld [vmem:[%s1 + $0x20] sm:$0xff]
    %v67 = vld [vmem:[%s1 + $0x28] sm:$0xff]
    %v68 = vlaneseq
    %v69 = vshrl.u32 %v68, 7
    %v70 = vsub.s32 0, %v69
    %v71 = vrot.slane %v57, %v70
    %vm72 = vcmask 392192
    %v74 = vsel %vm72, %v58, 0
    %v77 = vsel %vm72, %v59, 0
    %v80 = vsel %vm72, %v60, 0
    %v83 = vsel %vm72, %v61, 0
    %85 = vmatprep.subr.mxu0 0.0
    %86 = vmatpush1.msra.mxu0 %v62
    %87 = vmatprep.subr.mxu0 0.0
    %88 = vmatpush1.msra.mxu0 %v63
    %89 = vmatprep.subr.mxu0 0.0
    %90 = vmatpush1.msra.mxu0 %v64
    %91 = vmatprep.subr.mxu0 0.0
    %92 = vmatpush1.msra.mxu0 %v65
    %93 = vmatprep.subr.mxu0 0.0
    %94 = vmatpush1.msra.mxu0 %v66
    %95 = vmatprep.subr.mxu0 0.0
    %96 = vmatpush1.msra.mxu0 %v67
    %97 = vmatprep.subr.mxu0 0.0
    %98 = vmatpush1.msra.mxu0 0.0
    %99 = vmatprep.subr.mxu0 0.0
    %100 = vmatpush1.msra.mxu0 0.0
    %101 = vmatprep.subr.mxu0 0.0
    %102 = vmatpush1.msra.mxu0 0.0
    %103 = vmatprep.subr.mxu0 0.0
    %104 = vmatpush1.msra.mxu0 0.0
    %105 = vmatprep.subr.mxu0 0.0
    %106 = vmatpush1.msra.mxu0 0.0
    %107 = vmatprep.subr.mxu0 0.0
    %108 = vmatpush1.msra.mxu0 0.0
    %109 = vmatprep.subr.mxu0 0.0
    %110 = vmatpush1.msra.mxu0 0.0
    %111 = vmatprep.subr.mxu0 0.0
    %112 = vmatpush1.msra.mxu0 0.0
    %113 = vmatprep.subr.mxu0 0.0
    %114 = vmatpush1.msra.mxu0 0.0
    %115 = vmatprep.subr.mxu0 0.0
    %116 = vmatpush1.msra.mxu0 0.0
    %117 = vmatprep.subr.mxu0 0.0
    %118 = vmatpush1.msra.mxu0 0.0
    %119 = vmatprep.subr.mxu0 0.0
    %120 = vmatpush1.msra.mxu0 0.0
    %121 = vmatprep.subr.mxu0 0.0
    %122 = vmatpush1.msra.mxu0 0.0
    %123 = vmatprep.subr.mxu0 0.0
    %124 = vmatpush1.msra.mxu0 0.0
    %125 = vmatprep.subr.mxu0 0.0
    %126 = vmatpush1.msra.mxu0 0.0
    %127 = vmatprep.subr.mxu0 0.0
    %128 = vmatpush1.msra.mxu0 0.0
    %129 = vmatprep.subr.mxu0 0.0
    %130 = vmatpush1.msra.mxu0 0.0
    %131 = vmatprep.subr.mxu0 0.0
    %132 = vmatpush1.msra.mxu0 0.0
    %133 = vmatprep.subr.mxu0 0.0
    %134 = vmatpush1.msra.mxu0 0.0
    %135 = vmatprep.subr.mxu0 0.0
    %136 = vmatpush1.msra.mxu0 0.0
    %137 = vmatprep.subr.mxu0 0.0
    %138 = vmatpush1.msra.mxu0 0.0
    %139 = vmatprep.subr.mxu0 0.0
    %140 = vmatpush1.msra.mxu0 0.0
    %141 = vmatprep.subr.mxu0 0.0
    %142 = vmatpush1.msra.mxu0 0.0
    %143 = vmatprep.subr.mxu0 0.0
    %144 = vmatpush1.msra.mxu0 0.0
    %145 = vmatprep.subr.mxu0 0.0
    %146 = vmatpush1.msra.mxu0 0.0
    %147 = vmatprep.subr.mxu0 0.0
    %148 = vmatpush1.msra.mxu0 0.0
    %149 = vmatprep.mubr.f32.mxu0 0.0
    %150 = vmatmul.mubr.f32.gmra.mrb[0].mxu0 %v74
    %v151 = vpop.f32.mrb[0].mxu0
    %v152 = vadd.f32 %v71, %v151
    %v153 = vpop.f32.mrb[0].mxu0
    %154 = vmatprep.mubr.f32.mxu0 0.0
    %155 = vmatmul.mubr.f32.gmra.mrb[0].mxu0 %v77
    %v156 = vpop.f32.mrb[0].mxu0
    %v157 = vadd.f32 %v71, %v156
    %v158 = vpop.f32.mrb[0].mxu0
    %159 = vmatprep.mubr.f32.mxu0 0.0
    %160 = vmatmul.mubr.f32.gmra.mrb[0].mxu0 %v80
    %v161 = vpop.f32.mrb[0].mxu0
    %v162 = vadd.f32 %v71, %v161
    %v163 = vpop.f32.mrb[0].mxu0
    %164 = vmatprep.mubr.f32.mxu0 0.0
    %165 = vmatmul.mubr.f32.gmra.mrb[0].mxu0 %v83
    %v166 = vpop.f32.mrb[0].mxu0
    %v167 = vadd.f32 %v71, %v166
    %v168 = vpop.f32.mrb[0].mxu0
    %169 = vdwg.mxu0
    %vm170 = vcmask 130048
    %v171 = vsel %vm170, %v152, 0.0
    %172 = vadd.xlane.f32.xlu0 %v171
    %v173 = vpop.xlane.xlu0 %172
    %v174 = vsel %vm170, %v157, 0.0
    %175 = vadd.xlane.f32.xlu0 %v174
    %v176 = vpop.xlane.xlu0 %175
    %v177 = vsel %vm170, %v162, 0.0
    %178 = vadd.xlane.f32.xlu0 %v177
    %v179 = vpop.xlane.xlu0 %178
    %v180 = vsel %vm170, %v167, 0.0
    %181 = vadd.xlane.f32.xlu0 %v180
    %v182 = vpop.xlane.xlu0 %181
    %v183 = vrcp.pop 16.0
    %v184 = vmul.f32 %v173, %v183
    %v185 = vmul.f32 %v176, %v183
    %v186 = vmul.f32 %v179, %v183
    %v187 = vmul.f32 %v182, %v183
    %v188 = vsub.f32 %v152, %v184
    %v189 = vsub.f32 %v157, %v185
    %v190 = vsub.f32 %v162, %v186
    %v191 = vsub.f32 %v167, %v187
    %v192 = vmul.f32 %v188, %v188
    %v193 = vmul.f32 %v189, %v189
    %v194 = vmul.f32 %v190, %v190
    %v195 = vmul.f32 %v191, %v191
    %v196 = vsel %vm170, %v192, 0.0
    %197 = vadd.xlane.f32.xlu0 %v196
    %v198 = vpop.xlane.xlu0 %197
    %v199 = vsel %vm170, %v193, 0.0
    %200 = vadd.xlane.f32.xlu0 %v199
    %v201 = vpop.xlane.xlu0 %200
    %v202 = vsel %vm170, %v194, 0.0
    %203 = vadd.xlane.f32.xlu0 %v202
    %v204 = vpop.xlane.xlu0 %203
    %v205 = vsel %vm170, %v195, 0.0
    %206 = vadd.xlane.f32.xlu0 %v205
    %v207 = vpop.xlane.xlu0 %206
    %v208 = vmul.f32 %v198, %v183
    %v209 = vmul.f32 %v201, %v183
    %v210 = vmul.f32 %v204, %v183
    %v211 = vmul.f32 %v207, %v183
    %v212 = vadd.f32 %v208, 1e-05
    %v213 = vadd.f32 %v209, 1e-05
    %v214 = vadd.f32 %v210, 1e-05
    %v215 = vadd.f32 %v211, 1e-05
    %v216 = vrsqrt.pop %v212
    %v217 = vrsqrt.pop %v213
    %v218 = vrsqrt.pop %v214
    %v219 = vrsqrt.pop %v215
    %v220 = vmul.f32 %v188, %v216
    %v221 = vmul.f32 %v189, %v217
    %v222 = vmul.f32 %v190, %v218
    %v223 = vmul.f32 %v191, %v219
    %v224 = vlaneseq
    %v225 = vshrl.u32 %v224, 7
    %v226 = vsub.s32 1, %v225
    %v227 = vrot.slane %v57, %v226
    %v228 = vmul.f32 %v220, %v227
    %v229 = vmul.f32 %v221, %v227
    %v230 = vmul.f32 %v222, %v227
    %v231 = vmul.f32 %v223, %v227
    %v232 = vlaneseq
    %v233 = vshrl.u32 %v232, 7
    %v234 = vsub.s32 2, %v233
    %v235 = vrot.slane %v57, %v234
    %v236 = vadd.f32 %v228, %v235
    %v237 = vadd.f32 %v229, %v235
    %v238 = vadd.f32 %v230, %v235
    %v239 = vadd.f32 %v231, %v235
    %v240 = vld [vmem:[%s3] sm:$0xff]
    %v241 = vld [vmem:[%s3 + $0x8] sm:$0xff]
    %v242 = vld [vmem:[%s4] sm:$0xff]
    %v243 = vld [vmem:[%s4 + $0x8] sm:$0xff]
    %v244 = vld [vmem:[%s4 + $0x10] sm:$0xff]
    %v245 = vld [vmem:[%s4 + $0x18] sm:$0xff]
    %v246 = vld [vmem:[%s4 + $0x20] sm:$0xff]
    %v247 = vld [vmem:[%s4 + $0x28] sm:$0xff]
    %v248 = vld [vmem:[%s4 + $0x30] sm:$0xff]
    %v249 = vld [vmem:[%s4 + $0x38] sm:$0xff]
    %v250 = vld [vmem:[%s5] sm:$0xff]
    %v251 = vld [vmem:[%s6] sm:$0xff]
    %v252 = vld [vmem:[%s6 + $0x8] sm:$0xff]
    %v253 = vld [vmem:[%s6 + $0x10] sm:$0xff]
    %v254 = vld [vmem:[%s6 + $0x18] sm:$0xff]
    %v255 = vld [vmem:[%s6 + $0x20] sm:$0xff]
    %v256 = vld [vmem:[%s6 + $0x28] sm:$0xff]
    %v257 = vld [vmem:[%s6 + $0x30] sm:$0xff]
    %v258 = vld [vmem:[%s6 + $0x38] sm:$0xff]
    %v259 = vsel %vm170, %v236, 0.0
    %260 = vadd.xlane.f32.xlu0 %v259
    %v261 = vpop.xlane.xlu0 %260
    %v262 = vsel %vm170, %v237, 0.0
    %263 = vadd.xlane.f32.xlu0 %v262
    %v264 = vpop.xlane.xlu0 %263
    %v265 = vsel %vm170, %v238, 0.0
    %266 = vadd.xlane.f32.xlu0 %v265
    %v267 = vpop.xlane.xlu0 %266
    %v268 = vsel %vm170, %v239, 0.0
    %269 = vadd.xlane.f32.xlu0 %v268
    %v270 = vpop.xlane.xlu0 %269
    %v271 = vmul.f32 %v261, %v183
    %v272 = vmul.f32 %v264, %v183
    %v273 = vmul.f32 %v267, %v183
    %v274 = vmul.f32 %v270, %v183
    %v275 = vsub.f32 %v236, %v271
    %v276 = vsub.f32 %v237, %v272
    %v277 = vsub.f32 %v238, %v273
    %v278 = vsub.f32 %v239, %v274
    %v279 = vmul.f32 %v275, %v275
    %v280 = vmul.f32 %v276, %v276
    %v281 = vmul.f32 %v277, %v277
    %v282 = vmul.f32 %v278, %v278
    %v283 = vsel %vm170, %v279, 0.0
    %284 = vadd.xlane.f32.xlu0 %v283
    %v285 = vpop.xlane.xlu0 %284
    %v286 = vsel %vm170, %v280, 0.0
    %287 = vadd.xlane.f32.xlu0 %v286
    %v288 = vpop.xlane.xlu0 %287
    %v289 = vsel %vm170, %v281, 0.0
    %290 = vadd.xlane.f32.xlu0 %v289
    %v291 = vpop.xlane.xlu0 %290
    %v292 = vsel %vm170, %v282, 0.0
    %293 = vadd.xlane.f32.xlu0 %v292
    %v294 = vpop.xlane.xlu0 %293
    %v295 = vmul.f32 %v285, %v183
    %v296 = vmul.f32 %v288, %v183
    %v297 = vmul.f32 %v291, %v183
    %v298 = vmul.f32 %v294, %v183
    %v299 = vadd.f32 %v295, 1e-05
    %v300 = vadd.f32 %v296, 1e-05
    %v301 = vadd.f32 %v297, 1e-05
    %v302 = vadd.f32 %v298, 1e-05
    %v303 = vrsqrt.pop %v299
    %v304 = vrsqrt.pop %v300
    %v305 = vrsqrt.pop %v301
    %v306 = vrsqrt.pop %v302
    %v307 = vmul.f32 %v275, %v303
    %v308 = vmul.f32 %v276, %v304
    %v309 = vmul.f32 %v277, %v305
    %v310 = vmul.f32 %v278, %v306
    %v311 = vlaneseq
    %v312 = vshrl.u32 %v311, 7
    %v313 = vsub.s32 0, %v312
    %v314 = vrot.slane %v250, %v313
    %v315 = vmul.f32 %v307, %v314
    %v316 = vmul.f32 %v308, %v314
    %v317 = vmul.f32 %v309, %v314
    %v318 = vmul.f32 %v310, %v314
    %v319 = vlaneseq
    %v320 = vshrl.u32 %v319, 7
    %v321 = vsub.s32 1, %v320
    %v322 = vrot.slane %v250, %v321
    %v323 = vadd.f32 %v315, %v322
    %v324 = vadd.f32 %v316, %v322
    %v325 = vadd.f32 %v317, %v322
    %v326 = vadd.f32 %v318, %v322
    %v327 = vlaneseq
    %v328 = vshrl.u32 %v327, 7
    %v329 = vsub.s32 2, %v328
    %v330 = vrot.slane %v250, %v329
    %v332 = vsel %vm170, %v323, 0
    %v335 = vsel %vm170, %v324, 0
    %v338 = vsel %vm170, %v325, 0
    %v341 = vsel %vm170, %v326, 0
    %343 = vmatprep.subr.mxu0 0.0
    %344 = vmatpush1.msra.mxu0 %v240
    %345 = vmatprep.subr.mxu0 0.0
    %346 = vmatpush1.msra.mxu0 %v241
    %347 = vmatprep.subr.mxu0 0.0
    %348 = vmatpush1.msra.mxu0 0.0
    %349 = vmatprep.subr.mxu0 0.0
    %350 = vmatpush1.msra.mxu0 0.0
    %351 = vmatprep.subr.mxu0 0.0
    %352 = vmatpush1.msra.mxu0 0.0
    %353 = vmatprep.subr.mxu0 0.0
    %354 = vmatpush1.msra.mxu0 0.0
    %355 = vmatprep.subr.mxu0 0.0
    %356 = vmatpush1.msra.mxu0 0.0
    %357 = vmatprep.subr.mxu0 0.0
    %358 = vmatpush1.msra.mxu0 0.0
    %359 = vmatprep.subr.mxu0 0.0
    %360 = vmatpush1.msra.mxu0 0.0
    %361 = vmatprep.subr.mxu0 0.0
    %362 = vmatpush1.msra.mxu0 0.0
    %363 = vmatprep.subr.mxu0 0.0
    %364 = vmatpush1.msra.mxu0 0.0
    %365 = vmatprep.subr.mxu0 0.0
    %366 = vmatpush1.msra.mxu0 0.0
    %367 = vmatprep.subr.mxu0 0.0
    %368 = vmatpush1.msra.mxu0 0.0
    %369 = vmatprep.subr.mxu0 0.0
    %370 = vmatpush1.msra.mxu0 0.0
    %371 = vmatprep.subr.mxu0 0.0
    %372 = vmatpush1.msra.mxu0 0.0
    %373 = vmatprep.subr.mxu0 0.0
    %374 = vmatpush1.msra.mxu0 0.0
    %375 = vmatprep.subr.mxu0 0.0
    %376 = vmatpush1.msra.mxu0 0.0
    %377 = vmatprep.subr.mxu0 0.0
    %378 = vmatpush1.msra.mxu0 0.0
    %379 = vmatprep.subr.mxu0 0.0
    %380 = vmatpush1.msra.mxu0 0.0
    %381 = vmatprep.subr.mxu0 0.0
    %382 = vmatpush1.msra.mxu0 0.0
    %383 = vmatprep.subr.mxu0 0.0
    %384 = vmatpush1.msra.mxu0 0.0
    %385 = vmatprep.subr.mxu0 0.0
    %386 = vmatpush1.msra.mxu0 0.0
    %387 = vmatprep.subr.mxu0 0.0
    %388 = vmatpush1.msra.mxu0 0.0
    %389 = vmatprep.subr.mxu0 0.0
    %390 = vmatpush1.msra.mxu0 0.0
    %391 = vmatprep.subr.mxu0 0.0
    %392 = vmatpush1.msra.mxu0 0.0
    %393 = vmatprep.subr.mxu0 0.0
    %394 = vmatpush1.msra.mxu0 0.0
    %395 = vmatprep.subr.mxu0 0.0
    %396 = vmatpush1.msra.mxu0 0.0
    %397 = vmatprep.subr.mxu0 0.0
    %398 = vmatpush1.msra.mxu0 0.0
    %399 = vmatprep.subr.mxu0 0.0
    %400 = vmatpush1.msra.mxu0 0.0
    %401 = vmatprep.subr.mxu0 0.0
    %402 = vmatpush1.msra.mxu0 0.0
    %403 = vmatprep.subr.mxu0 0.0
    %404 = vmatpush1.msra.mxu0 0.0
    %405 = vmatprep.subr.mxu0 0.0
    %406 = vmatpush1.msra.mxu0 0.0
    %407 = vmatprep.mubr.f32.mxu0 0.0
    %408 = vmatmul.mubr.f32.gmra.mrb[0].mxu0 %v332
    %v409 = vpop.f32.mrb[0].mxu0
    %v410 = vadd.f32 %v330, %v409
    %v411 = vpop.f32.mrb[0].mxu0
    %412 = vmatprep.mubr.f32.mxu0 0.0
    %413 = vmatmul.mubr.f32.gmra.mrb[0].mxu0 %v335
    %v414 = vpop.f32.mrb[0].mxu0
    %v415 = vadd.f32 %v330, %v414
    %v416 = vpop.f32.mrb[0].mxu0
    %417 = vmatprep.mubr.f32.mxu0 0.0
    %418 = vmatmul.mubr.f32.gmra.mrb[0].mxu0 %v338
    %v419 = vpop.f32.mrb[0].mxu0
    %v420 = vadd.f32 %v330, %v419
    %v421 = vpop.f32.mrb[0].mxu0
    %422 = vmatprep.mubr.f32.mxu0 0.0
    %423 = vmatmul.mubr.f32.gmra.mrb[0].mxu0 %v341
    %v424 = vpop.f32.mrb[0].mxu0
    %v425 = vadd.f32 %v330, %v424
    %v426 = vpop.f32.mrb[0].mxu0
    %427 = vdwg.mxu0
    %432 = vrot.lane.b32.xlu0 %v410, 112
    %v433 = vpop.permute.xlu0 %432
    %434 = vrot.lane.b32.xlu0 %v415, 112
    %v435 = vpop.permute.xlu0 %434
    %436 = vrot.lane.b32.xlu0 %v420, 112
    %v437 = vpop.permute.xlu0 %436
    %438 = vrot.lane.b32.xlu0 %v425, 112
    %v439 = vpop.permute.xlu0 %438
    %vm440 = vcmask 64512
    %v441 = vsel %vm440, %v410, 0
    %v443 = vsel %vm440, %v415, 0
    %v445 = vsel %vm440, %v420, 0
    %v447 = vsel %vm440, %v425, 0
    %v449 = vsel %vm440, %v433, 0
    %v451 = vsel %vm440, %v435, 0
    %v453 = vsel %vm440, %v437, 0
    %v455 = vsel %vm440, %v439, 0
    %457 = vmatprep.subr.mxu0 0.0
    %458 = vmatpush1.xpose.msra.mxu0 %v449
    %459 = vmatprep.subr.mxu0 0.0
    %460 = vmatpush1.xpose.msra.mxu0 %v451
    %461 = vmatprep.subr.mxu0 0.0
    %462 = vmatpush1.xpose.msra.mxu0 %v453
    %463 = vmatprep.subr.mxu0 0.0
    %464 = vmatpush1.xpose.msra.mxu0 %v455
    %465 = vmatprep.subr.mxu0 0.0
    %466 = vmatpush1.xpose.msra.mxu0 0.0
    %467 = vmatprep.subr.mxu0 0.0
    %468 = vmatpush1.xpose.msra.mxu0 0.0
    %469 = vmatprep.subr.mxu0 0.0
    %470 = vmatpush1.xpose.msra.mxu0 0.0
    %471 = vmatprep.subr.mxu0 0.0
    %472 = vmatpush1.xpose.msra.mxu0 0.0
    %473 = vmatprep.subr.mxu0 0.0
    %474 = vmatpush1.xpose.msra.mxu0 0.0
    %475 = vmatprep.subr.mxu0 0.0
    %476 = vmatpush1.xpose.msra.mxu0 0.0
    %477 = vmatprep.subr.mxu0 0.0
    %478 = vmatpush1.xpose.msra.mxu0 0.0
    %479 = vmatprep.subr.mxu0 0.0
    %480 = vmatpush1.xpose.msra.mxu0 0.0
    %481 = vmatprep.subr.mxu0 0.0
    %482 = vmatpush1.xpose.msra.mxu0 0.0
    %483 = vmatprep.subr.mxu0 0.0
    %484 = vmatpush1.xpose.msra.mxu0 0.0
    %485 = vmatprep.subr.mxu0 0.0
    %486 = vmatpush1.xpose.msra.mxu0 0.0
    %487 = vmatprep.subr.mxu0 0.0
    %488 = vmatpush1.xpose.msra.mxu0 0.0
    %489 = vmatprep.subr.mxu0 0.0
    %490 = vmatpush1.xpose.msra.mxu0 0.0
    %491 = vmatprep.subr.mxu0 0.0
    %492 = vmatpush1.xpose.msra.mxu0 0.0
    %493 = vmatprep.subr.mxu0 0.0
    %494 = vmatpush1.xpose.msra.mxu0 0.0
    %495 = vmatprep.subr.mxu0 0.0
    %496 = vmatpush1.xpose.msra.mxu0 0.0
    %497 = vmatprep.subr.mxu0 0.0
    %498 = vmatpush1.xpose.msra.mxu0 0.0
    %499 = vmatprep.subr.mxu0 0.0
    %500 = vmatpush1.xpose.msra.mxu0 0.0
    %501 = vmatprep.subr.mxu0 0.0
    %502 = vmatpush1.xpose.msra.mxu0 0.0
    %503 = vmatprep.subr.mxu0 0.0
    %504 = vmatpush1.xpose.msra.mxu0 0.0
    %505 = vmatprep.subr.mxu0 0.0
    %506 = vmatpush1.xpose.msra.mxu0 0.0
    %507 = vmatprep.subr.mxu0 0.0
    %508 = vmatpush1.xpose.msra.mxu0 0.0
    %509 = vmatprep.subr.mxu0 0.0
    %510 = vmatpush1.xpose.msra.mxu0 0.0
    %511 = vmatprep.subr.mxu0 0.0
    %512 = vmatpush1.xpose.msra.mxu0 0.0
    %513 = vmatprep.subr.mxu0 0.0
    %514 = vmatpush1.xpose.msra.mxu0 0.0
    %515 = vmatprep.subr.mxu0 0.0
    %516 = vmatpush1.xpose.msra.mxu0 0.0
    %517 = vmatprep.subr.mxu0 0.0
    %518 = vmatpush1.xpose.msra.mxu0 0.0
    %519 = vmatprep.subr.mxu0 0.0
    %520 = vmatpush1.xpose.msra.mxu0 0.0
    %521 = vmatprep.mubr.f32.mxu0 0.0
    %522 = vmatmul.mubr.f32.gmra.mrb[0].mxu0 %v441
    %v523 = vpop.f32.mrb[0].mxu0
    %v524 = vadd.f32 %v251, %v523
    %v525 = vpop.f32.mrb[0].mxu0
    %526 = vmatprep.mubr.f32.mxu0 0.0
    %527 = vmatmul.mubr.f32.gmra.mrb[0].mxu0 %v443
    %v528 = vpop.f32.mrb[0].mxu0
    %v529 = vadd.f32 %v252, %v528
    %v530 = vpop.f32.mrb[0].mxu0
    %531 = vmatprep.mubr.f32.mxu0 0.0
    %532 = vmatmul.mubr.f32.gmra.mrb[0].mxu0 %v445
    %v533 = vpop.f32.mrb[0].mxu0
    %v534 = vadd.f32 %v253, %v533
    %v535 = vpop.f32.mrb[0].mxu0
    %536 = vmatprep.mubr.f32.mxu0 0.0
    %537 = vmatmul.mubr.f32.gmra.mrb[0].mxu0 %v447
    %v538 = vpop.f32.mrb[0].mxu0
    %v539 = vadd.f32 %v254, %v538
    %v540 = vpop.f32.mrb[0].mxu0
    %541 = vdwg.mxu0
    %vm542 = vcmask 261120
    %v543 = vsel %vm542, %v524, -inf
    %544 = vmax.xlane.f32.xlu0 %v543
    %v545 = vpop.xlane.xlu0 %544
    %v546 = vsel %vm542, %v529, -inf
    %547 = vmax.xlane.f32.xlu0 %v546
    %v548 = vpop.xlane.xlu0 %547
    %v549 = vsel %vm542, %v534, -inf
    %550 = vmax.xlane.f32.xlu0 %v549
    %v551 = vpop.xlane.xlu0 %550
    %v552 = vsel %vm542, %v539, -inf
    %553 = vmax.xlane.f32.xlu0 %v552
    %v554 = vpop.xlane.xlu0 %553
    %v555 = vsub.f32 %v524, %v545
    %v556 = vsub.f32 %v529, %v548
    %v557 = vsub.f32 %v534, %v551
    %v558 = vsub.f32 %v539, %v554
    %v559 = vmul.f32 %v555, 1.442695
    %v560 = vpow.pop %v559
    %v561 = vmul.f32 %v556, 1.442695
    %v562 = vpow.pop %v561
    %v563 = vmul.f32 %v557, 1.442695
    %v564 = vpow.pop %v563
    %v565 = vmul.f32 %v558, 1.442695
    %v566 = vpow.pop %v565
    %v567 = vsel %vm542, %v560, 0.0
    %568 = vadd.xlane.f32.xlu0 %v567
    %v569 = vpop.xlane.xlu0 %568
    %v570 = vsel %vm542, %v562, 0.0
    %571 = vadd.xlane.f32.xlu0 %v570
    %v572 = vpop.xlane.xlu0 %571
    %v573 = vsel %vm542, %v564, 0.0
    %574 = vadd.xlane.f32.xlu0 %v573
    %v575 = vpop.xlane.xlu0 %574
    %v576 = vsel %vm542, %v566, 0.0
    %577 = vadd.xlane.f32.xlu0 %v576
    %v578 = vpop.xlane.xlu0 %577
    %v579 = vrcp.pop %v569
    %v580 = vrcp.pop %v572
    %v581 = vrcp.pop %v575
    %v582 = vrcp.pop %v578
    %v583 = vmul.f32 %v560, %v579
    %v584 = vmul.f32 %v562, %v580
    %v585 = vmul.f32 %v564, %v581
    %v586 = vmul.f32 %v566, %v582
    %587 = vrot.lane.b32.xlu0 %v410, 96
    %v588 = vpop.permute.xlu0 %587
    %589 = vrot.lane.b32.xlu0 %v415, 96
    %v590 = vpop.permute.xlu0 %589
    %591 = vrot.lane.b32.xlu0 %v420, 96
    %v592 = vpop.permute.xlu0 %591
    %593 = vrot.lane.b32.xlu0 %v425, 96
    %v594 = vpop.permute.xlu0 %593
    %v600 = vsel %vm542, %v583, 0
    %v603 = vsel %vm542, %v584, 0
    %v606 = vsel %vm542, %v585, 0
    %v609 = vsel %vm542, %v586, 0
    %611 = vmatprep.subr.mxu0 0.0
    %612 = vmatpush1.msra.mxu0 %v588
    %613 = vmatprep.subr.mxu0 0.0
    %614 = vmatpush1.msra.mxu0 %v590
    %615 = vmatprep.subr.mxu0 0.0
    %616 = vmatpush1.msra.mxu0 %v592
    %617 = vmatprep.subr.mxu0 0.0
    %618 = vmatpush1.msra.mxu0 %v594
    %619 = vmatprep.subr.mxu0 0.0
    %620 = vmatpush1.msra.mxu0 0.0
    %621 = vmatprep.subr.mxu0 0.0
    %622 = vmatpush1.msra.mxu0 0.0
    %623 = vmatprep.subr.mxu0 0.0
    %624 = vmatpush1.msra.mxu0 0.0
    %625 = vmatprep.subr.mxu0 0.0
    %626 = vmatpush1.msra.mxu0 0.0
    %627 = vmatprep.subr.mxu0 0.0
    %628 = vmatpush1.msra.mxu0 0.0
    %629 = vmatprep.subr.mxu0 0.0
    %630 = vmatpush1.msra.mxu0 0.0
    %631 = vmatprep.subr.mxu0 0.0
    %632 = vmatpush1.msra.mxu0 0.0
    %633 = vmatprep.subr.mxu0 0.0
    %634 = vmatpush1.msra.mxu0 0.0
    %635 = vmatprep.subr.mxu0 0.0
    %636 = vmatpush1.msra.mxu0 0.0
    %637 = vmatprep.subr.mxu0 0.0
    %638 = vmatpush1.msra.mxu0 0.0
    %639 = vmatprep.subr.mxu0 0.0
    %640 = vmatpush1.msra.mxu0 0.0
    %641 = vmatprep.subr.mxu0 0.0
    %642 = vmatpush1.msra.mxu0 0.0
    %643 = vmatprep.subr.mxu0 0.0
    %644 = vmatpush1.msra.mxu0 0.0
    %645 = vmatprep.subr.mxu0 0.0
    %646 = vmatpush1.msra.mxu0 0.0
    %647 = vmatprep.subr.mxu0 0.0
    %648 = vmatpush1.msra.mxu0 0.0
    %649 = vmatprep.subr.mxu0 0.0
    %650 = vmatpush1.msra.mxu0 0.0
    %651 = vmatprep.subr.mxu0 0.0
    %652 = vmatpush1.msra.mxu0 0.0
    %653 = vmatprep.subr.mxu0 0.0
    %654 = vmatpush1.msra.mxu0 0.0
    %655 = vmatprep.subr.mxu0 0.0
    %656 = vmatpush1.msra.mxu0 0.0
    %657 = vmatprep.subr.mxu0 0.0
    %658 = vmatpush1.msra.mxu0 0.0
    %659 = vmatprep.subr.mxu0 0.0
    %660 = vmatpush1.msra.mxu0 0.0
    %661 = vmatprep.subr.mxu0 0.0
    %662 = vmatpush1.msra.mxu0 0.0
    %663 = vmatprep.subr.mxu0 0.0
    %664 = vmatpush1.msra.mxu0 0.0
    %665 = vmatprep.subr.mxu0 0.0
    %666 = vmatpush1.msra.mxu0 0.0
    %667 = vmatprep.subr.mxu0 0.0
    %668 = vmatpush1.msra.mxu0 0.0
    %669 = vmatprep.subr.mxu0 0.0
    %670 = vmatpush1.msra.mxu0 0.0
    %671 = vmatprep.subr.mxu0 0.0
    %672 = vmatpush1.msra.mxu0 0.0
    %673 = vmatprep.subr.mxu0 0.0
    %674 = vmatpush1.msra.mxu0 0.0
    %675 = vmatprep.mubr.f32.mxu0 0.0
    %676 = vmatmul.mubr.f32.gmra.mrb[0].mxu0 %v600
    %v677 = vpop.f32.mrb[0].mxu0
    %v678 = vadd.f32 0.0, %v677
    %v679 = vpop.f32.mrb[0].mxu0
    %680 = vmatprep.mubr.f32.mxu0 0.0
    %681 = vmatmul.mubr.f32.gmra.mrb[0].mxu0 %v603
    %v682 = vpop.f32.mrb[0].mxu0
    %v683 = vadd.f32 0.0, %v682
    %v684 = vpop.f32.mrb[0].mxu0
    %685 = vmatprep.mubr.f32.mxu0 0.0
    %686 = vmatmul.mubr.f32.gmra.mrb[0].mxu0 %v606
    %v687 = vpop.f32.mrb[0].mxu0
    %v688 = vadd.f32 0.0, %v687
    %v689 = vpop.f32.mrb[0].mxu0
    %690 = vmatprep.mubr.f32.mxu0 0.0
    %691 = vmatmul.mubr.f32.gmra.mrb[0].mxu0 %v609
    %v692 = vpop.f32.mrb[0].mxu0
    %v693 = vadd.f32 0.0, %v692
    %v694 = vpop.f32.mrb[0].mxu0
    %695 = vdwg.mxu0
    %697 = vrot.lane.b32.xlu0 %v240, 80
    %v698 = vpop.permute.xlu0 %697
    %v701 = vsel %vm440, %v678, 0
    %v704 = vsel %vm440, %v683, 0
    %v707 = vsel %vm440, %v688, 0
    %v710 = vsel %vm440, %v693, 0
    %712 = vmatprep.subr.mxu0 0.0
    %713 = vmatpush1.msra.mxu0 %v698
    %714 = vmatprep.subr.mxu0 0.0
    %715 = vmatpush1.msra.mxu0 0.0
    %716 = vmatprep.subr.mxu0 0.0
    %717 = vmatpush1.msra.mxu0 0.0
    %718 = vmatprep.subr.mxu0 0.0
    %719 = vmatpush1.msra.mxu0 0.0
    %720 = vmatprep.subr.mxu0 0.0
    %721 = vmatpush1.msra.mxu0 0.0
    %722 = vmatprep.subr.mxu0 0.0
    %723 = vmatpush1.msra.mxu0 0.0
    %724 = vmatprep.subr.mxu0 0.0
    %725 = vmatpush1.msra.mxu0 0.0
    %726 = vmatprep.subr.mxu0 0.0
    %727 = vmatpush1.msra.mxu0 0.0
    %728 = vmatprep.subr.mxu0 0.0
    %729 = vmatpush1.msra.mxu0 0.0
    %730 = vmatprep.subr.mxu0 0.0
    %731 = vmatpush1.msra.mxu0 0.0
    %732 = vmatprep.subr.mxu0 0.0
    %733 = vmatpush1.msra.mxu0 0.0
    %734 = vmatprep.subr.mxu0 0.0
    %735 = vmatpush1.msra.mxu0 0.0
    %736 = vmatprep.subr.mxu0 0.0
    %737 = vmatpush1.msra.mxu0 0.0
    %738 = vmatprep.subr.mxu0 0.0
    %739 = vmatpush1.msra.mxu0 0.0
    %740 = vmatprep.subr.mxu0 0.0
    %741 = vmatpush1.msra.mxu0 0.0
    %742 = vmatprep.subr.mxu0 0.0
    %743 = vmatpush1.msra.mxu0 0.0
    %744 = vmatprep.subr.mxu0 0.0
    %745 = vmatpush1.msra.mxu0 0.0
    %746 = vmatprep.subr.mxu0 0.0
    %747 = vmatpush1.msra.mxu0 0.0
    %748 = vmatprep.subr.mxu0 0.0
    %749 = vmatpush1.msra.mxu0 0.0
    %750 = vmatprep.subr.mxu0 0.0
    %751 = vmatpush1.msra.mxu0 0.0
    %752 = vmatprep.subr.mxu0 0.0
    %753 = vmatpush1.msra.mxu0 0.0
    %754 = vmatprep.subr.mxu0 0.0
    %755 = vmatpush1.msra.mxu0 0.0
    %756 = vmatprep.subr.mxu0 0.0
    %757 = vmatpush1.msra.mxu0 0.0
    %758 = vmatprep.subr.mxu0 0.0
    %759 = vmatpush1.msra.mxu0 0.0
    %760 = vmatprep.subr.mxu0 0.0
    %761 = vmatpush1.msra.mxu0 0.0
    %762 = vmatprep.subr.mxu0 0.0
    %763 = vmatpush1.msra.mxu0 0.0
    %764 = vmatprep.subr.mxu0 0.0
    %765 = vmatpush1.msra.mxu0 0.0
    %766 = vmatprep.subr.mxu0 0.0
    %767 = vmatpush1.msra.mxu0 0.0
    %768 = vmatprep.subr.mxu0 0.0
    %769 = vmatpush1.msra.mxu0 0.0
    %770 = vmatprep.subr.mxu0 0.0
    %771 = vmatpush1.msra.mxu0 0.0
    %772 = vmatprep.subr.mxu0 0.0
    %773 = vmatpush1.msra.mxu0 0.0
    %774 = vmatprep.subr.mxu0 0.0
    %775 = vmatpush1.msra.mxu0 0.0
    %776 = vmatprep.mubr.f32.mxu0 0.0
    %777 = vmatmul.mubr.f32.gmra.mrb[0].mxu0 %v701
    %v778 = vpop.f32.mrb[0].mxu0
    %v779 = vadd.f32 0.0, %v778
    %v780 = vpop.f32.mrb[0].mxu0
    %781 = vmatprep.mubr.f32.mxu0 0.0
    %782 = vmatmul.mubr.f32.gmra.mrb[0].mxu0 %v704
    %v783 = vpop.f32.mrb[0].mxu0
    %v784 = vadd.f32 0.0, %v783
    %v785 = vpop.f32.mrb[0].mxu0
    %786 = vmatprep.mubr.f32.mxu0 0.0
    %787 = vmatmul.mubr.f32.gmra.mrb[0].mxu0 %v707
    %v788 = vpop.f32.mrb[0].mxu0
    %v789 = vadd.f32 0.0, %v788
    %v790 = vpop.f32.mrb[0].mxu0
    %791 = vmatprep.mubr.f32.mxu0 0.0
    %792 = vmatmul.mubr.f32.gmra.mrb[0].mxu0 %v710
    %v793 = vpop.f32.mrb[0].mxu0
    %v794 = vadd.f32 0.0, %v793
    %v795 = vpop.f32.mrb[0].mxu0
    %796 = vdwg.mxu0
    %v797 = vlaneseq
    %v798 = vshrl.u32 %v797, 7
    %v799 = vsub.s32 3, %v798
    %v800 = vrot.slane %v250, %v799
    %v801 = vadd.f32 %v800, %v779
    %v802 = vadd.f32 %v800, %v784
    %v803 = vadd.f32 %v800, %v789
    %v804 = vadd.f32 %v800, %v794
    %805 = vrot.lane.b32.xlu0 %v410, 120
    %v806 = vpop.permute.xlu0 %805
    %807 = vrot.lane.b32.xlu0 %v415, 120
    %v808 = vpop.permute.xlu0 %807
    %809 = vrot.lane.b32.xlu0 %v420, 120
    %v810 = vpop.permute.xlu0 %809
    %811 = vrot.lane.b32.xlu0 %v425, 120
    %v812 = vpop.permute.xlu0 %811
    %813 = vrot.lane.b32.xlu0 %v410, 104
    %v814 = vpop.permute.xlu0 %813
    %815 = vrot.lane.b32.xlu0 %v415, 104
    %v816 = vpop.permute.xlu0 %815
    %817 = vrot.lane.b32.xlu0 %v420, 104
    %v818 = vpop.permute.xlu0 %817
    %819 = vrot.lane.b32.xlu0 %v425, 104
    %v820 = vpop.permute.xlu0 %819
    %v821 = vsel %vm440, %v806, 0
    %v823 = vsel %vm440, %v808, 0
    %v825 = vsel %vm440, %v810, 0
    %v827 = vsel %vm440, %v812, 0
    %v829 = vsel %vm440, %v814, 0
    %v831 = vsel %vm440, %v816, 0
    %v833 = vsel %vm440, %v818, 0
    %v835 = vsel %vm440, %v820, 0
    %837 = vmatprep.subr.mxu0 0.0
    %838 = vmatpush1.xpose.msra.mxu0 %v829
    %839 = vmatprep.subr.mxu0 0.0
    %840 = vmatpush1.xpose.msra.mxu0 %v831
    %841 = vmatprep.subr.mxu0 0.0
    %842 = vmatpush1.xpose.msra.mxu0 %v833
    %843 = vmatprep.subr.mxu0 0.0
    %844 = vmatpush1.xpose.msra.mxu0 %v835
    %845 = vmatprep.subr.mxu0 0.0
    %846 = vmatpush1.xpose.msra.mxu0 0.0
    %847 = vmatprep.subr.mxu0 0.0
    %848 = vmatpush1.xpose.msra.mxu0 0.0
    %849 = vmatprep.subr.mxu0 0.0
    %850 = vmatpush1.xpose.msra.mxu0 0.0
    %851 = vmatprep.subr.mxu0 0.0
    %852 = vmatpush1.xpose.msra.mxu0 0.0
    %853 = vmatprep.subr.mxu0 0.0
    %854 = vmatpush1.xpose.msra.mxu0 0.0
    %855 = vmatprep.subr.mxu0 0.0
    %856 = vmatpush1.xpose.msra.mxu0 0.0
    %857 = vmatprep.subr.mxu0 0.0
    %858 = vmatpush1.xpose.msra.mxu0 0.0
    %859 = vmatprep.subr.mxu0 0.0
    %860 = vmatpush1.xpose.msra.mxu0 0.0
    %861 = vmatprep.subr.mxu0 0.0
    %862 = vmatpush1.xpose.msra.mxu0 0.0
    %863 = vmatprep.subr.mxu0 0.0
    %864 = vmatpush1.xpose.msra.mxu0 0.0
    %865 = vmatprep.subr.mxu0 0.0
    %866 = vmatpush1.xpose.msra.mxu0 0.0
    %867 = vmatprep.subr.mxu0 0.0
    %868 = vmatpush1.xpose.msra.mxu0 0.0
    %869 = vmatprep.subr.mxu0 0.0
    %870 = vmatpush1.xpose.msra.mxu0 0.0
    %871 = vmatprep.subr.mxu0 0.0
    %872 = vmatpush1.xpose.msra.mxu0 0.0
    %873 = vmatprep.subr.mxu0 0.0
    %874 = vmatpush1.xpose.msra.mxu0 0.0
    %875 = vmatprep.subr.mxu0 0.0
    %876 = vmatpush1.xpose.msra.mxu0 0.0
    %877 = vmatprep.subr.mxu0 0.0
    %878 = vmatpush1.xpose.msra.mxu0 0.0
    %879 = vmatprep.subr.mxu0 0.0
    %880 = vmatpush1.xpose.msra.mxu0 0.0
    %881 = vmatprep.subr.mxu0 0.0
    %882 = vmatpush1.xpose.msra.mxu0 0.0
    %883 = vmatprep.subr.mxu0 0.0
    %884 = vmatpush1.xpose.msra.mxu0 0.0
    %885 = vmatprep.subr.mxu0 0.0
    %886 = vmatpush1.xpose.msra.mxu0 0.0
    %887 = vmatprep.subr.mxu0 0.0
    %888 = vmatpush1.xpose.msra.mxu0 0.0
    %889 = vmatprep.subr.mxu0 0.0
    %890 = vmatpush1.xpose.msra.mxu0 0.0
    %891 = vmatprep.subr.mxu0 0.0
    %892 = vmatpush1.xpose.msra.mxu0 0.0
    %893 = vmatprep.subr.mxu0 0.0
    %894 = vmatpush1.xpose.msra.mxu0 0.0
    %895 = vmatprep.subr.mxu0 0.0
    %896 = vmatpush1.xpose.msra.mxu0 0.0
    %897 = vmatprep.subr.mxu0 0.0
    %898 = vmatpush1.xpose.msra.mxu0 0.0
    %899 = vmatprep.subr.mxu0 0.0
    %900 = vmatpush1.xpose.msra.mxu0 0.0
    %901 = vmatprep.mubr.f32.mxu0 0.0
    %902 = vmatmul.mubr.f32.gmra.mrb[0].mxu0 %v821
    %v903 = vpop.f32.mrb[0].mxu0
    %v904 = vadd.f32 %v255, %v903
    %v905 = vpop.f32.mrb[0].mxu0
    %906 = vmatprep.mubr.f32.mxu0 0.0
    %907 = vmatmul.mubr.f32.gmra.mrb[0].mxu0 %v823
    %v908 = vpop.f32.mrb[0].mxu0
    %v909 = vadd.f32 %v256, %v908
    %v910 = vpop.f32.mrb[0].mxu0
    %911 = vmatprep.mubr.f32.mxu0 0.0
    %912 = vmatmul.mubr.f32.gmra.mrb[0].mxu0 %v825
    %v913 = vpop.f32.mrb[0].mxu0
    %v914 = vadd.f32 %v257, %v913
    %v915 = vpop.f32.mrb[0].mxu0
    %916 = vmatprep.mubr.f32.mxu0 0.0
    %917 = vmatmul.mubr.f32.gmra.mrb[0].mxu0 %v827
    %v918 = vpop.f32.mrb[0].mxu0
    %v919 = vadd.f32 %v258, %v918
    %v920 = vpop.f32.mrb[0].mxu0
    %921 = vdwg.mxu0
    %v922 = vsel %vm542, %v904, -inf
    %923 = vmax.xlane.f32.xlu0 %v922
    %v924 = vpop.xlane.xlu0 %923
    %v925 = vsel %vm542, %v909, -inf
    %926 = vmax.xlane.f32.xlu0 %v925
    %v927 = vpop.xlane.xlu0 %926
    %v928 = vsel %vm542, %v914, -inf
    %929 = vmax.xlane.f32.xlu0 %v928
    %v930 = vpop.xlane.xlu0 %929
    %v931 = vsel %vm542, %v919, -inf
    %932 = vmax.xlane.f32.xlu0 %v931
    %v933 = vpop.xlane.xlu0 %932
    %v934 = vsub.f32 %v904, %v924
    %v935 = vsub.f32 %v909, %v927
    %v936 = vsub.f32 %v914, %v930
    %v937 = vsub.f32 %v919, %v933
    %v938 = vmul.f32 %v934, 1.442695
    %v939 = vpow.pop %v938
    %v940 = vmul.f32 %v935, 1.442695
    %v941 = vpow.pop %v940
    %v942 = vmul.f32 %v936, 1.442695
    %v943 = vpow.pop %v942
    %v944 = vmul.f32 %v937, 1.442695
    %v945 = vpow.pop %v944
    %v946 = vsel %vm542, %v939, 0.0
    %947 = vadd.xlane.f32.xlu0 %v946
    %v948 = vpop.xlane.xlu0 %947
    %v949 = vsel %vm542, %v941, 0.0
    %950 = vadd.xlane.f32.xlu0 %v949
    %v951 = vpop.xlane.xlu0 %950
    %v952 = vsel %vm542, %v943, 0.0
    %953 = vadd.xlane.f32.xlu0 %v952
    %v954 = vpop.xlane.xlu0 %953
    %v955 = vsel %vm542, %v945, 0.0
    %956 = vadd.xlane.f32.xlu0 %v955
    %v957 = vpop.xlane.xlu0 %956
    %v958 = vrcp.pop %v948
    %v959 = vrcp.pop %v951
    %v960 = vrcp.pop %v954
    %v961 = vrcp.pop %v957
    %v962 = vmul.f32 %v939, %v958
    %v963 = vmul.f32 %v941, %v959
    %v964 = vmul.f32 %v943, %v960
    %v965 = vmul.f32 %v945, %v961
    %966 = vrot.lane.b32.xlu0 %v410, 88
    %v967 = vpop.permute.xlu0 %966
    %968 = vrot.lane.b32.xlu0 %v415, 88
    %v969 = vpop.permute.xlu0 %968
    %970 = vrot.lane.b32.xlu0 %v420, 88
    %v971 = vpop.permute.xlu0 %970
    %972 = vrot.lane.b32.xlu0 %v425, 88
    %v973 = vpop.permute.xlu0 %972
    %v979 = vsel %vm542, %v962, 0
    %v982 = vsel %vm542, %v963, 0
    %v985 = vsel %vm542, %v964, 0
    %v988 = vsel %vm542, %v965, 0
    %990 = vmatprep.subr.mxu0 0.0
    %991 = vmatpush1.msra.mxu0 %v967
    %992 = vmatprep.subr.mxu0 0.0
    %993 = vmatpush1.msra.mxu0 %v969
    %994 = vmatprep.subr.mxu0 0.0
    %995 = vmatpush1.msra.mxu0 %v971
    %996 = vmatprep.subr.mxu0 0.0
    %997 = vmatpush1.msra.mxu0 %v973
    %998 = vmatprep.subr.mxu0 0.0
    %999 = vmatpush1.msra.mxu0 0.0
    %1000 = vmatprep.subr.mxu0 0.0
    %1001 = vmatpush1.msra.mxu0 0.0
    %1002 = vmatprep.subr.mxu0 0.0
    %1003 = vmatpush1.msra.mxu0 0.0
    %1004 = vmatprep.subr.mxu0 0.0
    %1005 = vmatpush1.msra.mxu0 0.0
    %1006 = vmatprep.subr.mxu0 0.0
    %1007 = vmatpush1.msra.mxu0 0.0
    %1008 = vmatprep.subr.mxu0 0.0
    %1009 = vmatpush1.msra.mxu0 0.0
    %1010 = vmatprep.subr.mxu0 0.0
    %1011 = vmatpush1.msra.mxu0 0.0
    %1012 = vmatprep.subr.mxu0 0.0
    %1013 = vmatpush1.msra.mxu0 0.0
    %1014 = vmatprep.subr.mxu0 0.0
    %1015 = vmatpush1.msra.mxu0 0.0
    %1016 = vmatprep.subr.mxu0 0.0
    %1017 = vmatpush1.msra.mxu0 0.0
    %1018 = vmatprep.subr.mxu0 0.0
    %1019 = vmatpush1.msra.mxu0 0.0
    %1020 = vmatprep.subr.mxu0 0.0
    %1021 = vmatpush1.msra.mxu0 0.0
    %1022 = vmatprep.subr.mxu0 0.0
    %1023 = vmatpush1.msra.mxu0 0.0
    %1024 = vmatprep.subr.mxu0 0.0
    %1025 = vmatpush1.msra.mxu0 0.0
    %1026 = vmatprep.subr.mxu0 0.0
    %1027 = vmatpush1.msra.mxu0 0.0
    %1028 = vmatprep.subr.mxu0 0.0
    %1029 = vmatpush1.msra.mxu0 0.0
    %1030 = vmatprep.subr.mxu0 0.0
    %1031 = vmatpush1.msra.mxu0 0.0
    %1032 = vmatprep.subr.mxu0 0.0
    %1033 = vmatpush1.msra.mxu0 0.0
    %1034 = vmatprep.subr.mxu0 0.0
    %1035 = vmatpush1.msra.mxu0 0.0
    %1036 = vmatprep.subr.mxu0 0.0
    %1037 = vmatpush1.msra.mxu0 0.0
    %1038 = vmatprep.subr.mxu0 0.0
    %1039 = vmatpush1.msra.mxu0 0.0
    %1040 = vmatprep.subr.mxu0 0.0
    %1041 = vmatpush1.msra.mxu0 0.0
    %1042 = vmatprep.subr.mxu0 0.0
    %1043 = vmatpush1.msra.mxu0 0.0
    %1044 = vmatprep.subr.mxu0 0.0
    %1045 = vmatpush1.msra.mxu0 0.0
    %1046 = vmatprep.subr.mxu0 0.0
    %1047 = vmatpush1.msra.mxu0 0.0
    %1048 = vmatprep.subr.mxu0 0.0
    %1049 = vmatpush1.msra.mxu0 0.0
    %1050 = vmatprep.subr.mxu0 0.0
    %1051 = vmatpush1.msra.mxu0 0.0
    %1052 = vmatprep.subr.mxu0 0.0
    %1053 = vmatpush1.msra.mxu0 0.0
    %1054 = vmatprep.mubr.f32.mxu0 0.0
    %1055 = vmatmul.mubr.f32.gmra.mrb[0].mxu0 %v979
    %v1056 = vpop.f32.mrb[0].mxu0
    %v1057 = vadd.f32 0.0, %v1056
    %v1058 = vpop.f32.mrb[0].mxu0
    %1059 = vmatprep.mubr.f32.mxu0 0.0
    %1060 = vmatmul.mubr.f32.gmra.mrb[0].mxu0 %v982
    %v1061 = vpop.f32.mrb[0].mxu0
    %v1062 = vadd.f32 0.0, %v1061
    %v1063 = vpop.f32.mrb[0].mxu0
    %1064 = vmatprep.mubr.f32.mxu0 0.0
    %1065 = vmatmul.mubr.f32.gmra.mrb[0].mxu0 %v985
    %v1066 = vpop.f32.mrb[0].mxu0
    %v1067 = vadd.f32 0.0, %v1066
    %v1068 = vpop.f32.mrb[0].mxu0
    %1069 = vmatprep.mubr.f32.mxu0 0.0
    %1070 = vmatmul.mubr.f32.gmra.mrb[0].mxu0 %v988
    %v1071 = vpop.f32.mrb[0].mxu0
    %v1072 = vadd.f32 0.0, %v1071
    %v1073 = vpop.f32.mrb[0].mxu0
    %1074 = vdwg.mxu0
    %1076 = vrot.lane.b32.xlu0 %v241, 80
    %v1077 = vpop.permute.xlu0 %1076
    %v1080 = vsel %vm440, %v1057, 0
    %v1083 = vsel %vm440, %v1062, 0
    %v1086 = vsel %vm440, %v1067, 0
    %v1089 = vsel %vm440, %v1072, 0
    %1091 = vmatprep.subr.mxu0 0.0
    %1092 = vmatpush1.msra.mxu0 %v1077
    %1093 = vmatprep.subr.mxu0 0.0
    %1094 = vmatpush1.msra.mxu0 0.0
    %1095 = vmatprep.subr.mxu0 0.0
    %1096 = vmatpush1.msra.mxu0 0.0
    %1097 = vmatprep.subr.mxu0 0.0
    %1098 = vmatpush1.msra.mxu0 0.0
    %1099 = vmatprep.subr.mxu0 0.0
    %1100 = vmatpush1.msra.mxu0 0.0
    %1101 = vmatprep.subr.mxu0 0.0
    %1102 = vmatpush1.msra.mxu0 0.0
    %1103 = vmatprep.subr.mxu0 0.0
    %1104 = vmatpush1.msra.mxu0 0.0
    %1105 = vmatprep.subr.mxu0 0.0
    %1106 = vmatpush1.msra.mxu0 0.0
    %1107 = vmatprep.subr.mxu0 0.0
    %1108 = vmatpush1.msra.mxu0 0.0
    %1109 = vmatprep.subr.mxu0 0.0
    %1110 = vmatpush1.msra.mxu0 0.0
    %1111 = vmatprep.subr.mxu0 0.0
    %1112 = vmatpush1.msra.mxu0 0.0
    %1113 = vmatprep.subr.mxu0 0.0
    %1114 = vmatpush1.msra.mxu0 0.0
    %1115 = vmatprep.subr.mxu0 0.0
    %1116 = vmatpush1.msra.mxu0 0.0
    %1117 = vmatprep.subr.mxu0 0.0
    %1118 = vmatpush1.msra.mxu0 0.0
    %1119 = vmatprep.subr.mxu0 0.0
    %1120 = vmatpush1.msra.mxu0 0.0
    %1121 = vmatprep.subr.mxu0 0.0
    %1122 = vmatpush1.msra.mxu0 0.0
    %1123 = vmatprep.subr.mxu0 0.0
    %1124 = vmatpush1.msra.mxu0 0.0
    %1125 = vmatprep.subr.mxu0 0.0
    %1126 = vmatpush1.msra.mxu0 0.0
    %1127 = vmatprep.subr.mxu0 0.0
    %1128 = vmatpush1.msra.mxu0 0.0
    %1129 = vmatprep.subr.mxu0 0.0
    %1130 = vmatpush1.msra.mxu0 0.0
    %1131 = vmatprep.subr.mxu0 0.0
    %1132 = vmatpush1.msra.mxu0 0.0
    %1133 = vmatprep.subr.mxu0 0.0
    %1134 = vmatpush1.msra.mxu0 0.0
    %1135 = vmatprep.subr.mxu0 0.0
    %1136 = vmatpush1.msra.mxu0 0.0
    %1137 = vmatprep.subr.mxu0 0.0
    %1138 = vmatpush1.msra.mxu0 0.0
    %1139 = vmatprep.subr.mxu0 0.0
    %1140 = vmatpush1.msra.mxu0 0.0
    %1141 = vmatprep.subr.mxu0 0.0
    %1142 = vmatpush1.msra.mxu0 0.0
    %1143 = vmatprep.subr.mxu0 0.0
    %1144 = vmatpush1.msra.mxu0 0.0
    %1145 = vmatprep.subr.mxu0 0.0
    %1146 = vmatpush1.msra.mxu0 0.0
    %1147 = vmatprep.subr.mxu0 0.0
    %1148 = vmatpush1.msra.mxu0 0.0
    %1149 = vmatprep.subr.mxu0 0.0
    %1150 = vmatpush1.msra.mxu0 0.0
    %1151 = vmatprep.subr.mxu0 0.0
    %1152 = vmatpush1.msra.mxu0 0.0
    %1153 = vmatprep.subr.mxu0 0.0
    %1154 = vmatpush1.msra.mxu0 0.0
    %1155 = vmatprep.mubr.f32.mxu0 0.0
    %1156 = vmatmul.mubr.f32.gmra.mrb[0].mxu0 %v1080
    %v1157 = vpop.f32.mrb[0].mxu0
    %v1158 = vadd.f32 0.0, %v1157
    %v1159 = vpop.f32.mrb[0].mxu0
    %1160 = vmatprep.mubr.f32.mxu0 0.0
    %1161 = vmatmul.mubr.f32.gmra.mrb[0].mxu0 %v1083
    %v1162 = vpop.f32.mrb[0].mxu0
    %v1163 = vadd.f32 0.0, %v1162
    %v1164 = vpop.f32.mrb[0].mxu0
    %1165 = vmatprep.mubr.f32.mxu0 0.0
    %1166 = vmatmul.mubr.f32.gmra.mrb[0].mxu0 %v1086
    %v1167 = vpop.f32.mrb[0].mxu0
    %v1168 = vadd.f32 0.0, %v1167
    %v1169 = vpop.f32.mrb[0].mxu0
    %1170 = vmatprep.mubr.f32.mxu0 0.0
    %1171 = vmatmul.mubr.f32.gmra.mrb[0].mxu0 %v1089
    %v1172 = vpop.f32.mrb[0].mxu0
    %v1173 = vadd.f32 0.0, %v1172
    %v1174 = vpop.f32.mrb[0].mxu0
    %1175 = vdwg.mxu0
    %v1176 = vadd.f32 %v801, %v1158
    %v1177 = vadd.f32 %v802, %v1163
    %v1178 = vadd.f32 %v803, %v1168
    %v1179 = vadd.f32 %v804, %v1173
    %v1180 = vadd.f32 %v236, %v1176
    %v1181 = vadd.f32 %v237, %v1177
    %v1182 = vadd.f32 %v238, %v1178
    %v1183 = vadd.f32 %v239, %v1179
    %v1184 = vsel %vm170, %v1180, 0.0
    %1185 = vadd.xlane.f32.xlu0 %v1184
    %v1186 = vpop.xlane.xlu0 %1185
    %v1187 = vsel %vm170, %v1181, 0.0
    %1188 = vadd.xlane.f32.xlu0 %v1187
    %v1189 = vpop.xlane.xlu0 %1188
    %v1190 = vsel %vm170, %v1182, 0.0
    %1191 = vadd.xlane.f32.xlu0 %v1190
    %v1192 = vpop.xlane.xlu0 %1191
    %v1193 = vsel %vm170, %v1183, 0.0
    %1194 = vadd.xlane.f32.xlu0 %v1193
    %v1195 = vpop.xlane.xlu0 %1194
    %v1196 = vmul.f32 %v1186, %v183
    %v1197 = vmul.f32 %v1189, %v183
    %v1198 = vmul.f32 %v1192, %v183
    %v1199 = vmul.f32 %v1195, %v183
    %v1200 = vsub.f32 %v1180, %v1196
    %v1201 = vsub.f32 %v1181, %v1197
    %v1202 = vsub.f32 %v1182, %v1198
    %v1203 = vsub.f32 %v1183, %v1199
    %v1204 = vmul.f32 %v1200, %v1200
    %v1205 = vmul.f32 %v1201, %v1201
    %v1206 = vmul.f32 %v1202, %v1202
    %v1207 = vmul.f32 %v1203, %v1203
    %v1208 = vsel %vm170, %v1204, 0.0
    %1209 = vadd.xlane.f32.xlu0 %v1208
    %v1210 = vpop.xlane.xlu0 %1209
    %v1211 = vsel %vm170, %v1205, 0.0
    %1212 = vadd.xlane.f32.xlu0 %v1211
    %v1213 = vpop.xlane.xlu0 %1212
    %v1214 = vsel %vm170, %v1206, 0.0
    %1215 = vadd.xlane.f32.xlu0 %v1214
    %v1216 = vpop.xlane.xlu0 %1215
    %v1217 = vsel %vm170, %v1207, 0.0
    %1218 = vadd.xlane.f32.xlu0 %v1217
    %v1219 = vpop.xlane.xlu0 %1218
    %v1220 = vmul.f32 %v1210, %v183
    %v1221 = vmul.f32 %v1213, %v183
    %v1222 = vmul.f32 %v1216, %v183
    %v1223 = vmul.f32 %v1219, %v183
    %v1224 = vadd.f32 %v1220, 1e-05
    %v1225 = vadd.f32 %v1221, 1e-05
    %v1226 = vadd.f32 %v1222, 1e-05
    %v1227 = vadd.f32 %v1223, 1e-05
    %v1228 = vrsqrt.pop %v1224
    %v1229 = vrsqrt.pop %v1225
    %v1230 = vrsqrt.pop %v1226
    %v1231 = vrsqrt.pop %v1227
    %v1232 = vmul.f32 %v1200, %v1228
    %v1233 = vmul.f32 %v1201, %v1229
    %v1234 = vmul.f32 %v1202, %v1230
    %v1235 = vmul.f32 %v1203, %v1231
    %v1236 = vlaneseq
    %v1237 = vshrl.u32 %v1236, 7
    %v1238 = vsub.s32 4, %v1237
    %v1239 = vrot.slane %v250, %v1238
    %v1240 = vmul.f32 %v1232, %v1239
    %v1241 = vmul.f32 %v1233, %v1239
    %v1242 = vmul.f32 %v1234, %v1239
    %v1243 = vmul.f32 %v1235, %v1239
    %v1244 = vlaneseq
    %v1245 = vshrl.u32 %v1244, 7
    %v1246 = vsub.s32 5, %v1245
    %v1247 = vrot.slane %v250, %v1246
    %v1248 = vadd.f32 %v1240, %v1247
    %v1249 = vadd.f32 %v1241, %v1247
    %v1250 = vadd.f32 %v1242, %v1247
    %v1251 = vadd.f32 %v1243, %v1247
    %v1252 = vlaneseq
    %v1253 = vshrl.u32 %v1252, 7
    %v1254 = vsub.s32 6, %v1253
    %v1255 = vrot.slane %v250, %v1254
    %1256 = vrot.lane.b32.xlu0 %v240, 64
    %v1257 = vpop.permute.xlu0 %1256
    %1258 = vrot.lane.b32.xlu0 %v241, 64
    %v1259 = vpop.permute.xlu0 %1258
    %v1263 = vsel %vm170, %v1248, 0
    %v1266 = vsel %vm170, %v1249, 0
    %v1269 = vsel %vm170, %v1250, 0
    %v1272 = vsel %vm170, %v1251, 0
    %1274 = vmatprep.subr.mxu0 0.0
    %1275 = vmatpush1.msra.mxu0 %v1257
    %1276 = vmatprep.subr.mxu0 0.0
    %1277 = vmatpush1.msra.mxu0 %v1259
    %1278 = vmatprep.subr.mxu0 0.0
    %1279 = vmatpush1.msra.mxu0 0.0
    %1280 = vmatprep.subr.mxu0 0.0
    %1281 = vmatpush1.msra.mxu0 0.0
    %1282 = vmatprep.subr.mxu0 0.0
    %1283 = vmatpush1.msra.mxu0 0.0
    %1284 = vmatprep.subr.mxu0 0.0
    %1285 = vmatpush1.msra.mxu0 0.0
    %1286 = vmatprep.subr.mxu0 0.0
    %1287 = vmatpush1.msra.mxu0 0.0
    %1288 = vmatprep.subr.mxu0 0.0
    %1289 = vmatpush1.msra.mxu0 0.0
    %1290 = vmatprep.subr.mxu0 0.0
    %1291 = vmatpush1.msra.mxu0 0.0
    %1292 = vmatprep.subr.mxu0 0.0
    %1293 = vmatpush1.msra.mxu0 0.0
    %1294 = vmatprep.subr.mxu0 0.0
    %1295 = vmatpush1.msra.mxu0 0.0
    %1296 = vmatprep.subr.mxu0 0.0
    %1297 = vmatpush1.msra.mxu0 0.0
    %1298 = vmatprep.subr.mxu0 0.0
    %1299 = vmatpush1.msra.mxu0 0.0
    %1300 = vmatprep.subr.mxu0 0.0
    %1301 = vmatpush1.msra.mxu0 0.0
    %1302 = vmatprep.subr.mxu0 0.0
    %1303 = vmatpush1.msra.mxu0 0.0
    %1304 = vmatprep.subr.mxu0 0.0
    %1305 = vmatpush1.msra.mxu0 0.0
    %1306 = vmatprep.subr.mxu0 0.0
    %1307 = vmatpush1.msra.mxu0 0.0
    %1308 = vmatprep.subr.mxu0 0.0
    %1309 = vmatpush1.msra.mxu0 0.0
    %1310 = vmatprep.subr.mxu0 0.0
    %1311 = vmatpush1.msra.mxu0 0.0
    %1312 = vmatprep.subr.mxu0 0.0
    %1313 = vmatpush1.msra.mxu0 0.0
    %1314 = vmatprep.subr.mxu0 0.0
    %1315 = vmatpush1.msra.mxu0 0.0
    %1316 = vmatprep.subr.mxu0 0.0
    %1317 = vmatpush1.msra.mxu0 0.0
    %1318 = vmatprep.subr.mxu0 0.0
    %1319 = vmatpush1.msra.mxu0 0.0
    %1320 = vmatprep.subr.mxu0 0.0
    %1321 = vmatpush1.msra.mxu0 0.0
    %1322 = vmatprep.subr.mxu0 0.0
    %1323 = vmatpush1.msra.mxu0 0.0
    %1324 = vmatprep.subr.mxu0 0.0
    %1325 = vmatpush1.msra.mxu0 0.0
    %1326 = vmatprep.subr.mxu0 0.0
    %1327 = vmatpush1.msra.mxu0 0.0
    %1328 = vmatprep.subr.mxu0 0.0
    %1329 = vmatpush1.msra.mxu0 0.0
    %1330 = vmatprep.subr.mxu0 0.0
    %1331 = vmatpush1.msra.mxu0 0.0
    %1332 = vmatprep.subr.mxu0 0.0
    %1333 = vmatpush1.msra.mxu0 0.0
    %1334 = vmatprep.subr.mxu0 0.0
    %1335 = vmatpush1.msra.mxu0 0.0
    %1336 = vmatprep.subr.mxu0 0.0
    %1337 = vmatpush1.msra.mxu0 0.0
    %1338 = vmatprep.mubr.f32.mxu0 0.0
    %1339 = vmatmul.mubr.f32.gmra.mrb[0].mxu0 %v1263
    %v1340 = vpop.f32.mrb[0].mxu0
    %v1341 = vadd.f32 %v1255, %v1340
    %v1342 = vpop.f32.mrb[0].mxu0
    %1343 = vmatprep.mubr.f32.mxu0 0.0
    %1344 = vmatmul.mubr.f32.gmra.mrb[0].mxu0 %v1266
    %v1345 = vpop.f32.mrb[0].mxu0
    %v1346 = vadd.f32 %v1255, %v1345
    %v1347 = vpop.f32.mrb[0].mxu0
    %1348 = vmatprep.mubr.f32.mxu0 0.0
    %1349 = vmatmul.mubr.f32.gmra.mrb[0].mxu0 %v1269
    %v1350 = vpop.f32.mrb[0].mxu0
    %v1351 = vadd.f32 %v1255, %v1350
    %v1352 = vpop.f32.mrb[0].mxu0
    %1353 = vmatprep.mubr.f32.mxu0 0.0
    %1354 = vmatmul.mubr.f32.gmra.mrb[0].mxu0 %v1272
    %v1355 = vpop.f32.mrb[0].mxu0
    %v1356 = vadd.f32 %v1255, %v1355
    %v1357 = vpop.f32.mrb[0].mxu0
    %1358 = vdwg.mxu0
    %v1359 = vmul.f32 %v1341, 0.5
    %v1360 = vmul.f32 %v1346, 0.5
    %v1361 = vmul.f32 %v1351, 0.5
    %v1362 = vmul.f32 %v1356, 0.5
    %v1363 = vmul.f32 %v1341, 0.70710677
    %v1364 = vmul.f32 %v1346, 0.70710677
    %v1365 = vmul.f32 %v1351, 0.70710677
    %v1366 = vmul.f32 %v1356, 0.70710677
    %v1367 = vand.u32 2147483647, %v1363
    %v1368 = vand.u32 2147483647, %v1364
    %v1369 = vand.u32 2147483647, %v1365
    %v1370 = vand.u32 2147483647, %v1366
    %v1371 = vmul.f32 %v1367, 0.3275911
    %v1372 = vmul.f32 %v1368, 0.3275911
    %v1373 = vmul.f32 %v1369, 0.3275911
    %v1374 = vmul.f32 %v1370, 0.3275911
    %v1375 = vadd.f32 %v1371, 1.0
    %v1376 = vadd.f32 %v1372, 1.0
    %v1377 = vadd.f32 %v1373, 1.0
    %v1378 = vadd.f32 %v1374, 1.0
    %v1379 = vrcp.pop %v1375
    %v1380 = vmul.f32 1.0, %v1379
    %v1381 = vrcp.pop %v1376
    %v1382 = vmul.f32 1.0, %v1381
    %v1383 = vrcp.pop %v1377
    %v1384 = vmul.f32 1.0, %v1383
    %v1385 = vrcp.pop %v1378
    %v1386 = vmul.f32 1.0, %v1385
    %v1387 = vmul.f32 %v1380, 1.0614054
    %v1388 = vmul.f32 %v1382, 1.0614054
    %v1389 = vmul.f32 %v1384, 1.0614054
    %v1390 = vmul.f32 %v1386, 1.0614054
    %v1391 = vadd.f32 %v1387, -1.4531521
    %v1392 = vadd.f32 %v1388, -1.4531521
    %v1393 = vadd.f32 %v1389, -1.4531521
    %v1394 = vadd.f32 %v1390, -1.4531521
    %v1395 = vmul.f32 %v1391, %v1380
    %v1396 = vmul.f32 %v1392, %v1382
    %v1397 = vmul.f32 %v1393, %v1384
    %v1398 = vmul.f32 %v1394, %v1386
    %v1399 = vadd.f32 %v1395, 1.4214138
    %v1400 = vadd.f32 %v1396, 1.4214138
    %v1401 = vadd.f32 %v1397, 1.4214138
    %v1402 = vadd.f32 %v1398, 1.4214138
    %v1403 = vmul.f32 %v1399, %v1380
    %v1404 = vmul.f32 %v1400, %v1382
    %v1405 = vmul.f32 %v1401, %v1384
    %v1406 = vmul.f32 %v1402, %v1386
    %v1407 = vadd.f32 %v1403, -0.28449672
    %v1408 = vadd.f32 %v1404, -0.28449672
    %v1409 = vadd.f32 %v1405, -0.28449672
    %v1410 = vadd.f32 %v1406, -0.28449672
    %v1411 = vmul.f32 %v1407, %v1380
    %v1412 = vmul.f32 %v1408, %v1382
    %v1413 = vmul.f32 %v1409, %v1384
    %v1414 = vmul.f32 %v1410, %v1386
    %v1415 = vadd.f32 %v1411, 0.2548296
    %v1416 = vadd.f32 %v1412, 0.2548296
    %v1417 = vadd.f32 %v1413, 0.2548296
    %v1418 = vadd.f32 %v1414, 0.2548296
    %v1419 = vmul.f32 %v1415, %v1380
    %v1420 = vmul.f32 %v1416, %v1382
    %v1421 = vmul.f32 %v1417, %v1384
    %v1422 = vmul.f32 %v1418, %v1386
    %v1423 = vsub.f32 0.0, %v1367
    %v1424 = vsub.f32 0.0, %v1368
    %v1425 = vsub.f32 0.0, %v1369
    %v1426 = vsub.f32 0.0, %v1370
    %v1427 = vmul.f32 %v1423, %v1367
    %v1428 = vmul.f32 %v1424, %v1368
    %v1429 = vmul.f32 %v1425, %v1369
    %v1430 = vmul.f32 %v1426, %v1370
    %v1431 = vmul.f32 %v1427, 1.442695
    %v1432 = vpow.pop %v1431
    %v1433 = vmul.f32 %v1428, 1.442695
    %v1434 = vpow.pop %v1433
    %v1435 = vmul.f32 %v1429, 1.442695
    %v1436 = vpow.pop %v1435
    %v1437 = vmul.f32 %v1430, 1.442695
    %v1438 = vpow.pop %v1437
    %v1439 = vmul.f32 %v1419, %v1432
    %v1440 = vmul.f32 %v1420, %v1434
    %v1441 = vmul.f32 %v1421, %v1436
    %v1442 = vmul.f32 %v1422, %v1438
    %v1443 = vsub.f32 1.0, %v1439
    %v1444 = vsub.f32 1.0, %v1440
    %v1445 = vsub.f32 1.0, %v1441
    %v1446 = vsub.f32 1.0, %v1442
    %vm1447 = vcmp.ge.f32.partialorder %v1363, 0.0
    %vm1448 = vcmp.ge.f32.partialorder %v1364, 0.0
    %vm1449 = vcmp.ge.f32.partialorder %v1365, 0.0
    %vm1450 = vcmp.ge.f32.partialorder %v1366, 0.0
    %v1451 = vsub.f32 0.0, %v1443
    %v1452 = vsub.f32 0.0, %v1444
    %v1453 = vsub.f32 0.0, %v1445
    %v1454 = vsub.f32 0.0, %v1446
    %v1455 = vsel %vm1447, %v1443, %v1451
    %v1456 = vsel %vm1448, %v1444, %v1452
    %v1457 = vsel %vm1449, %v1445, %v1453
    %v1458 = vsel %vm1450, %v1446, %v1454
    %v1459 = vadd.f32 %v1455, 1.0
    %v1460 = vadd.f32 %v1456, 1.0
    %v1461 = vadd.f32 %v1457, 1.0
    %v1462 = vadd.f32 %v1458, 1.0
    %v1463 = vmul.f32 %v1359, %v1459
    %v1464 = vmul.f32 %v1360, %v1460
    %v1465 = vmul.f32 %v1361, %v1461
    %v1466 = vmul.f32 %v1362, %v1462
    %v1467 = vlaneseq
    %v1468 = vshrl.u32 %v1467, 7
    %v1469 = vsub.s32 7, %v1468
    %v1470 = vrot.slane %v250, %v1469
    %vm1471 = vcmask 523264
    %v1473 = vsel %vm1471, %v1463, 0
    %v1476 = vsel %vm1471, %v1464, 0
    %v1479 = vsel %vm1471, %v1465, 0
    %v1482 = vsel %vm1471, %v1466, 0
    %1484 = vmatprep.subr.mxu0 0.0
    %1485 = vmatpush1.msra.mxu0 %v242
    %1486 = vmatprep.subr.mxu0 0.0
    %1487 = vmatpush1.msra.mxu0 %v243
    %1488 = vmatprep.subr.mxu0 0.0
    %1489 = vmatpush1.msra.mxu0 %v244
    %1490 = vmatprep.subr.mxu0 0.0
    %1491 = vmatpush1.msra.mxu0 %v245
    %1492 = vmatprep.subr.mxu0 0.0
    %1493 = vmatpush1.msra.mxu0 %v246
    %1494 = vmatprep.subr.mxu0 0.0
    %1495 = vmatpush1.msra.mxu0 %v247
    %1496 = vmatprep.subr.mxu0 0.0
    %1497 = vmatpush1.msra.mxu0 %v248
    %1498 = vmatprep.subr.mxu0 0.0
    %1499 = vmatpush1.msra.mxu0 %v249
    %1500 = vmatprep.subr.mxu0 0.0
    %1501 = vmatpush1.msra.mxu0 0.0
    %1502 = vmatprep.subr.mxu0 0.0
    %1503 = vmatpush1.msra.mxu0 0.0
    %1504 = vmatprep.subr.mxu0 0.0
    %1505 = vmatpush1.msra.mxu0 0.0
    %1506 = vmatprep.subr.mxu0 0.0
    %1507 = vmatpush1.msra.mxu0 0.0
    %1508 = vmatprep.subr.mxu0 0.0
    %1509 = vmatpush1.msra.mxu0 0.0
    %1510 = vmatprep.subr.mxu0 0.0
    %1511 = vmatpush1.msra.mxu0 0.0
    %1512 = vmatprep.subr.mxu0 0.0
    %1513 = vmatpush1.msra.mxu0 0.0
    %1514 = vmatprep.subr.mxu0 0.0
    %1515 = vmatpush1.msra.mxu0 0.0
    %1516 = vmatprep.subr.mxu0 0.0
    %1517 = vmatpush1.msra.mxu0 0.0
    %1518 = vmatprep.subr.mxu0 0.0
    %1519 = vmatpush1.msra.mxu0 0.0
    %1520 = vmatprep.subr.mxu0 0.0
    %1521 = vmatpush1.msra.mxu0 0.0
    %1522 = vmatprep.subr.mxu0 0.0
    %1523 = vmatpush1.msra.mxu0 0.0
    %1524 = vmatprep.subr.mxu0 0.0
    %1525 = vmatpush1.msra.mxu0 0.0
    %1526 = vmatprep.subr.mxu0 0.0
    %1527 = vmatpush1.msra.mxu0 0.0
    %1528 = vmatprep.subr.mxu0 0.0
    %1529 = vmatpush1.msra.mxu0 0.0
    %1530 = vmatprep.subr.mxu0 0.0
    %1531 = vmatpush1.msra.mxu0 0.0
    %1532 = vmatprep.subr.mxu0 0.0
    %1533 = vmatpush1.msra.mxu0 0.0
    %1534 = vmatprep.subr.mxu0 0.0
    %1535 = vmatpush1.msra.mxu0 0.0
    %1536 = vmatprep.subr.mxu0 0.0
    %1537 = vmatpush1.msra.mxu0 0.0
    %1538 = vmatprep.subr.mxu0 0.0
    %1539 = vmatpush1.msra.mxu0 0.0
    %1540 = vmatprep.subr.mxu0 0.0
    %1541 = vmatpush1.msra.mxu0 0.0
    %1542 = vmatprep.subr.mxu0 0.0
    %1543 = vmatpush1.msra.mxu0 0.0
    %1544 = vmatprep.subr.mxu0 0.0
    %1545 = vmatpush1.msra.mxu0 0.0
    %1546 = vmatprep.subr.mxu0 0.0
    %1547 = vmatpush1.msra.mxu0 0.0
    %1548 = vmatprep.mubr.f32.mxu0 0.0
    %1549 = vmatmul.mubr.f32.gmra.mrb[0].mxu0 %v1473
    %v1550 = vpop.f32.mrb[0].mxu0
    %v1551 = vadd.f32 %v1470, %v1550
    %v1552 = vpop.f32.mrb[0].mxu0
    %1553 = vmatprep.mubr.f32.mxu0 0.0
    %1554 = vmatmul.mubr.f32.gmra.mrb[0].mxu0 %v1476
    %v1555 = vpop.f32.mrb[0].mxu0
    %v1556 = vadd.f32 %v1470, %v1555
    %v1557 = vpop.f32.mrb[0].mxu0
    %1558 = vmatprep.mubr.f32.mxu0 0.0
    %1559 = vmatmul.mubr.f32.gmra.mrb[0].mxu0 %v1479
    %v1560 = vpop.f32.mrb[0].mxu0
    %v1561 = vadd.f32 %v1470, %v1560
    %v1562 = vpop.f32.mrb[0].mxu0
    %1563 = vmatprep.mubr.f32.mxu0 0.0
    %1564 = vmatmul.mubr.f32.gmra.mrb[0].mxu0 %v1482
    %v1565 = vpop.f32.mrb[0].mxu0
    %v1566 = vadd.f32 %v1470, %v1565
    %v1567 = vpop.f32.mrb[0].mxu0
    %1568 = vdwg.mxu0
    %v1569 = vadd.f32 %v1180, %v1551
    %v1570 = vadd.f32 %v1181, %v1556
    %v1571 = vadd.f32 %v1182, %v1561
    %v1572 = vadd.f32 %v1183, %v1566
    %s1573 = scalar_lea.vmem %s3, 16
    %v1574 = vld [vmem:[%s1573] sm:$0xff]
    %v1575 = vld [vmem:[%s1573 + $0x8] sm:$0xff]
    %s1576 = scalar_lea.vmem %s4, 64
    %v1577 = vld [vmem:[%s1576] sm:$0xff]
    %v1578 = vld [vmem:[%s1576 + $0x8] sm:$0xff]
    %v1579 = vld [vmem:[%s1576 + $0x10] sm:$0xff]
    %v1580 = vld [vmem:[%s1576 + $0x18] sm:$0xff]
    %v1581 = vld [vmem:[%s1576 + $0x20] sm:$0xff]
    %v1582 = vld [vmem:[%s1576 + $0x28] sm:$0xff]
    %v1583 = vld [vmem:[%s1576 + $0x30] sm:$0xff]
    %v1584 = vld [vmem:[%s1576 + $0x38] sm:$0xff]
    %s1585 = scalar_lea.vmem %s5, 8
    %v1586 = vld [vmem:[%s1585] sm:$0xff]
    %s1587 = scalar_lea.vmem %s6, 64
    %v1588 = vld [vmem:[%s1587] sm:$0xff]
    %v1589 = vld [vmem:[%s1587 + $0x8] sm:$0xff]
    %v1590 = vld [vmem:[%s1587 + $0x10] sm:$0xff]
    %v1591 = vld [vmem:[%s1587 + $0x18] sm:$0xff]
    %v1592 = vld [vmem:[%s1587 + $0x20] sm:$0xff]
    %v1593 = vld [vmem:[%s1587 + $0x28] sm:$0xff]
    %v1594 = vld [vmem:[%s1587 + $0x30] sm:$0xff]
    %v1595 = vld [vmem:[%s1587 + $0x38] sm:$0xff]
    %v1596 = vsel %vm170, %v1569, 0.0
    %1597 = vadd.xlane.f32.xlu0 %v1596
    %v1598 = vpop.xlane.xlu0 %1597
    %v1599 = vsel %vm170, %v1570, 0.0
    %1600 = vadd.xlane.f32.xlu0 %v1599
    %v1601 = vpop.xlane.xlu0 %1600
    %v1602 = vsel %vm170, %v1571, 0.0
    %1603 = vadd.xlane.f32.xlu0 %v1602
    %v1604 = vpop.xlane.xlu0 %1603
    %v1605 = vsel %vm170, %v1572, 0.0
    %1606 = vadd.xlane.f32.xlu0 %v1605
    %v1607 = vpop.xlane.xlu0 %1606
    %v1608 = vmul.f32 %v1598, %v183
    %v1609 = vmul.f32 %v1601, %v183
    %v1610 = vmul.f32 %v1604, %v183
    %v1611 = vmul.f32 %v1607, %v183
    %v1612 = vsub.f32 %v1569, %v1608
    %v1613 = vsub.f32 %v1570, %v1609
    %v1614 = vsub.f32 %v1571, %v1610
    %v1615 = vsub.f32 %v1572, %v1611
    %v1616 = vmul.f32 %v1612, %v1612
    %v1617 = vmul.f32 %v1613, %v1613
    %v1618 = vmul.f32 %v1614, %v1614
    %v1619 = vmul.f32 %v1615, %v1615
    %v1620 = vsel %vm170, %v1616, 0.0
    %1621 = vadd.xlane.f32.xlu0 %v1620
    %v1622 = vpop.xlane.xlu0 %1621
    %v1623 = vsel %vm170, %v1617, 0.0
    %1624 = vadd.xlane.f32.xlu0 %v1623
    %v1625 = vpop.xlane.xlu0 %1624
    %v1626 = vsel %vm170, %v1618, 0.0
    %1627 = vadd.xlane.f32.xlu0 %v1626
    %v1628 = vpop.xlane.xlu0 %1627
    %v1629 = vsel %vm170, %v1619, 0.0
    %1630 = vadd.xlane.f32.xlu0 %v1629
    %v1631 = vpop.xlane.xlu0 %1630
    %v1632 = vmul.f32 %v1622, %v183
    %v1633 = vmul.f32 %v1625, %v183
    %v1634 = vmul.f32 %v1628, %v183
    %v1635 = vmul.f32 %v1631, %v183
    %v1636 = vadd.f32 %v1632, 1e-05
    %v1637 = vadd.f32 %v1633, 1e-05
    %v1638 = vadd.f32 %v1634, 1e-05
    %v1639 = vadd.f32 %v1635, 1e-05
    %v1640 = vrsqrt.pop %v1636
    %v1641 = vrsqrt.pop %v1637
    %v1642 = vrsqrt.pop %v1638
    %v1643 = vrsqrt.pop %v1639
    %v1644 = vmul.f32 %v1612, %v1640
    %v1645 = vmul.f32 %v1613, %v1641
    %v1646 = vmul.f32 %v1614, %v1642
    %v1647 = vmul.f32 %v1615, %v1643
    %v1648 = vlaneseq
    %v1649 = vshrl.u32 %v1648, 7
    %v1650 = vsub.s32 0, %v1649
    %v1651 = vrot.slane %v1586, %v1650
    %v1652 = vmul.f32 %v1644, %v1651
    %v1653 = vmul.f32 %v1645, %v1651
    %v1654 = vmul.f32 %v1646, %v1651
    %v1655 = vmul.f32 %v1647, %v1651
    %v1656 = vlaneseq
    %v1657 = vshrl.u32 %v1656, 7
    %v1658 = vsub.s32 1, %v1657
    %v1659 = vrot.slane %v1586, %v1658
    %v1660 = vadd.f32 %v1652, %v1659
    %v1661 = vadd.f32 %v1653, %v1659
    %v1662 = vadd.f32 %v1654, %v1659
    %v1663 = vadd.f32 %v1655, %v1659
    %v1664 = vlaneseq
    %v1665 = vshrl.u32 %v1664, 7
    %v1666 = vsub.s32 2, %v1665
    %v1667 = vrot.slane %v1586, %v1666
    %v1669 = vsel %vm170, %v1660, 0
    %v1672 = vsel %vm170, %v1661, 0
    %v1675 = vsel %vm170, %v1662, 0
    %v1678 = vsel %vm170, %v1663, 0
    %1680 = vmatprep.subr.mxu0 0.0
    %1681 = vmatpush1.msra.mxu0 %v1574
    %1682 = vmatprep.subr.mxu0 0.0
    %1683 = vmatpush1.msra.mxu0 %v1575
    %1684 = vmatprep.subr.mxu0 0.0
    %1685 = vmatpush1.msra.mxu0 0.0
    %1686 = vmatprep.subr.mxu0 0.0
    %1687 = vmatpush1.msra.mxu0 0.0
    %1688 = vmatprep.subr.mxu0 0.0
    %1689 = vmatpush1.msra.mxu0 0.0
    %1690 = vmatprep.subr.mxu0 0.0
    %1691 = vmatpush1.msra.mxu0 0.0
    %1692 = vmatprep.subr.mxu0 0.0
    %1693 = vmatpush1.msra.mxu0 0.0
    %1694 = vmatprep.subr.mxu0 0.0
    %1695 = vmatpush1.msra.mxu0 0.0
    %1696 = vmatprep.subr.mxu0 0.0
    %1697 = vmatpush1.msra.mxu0 0.0
    %1698 = vmatprep.subr.mxu0 0.0
    %1699 = vmatpush1.msra.mxu0 0.0
    %1700 = vmatprep.subr.mxu0 0.0
    %1701 = vmatpush1.msra.mxu0 0.0
    %1702 = vmatprep.subr.mxu0 0.0
    %1703 = vmatpush1.msra.mxu0 0.0
    %1704 = vmatprep.subr.mxu0 0.0
    %1705 = vmatpush1.msra.mxu0 0.0
    %1706 = vmatprep.subr.mxu0 0.0
    %1707 = vmatpush1.msra.mxu0 0.0
    %1708 = vmatprep.subr.mxu0 0.0
    %1709 = vmatpush1.msra.mxu0 0.0
    %1710 = vmatprep.subr.mxu0 0.0
    %1711 = vmatpush1.msra.mxu0 0.0
    %1712 = vmatprep.subr.mxu0 0.0
    %1713 = vmatpush1.msra.mxu0 0.0
    %1714 = vmatprep.subr.mxu0 0.0
    %1715 = vmatpush1.msra.mxu0 0.0
    %1716 = vmatprep.subr.mxu0 0.0
    %1717 = vmatpush1.msra.mxu0 0.0
    %1718 = vmatprep.subr.mxu0 0.0
    %1719 = vmatpush1.msra.mxu0 0.0
    %1720 = vmatprep.subr.mxu0 0.0
    %1721 = vmatpush1.msra.mxu0 0.0
    %1722 = vmatprep.subr.mxu0 0.0
    %1723 = vmatpush1.msra.mxu0 0.0
    %1724 = vmatprep.subr.mxu0 0.0
    %1725 = vmatpush1.msra.mxu0 0.0
    %1726 = vmatprep.subr.mxu0 0.0
    %1727 = vmatpush1.msra.mxu0 0.0
    %1728 = vmatprep.subr.mxu0 0.0
    %1729 = vmatpush1.msra.mxu0 0.0
    %1730 = vmatprep.subr.mxu0 0.0
    %1731 = vmatpush1.msra.mxu0 0.0
    %1732 = vmatprep.subr.mxu0 0.0
    %1733 = vmatpush1.msra.mxu0 0.0
    %1734 = vmatprep.subr.mxu0 0.0
    %1735 = vmatpush1.msra.mxu0 0.0
    %1736 = vmatprep.subr.mxu0 0.0
    %1737 = vmatpush1.msra.mxu0 0.0
    %1738 = vmatprep.subr.mxu0 0.0
    %1739 = vmatpush1.msra.mxu0 0.0
    %1740 = vmatprep.subr.mxu0 0.0
    %1741 = vmatpush1.msra.mxu0 0.0
    %1742 = vmatprep.subr.mxu0 0.0
    %1743 = vmatpush1.msra.mxu0 0.0
    %1744 = vmatprep.mubr.f32.mxu0 0.0
    %1745 = vmatmul.mubr.f32.gmra.mrb[0].mxu0 %v1669
    %v1746 = vpop.f32.mrb[0].mxu0
    %v1747 = vadd.f32 %v1667, %v1746
    %v1748 = vpop.f32.mrb[0].mxu0
    %1749 = vmatprep.mubr.f32.mxu0 0.0
    %1750 = vmatmul.mubr.f32.gmra.mrb[0].mxu0 %v1672
    %v1751 = vpop.f32.mrb[0].mxu0
    %v1752 = vadd.f32 %v1667, %v1751
    %v1753 = vpop.f32.mrb[0].mxu0
    %1754 = vmatprep.mubr.f32.mxu0 0.0
    %1755 = vmatmul.mubr.f32.gmra.mrb[0].mxu0 %v1675
    %v1756 = vpop.f32.mrb[0].mxu0
    %v1757 = vadd.f32 %v1667, %v1756
    %v1758 = vpop.f32.mrb[0].mxu0
    %1759 = vmatprep.mubr.f32.mxu0 0.0
    %1760 = vmatmul.mubr.f32.gmra.mrb[0].mxu0 %v1678
    %v1761 = vpop.f32.mrb[0].mxu0
    %v1762 = vadd.f32 %v1667, %v1761
    %v1763 = vpop.f32.mrb[0].mxu0
    %1764 = vdwg.mxu0
    %1769 = vrot.lane.b32.xlu0 %v1747, 112
    %v1770 = vpop.permute.xlu0 %1769
    %1771 = vrot.lane.b32.xlu0 %v1752, 112
    %v1772 = vpop.permute.xlu0 %1771
    %1773 = vrot.lane.b32.xlu0 %v1757, 112
    %v1774 = vpop.permute.xlu0 %1773
    %1775 = vrot.lane.b32.xlu0 %v1762, 112
    %v1776 = vpop.permute.xlu0 %1775
    %v1777 = vsel %vm440, %v1747, 0
    %v1779 = vsel %vm440, %v1752, 0
    %v1781 = vsel %vm440, %v1757, 0
    %v1783 = vsel %vm440, %v1762, 0
    %v1785 = vsel %vm440, %v1770, 0
    %v1787 = vsel %vm440, %v1772, 0
    %v1789 = vsel %vm440, %v1774, 0
    %v1791 = vsel %vm440, %v1776, 0
    %1793 = vmatprep.subr.mxu0 0.0
    %1794 = vmatpush1.xpose.msra.mxu0 %v1785
    %1795 = vmatprep.subr.mxu0 0.0
    %1796 = vmatpush1.xpose.msra.mxu0 %v1787
    %1797 = vmatprep.subr.mxu0 0.0
    %1798 = vmatpush1.xpose.msra.mxu0 %v1789
    %1799 = vmatprep.subr.mxu0 0.0
    %1800 = vmatpush1.xpose.msra.mxu0 %v1791
    %1801 = vmatprep.subr.mxu0 0.0
    %1802 = vmatpush1.xpose.msra.mxu0 0.0
    %1803 = vmatprep.subr.mxu0 0.0
    %1804 = vmatpush1.xpose.msra.mxu0 0.0
    %1805 = vmatprep.subr.mxu0 0.0
    %1806 = vmatpush1.xpose.msra.mxu0 0.0
    %1807 = vmatprep.subr.mxu0 0.0
    %1808 = vmatpush1.xpose.msra.mxu0 0.0
    %1809 = vmatprep.subr.mxu0 0.0
    %1810 = vmatpush1.xpose.msra.mxu0 0.0
    %1811 = vmatprep.subr.mxu0 0.0
    %1812 = vmatpush1.xpose.msra.mxu0 0.0
    %1813 = vmatprep.subr.mxu0 0.0
    %1814 = vmatpush1.xpose.msra.mxu0 0.0
    %1815 = vmatprep.subr.mxu0 0.0
    %1816 = vmatpush1.xpose.msra.mxu0 0.0
    %1817 = vmatprep.subr.mxu0 0.0
    %1818 = vmatpush1.xpose.msra.mxu0 0.0
    %1819 = vmatprep.subr.mxu0 0.0
    %1820 = vmatpush1.xpose.msra.mxu0 0.0
    %1821 = vmatprep.subr.mxu0 0.0
    %1822 = vmatpush1.xpose.msra.mxu0 0.0
    %1823 = vmatprep.subr.mxu0 0.0
    %1824 = vmatpush1.xpose.msra.mxu0 0.0
    %1825 = vmatprep.subr.mxu0 0.0
    %1826 = vmatpush1.xpose.msra.mxu0 0.0
    %1827 = vmatprep.subr.mxu0 0.0
    %1828 = vmatpush1.xpose.msra.mxu0 0.0
    %1829 = vmatprep.subr.mxu0 0.0
    %1830 = vmatpush1.xpose.msra.mxu0 0.0
    %1831 = vmatprep.subr.mxu0 0.0
    %1832 = vmatpush1.xpose.msra.mxu0 0.0
    %1833 = vmatprep.subr.mxu0 0.0
    %1834 = vmatpush1.xpose.msra.mxu0 0.0
    %1835 = vmatprep.subr.mxu0 0.0
    %1836 = vmatpush1.xpose.msra.mxu0 0.0
    %1837 = vmatprep.subr.mxu0 0.0
    %1838 = vmatpush1.xpose.msra.mxu0 0.0
    %1839 = vmatprep.subr.mxu0 0.0
    %1840 = vmatpush1.xpose.msra.mxu0 0.0
    %1841 = vmatprep.subr.mxu0 0.0
    %1842 = vmatpush1.xpose.msra.mxu0 0.0
    %1843 = vmatprep.subr.mxu0 0.0
    %1844 = vmatpush1.xpose.msra.mxu0 0.0
    %1845 = vmatprep.subr.mxu0 0.0
    %1846 = vmatpush1.xpose.msra.mxu0 0.0
    %1847 = vmatprep.subr.mxu0 0.0
    %1848 = vmatpush1.xpose.msra.mxu0 0.0
    %1849 = vmatprep.subr.mxu0 0.0
    %1850 = vmatpush1.xpose.msra.mxu0 0.0
    %1851 = vmatprep.subr.mxu0 0.0
    %1852 = vmatpush1.xpose.msra.mxu0 0.0
    %1853 = vmatprep.subr.mxu0 0.0
    %1854 = vmatpush1.xpose.msra.mxu0 0.0
    %1855 = vmatprep.subr.mxu0 0.0
    %1856 = vmatpush1.xpose.msra.mxu0 0.0
    %1857 = vmatprep.mubr.f32.mxu0 0.0
    %1858 = vmatmul.mubr.f32.gmra.mrb[0].mxu0 %v1777
    %v1859 = vpop.f32.mrb[0].mxu0
    %v1860 = vadd.f32 %v1588, %v1859
    %v1861 = vpop.f32.mrb[0].mxu0
    %1862 = vmatprep.mubr.f32.mxu0 0.0
    %1863 = vmatmul.mubr.f32.gmra.mrb[0].mxu0 %v1779
    %v1864 = vpop.f32.mrb[0].mxu0
    %v1865 = vadd.f32 %v1589, %v1864
    %v1866 = vpop.f32.mrb[0].mxu0
    %1867 = vmatprep.mubr.f32.mxu0 0.0
    %1868 = vmatmul.mubr.f32.gmra.mrb[0].mxu0 %v1781
    %v1869 = vpop.f32.mrb[0].mxu0
    %v1870 = vadd.f32 %v1590, %v1869
    %v1871 = vpop.f32.mrb[0].mxu0
    %1872 = vmatprep.mubr.f32.mxu0 0.0
    %1873 = vmatmul.mubr.f32.gmra.mrb[0].mxu0 %v1783
    %v1874 = vpop.f32.mrb[0].mxu0
    %v1875 = vadd.f32 %v1591, %v1874
    %v1876 = vpop.f32.mrb[0].mxu0
    %1877 = vdwg.mxu0
    %v1878 = vsel %vm542, %v1860, -inf
    %1879 = vmax.xlane.f32.xlu0 %v1878
    %v1880 = vpop.xlane.xlu0 %1879
    %v1881 = vsel %vm542, %v1865, -inf
    %1882 = vmax.xlane.f32.xlu0 %v1881
    %v1883 = vpop.xlane.xlu0 %1882
    %v1884 = vsel %vm542, %v1870, -inf
    %1885 = vmax.xlane.f32.xlu0 %v1884
    %v1886 = vpop.xlane.xlu0 %1885
    %v1887 = vsel %vm542, %v1875, -inf
    %1888 = vmax.xlane.f32.xlu0 %v1887
    %v1889 = vpop.xlane.xlu0 %1888
    %v1890 = vsub.f32 %v1860, %v1880
    %v1891 = vsub.f32 %v1865, %v1883
    %v1892 = vsub.f32 %v1870, %v1886
    %v1893 = vsub.f32 %v1875, %v1889
    %v1894 = vmul.f32 %v1890, 1.442695
    %v1895 = vpow.pop %v1894
    %v1896 = vmul.f32 %v1891, 1.442695
    %v1897 = vpow.pop %v1896
    %v1898 = vmul.f32 %v1892, 1.442695
    %v1899 = vpow.pop %v1898
    %v1900 = vmul.f32 %v1893, 1.442695
    %v1901 = vpow.pop %v1900
    %v1902 = vsel %vm542, %v1895, 0.0
    %1903 = vadd.xlane.f32.xlu0 %v1902
    %v1904 = vpop.xlane.xlu0 %1903
    %v1905 = vsel %vm542, %v1897, 0.0
    %1906 = vadd.xlane.f32.xlu0 %v1905
    %v1907 = vpop.xlane.xlu0 %1906
    %v1908 = vsel %vm542, %v1899, 0.0
    %1909 = vadd.xlane.f32.xlu0 %v1908
    %v1910 = vpop.xlane.xlu0 %1909
    %v1911 = vsel %vm542, %v1901, 0.0
    %1912 = vadd.xlane.f32.xlu0 %v1911
    %v1913 = vpop.xlane.xlu0 %1912
    %v1914 = vrcp.pop %v1904
    %v1915 = vrcp.pop %v1907
    %v1916 = vrcp.pop %v1910
    %v1917 = vrcp.pop %v1913
    %v1918 = vmul.f32 %v1895, %v1914
    %v1919 = vmul.f32 %v1897, %v1915
    %v1920 = vmul.f32 %v1899, %v1916
    %v1921 = vmul.f32 %v1901, %v1917
    %1922 = vrot.lane.b32.xlu0 %v1747, 96
    %v1923 = vpop.permute.xlu0 %1922
    %1924 = vrot.lane.b32.xlu0 %v1752, 96
    %v1925 = vpop.permute.xlu0 %1924
    %1926 = vrot.lane.b32.xlu0 %v1757, 96
    %v1927 = vpop.permute.xlu0 %1926
    %1928 = vrot.lane.b32.xlu0 %v1762, 96
    %v1929 = vpop.permute.xlu0 %1928
    %v1935 = vsel %vm542, %v1918, 0
    %v1938 = vsel %vm542, %v1919, 0
    %v1941 = vsel %vm542, %v1920, 0
    %v1944 = vsel %vm542, %v1921, 0
    %1946 = vmatprep.subr.mxu0 0.0
    %1947 = vmatpush1.msra.mxu0 %v1923
    %1948 = vmatprep.subr.mxu0 0.0
    %1949 = vmatpush1.msra.mxu0 %v1925
    %1950 = vmatprep.subr.mxu0 0.0
    %1951 = vmatpush1.msra.mxu0 %v1927
    %1952 = vmatprep.subr.mxu0 0.0
    %1953 = vmatpush1.msra.mxu0 %v1929
    %1954 = vmatprep.subr.mxu0 0.0
    %1955 = vmatpush1.msra.mxu0 0.0
    %1956 = vmatprep.subr.mxu0 0.0
    %1957 = vmatpush1.msra.mxu0 0.0
    %1958 = vmatprep.subr.mxu0 0.0
    %1959 = vmatpush1.msra.mxu0 0.0
    %1960 = vmatprep.subr.mxu0 0.0
    %1961 = vmatpush1.msra.mxu0 0.0
    %1962 = vmatprep.subr.mxu0 0.0
    %1963 = vmatpush1.msra.mxu0 0.0
    %1964 = vmatprep.subr.mxu0 0.0
    %1965 = vmatpush1.msra.mxu0 0.0
    %1966 = vmatprep.subr.mxu0 0.0
    %1967 = vmatpush1.msra.mxu0 0.0
    %1968 = vmatprep.subr.mxu0 0.0
    %1969 = vmatpush1.msra.mxu0 0.0
    %1970 = vmatprep.subr.mxu0 0.0
    %1971 = vmatpush1.msra.mxu0 0.0
    %1972 = vmatprep.subr.mxu0 0.0
    %1973 = vmatpush1.msra.mxu0 0.0
    %1974 = vmatprep.subr.mxu0 0.0
    %1975 = vmatpush1.msra.mxu0 0.0
    %1976 = vmatprep.subr.mxu0 0.0
    %1977 = vmatpush1.msra.mxu0 0.0
    %1978 = vmatprep.subr.mxu0 0.0
    %1979 = vmatpush1.msra.mxu0 0.0
    %1980 = vmatprep.subr.mxu0 0.0
    %1981 = vmatpush1.msra.mxu0 0.0
    %1982 = vmatprep.subr.mxu0 0.0
    %1983 = vmatpush1.msra.mxu0 0.0
    %1984 = vmatprep.subr.mxu0 0.0
    %1985 = vmatpush1.msra.mxu0 0.0
    %1986 = vmatprep.subr.mxu0 0.0
    %1987 = vmatpush1.msra.mxu0 0.0
    %1988 = vmatprep.subr.mxu0 0.0
    %1989 = vmatpush1.msra.mxu0 0.0
    %1990 = vmatprep.subr.mxu0 0.0
    %1991 = vmatpush1.msra.mxu0 0.0
    %1992 = vmatprep.subr.mxu0 0.0
    %1993 = vmatpush1.msra.mxu0 0.0
    %1994 = vmatprep.subr.mxu0 0.0
    %1995 = vmatpush1.msra.mxu0 0.0
    %1996 = vmatprep.subr.mxu0 0.0
    %1997 = vmatpush1.msra.mxu0 0.0
    %1998 = vmatprep.subr.mxu0 0.0
    %1999 = vmatpush1.msra.mxu0 0.0
    %2000 = vmatprep.subr.mxu0 0.0
    %2001 = vmatpush1.msra.mxu0 0.0
    %2002 = vmatprep.subr.mxu0 0.0
    %2003 = vmatpush1.msra.mxu0 0.0
    %2004 = vmatprep.subr.mxu0 0.0
    %2005 = vmatpush1.msra.mxu0 0.0
    %2006 = vmatprep.subr.mxu0 0.0
    %2007 = vmatpush1.msra.mxu0 0.0
    %2008 = vmatprep.subr.mxu0 0.0
    %2009 = vmatpush1.msra.mxu0 0.0
    %2010 = vmatprep.mubr.f32.mxu0 0.0
    %2011 = vmatmul.mubr.f32.gmra.mrb[0].mxu0 %v1935
    %v2012 = vpop.f32.mrb[0].mxu0
    %v2013 = vadd.f32 0.0, %v2012
    %v2014 = vpop.f32.mrb[0].mxu0
    %2015 = vmatprep.mubr.f32.mxu0 0.0
    %2016 = vmatmul.mubr.f32.gmra.mrb[0].mxu0 %v1938
    %v2017 = vpop.f32.mrb[0].mxu0
    %v2018 = vadd.f32 0.0, %v2017
    %v2019 = vpop.f32.mrb[0].mxu0
    %2020 = vmatprep.mubr.f32.mxu0 0.0
    %2021 = vmatmul.mubr.f32.gmra.mrb[0].mxu0 %v1941
    %v2022 = vpop.f32.mrb[0].mxu0
    %v2023 = vadd.f32 0.0, %v2022
    %v2024 = vpop.f32.mrb[0].mxu0
    %2025 = vmatprep.mubr.f32.mxu0 0.0
    %2026 = vmatmul.mubr.f32.gmra.mrb[0].mxu0 %v1944
    %v2027 = vpop.f32.mrb[0].mxu0
    %v2028 = vadd.f32 0.0, %v2027
    %v2029 = vpop.f32.mrb[0].mxu0
    %2030 = vdwg.mxu0
    %2032 = vrot.lane.b32.xlu0 %v1574, 80
    %v2033 = vpop.permute.xlu0 %2032
    %v2036 = vsel %vm440, %v2013, 0
    %v2039 = vsel %vm440, %v2018, 0
    %v2042 = vsel %vm440, %v2023, 0
    %v2045 = vsel %vm440, %v2028, 0
    %2047 = vmatprep.subr.mxu0 0.0
    %2048 = vmatpush1.msra.mxu0 %v2033
    %2049 = vmatprep.subr.mxu0 0.0
    %2050 = vmatpush1.msra.mxu0 0.0
    %2051 = vmatprep.subr.mxu0 0.0
    %2052 = vmatpush1.msra.mxu0 0.0
    %2053 = vmatprep.subr.mxu0 0.0
    %2054 = vmatpush1.msra.mxu0 0.0
    %2055 = vmatprep.subr.mxu0 0.0
    %2056 = vmatpush1.msra.mxu0 0.0
    %2057 = vmatprep.subr.mxu0 0.0
    %2058 = vmatpush1.msra.mxu0 0.0
    %2059 = vmatprep.subr.mxu0 0.0
    %2060 = vmatpush1.msra.mxu0 0.0
    %2061 = vmatprep.subr.mxu0 0.0
    %2062 = vmatpush1.msra.mxu0 0.0
    %2063 = vmatprep.subr.mxu0 0.0
    %2064 = vmatpush1.msra.mxu0 0.0
    %2065 = vmatprep.subr.mxu0 0.0
    %2066 = vmatpush1.msra.mxu0 0.0
    %2067 = vmatprep.subr.mxu0 0.0
    %2068 = vmatpush1.msra.mxu0 0.0
    %2069 = vmatprep.subr.mxu0 0.0
    %2070 = vmatpush1.msra.mxu0 0.0
    %2071 = vmatprep.subr.mxu0 0.0
    %2072 = vmatpush1.msra.mxu0 0.0
    %2073 = vmatprep.subr.mxu0 0.0
    %2074 = vmatpush1.msra.mxu0 0.0
    %2075 = vmatprep.subr.mxu0 0.0
    %2076 = vmatpush1.msra.mxu0 0.0
    %2077 = vmatprep.subr.mxu0 0.0
    %2078 = vmatpush1.msra.mxu0 0.0
    %2079 = vmatprep.subr.mxu0 0.0
    %2080 = vmatpush1.msra.mxu0 0.0
    %2081 = vmatprep.subr.mxu0 0.0
    %2082 = vmatpush1.msra.mxu0 0.0
    %2083 = vmatprep.subr.mxu0 0.0
    %2084 = vmatpush1.msra.mxu0 0.0
    %2085 = vmatprep.subr.mxu0 0.0
    %2086 = vmatpush1.msra.mxu0 0.0
    %2087 = vmatprep.subr.mxu0 0.0
    %2088 = vmatpush1.msra.mxu0 0.0
    %2089 = vmatprep.subr.mxu0 0.0
    %2090 = vmatpush1.msra.mxu0 0.0
    %2091 = vmatprep.subr.mxu0 0.0
    %2092 = vmatpush1.msra.mxu0 0.0
    %2093 = vmatprep.subr.mxu0 0.0
    %2094 = vmatpush1.msra.mxu0 0.0
    %2095 = vmatprep.subr.mxu0 0.0
    %2096 = vmatpush1.msra.mxu0 0.0
    %2097 = vmatprep.subr.mxu0 0.0
    %2098 = vmatpush1.msra.mxu0 0.0
    %2099 = vmatprep.subr.mxu0 0.0
    %2100 = vmatpush1.msra.mxu0 0.0
    %2101 = vmatprep.subr.mxu0 0.0
    %2102 = vmatpush1.msra.mxu0 0.0
    %2103 = vmatprep.subr.mxu0 0.0
    %2104 = vmatpush1.msra.mxu0 0.0
    %2105 = vmatprep.subr.mxu0 0.0
    %2106 = vmatpush1.msra.mxu0 0.0
    %2107 = vmatprep.subr.mxu0 0.0
    %2108 = vmatpush1.msra.mxu0 0.0
    %2109 = vmatprep.subr.mxu0 0.0
    %2110 = vmatpush1.msra.mxu0 0.0
    %2111 = vmatprep.mubr.f32.mxu0 0.0
    %2112 = vmatmul.mubr.f32.gmra.mrb[0].mxu0 %v2036
    %v2113 = vpop.f32.mrb[0].mxu0
    %v2114 = vadd.f32 0.0, %v2113
    %v2115 = vpop.f32.mrb[0].mxu0
    %2116 = vmatprep.mubr.f32.mxu0 0.0
    %2117 = vmatmul.mubr.f32.gmra.mrb[0].mxu0 %v2039
    %v2118 = vpop.f32.mrb[0].mxu0
    %v2119 = vadd.f32 0.0, %v2118
    %v2120 = vpop.f32.mrb[0].mxu0
    %2121 = vmatprep.mubr.f32.mxu0 0.0
    %2122 = vmatmul.mubr.f32.gmra.mrb[0].mxu0 %v2042
    %v2123 = vpop.f32.mrb[0].mxu0
    %v2124 = vadd.f32 0.0, %v2123
    %v2125 = vpop.f32.mrb[0].mxu0
    %2126 = vmatprep.mubr.f32.mxu0 0.0
    %2127 = vmatmul.mubr.f32.gmra.mrb[0].mxu0 %v2045
    %v2128 = vpop.f32.mrb[0].mxu0
    %v2129 = vadd.f32 0.0, %v2128
    %v2130 = vpop.f32.mrb[0].mxu0
    %2131 = vdwg.mxu0
    %v2132 = vlaneseq
    %v2133 = vshrl.u32 %v2132, 7
    %v2134 = vsub.s32 3, %v2133
    %v2135 = vrot.slane %v1586, %v2134
    %v2136 = vadd.f32 %v2135, %v2114
    %v2137 = vadd.f32 %v2135, %v2119
    %v2138 = vadd.f32 %v2135, %v2124
    %v2139 = vadd.f32 %v2135, %v2129
    %2140 = vrot.lane.b32.xlu0 %v1747, 120
    %v2141 = vpop.permute.xlu0 %2140
    %2142 = vrot.lane.b32.xlu0 %v1752, 120
    %v2143 = vpop.permute.xlu0 %2142
    %2144 = vrot.lane.b32.xlu0 %v1757, 120
    %v2145 = vpop.permute.xlu0 %2144
    %2146 = vrot.lane.b32.xlu0 %v1762, 120
    %v2147 = vpop.permute.xlu0 %2146
    %2148 = vrot.lane.b32.xlu0 %v1747, 104
    %v2149 = vpop.permute.xlu0 %2148
    %2150 = vrot.lane.b32.xlu0 %v1752, 104
    %v2151 = vpop.permute.xlu0 %2150
    %2152 = vrot.lane.b32.xlu0 %v1757, 104
    %v2153 = vpop.permute.xlu0 %2152
    %2154 = vrot.lane.b32.xlu0 %v1762, 104
    %v2155 = vpop.permute.xlu0 %2154
    %v2156 = vsel %vm440, %v2141, 0
    %v2158 = vsel %vm440, %v2143, 0
    %v2160 = vsel %vm440, %v2145, 0
    %v2162 = vsel %vm440, %v2147, 0
    %v2164 = vsel %vm440, %v2149, 0
    %v2166 = vsel %vm440, %v2151, 0
    %v2168 = vsel %vm440, %v2153, 0
    %v2170 = vsel %vm440, %v2155, 0
    %2172 = vmatprep.subr.mxu0 0.0
    %2173 = vmatpush1.xpose.msra.mxu0 %v2164
    %2174 = vmatprep.subr.mxu0 0.0
    %2175 = vmatpush1.xpose.msra.mxu0 %v2166
    %2176 = vmatprep.subr.mxu0 0.0
    %2177 = vmatpush1.xpose.msra.mxu0 %v2168
    %2178 = vmatprep.subr.mxu0 0.0
    %2179 = vmatpush1.xpose.msra.mxu0 %v2170
    %2180 = vmatprep.subr.mxu0 0.0
    %2181 = vmatpush1.xpose.msra.mxu0 0.0
    %2182 = vmatprep.subr.mxu0 0.0
    %2183 = vmatpush1.xpose.msra.mxu0 0.0
    %2184 = vmatprep.subr.mxu0 0.0
    %2185 = vmatpush1.xpose.msra.mxu0 0.0
    %2186 = vmatprep.subr.mxu0 0.0
    %2187 = vmatpush1.xpose.msra.mxu0 0.0
    %2188 = vmatprep.subr.mxu0 0.0
    %2189 = vmatpush1.xpose.msra.mxu0 0.0
    %2190 = vmatprep.subr.mxu0 0.0
    %2191 = vmatpush1.xpose.msra.mxu0 0.0
    %2192 = vmatprep.subr.mxu0 0.0
    %2193 = vmatpush1.xpose.msra.mxu0 0.0
    %2194 = vmatprep.subr.mxu0 0.0
    %2195 = vmatpush1.xpose.msra.mxu0 0.0
    %2196 = vmatprep.subr.mxu0 0.0
    %2197 = vmatpush1.xpose.msra.mxu0 0.0
    %2198 = vmatprep.subr.mxu0 0.0
    %2199 = vmatpush1.xpose.msra.mxu0 0.0
    %2200 = vmatprep.subr.mxu0 0.0
    %2201 = vmatpush1.xpose.msra.mxu0 0.0
    %2202 = vmatprep.subr.mxu0 0.0
    %2203 = vmatpush1.xpose.msra.mxu0 0.0
    %2204 = vmatprep.subr.mxu0 0.0
    %2205 = vmatpush1.xpose.msra.mxu0 0.0
    %2206 = vmatprep.subr.mxu0 0.0
    %2207 = vmatpush1.xpose.msra.mxu0 0.0
    %2208 = vmatprep.subr.mxu0 0.0
    %2209 = vmatpush1.xpose.msra.mxu0 0.0
    %2210 = vmatprep.subr.mxu0 0.0
    %2211 = vmatpush1.xpose.msra.mxu0 0.0
    %2212 = vmatprep.subr.mxu0 0.0
    %2213 = vmatpush1.xpose.msra.mxu0 0.0
    %2214 = vmatprep.subr.mxu0 0.0
    %2215 = vmatpush1.xpose.msra.mxu0 0.0
    %2216 = vmatprep.subr.mxu0 0.0
    %2217 = vmatpush1.xpose.msra.mxu0 0.0
    %2218 = vmatprep.subr.mxu0 0.0
    %2219 = vmatpush1.xpose.msra.mxu0 0.0
    %2220 = vmatprep.subr.mxu0 0.0
    %2221 = vmatpush1.xpose.msra.mxu0 0.0
    %2222 = vmatprep.subr.mxu0 0.0
    %2223 = vmatpush1.xpose.msra.mxu0 0.0
    %2224 = vmatprep.subr.mxu0 0.0
    %2225 = vmatpush1.xpose.msra.mxu0 0.0
    %2226 = vmatprep.subr.mxu0 0.0
    %2227 = vmatpush1.xpose.msra.mxu0 0.0
    %2228 = vmatprep.subr.mxu0 0.0
    %2229 = vmatpush1.xpose.msra.mxu0 0.0
    %2230 = vmatprep.subr.mxu0 0.0
    %2231 = vmatpush1.xpose.msra.mxu0 0.0
    %2232 = vmatprep.subr.mxu0 0.0
    %2233 = vmatpush1.xpose.msra.mxu0 0.0
    %2234 = vmatprep.subr.mxu0 0.0
    %2235 = vmatpush1.xpose.msra.mxu0 0.0
    %2236 = vmatprep.mubr.f32.mxu0 0.0
    %2237 = vmatmul.mubr.f32.gmra.mrb[0].mxu0 %v2156
    %v2238 = vpop.f32.mrb[0].mxu0
    %v2239 = vadd.f32 %v1592, %v2238
    %v2240 = vpop.f32.mrb[0].mxu0
    %2241 = vmatprep.mubr.f32.mxu0 0.0
    %2242 = vmatmul.mubr.f32.gmra.mrb[0].mxu0 %v2158
    %v2243 = vpop.f32.mrb[0].mxu0
    %v2244 = vadd.f32 %v1593, %v2243
    %v2245 = vpop.f32.mrb[0].mxu0
    %2246 = vmatprep.mubr.f32.mxu0 0.0
    %2247 = vmatmul.mubr.f32.gmra.mrb[0].mxu0 %v2160
    %v2248 = vpop.f32.mrb[0].mxu0
    %v2249 = vadd.f32 %v1594, %v2248
    %v2250 = vpop.f32.mrb[0].mxu0
    %2251 = vmatprep.mubr.f32.mxu0 0.0
    %2252 = vmatmul.mubr.f32.gmra.mrb[0].mxu0 %v2162
    %v2253 = vpop.f32.mrb[0].mxu0
    %v2254 = vadd.f32 %v1595, %v2253
    %v2255 = vpop.f32.mrb[0].mxu0
    %2256 = vdwg.mxu0
    %v2257 = vsel %vm542, %v2239, -inf
    %2258 = vmax.xlane.f32.xlu0 %v2257
    %v2259 = vpop.xlane.xlu0 %2258
    %v2260 = vsel %vm542, %v2244, -inf
    %2261 = vmax.xlane.f32.xlu0 %v2260
    %v2262 = vpop.xlane.xlu0 %2261
    %v2263 = vsel %vm542, %v2249, -inf
    %2264 = vmax.xlane.f32.xlu0 %v2263
    %v2265 = vpop.xlane.xlu0 %2264
    %v2266 = vsel %vm542, %v2254, -inf
    %2267 = vmax.xlane.f32.xlu0 %v2266
    %v2268 = vpop.xlane.xlu0 %2267
    %v2269 = vsub.f32 %v2239, %v2259
    %v2270 = vsub.f32 %v2244, %v2262
    %v2271 = vsub.f32 %v2249, %v2265
    %v2272 = vsub.f32 %v2254, %v2268
    %v2273 = vmul.f32 %v2269, 1.442695
    %v2274 = vpow.pop %v2273
    %v2275 = vmul.f32 %v2270, 1.442695
    %v2276 = vpow.pop %v2275
    %v2277 = vmul.f32 %v2271, 1.442695
    %v2278 = vpow.pop %v2277
    %v2279 = vmul.f32 %v2272, 1.442695
    %v2280 = vpow.pop %v2279
    %v2281 = vsel %vm542, %v2274, 0.0
    %2282 = vadd.xlane.f32.xlu0 %v2281
    %v2283 = vpop.xlane.xlu0 %2282
    %v2284 = vsel %vm542, %v2276, 0.0
    %2285 = vadd.xlane.f32.xlu0 %v2284
    %v2286 = vpop.xlane.xlu0 %2285
    %v2287 = vsel %vm542, %v2278, 0.0
    %2288 = vadd.xlane.f32.xlu0 %v2287
    %v2289 = vpop.xlane.xlu0 %2288
    %v2290 = vsel %vm542, %v2280, 0.0
    %2291 = vadd.xlane.f32.xlu0 %v2290
    %v2292 = vpop.xlane.xlu0 %2291
    %v2293 = vrcp.pop %v2283
    %v2294 = vrcp.pop %v2286
    %v2295 = vrcp.pop %v2289
    %v2296 = vrcp.pop %v2292
    %v2297 = vmul.f32 %v2274, %v2293
    %v2298 = vmul.f32 %v2276, %v2294
    %v2299 = vmul.f32 %v2278, %v2295
    %v2300 = vmul.f32 %v2280, %v2296
    %2301 = vrot.lane.b32.xlu0 %v1747, 88
    %v2302 = vpop.permute.xlu0 %2301
    %2303 = vrot.lane.b32.xlu0 %v1752, 88
    %v2304 = vpop.permute.xlu0 %2303
    %2305 = vrot.lane.b32.xlu0 %v1757, 88
    %v2306 = vpop.permute.xlu0 %2305
    %2307 = vrot.lane.b32.xlu0 %v1762, 88
    %v2308 = vpop.permute.xlu0 %2307
    %v2314 = vsel %vm542, %v2297, 0
    %v2317 = vsel %vm542, %v2298, 0
    %v2320 = vsel %vm542, %v2299, 0
    %v2323 = vsel %vm542, %v2300, 0
    %2325 = vmatprep.subr.mxu0 0.0
    %2326 = vmatpush1.msra.mxu0 %v2302
    %2327 = vmatprep.subr.mxu0 0.0
    %2328 = vmatpush1.msra.mxu0 %v2304
    %2329 = vmatprep.subr.mxu0 0.0
    %2330 = vmatpush1.msra.mxu0 %v2306
    %2331 = vmatprep.subr.mxu0 0.0
    %2332 = vmatpush1.msra.mxu0 %v2308
    %2333 = vmatprep.subr.mxu0 0.0
    %2334 = vmatpush1.msra.mxu0 0.0
    %2335 = vmatprep.subr.mxu0 0.0
    %2336 = vmatpush1.msra.mxu0 0.0
    %2337 = vmatprep.subr.mxu0 0.0
    %2338 = vmatpush1.msra.mxu0 0.0
    %2339 = vmatprep.subr.mxu0 0.0
    %2340 = vmatpush1.msra.mxu0 0.0
    %2341 = vmatprep.subr.mxu0 0.0
    %2342 = vmatpush1.msra.mxu0 0.0
    %2343 = vmatprep.subr.mxu0 0.0
    %2344 = vmatpush1.msra.mxu0 0.0
    %2345 = vmatprep.subr.mxu0 0.0
    %2346 = vmatpush1.msra.mxu0 0.0
    %2347 = vmatprep.subr.mxu0 0.0
    %2348 = vmatpush1.msra.mxu0 0.0
    %2349 = vmatprep.subr.mxu0 0.0
    %2350 = vmatpush1.msra.mxu0 0.0
    %2351 = vmatprep.subr.mxu0 0.0
    %2352 = vmatpush1.msra.mxu0 0.0
    %2353 = vmatprep.subr.mxu0 0.0
    %2354 = vmatpush1.msra.mxu0 0.0
    %2355 = vmatprep.subr.mxu0 0.0
    %2356 = vmatpush1.msra.mxu0 0.0
    %2357 = vmatprep.subr.mxu0 0.0
    %2358 = vmatpush1.msra.mxu0 0.0
    %2359 = vmatprep.subr.mxu0 0.0
    %2360 = vmatpush1.msra.mxu0 0.0
    %2361 = vmatprep.subr.mxu0 0.0
    %2362 = vmatpush1.msra.mxu0 0.0
    %2363 = vmatprep.subr.mxu0 0.0
    %2364 = vmatpush1.msra.mxu0 0.0
    %2365 = vmatprep.subr.mxu0 0.0
    %2366 = vmatpush1.msra.mxu0 0.0
    %2367 = vmatprep.subr.mxu0 0.0
    %2368 = vmatpush1.msra.mxu0 0.0
    %2369 = vmatprep.subr.mxu0 0.0
    %2370 = vmatpush1.msra.mxu0 0.0
    %2371 = vmatprep.subr.mxu0 0.0
    %2372 = vmatpush1.msra.mxu0 0.0
    %2373 = vmatprep.subr.mxu0 0.0
    %2374 = vmatpush1.msra.mxu0 0.0
    %2375 = vmatprep.subr.mxu0 0.0
    %2376 = vmatpush1.msra.mxu0 0.0
    %2377 = vmatprep.subr.mxu0 0.0
    %2378 = vmatpush1.msra.mxu0 0.0
    %2379 = vmatprep.subr.mxu0 0.0
    %2380 = vmatpush1.msra.mxu0 0.0
    %2381 = vmatprep.subr.mxu0 0.0
    %2382 = vmatpush1.msra.mxu0 0.0
    %2383 = vmatprep.subr.mxu0 0.0
    %2384 = vmatpush1.msra.mxu0 0.0
    %2385 = vmatprep.subr.mxu0 0.0
    %2386 = vmatpush1.msra.mxu0 0.0
    %2387 = vmatprep.subr.mxu0 0.0
    %2388 = vmatpush1.msra.mxu0 0.0
    %2389 = vmatprep.mubr.f32.mxu0 0.0
    %2390 = vmatmul.mubr.f32.gmra.mrb[0].mxu0 %v2314
    %v2391 = vpop.f32.mrb[0].mxu0
    %v2392 = vadd.f32 0.0, %v2391
    %v2393 = vpop.f32.mrb[0].mxu0
    %2394 = vmatprep.mubr.f32.mxu0 0.0
    %2395 = vmatmul.mubr.f32.gmra.mrb[0].mxu0 %v2317
    %v2396 = vpop.f32.mrb[0].mxu0
    %v2397 = vadd.f32 0.0, %v2396
    %v2398 = vpop.f32.mrb[0].mxu0
    %2399 = vmatprep.mubr.f32.mxu0 0.0
    %2400 = vmatmul.mubr.f32.gmra.mrb[0].mxu0 %v2320
    %v2401 = vpop.f32.mrb[0].mxu0
    %v2402 = vadd.f32 0.0, %v2401
    %v2403 = vpop.f32.mrb[0].mxu0
    %2404 = vmatprep.mubr.f32.mxu0 0.0
    %2405 = vmatmul.mubr.f32.gmra.mrb[0].mxu0 %v2323
    %v2406 = vpop.f32.mrb[0].mxu0
    %v2407 = vadd.f32 0.0, %v2406
    %v2408 = vpop.f32.mrb[0].mxu0
    %2409 = vdwg.mxu0
    %2411 = vrot.lane.b32.xlu0 %v1575, 80
    %v2412 = vpop.permute.xlu0 %2411
    %v2415 = vsel %vm440, %v2392, 0
    %v2418 = vsel %vm440, %v2397, 0
    %v2421 = vsel %vm440, %v2402, 0
    %v2424 = vsel %vm440, %v2407, 0
    %2426 = vmatprep.subr.mxu0 0.0
    %2427 = vmatpush1.msra.mxu0 %v2412
    %2428 = vmatprep.subr.mxu0 0.0
    %2429 = vmatpush1.msra.mxu0 0.0
    %2430 = vmatprep.subr.mxu0 0.0
    %2431 = vmatpush1.msra.mxu0 0.0
    %2432 = vmatprep.subr.mxu0 0.0
    %2433 = vmatpush1.msra.mxu0 0.0
    %2434 = vmatprep.subr.mxu0 0.0
    %2435 = vmatpush1.msra.mxu0 0.0
    %2436 = vmatprep.subr.mxu0 0.0
    %2437 = vmatpush1.msra.mxu0 0.0
    %2438 = vmatprep.subr.mxu0 0.0
    %2439 = vmatpush1.msra.mxu0 0.0
    %2440 = vmatprep.subr.mxu0 0.0
    %2441 = vmatpush1.msra.mxu0 0.0
    %2442 = vmatprep.subr.mxu0 0.0
    %2443 = vmatpush1.msra.mxu0 0.0
    %2444 = vmatprep.subr.mxu0 0.0
    %2445 = vmatpush1.msra.mxu0 0.0
    %2446 = vmatprep.subr.mxu0 0.0
    %2447 = vmatpush1.msra.mxu0 0.0
    %2448 = vmatprep.subr.mxu0 0.0
    %2449 = vmatpush1.msra.mxu0 0.0
    %2450 = vmatprep.subr.mxu0 0.0
    %2451 = vmatpush1.msra.mxu0 0.0
    %2452 = vmatprep.subr.mxu0 0.0
    %2453 = vmatpush1.msra.mxu0 0.0
    %2454 = vmatprep.subr.mxu0 0.0
    %2455 = vmatpush1.msra.mxu0 0.0
    %2456 = vmatprep.subr.mxu0 0.0
    %2457 = vmatpush1.msra.mxu0 0.0
    %2458 = vmatprep.subr.mxu0 0.0
    %2459 = vmatpush1.msra.mxu0 0.0
    %2460 = vmatprep.subr.mxu0 0.0
    %2461 = vmatpush1.msra.mxu0 0.0
    %2462 = vmatprep.subr.mxu0 0.0
    %2463 = vmatpush1.msra.mxu0 0.0
    %2464 = vmatprep.subr.mxu0 0.0
    %2465 = vmatpush1.msra.mxu0 0.0
    %2466 = vmatprep.subr.mxu0 0.0
    %2467 = vmatpush1.msra.mxu0 0.0
    %2468 = vmatprep.subr.mxu0 0.0
    %2469 = vmatpush1.msra.mxu0 0.0
    %2470 = vmatprep.subr.mxu0 0.0
    %2471 = vmatpush1.msra.mxu0 0.0
    %2472 = vmatprep.subr.mxu0 0.0
    %2473 = vmatpush1.msra.mxu0 0.0
    %2474 = vmatprep.subr.mxu0 0.0
    %2475 = vmatpush1.msra.mxu0 0.0
    %2476 = vmatprep.subr.mxu0 0.0
    %2477 = vmatpush1.msra.mxu0 0.0
    %2478 = vmatprep.subr.mxu0 0.0
    %2479 = vmatpush1.msra.mxu0 0.0
    %2480 = vmatprep.subr.mxu0 0.0
    %2481 = vmatpush1.msra.mxu0 0.0
    %2482 = vmatprep.subr.mxu0 0.0
    %2483 = vmatpush1.msra.mxu0 0.0
    %2484 = vmatprep.subr.mxu0 0.0
    %2485 = vmatpush1.msra.mxu0 0.0
    %2486 = vmatprep.subr.mxu0 0.0
    %2487 = vmatpush1.msra.mxu0 0.0
    %2488 = vmatprep.subr.mxu0 0.0
    %2489 = vmatpush1.msra.mxu0 0.0
    %2490 = vmatprep.mubr.f32.mxu0 0.0
    %2491 = vmatmul.mubr.f32.gmra.mrb[0].mxu0 %v2415
    %v2492 = vpop.f32.mrb[0].mxu0
    %v2493 = vadd.f32 0.0, %v2492
    %v2494 = vpop.f32.mrb[0].mxu0
    %2495 = vmatprep.mubr.f32.mxu0 0.0
    %2496 = vmatmul.mubr.f32.gmra.mrb[0].mxu0 %v2418
    %v2497 = vpop.f32.mrb[0].mxu0
    %v2498 = vadd.f32 0.0, %v2497
    %v2499 = vpop.f32.mrb[0].mxu0
    %2500 = vmatprep.mubr.f32.mxu0 0.0
    %2501 = vmatmul.mubr.f32.gmra.mrb[0].mxu0 %v2421
    %v2502 = vpop.f32.mrb[0].mxu0
    %v2503 = vadd.f32 0.0, %v2502
    %v2504 = vpop.f32.mrb[0].mxu0
    %2505 = vmatprep.mubr.f32.mxu0 0.0
    %2506 = vmatmul.mubr.f32.gmra.mrb[0].mxu0 %v2424
    %v2507 = vpop.f32.mrb[0].mxu0
    %v2508 = vadd.f32 0.0, %v2507
    %v2509 = vpop.f32.mrb[0].mxu0
    %2510 = vdwg.mxu0
    %v2511 = vadd.f32 %v2136, %v2493
    %v2512 = vadd.f32 %v2137, %v2498
    %v2513 = vadd.f32 %v2138, %v2503
    %v2514 = vadd.f32 %v2139, %v2508
    %v2515 = vadd.f32 %v1569, %v2511
    %v2516 = vadd.f32 %v1570, %v2512
    %v2517 = vadd.f32 %v1571, %v2513
    %v2518 = vadd.f32 %v1572, %v2514
    %v2519 = vsel %vm170, %v2515, 0.0
    %2520 = vadd.xlane.f32.xlu0 %v2519
    %v2521 = vpop.xlane.xlu0 %2520
    %v2522 = vsel %vm170, %v2516, 0.0
    %2523 = vadd.xlane.f32.xlu0 %v2522
    %v2524 = vpop.xlane.xlu0 %2523
    %v2525 = vsel %vm170, %v2517, 0.0
    %2526 = vadd.xlane.f32.xlu0 %v2525
    %v2527 = vpop.xlane.xlu0 %2526
    %v2528 = vsel %vm170, %v2518, 0.0
    %2529 = vadd.xlane.f32.xlu0 %v2528
    %v2530 = vpop.xlane.xlu0 %2529
    %v2531 = vmul.f32 %v2521, %v183
    %v2532 = vmul.f32 %v2524, %v183
    %v2533 = vmul.f32 %v2527, %v183
    %v2534 = vmul.f32 %v2530, %v183
    %v2535 = vsub.f32 %v2515, %v2531
    %v2536 = vsub.f32 %v2516, %v2532
    %v2537 = vsub.f32 %v2517, %v2533
    %v2538 = vsub.f32 %v2518, %v2534
    %v2539 = vmul.f32 %v2535, %v2535
    %v2540 = vmul.f32 %v2536, %v2536
    %v2541 = vmul.f32 %v2537, %v2537
    %v2542 = vmul.f32 %v2538, %v2538
    %v2543 = vsel %vm170, %v2539, 0.0
    %2544 = vadd.xlane.f32.xlu0 %v2543
    %v2545 = vpop.xlane.xlu0 %2544
    %v2546 = vsel %vm170, %v2540, 0.0
    %2547 = vadd.xlane.f32.xlu0 %v2546
    %v2548 = vpop.xlane.xlu0 %2547
    %v2549 = vsel %vm170, %v2541, 0.0
    %2550 = vadd.xlane.f32.xlu0 %v2549
    %v2551 = vpop.xlane.xlu0 %2550
    %v2552 = vsel %vm170, %v2542, 0.0
    %2553 = vadd.xlane.f32.xlu0 %v2552
    %v2554 = vpop.xlane.xlu0 %2553
    %v2555 = vmul.f32 %v2545, %v183
    %v2556 = vmul.f32 %v2548, %v183
    %v2557 = vmul.f32 %v2551, %v183
    %v2558 = vmul.f32 %v2554, %v183
    %v2559 = vadd.f32 %v2555, 1e-05
    %v2560 = vadd.f32 %v2556, 1e-05
    %v2561 = vadd.f32 %v2557, 1e-05
    %v2562 = vadd.f32 %v2558, 1e-05
    %v2563 = vrsqrt.pop %v2559
    %v2564 = vrsqrt.pop %v2560
    %v2565 = vrsqrt.pop %v2561
    %v2566 = vrsqrt.pop %v2562
    %v2567 = vmul.f32 %v2535, %v2563
    %v2568 = vmul.f32 %v2536, %v2564
    %v2569 = vmul.f32 %v2537, %v2565
    %v2570 = vmul.f32 %v2538, %v2566
    %v2571 = vlaneseq
    %v2572 = vshrl.u32 %v2571, 7
    %v2573 = vsub.s32 4, %v2572
    %v2574 = vrot.slane %v1586, %v2573
    %v2575 = vmul.f32 %v2567, %v2574
    %v2576 = vmul.f32 %v2568, %v2574
    %v2577 = vmul.f32 %v2569, %v2574
    %v2578 = vmul.f32 %v2570, %v2574
    %v2579 = vlaneseq
    %v2580 = vshrl.u32 %v2579, 7
    %v2581 = vsub.s32 5, %v2580
    %v2582 = vrot.slane %v1586, %v2581
    %v2583 = vadd.f32 %v2575, %v2582
    %v2584 = vadd.f32 %v2576, %v2582
    %v2585 = vadd.f32 %v2577, %v2582
    %v2586 = vadd.f32 %v2578, %v2582
    %v2587 = vlaneseq
    %v2588 = vshrl.u32 %v2587, 7
    %v2589 = vsub.s32 6, %v2588
    %v2590 = vrot.slane %v1586, %v2589
    %2591 = vrot.lane.b32.xlu0 %v1574, 64
    %v2592 = vpop.permute.xlu0 %2591
    %2593 = vrot.lane.b32.xlu0 %v1575, 64
    %v2594 = vpop.permute.xlu0 %2593
    %v2598 = vsel %vm170, %v2583, 0
    %v2601 = vsel %vm170, %v2584, 0
    %v2604 = vsel %vm170, %v2585, 0
    %v2607 = vsel %vm170, %v2586, 0
    %2609 = vmatprep.subr.mxu0 0.0
    %2610 = vmatpush1.msra.mxu0 %v2592
    %2611 = vmatprep.subr.mxu0 0.0
    %2612 = vmatpush1.msra.mxu0 %v2594
    %2613 = vmatprep.subr.mxu0 0.0
    %2614 = vmatpush1.msra.mxu0 0.0
    %2615 = vmatprep.subr.mxu0 0.0
    %2616 = vmatpush1.msra.mxu0 0.0
    %2617 = vmatprep.subr.mxu0 0.0
    %2618 = vmatpush1.msra.mxu0 0.0
    %2619 = vmatprep.subr.mxu0 0.0
    %2620 = vmatpush1.msra.mxu0 0.0
    %2621 = vmatprep.subr.mxu0 0.0
    %2622 = vmatpush1.msra.mxu0 0.0
    %2623 = vmatprep.subr.mxu0 0.0
    %2624 = vmatpush1.msra.mxu0 0.0
    %2625 = vmatprep.subr.mxu0 0.0
    %2626 = vmatpush1.msra.mxu0 0.0
    %2627 = vmatprep.subr.mxu0 0.0
    %2628 = vmatpush1.msra.mxu0 0.0
    %2629 = vmatprep.subr.mxu0 0.0
    %2630 = vmatpush1.msra.mxu0 0.0
    %2631 = vmatprep.subr.mxu0 0.0
    %2632 = vmatpush1.msra.mxu0 0.0
    %2633 = vmatprep.subr.mxu0 0.0
    %2634 = vmatpush1.msra.mxu0 0.0
    %2635 = vmatprep.subr.mxu0 0.0
    %2636 = vmatpush1.msra.mxu0 0.0
    %2637 = vmatprep.subr.mxu0 0.0
    %2638 = vmatpush1.msra.mxu0 0.0
    %2639 = vmatprep.subr.mxu0 0.0
    %2640 = vmatpush1.msra.mxu0 0.0
    %2641 = vmatprep.subr.mxu0 0.0
    %2642 = vmatpush1.msra.mxu0 0.0
    %2643 = vmatprep.subr.mxu0 0.0
    %2644 = vmatpush1.msra.mxu0 0.0
    %2645 = vmatprep.subr.mxu0 0.0
    %2646 = vmatpush1.msra.mxu0 0.0
    %2647 = vmatprep.subr.mxu0 0.0
    %2648 = vmatpush1.msra.mxu0 0.0
    %2649 = vmatprep.subr.mxu0 0.0
    %2650 = vmatpush1.msra.mxu0 0.0
    %2651 = vmatprep.subr.mxu0 0.0
    %2652 = vmatpush1.msra.mxu0 0.0
    %2653 = vmatprep.subr.mxu0 0.0
    %2654 = vmatpush1.msra.mxu0 0.0
    %2655 = vmatprep.subr.mxu0 0.0
    %2656 = vmatpush1.msra.mxu0 0.0
    %2657 = vmatprep.subr.mxu0 0.0
    %2658 = vmatpush1.msra.mxu0 0.0
    %2659 = vmatprep.subr.mxu0 0.0
    %2660 = vmatpush1.msra.mxu0 0.0
    %2661 = vmatprep.subr.mxu0 0.0
    %2662 = vmatpush1.msra.mxu0 0.0
    %2663 = vmatprep.subr.mxu0 0.0
    %2664 = vmatpush1.msra.mxu0 0.0
    %2665 = vmatprep.subr.mxu0 0.0
    %2666 = vmatpush1.msra.mxu0 0.0
    %2667 = vmatprep.subr.mxu0 0.0
    %2668 = vmatpush1.msra.mxu0 0.0
    %2669 = vmatprep.subr.mxu0 0.0
    %2670 = vmatpush1.msra.mxu0 0.0
    %2671 = vmatprep.subr.mxu0 0.0
    %2672 = vmatpush1.msra.mxu0 0.0
    %2673 = vmatprep.mubr.f32.mxu0 0.0
    %2674 = vmatmul.mubr.f32.gmra.mrb[0].mxu0 %v2598
    %v2675 = vpop.f32.mrb[0].mxu0
    %v2676 = vadd.f32 %v2590, %v2675
    %v2677 = vpop.f32.mrb[0].mxu0
    %2678 = vmatprep.mubr.f32.mxu0 0.0
    %2679 = vmatmul.mubr.f32.gmra.mrb[0].mxu0 %v2601
    %v2680 = vpop.f32.mrb[0].mxu0
    %v2681 = vadd.f32 %v2590, %v2680
    %v2682 = vpop.f32.mrb[0].mxu0
    %2683 = vmatprep.mubr.f32.mxu0 0.0
    %2684 = vmatmul.mubr.f32.gmra.mrb[0].mxu0 %v2604
    %v2685 = vpop.f32.mrb[0].mxu0
    %v2686 = vadd.f32 %v2590, %v2685
    %v2687 = vpop.f32.mrb[0].mxu0
    %2688 = vmatprep.mubr.f32.mxu0 0.0
    %2689 = vmatmul.mubr.f32.gmra.mrb[0].mxu0 %v2607
    %v2690 = vpop.f32.mrb[0].mxu0
    %v2691 = vadd.f32 %v2590, %v2690
    %v2692 = vpop.f32.mrb[0].mxu0
    %2693 = vdwg.mxu0
    %v2694 = vmul.f32 %v2676, 0.5
    %v2695 = vmul.f32 %v2681, 0.5
    %v2696 = vmul.f32 %v2686, 0.5
    %v2697 = vmul.f32 %v2691, 0.5
    %v2698 = vmul.f32 %v2676, 0.70710677
    %v2699 = vmul.f32 %v2681, 0.70710677
    %v2700 = vmul.f32 %v2686, 0.70710677
    %v2701 = vmul.f32 %v2691, 0.70710677
    %v2702 = vand.u32 2147483647, %v2698
    %v2703 = vand.u32 2147483647, %v2699
    %v2704 = vand.u32 2147483647, %v2700
    %v2705 = vand.u32 2147483647, %v2701
    %v2706 = vmul.f32 %v2702, 0.3275911
    %v2707 = vmul.f32 %v2703, 0.3275911
    %v2708 = vmul.f32 %v2704, 0.3275911
    %v2709 = vmul.f32 %v2705, 0.3275911
    %v2710 = vadd.f32 %v2706, 1.0
    %v2711 = vadd.f32 %v2707, 1.0
    %v2712 = vadd.f32 %v2708, 1.0
    %v2713 = vadd.f32 %v2709, 1.0
    %v2714 = vrcp.pop %v2710
    %v2715 = vmul.f32 1.0, %v2714
    %v2716 = vrcp.pop %v2711
    %v2717 = vmul.f32 1.0, %v2716
    %v2718 = vrcp.pop %v2712
    %v2719 = vmul.f32 1.0, %v2718
    %v2720 = vrcp.pop %v2713
    %v2721 = vmul.f32 1.0, %v2720
    %v2722 = vmul.f32 %v2715, 1.0614054
    %v2723 = vmul.f32 %v2717, 1.0614054
    %v2724 = vmul.f32 %v2719, 1.0614054
    %v2725 = vmul.f32 %v2721, 1.0614054
    %v2726 = vadd.f32 %v2722, -1.4531521
    %v2727 = vadd.f32 %v2723, -1.4531521
    %v2728 = vadd.f32 %v2724, -1.4531521
    %v2729 = vadd.f32 %v2725, -1.4531521
    %v2730 = vmul.f32 %v2726, %v2715
    %v2731 = vmul.f32 %v2727, %v2717
    %v2732 = vmul.f32 %v2728, %v2719
    %v2733 = vmul.f32 %v2729, %v2721
    %v2734 = vadd.f32 %v2730, 1.4214138
    %v2735 = vadd.f32 %v2731, 1.4214138
    %v2736 = vadd.f32 %v2732, 1.4214138
    %v2737 = vadd.f32 %v2733, 1.4214138
    %v2738 = vmul.f32 %v2734, %v2715
    %v2739 = vmul.f32 %v2735, %v2717
    %v2740 = vmul.f32 %v2736, %v2719
    %v2741 = vmul.f32 %v2737, %v2721
    %v2742 = vadd.f32 %v2738, -0.28449672
    %v2743 = vadd.f32 %v2739, -0.28449672
    %v2744 = vadd.f32 %v2740, -0.28449672
    %v2745 = vadd.f32 %v2741, -0.28449672
    %v2746 = vmul.f32 %v2742, %v2715
    %v2747 = vmul.f32 %v2743, %v2717
    %v2748 = vmul.f32 %v2744, %v2719
    %v2749 = vmul.f32 %v2745, %v2721
    %v2750 = vadd.f32 %v2746, 0.2548296
    %v2751 = vadd.f32 %v2747, 0.2548296
    %v2752 = vadd.f32 %v2748, 0.2548296
    %v2753 = vadd.f32 %v2749, 0.2548296
    %v2754 = vmul.f32 %v2750, %v2715
    %v2755 = vmul.f32 %v2751, %v2717
    %v2756 = vmul.f32 %v2752, %v2719
    %v2757 = vmul.f32 %v2753, %v2721
    %v2758 = vsub.f32 0.0, %v2702
    %v2759 = vsub.f32 0.0, %v2703
    %v2760 = vsub.f32 0.0, %v2704
    %v2761 = vsub.f32 0.0, %v2705
    %v2762 = vmul.f32 %v2758, %v2702
    %v2763 = vmul.f32 %v2759, %v2703
    %v2764 = vmul.f32 %v2760, %v2704
    %v2765 = vmul.f32 %v2761, %v2705
    %v2766 = vmul.f32 %v2762, 1.442695
    %v2767 = vpow.pop %v2766
    %v2768 = vmul.f32 %v2763, 1.442695
    %v2769 = vpow.pop %v2768
    %v2770 = vmul.f32 %v2764, 1.442695
    %v2771 = vpow.pop %v2770
    %v2772 = vmul.f32 %v2765, 1.442695
    %v2773 = vpow.pop %v2772
    %v2774 = vmul.f32 %v2754, %v2767
    %v2775 = vmul.f32 %v2755, %v2769
    %v2776 = vmul.f32 %v2756, %v2771
    %v2777 = vmul.f32 %v2757, %v2773
    %v2778 = vsub.f32 1.0, %v2774
    %v2779 = vsub.f32 1.0, %v2775
    %v2780 = vsub.f32 1.0, %v2776
    %v2781 = vsub.f32 1.0, %v2777
    %vm2782 = vcmp.ge.f32.partialorder %v2698, 0.0
    %vm2783 = vcmp.ge.f32.partialorder %v2699, 0.0
    %vm2784 = vcmp.ge.f32.partialorder %v2700, 0.0
    %vm2785 = vcmp.ge.f32.partialorder %v2701, 0.0
    %v2786 = vsub.f32 0.0, %v2778
    %v2787 = vsub.f32 0.0, %v2779
    %v2788 = vsub.f32 0.0, %v2780
    %v2789 = vsub.f32 0.0, %v2781
    %v2790 = vsel %vm2782, %v2778, %v2786
    %v2791 = vsel %vm2783, %v2779, %v2787
    %v2792 = vsel %vm2784, %v2780, %v2788
    %v2793 = vsel %vm2785, %v2781, %v2789
    %v2794 = vadd.f32 %v2790, 1.0
    %v2795 = vadd.f32 %v2791, 1.0
    %v2796 = vadd.f32 %v2792, 1.0
    %v2797 = vadd.f32 %v2793, 1.0
    %v2798 = vmul.f32 %v2694, %v2794
    %v2799 = vmul.f32 %v2695, %v2795
    %v2800 = vmul.f32 %v2696, %v2796
    %v2801 = vmul.f32 %v2697, %v2797
    %v2802 = vlaneseq
    %v2803 = vshrl.u32 %v2802, 7
    %v2804 = vsub.s32 7, %v2803
    %v2805 = vrot.slane %v1586, %v2804
    %v2807 = vsel %vm1471, %v2798, 0
    %v2810 = vsel %vm1471, %v2799, 0
    %v2813 = vsel %vm1471, %v2800, 0
    %v2816 = vsel %vm1471, %v2801, 0
    %2818 = vmatprep.subr.mxu0 0.0
    %2819 = vmatpush1.msra.mxu0 %v1577
    %2820 = vmatprep.subr.mxu0 0.0
    %2821 = vmatpush1.msra.mxu0 %v1578
    %2822 = vmatprep.subr.mxu0 0.0
    %2823 = vmatpush1.msra.mxu0 %v1579
    %2824 = vmatprep.subr.mxu0 0.0
    %2825 = vmatpush1.msra.mxu0 %v1580
    %2826 = vmatprep.subr.mxu0 0.0
    %2827 = vmatpush1.msra.mxu0 %v1581
    %2828 = vmatprep.subr.mxu0 0.0
    %2829 = vmatpush1.msra.mxu0 %v1582
    %2830 = vmatprep.subr.mxu0 0.0
    %2831 = vmatpush1.msra.mxu0 %v1583
    %2832 = vmatprep.subr.mxu0 0.0
    %2833 = vmatpush1.msra.mxu0 %v1584
    %2834 = vmatprep.subr.mxu0 0.0
    %2835 = vmatpush1.msra.mxu0 0.0
    %2836 = vmatprep.subr.mxu0 0.0
    %2837 = vmatpush1.msra.mxu0 0.0
    %2838 = vmatprep.subr.mxu0 0.0
    %2839 = vmatpush1.msra.mxu0 0.0
    %2840 = vmatprep.subr.mxu0 0.0
    %2841 = vmatpush1.msra.mxu0 0.0
    %2842 = vmatprep.subr.mxu0 0.0
    %2843 = vmatpush1.msra.mxu0 0.0
    %2844 = vmatprep.subr.mxu0 0.0
    %2845 = vmatpush1.msra.mxu0 0.0
    %2846 = vmatprep.subr.mxu0 0.0
    %2847 = vmatpush1.msra.mxu0 0.0
    %2848 = vmatprep.subr.mxu0 0.0
    %2849 = vmatpush1.msra.mxu0 0.0
    %2850 = vmatprep.subr.mxu0 0.0
    %2851 = vmatpush1.msra.mxu0 0.0
    %2852 = vmatprep.subr.mxu0 0.0
    %2853 = vmatpush1.msra.mxu0 0.0
    %2854 = vmatprep.subr.mxu0 0.0
    %2855 = vmatpush1.msra.mxu0 0.0
    %2856 = vmatprep.subr.mxu0 0.0
    %2857 = vmatpush1.msra.mxu0 0.0
    %2858 = vmatprep.subr.mxu0 0.0
    %2859 = vmatpush1.msra.mxu0 0.0
    %2860 = vmatprep.subr.mxu0 0.0
    %2861 = vmatpush1.msra.mxu0 0.0
    %2862 = vmatprep.subr.mxu0 0.0
    %2863 = vmatpush1.msra.mxu0 0.0
    %2864 = vmatprep.subr.mxu0 0.0
    %2865 = vmatpush1.msra.mxu0 0.0
    %2866 = vmatprep.subr.mxu0 0.0
    %2867 = vmatpush1.msra.mxu0 0.0
    %2868 = vmatprep.subr.mxu0 0.0
    %2869 = vmatpush1.msra.mxu0 0.0
    %2870 = vmatprep.subr.mxu0 0.0
    %2871 = vmatpush1.msra.mxu0 0.0
    %2872 = vmatprep.subr.mxu0 0.0
    %2873 = vmatpush1.msra.mxu0 0.0
    %2874 = vmatprep.subr.mxu0 0.0
    %2875 = vmatpush1.msra.mxu0 0.0
    %2876 = vmatprep.subr.mxu0 0.0
    %2877 = vmatpush1.msra.mxu0 0.0
    %2878 = vmatprep.subr.mxu0 0.0
    %2879 = vmatpush1.msra.mxu0 0.0
    %2880 = vmatprep.subr.mxu0 0.0
    %2881 = vmatpush1.msra.mxu0 0.0
    %2882 = vmatprep.mubr.f32.mxu0 0.0
    %2883 = vmatmul.mubr.f32.gmra.mrb[0].mxu0 %v2807
    %v2884 = vpop.f32.mrb[0].mxu0
    %v2885 = vadd.f32 %v2805, %v2884
    %v2886 = vpop.f32.mrb[0].mxu0
    %2887 = vmatprep.mubr.f32.mxu0 0.0
    %2888 = vmatmul.mubr.f32.gmra.mrb[0].mxu0 %v2810
    %v2889 = vpop.f32.mrb[0].mxu0
    %v2890 = vadd.f32 %v2805, %v2889
    %v2891 = vpop.f32.mrb[0].mxu0
    %2892 = vmatprep.mubr.f32.mxu0 0.0
    %2893 = vmatmul.mubr.f32.gmra.mrb[0].mxu0 %v2813
    %v2894 = vpop.f32.mrb[0].mxu0
    %v2895 = vadd.f32 %v2805, %v2894
    %v2896 = vpop.f32.mrb[0].mxu0
    %2897 = vmatprep.mubr.f32.mxu0 0.0
    %2898 = vmatmul.mubr.f32.gmra.mrb[0].mxu0 %v2816
    %v2899 = vpop.f32.mrb[0].mxu0
    %v2900 = vadd.f32 %v2805, %v2899
    %v2901 = vpop.f32.mrb[0].mxu0
    %2902 = vdwg.mxu0
    %v2903 = vadd.f32 %v2515, %v2885
    %v2904 = vadd.f32 %v2516, %v2890
    %v2905 = vadd.f32 %v2517, %v2895
    %v2906 = vadd.f32 %v2518, %v2900
    %v2907 = vld [vmem:[%s7] sm:$0xff]
    %v2908 = vld [vmem:[%s7 + $0x8] sm:$0xff]
    %v2909 = vld [vmem:[%s7 + $0x10] sm:$0xff]
    %v2910 = vld [vmem:[%s7 + $0x18] sm:$0xff]
    %v2912 = vsel %vm542, %v2907, 0
    %v2915 = vsel %vm542, %v2908, 0
    %v2918 = vsel %vm542, %v2909, 0
    %v2921 = vsel %vm542, %v2910, 0
    %2923 = vmatprep.subr.mxu0 0.0
    %2924 = vmatpush1.msra.mxu0 %v2903
    %2925 = vmatprep.subr.mxu0 0.0
    %2926 = vmatpush1.msra.mxu0 %v2904
    %2927 = vmatprep.subr.mxu0 0.0
    %2928 = vmatpush1.msra.mxu0 %v2905
    %2929 = vmatprep.subr.mxu0 0.0
    %2930 = vmatpush1.msra.mxu0 %v2906
    %2931 = vmatprep.subr.mxu0 0.0
    %2932 = vmatpush1.msra.mxu0 0.0
    %2933 = vmatprep.subr.mxu0 0.0
    %2934 = vmatpush1.msra.mxu0 0.0
    %2935 = vmatprep.subr.mxu0 0.0
    %2936 = vmatpush1.msra.mxu0 0.0
    %2937 = vmatprep.subr.mxu0 0.0
    %2938 = vmatpush1.msra.mxu0 0.0
    %2939 = vmatprep.subr.mxu0 0.0
    %2940 = vmatpush1.msra.mxu0 0.0
    %2941 = vmatprep.subr.mxu0 0.0
    %2942 = vmatpush1.msra.mxu0 0.0
    %2943 = vmatprep.subr.mxu0 0.0
    %2944 = vmatpush1.msra.mxu0 0.0
    %2945 = vmatprep.subr.mxu0 0.0
    %2946 = vmatpush1.msra.mxu0 0.0
    %2947 = vmatprep.subr.mxu0 0.0
    %2948 = vmatpush1.msra.mxu0 0.0
    %2949 = vmatprep.subr.mxu0 0.0
    %2950 = vmatpush1.msra.mxu0 0.0
    %2951 = vmatprep.subr.mxu0 0.0
    %2952 = vmatpush1.msra.mxu0 0.0
    %2953 = vmatprep.subr.mxu0 0.0
    %2954 = vmatpush1.msra.mxu0 0.0
    %2955 = vmatprep.subr.mxu0 0.0
    %2956 = vmatpush1.msra.mxu0 0.0
    %2957 = vmatprep.subr.mxu0 0.0
    %2958 = vmatpush1.msra.mxu0 0.0
    %2959 = vmatprep.subr.mxu0 0.0
    %2960 = vmatpush1.msra.mxu0 0.0
    %2961 = vmatprep.subr.mxu0 0.0
    %2962 = vmatpush1.msra.mxu0 0.0
    %2963 = vmatprep.subr.mxu0 0.0
    %2964 = vmatpush1.msra.mxu0 0.0
    %2965 = vmatprep.subr.mxu0 0.0
    %2966 = vmatpush1.msra.mxu0 0.0
    %2967 = vmatprep.subr.mxu0 0.0
    %2968 = vmatpush1.msra.mxu0 0.0
    %2969 = vmatprep.subr.mxu0 0.0
    %2970 = vmatpush1.msra.mxu0 0.0
    %2971 = vmatprep.subr.mxu0 0.0
    %2972 = vmatpush1.msra.mxu0 0.0
    %2973 = vmatprep.subr.mxu0 0.0
    %2974 = vmatpush1.msra.mxu0 0.0
    %2975 = vmatprep.subr.mxu0 0.0
    %2976 = vmatpush1.msra.mxu0 0.0
    %2977 = vmatprep.subr.mxu0 0.0
    %2978 = vmatpush1.msra.mxu0 0.0
    %2979 = vmatprep.subr.mxu0 0.0
    %2980 = vmatpush1.msra.mxu0 0.0
    %2981 = vmatprep.subr.mxu0 0.0
    %2982 = vmatpush1.msra.mxu0 0.0
    %2983 = vmatprep.subr.mxu0 0.0
    %2984 = vmatpush1.msra.mxu0 0.0
    %2985 = vmatprep.subr.mxu0 0.0
    %2986 = vmatpush1.msra.mxu0 0.0
    %2987 = vmatprep.mubr.f32.mxu0 0.0
    %2988 = vmatmul.mubr.f32.gmra.mrb[0].mxu0 %v2912
    %v2989 = vpop.f32.mrb[0].mxu0
    %v2990 = vadd.f32 0.0, %v2989
    %v2991 = vpop.f32.mrb[0].mxu0
    %2992 = vmatprep.mubr.f32.mxu0 0.0
    %2993 = vmatmul.mubr.f32.gmra.mrb[0].mxu0 %v2915
    %v2994 = vpop.f32.mrb[0].mxu0
    %v2995 = vadd.f32 0.0, %v2994
    %v2996 = vpop.f32.mrb[0].mxu0
    %2997 = vmatprep.mubr.f32.mxu0 0.0
    %2998 = vmatmul.mubr.f32.gmra.mrb[0].mxu0 %v2918
    %v2999 = vpop.f32.mrb[0].mxu0
    %v3000 = vadd.f32 0.0, %v2999
    %v3001 = vpop.f32.mrb[0].mxu0
    %3002 = vmatprep.mubr.f32.mxu0 0.0
    %3003 = vmatmul.mubr.f32.gmra.mrb[0].mxu0 %v2921
    %v3004 = vpop.f32.mrb[0].mxu0
    %v3005 = vadd.f32 0.0, %v3004
    %v3006 = vpop.f32.mrb[0].mxu0
    %3007 = vdwg.mxu0
    %v3008 = vld [vmem:[%s8] sm:$0x3]
    %v3009 = vsel %vm170, %v2990, 0.0
    %3010 = vadd.xlane.f32.xlu0 %v3009
    %v3011 = vpop.xlane.xlu0 %3010
    %v3012 = vadd.f32 %v3011, 0.0
    %v3013 = vsel %vm170, %v2995, 0.0
    %3014 = vadd.xlane.f32.xlu0 %v3013
    %v3015 = vpop.xlane.xlu0 %3014
    %v3016 = vadd.f32 %v3012, %v3015
    %v3017 = vsel %vm170, %v3000, 0.0
    %3018 = vadd.xlane.f32.xlu0 %v3017
    %v3019 = vpop.xlane.xlu0 %3018
    %v3020 = vadd.f32 %v3016, %v3019
    %v3021 = vsel %vm170, %v3005, 0.0
    %3022 = vadd.xlane.f32.xlu0 %v3021
    %v3023 = vpop.xlane.xlu0 %3022
    %v3024 = vadd.f32 %v3020, %v3023
    %v3025 = vrcp.pop 64.0
    %v3026 = vmul.f32 %v3024, %v3025
    %v3027 = vsub.f32 %v2990, %v3026
    %v3028 = vmul.f32 %v3027, %v3027
    %v3029 = vsel %vm170, %v3028, 0.0
    %3030 = vadd.xlane.f32.xlu0 %v3029
    %v3031 = vpop.xlane.xlu0 %3030
    %v3032 = vadd.f32 %v3031, 0.0
    %v3033 = vsub.f32 %v2995, %v3026
    %v3034 = vmul.f32 %v3033, %v3033
    %v3035 = vsel %vm170, %v3034, 0.0
    %3036 = vadd.xlane.f32.xlu0 %v3035
    %v3037 = vpop.xlane.xlu0 %3036
    %v3038 = vadd.f32 %v3032, %v3037
    %v3039 = vsub.f32 %v3000, %v3026
    %v3040 = vmul.f32 %v3039, %v3039
    %v3041 = vsel %vm170, %v3040, 0.0
    %3042 = vadd.xlane.f32.xlu0 %v3041
    %v3043 = vpop.xlane.xlu0 %3042
    %v3044 = vadd.f32 %v3038, %v3043
    %v3045 = vsub.f32 %v3005, %v3026
    %v3046 = vmul.f32 %v3045, %v3045
    %v3047 = vsel %vm170, %v3046, 0.0
    %3048 = vadd.xlane.f32.xlu0 %v3047
    %v3049 = vpop.xlane.xlu0 %3048
    %v3050 = vadd.f32 %v3044, %v3049
    %v3051 = vmul.f32 %v3050, %v3025
    %v3052 = vadd.f32 %v3051, 1e-05
    %v3053 = vrsqrt.pop %v3052
    %v3054 = vmul.f32 %v3027, %v3053
    %v3055 = vlaneseq
    %v3056 = vshrl.u32 %v3055, 7
    %v3057 = vsub.s32 0, %v3056
    %v3058 = vrot.slane %v3008, %v3057
    %v3059 = vmul.f32 %v3054, %v3058
    %v3060 = vlaneseq
    %v3061 = vshrl.u32 %v3060, 7
    %v3062 = vsub.s32 1, %v3061
    %v3063 = vrot.slane %v3008, %v3062
    %v3064 = vadd.f32 %v3059, %v3063
    %v3065 = vld [vmem:[%s9] sm:$0xff]
    %v3066 = vld [vmem:[%s9 + $0x8] sm:$0xff]
    %v3067 = vmul.f32 %v3033, %v3053
    %3069 = vrot.lane.b32.xlu0 %v3058, 112
    %v3070 = vpop.permute.xlu0 %3069
    %v3072 = vmul.f32 %v3067, %v3070
    %3074 = vrot.lane.b32.xlu0 %v3063, 112
    %v3075 = vpop.permute.xlu0 %3074
    %v3077 = vadd.f32 %v3072, %v3075
    %v3078 = vld [vmem:[%s9 + $0x10] sm:$0xff]
    %v3079 = vld [vmem:[%s9 + $0x18] sm:$0xff]
    %v3081 = vsel %vm170, %v3077, 0
    %3083 = vmatprep.subr.mxu0 0.0
    %3084 = vmatpush1.msra.mxu0 %v3078
    %3085 = vmatprep.subr.mxu0 0.0
    %3086 = vmatpush1.msra.mxu0 %v3079
    %3087 = vmatprep.subr.mxu0 0.0
    %3088 = vmatpush1.msra.mxu0 0.0
    %3089 = vmatprep.subr.mxu0 0.0
    %3090 = vmatpush1.msra.mxu0 0.0
    %3091 = vmatprep.subr.mxu0 0.0
    %3092 = vmatpush1.msra.mxu0 0.0
    %3093 = vmatprep.subr.mxu0 0.0
    %3094 = vmatpush1.msra.mxu0 0.0
    %3095 = vmatprep.subr.mxu0 0.0
    %3096 = vmatpush1.msra.mxu0 0.0
    %3097 = vmatprep.subr.mxu0 0.0
    %3098 = vmatpush1.msra.mxu0 0.0
    %3099 = vmatprep.subr.mxu0 0.0
    %3100 = vmatpush1.msra.mxu0 0.0
    %3101 = vmatprep.subr.mxu0 0.0
    %3102 = vmatpush1.msra.mxu0 0.0
    %3103 = vmatprep.subr.mxu0 0.0
    %3104 = vmatpush1.msra.mxu0 0.0
    %3105 = vmatprep.subr.mxu0 0.0
    %3106 = vmatpush1.msra.mxu0 0.0
    %3107 = vmatprep.subr.mxu0 0.0
    %3108 = vmatpush1.msra.mxu0 0.0
    %3109 = vmatprep.subr.mxu0 0.0
    %3110 = vmatpush1.msra.mxu0 0.0
    %3111 = vmatprep.subr.mxu0 0.0
    %3112 = vmatpush1.msra.mxu0 0.0
    %3113 = vmatprep.subr.mxu0 0.0
    %3114 = vmatpush1.msra.mxu0 0.0
    %3115 = vmatprep.subr.mxu0 0.0
    %3116 = vmatpush1.msra.mxu0 0.0
    %3117 = vmatprep.subr.mxu0 0.0
    %3118 = vmatpush1.msra.mxu0 0.0
    %3119 = vmatprep.subr.mxu0 0.0
    %3120 = vmatpush1.msra.mxu0 0.0
    %3121 = vmatprep.subr.mxu0 0.0
    %3122 = vmatpush1.msra.mxu0 0.0
    %3123 = vmatprep.subr.mxu0 0.0
    %3124 = vmatpush1.msra.mxu0 0.0
    %3125 = vmatprep.subr.mxu0 0.0
    %3126 = vmatpush1.msra.mxu0 0.0
    %3127 = vmatprep.subr.mxu0 0.0
    %3128 = vmatpush1.msra.mxu0 0.0
    %3129 = vmatprep.subr.mxu0 0.0
    %3130 = vmatpush1.msra.mxu0 0.0
    %3131 = vmatprep.subr.mxu0 0.0
    %3132 = vmatpush1.msra.mxu0 0.0
    %3133 = vmatprep.subr.mxu0 0.0
    %3134 = vmatpush1.msra.mxu0 0.0
    %3135 = vmatprep.subr.mxu0 0.0
    %3136 = vmatpush1.msra.mxu0 0.0
    %3137 = vmatprep.subr.mxu0 0.0
    %3138 = vmatpush1.msra.mxu0 0.0
    %3139 = vmatprep.subr.mxu0 0.0
    %3140 = vmatpush1.msra.mxu0 0.0
    %3141 = vmatprep.subr.mxu0 0.0
    %3142 = vmatpush1.msra.mxu0 0.0
    %3143 = vmatprep.subr.mxu0 0.0
    %3144 = vmatpush1.msra.mxu0 0.0
    %3145 = vmatprep.subr.mxu0 0.0
    %3146 = vmatpush1.msra.mxu0 0.0
    %3147 = vmatprep.mubr.f32.mxu0 0.0
    %3148 = vmatmul.mubr.f32.gmra.mrb[0].mxu0 %v3081
    %v3149 = vpop.f32.mrb[0].mxu0
    %v3150 = vadd.f32 0.0, %v3149
    %v3151 = vpop.f32.mrb[0].mxu0
    %3152 = vdwg.mxu0
    %v3154 = vsel %vm170, %v3064, 0
    %3156 = vmatprep.subr.mxu0 0.0
    %3157 = vmatpush1.msra.mxu0 %v3065
    %3158 = vmatprep.subr.mxu0 0.0
    %3159 = vmatpush1.msra.mxu0 %v3066
    %3160 = vmatprep.subr.mxu0 0.0
    %3161 = vmatpush1.msra.mxu0 0.0
    %3162 = vmatprep.subr.mxu0 0.0
    %3163 = vmatpush1.msra.mxu0 0.0
    %3164 = vmatprep.subr.mxu0 0.0
    %3165 = vmatpush1.msra.mxu0 0.0
    %3166 = vmatprep.subr.mxu0 0.0
    %3167 = vmatpush1.msra.mxu0 0.0
    %3168 = vmatprep.subr.mxu0 0.0
    %3169 = vmatpush1.msra.mxu0 0.0
    %3170 = vmatprep.subr.mxu0 0.0
    %3171 = vmatpush1.msra.mxu0 0.0
    %3172 = vmatprep.subr.mxu0 0.0
    %3173 = vmatpush1.msra.mxu0 0.0
    %3174 = vmatprep.subr.mxu0 0.0
    %3175 = vmatpush1.msra.mxu0 0.0
    %3176 = vmatprep.subr.mxu0 0.0
    %3177 = vmatpush1.msra.mxu0 0.0
    %3178 = vmatprep.subr.mxu0 0.0
    %3179 = vmatpush1.msra.mxu0 0.0
    %3180 = vmatprep.subr.mxu0 0.0
    %3181 = vmatpush1.msra.mxu0 0.0
    %3182 = vmatprep.subr.mxu0 0.0
    %3183 = vmatpush1.msra.mxu0 0.0
    %3184 = vmatprep.subr.mxu0 0.0
    %3185 = vmatpush1.msra.mxu0 0.0
    %3186 = vmatprep.subr.mxu0 0.0
    %3187 = vmatpush1.msra.mxu0 0.0
    %3188 = vmatprep.subr.mxu0 0.0
    %3189 = vmatpush1.msra.mxu0 0.0
    %3190 = vmatprep.subr.mxu0 0.0
    %3191 = vmatpush1.msra.mxu0 0.0
    %3192 = vmatprep.subr.mxu0 0.0
    %3193 = vmatpush1.msra.mxu0 0.0
    %3194 = vmatprep.subr.mxu0 0.0
    %3195 = vmatpush1.msra.mxu0 0.0
    %3196 = vmatprep.subr.mxu0 0.0
    %3197 = vmatpush1.msra.mxu0 0.0
    %3198 = vmatprep.subr.mxu0 0.0
    %3199 = vmatpush1.msra.mxu0 0.0
    %3200 = vmatprep.subr.mxu0 0.0
    %3201 = vmatpush1.msra.mxu0 0.0
    %3202 = vmatprep.subr.mxu0 0.0
    %3203 = vmatpush1.msra.mxu0 0.0
    %3204 = vmatprep.subr.mxu0 0.0
    %3205 = vmatpush1.msra.mxu0 0.0
    %3206 = vmatprep.subr.mxu0 0.0
    %3207 = vmatpush1.msra.mxu0 0.0
    %3208 = vmatprep.subr.mxu0 0.0
    %3209 = vmatpush1.msra.mxu0 0.0
    %3210 = vmatprep.subr.mxu0 0.0
    %3211 = vmatpush1.msra.mxu0 0.0
    %3212 = vmatprep.subr.mxu0 0.0
    %3213 = vmatpush1.msra.mxu0 0.0
    %3214 = vmatprep.subr.mxu0 0.0
    %3215 = vmatpush1.msra.mxu0 0.0
    %3216 = vmatprep.subr.mxu0 0.0
    %3217 = vmatpush1.msra.mxu0 0.0
    %3218 = vmatprep.subr.mxu0 0.0
    %3219 = vmatpush1.msra.mxu0 0.0
    %3220 = vmatprep.mubr.f32.mxu0 0.0
    %3221 = vmatmul.mubr.f32.gmra.mrb[0].mxu0 %v3154
    %v3222 = vpop.f32.mrb[0].mxu0
    %v3223 = vadd.f32 %v3150, %v3222
    %v3224 = vpop.f32.mrb[0].mxu0
    %3225 = vdwg.mxu0
    %v3226 = vmul.f32 %v3039, %v3053
    %3227 = vrot.lane.b32.xlu0 %v3058, 96
    %v3228 = vpop.permute.xlu0 %3227
    %v3230 = vmul.f32 %v3226, %v3228
    %3231 = vrot.lane.b32.xlu0 %v3063, 96
    %v3232 = vpop.permute.xlu0 %3231
    %v3234 = vadd.f32 %v3230, %v3232
    %v3235 = vld [vmem:[%s9 + $0x20] sm:$0xff]
    %v3236 = vld [vmem:[%s9 + $0x28] sm:$0xff]
    %v3238 = vsel %vm170, %v3234, 0
    %3240 = vmatprep.subr.mxu0 0.0
    %3241 = vmatpush1.msra.mxu0 %v3235
    %3242 = vmatprep.subr.mxu0 0.0
    %3243 = vmatpush1.msra.mxu0 %v3236
    %3244 = vmatprep.subr.mxu0 0.0
    %3245 = vmatpush1.msra.mxu0 0.0
    %3246 = vmatprep.subr.mxu0 0.0
    %3247 = vmatpush1.msra.mxu0 0.0
    %3248 = vmatprep.subr.mxu0 0.0
    %3249 = vmatpush1.msra.mxu0 0.0
    %3250 = vmatprep.subr.mxu0 0.0
    %3251 = vmatpush1.msra.mxu0 0.0
    %3252 = vmatprep.subr.mxu0 0.0
    %3253 = vmatpush1.msra.mxu0 0.0
    %3254 = vmatprep.subr.mxu0 0.0
    %3255 = vmatpush1.msra.mxu0 0.0
    %3256 = vmatprep.subr.mxu0 0.0
    %3257 = vmatpush1.msra.mxu0 0.0
    %3258 = vmatprep.subr.mxu0 0.0
    %3259 = vmatpush1.msra.mxu0 0.0
    %3260 = vmatprep.subr.mxu0 0.0
    %3261 = vmatpush1.msra.mxu0 0.0
    %3262 = vmatprep.subr.mxu0 0.0
    %3263 = vmatpush1.msra.mxu0 0.0
    %3264 = vmatprep.subr.mxu0 0.0
    %3265 = vmatpush1.msra.mxu0 0.0
    %3266 = vmatprep.subr.mxu0 0.0
    %3267 = vmatpush1.msra.mxu0 0.0
    %3268 = vmatprep.subr.mxu0 0.0
    %3269 = vmatpush1.msra.mxu0 0.0
    %3270 = vmatprep.subr.mxu0 0.0
    %3271 = vmatpush1.msra.mxu0 0.0
    %3272 = vmatprep.subr.mxu0 0.0
    %3273 = vmatpush1.msra.mxu0 0.0
    %3274 = vmatprep.subr.mxu0 0.0
    %3275 = vmatpush1.msra.mxu0 0.0
    %3276 = vmatprep.subr.mxu0 0.0
    %3277 = vmatpush1.msra.mxu0 0.0
    %3278 = vmatprep.subr.mxu0 0.0
    %3279 = vmatpush1.msra.mxu0 0.0
    %3280 = vmatprep.subr.mxu0 0.0
    %3281 = vmatpush1.msra.mxu0 0.0
    %3282 = vmatprep.subr.mxu0 0.0
    %3283 = vmatpush1.msra.mxu0 0.0
    %3284 = vmatprep.subr.mxu0 0.0
    %3285 = vmatpush1.msra.mxu0 0.0
    %3286 = vmatprep.subr.mxu0 0.0
    %3287 = vmatpush1.msra.mxu0 0.0
    %3288 = vmatprep.subr.mxu0 0.0
    %3289 = vmatpush1.msra.mxu0 0.0
    %3290 = vmatprep.subr.mxu0 0.0
    %3291 = vmatpush1.msra.mxu0 0.0
    %3292 = vmatprep.subr.mxu0 0.0
    %3293 = vmatpush1.msra.mxu0 0.0
    %3294 = vmatprep.subr.mxu0 0.0
    %3295 = vmatpush1.msra.mxu0 0.0
    %3296 = vmatprep.subr.mxu0 0.0
    %3297 = vmatpush1.msra.mxu0 0.0
    %3298 = vmatprep.subr.mxu0 0.0
    %3299 = vmatpush1.msra.mxu0 0.0
    %3300 = vmatprep.subr.mxu0 0.0
    %3301 = vmatpush1.msra.mxu0 0.0
    %3302 = vmatprep.subr.mxu0 0.0
    %3303 = vmatpush1.msra.mxu0 0.0
    %3304 = vmatprep.mubr.f32.mxu0 0.0
    %3305 = vmatmul.mubr.f32.gmra.mrb[0].mxu0 %v3238
    %v3306 = vpop.f32.mrb[0].mxu0
    %v3307 = vadd.f32 0.0, %v3306
    %v3308 = vpop.f32.mrb[0].mxu0
    %3309 = vdwg.mxu0
    %v3310 = vadd.f32 %v3223, %v3307
    %v3311 = vmul.f32 %v3045, %v3053
    %3312 = vrot.lane.b32.xlu0 %v3058, 80
    %v3313 = vpop.permute.xlu0 %3312
    %v3315 = vmul.f32 %v3311, %v3313
    %3316 = vrot.lane.b32.xlu0 %v3063, 80
    %v3317 = vpop.permute.xlu0 %3316
    %v3319 = vadd.f32 %v3315, %v3317
    %v3320 = vld [vmem:[%s9 + $0x30] sm:$0xff]
    %v3321 = vld [vmem:[%s9 + $0x38] sm:$0xff]
    %v3323 = vsel %vm170, %v3319, 0
    %3325 = vmatprep.subr.mxu0 0.0
    %3326 = vmatpush1.msra.mxu0 %v3320
    %3327 = vmatprep.subr.mxu0 0.0
    %3328 = vmatpush1.msra.mxu0 %v3321
    %3329 = vmatprep.subr.mxu0 0.0
    %3330 = vmatpush1.msra.mxu0 0.0
    %3331 = vmatprep.subr.mxu0 0.0
    %3332 = vmatpush1.msra.mxu0 0.0
    %3333 = vmatprep.subr.mxu0 0.0
    %3334 = vmatpush1.msra.mxu0 0.0
    %3335 = vmatprep.subr.mxu0 0.0
    %3336 = vmatpush1.msra.mxu0 0.0
    %3337 = vmatprep.subr.mxu0 0.0
    %3338 = vmatpush1.msra.mxu0 0.0
    %3339 = vmatprep.subr.mxu0 0.0
    %3340 = vmatpush1.msra.mxu0 0.0
    %3341 = vmatprep.subr.mxu0 0.0
    %3342 = vmatpush1.msra.mxu0 0.0
    %3343 = vmatprep.subr.mxu0 0.0
    %3344 = vmatpush1.msra.mxu0 0.0
    %3345 = vmatprep.subr.mxu0 0.0
    %3346 = vmatpush1.msra.mxu0 0.0
    %3347 = vmatprep.subr.mxu0 0.0
    %3348 = vmatpush1.msra.mxu0 0.0
    %3349 = vmatprep.subr.mxu0 0.0
    %3350 = vmatpush1.msra.mxu0 0.0
    %3351 = vmatprep.subr.mxu0 0.0
    %3352 = vmatpush1.msra.mxu0 0.0
    %3353 = vmatprep.subr.mxu0 0.0
    %3354 = vmatpush1.msra.mxu0 0.0
    %3355 = vmatprep.subr.mxu0 0.0
    %3356 = vmatpush1.msra.mxu0 0.0
    %3357 = vmatprep.subr.mxu0 0.0
    %3358 = vmatpush1.msra.mxu0 0.0
    %3359 = vmatprep.subr.mxu0 0.0
    %3360 = vmatpush1.msra.mxu0 0.0
    %3361 = vmatprep.subr.mxu0 0.0
    %3362 = vmatpush1.msra.mxu0 0.0
    %3363 = vmatprep.subr.mxu0 0.0
    %3364 = vmatpush1.msra.mxu0 0.0
    %3365 = vmatprep.subr.mxu0 0.0
    %3366 = vmatpush1.msra.mxu0 0.0
    %3367 = vmatprep.subr.mxu0 0.0
    %3368 = vmatpush1.msra.mxu0 0.0
    %3369 = vmatprep.subr.mxu0 0.0
    %3370 = vmatpush1.msra.mxu0 0.0
    %3371 = vmatprep.subr.mxu0 0.0
    %3372 = vmatpush1.msra.mxu0 0.0
    %3373 = vmatprep.subr.mxu0 0.0
    %3374 = vmatpush1.msra.mxu0 0.0
    %3375 = vmatprep.subr.mxu0 0.0
    %3376 = vmatpush1.msra.mxu0 0.0
    %3377 = vmatprep.subr.mxu0 0.0
    %3378 = vmatpush1.msra.mxu0 0.0
    %3379 = vmatprep.subr.mxu0 0.0
    %3380 = vmatpush1.msra.mxu0 0.0
    %3381 = vmatprep.subr.mxu0 0.0
    %3382 = vmatpush1.msra.mxu0 0.0
    %3383 = vmatprep.subr.mxu0 0.0
    %3384 = vmatpush1.msra.mxu0 0.0
    %3385 = vmatprep.subr.mxu0 0.0
    %3386 = vmatpush1.msra.mxu0 0.0
    %3387 = vmatprep.subr.mxu0 0.0
    %3388 = vmatpush1.msra.mxu0 0.0
    %3389 = vmatprep.mubr.f32.mxu0 0.0
    %3390 = vmatmul.mubr.f32.gmra.mrb[0].mxu0 %v3323
    %v3391 = vpop.f32.mrb[0].mxu0
    %v3392 = vadd.f32 0.0, %v3391
    %v3393 = vpop.f32.mrb[0].mxu0
    %3394 = vdwg.mxu0
    %v3395 = vadd.f32 %v3310, %v3392
    %v3396 = vld [vmem:[%s10] sm:$0xff]
    %v3397 = vld [vmem:[%s10 + $0x8] sm:$0xff]
    %v3398 = vld [vmem:[%s10 + $0x10] sm:$0xff]
    %v3399 = vld [vmem:[%s10 + $0x18] sm:$0xff]
    %v3400 = vld [vmem:[%s10 + $0x20] sm:$0xff]
    %v3401 = vld [vmem:[%s10 + $0x28] sm:$0xff]
    %v3402 = vld [vmem:[%s10 + $0x30] sm:$0xff]
    %v3403 = vld [vmem:[%s10 + $0x38] sm:$0xff]
    %v3404 = vld [vmem:[%s11] sm:$0xff]
    %v3405 = vld [vmem:[%s11 + $0x8] sm:$0xff]
    %v3406 = vld [vmem:[%s11 + $0x10] sm:$0xff]
    %v3407 = vld [vmem:[%s11 + $0x18] sm:$0xff]
    %v3408 = vld [vmem:[%s11 + $0x20] sm:$0xff]
    %v3409 = vld [vmem:[%s11 + $0x28] sm:$0xff]
    %v3410 = vld [vmem:[%s11 + $0x30] sm:$0xff]
    %v3411 = vld [vmem:[%s11 + $0x38] sm:$0xff]
    %v3412 = vld [vmem:[%s11 + $0x40] sm:$0xff]
    %v3413 = vld [vmem:[%s11 + $0x48] sm:$0xff]
    %v3414 = vld [vmem:[%s11 + $0x50] sm:$0xff]
    %v3415 = vld [vmem:[%s11 + $0x58] sm:$0xff]
    %v3416 = vld [vmem:[%s11 + $0x60] sm:$0xff]
    %v3417 = vld [vmem:[%s11 + $0x68] sm:$0xff]
    %v3418 = vld [vmem:[%s11 + $0x70] sm:$0xff]
    %v3419 = vld [vmem:[%s11 + $0x78] sm:$0xff]
    %v3420 = vld [vmem:[%s12] sm:$0xff]
    %v3421 = vld [vmem:[%s13] sm:$0xff]
    %v3422 = vld [vmem:[%s13 + $0x8] sm:$0xff]
    %v3423 = vld [vmem:[%s13 + $0x10] sm:$0xff]
    %v3424 = vld [vmem:[%s13 + $0x18] sm:$0xff]
    %v3425 = vsel %vm542, %v3395, 0.0
    %3426 = vadd.xlane.f32.xlu0 %v3425
    %v3427 = vpop.xlane.xlu0 %3426
    %v3428 = vrcp.pop 32.0
    %v3429 = vmul.f32 %v3427, %v3428
    %v3430 = vsub.f32 %v3395, %v3429
    %v3431 = vmul.f32 %v3430, %v3430
    %v3432 = vsel %vm542, %v3431, 0.0
    %3433 = vadd.xlane.f32.xlu0 %v3432
    %v3434 = vpop.xlane.xlu0 %3433
    %v3435 = vmul.f32 %v3434, %v3428
    %v3436 = vadd.f32 %v3435, 1e-05
    %v3437 = vrsqrt.pop %v3436
    %v3438 = vmul.f32 %v3430, %v3437
    %v3439 = vlaneseq
    %v3440 = vshrl.u32 %v3439, 7
    %v3441 = vsub.s32 0, %v3440
    %v3442 = vrot.slane %v3420, %v3441
    %v3443 = vmul.f32 %v3438, %v3442
    %v3444 = vlaneseq
    %v3445 = vshrl.u32 %v3444, 7
    %v3446 = vsub.s32 1, %v3445
    %v3447 = vrot.slane %v3420, %v3446
    %v3448 = vadd.f32 %v3443, %v3447
    %v3449 = vlaneseq
    %v3450 = vshrl.u32 %v3449, 7
    %v3451 = vsub.s32 2, %v3450
    %v3452 = vrot.slane %v3420, %v3451
    %v3454 = vsel %vm542, %v3448, 0
    %3456 = vmatprep.subr.mxu0 0.0
    %3457 = vmatpush1.msra.mxu0 %v3396
    %3458 = vmatprep.subr.mxu0 0.0
    %3459 = vmatpush1.msra.mxu0 %v3398
    %3460 = vmatprep.subr.mxu0 0.0
    %3461 = vmatpush1.msra.mxu0 %v3400
    %3462 = vmatprep.subr.mxu0 0.0
    %3463 = vmatpush1.msra.mxu0 %v3402
    %3464 = vmatprep.subr.mxu0 0.0
    %3465 = vmatpush1.msra.mxu0 0.0
    %3466 = vmatprep.subr.mxu0 0.0
    %3467 = vmatpush1.msra.mxu0 0.0
    %3468 = vmatprep.subr.mxu0 0.0
    %3469 = vmatpush1.msra.mxu0 0.0
    %3470 = vmatprep.subr.mxu0 0.0
    %3471 = vmatpush1.msra.mxu0 0.0
    %3472 = vmatprep.subr.mxu0 0.0
    %3473 = vmatpush1.msra.mxu0 0.0
    %3474 = vmatprep.subr.mxu0 0.0
    %3475 = vmatpush1.msra.mxu0 0.0
    %3476 = vmatprep.subr.mxu0 0.0
    %3477 = vmatpush1.msra.mxu0 0.0
    %3478 = vmatprep.subr.mxu0 0.0
    %3479 = vmatpush1.msra.mxu0 0.0
    %3480 = vmatprep.subr.mxu0 0.0
    %3481 = vmatpush1.msra.mxu0 0.0
    %3482 = vmatprep.subr.mxu0 0.0
    %3483 = vmatpush1.msra.mxu0 0.0
    %3484 = vmatprep.subr.mxu0 0.0
    %3485 = vmatpush1.msra.mxu0 0.0
    %3486 = vmatprep.subr.mxu0 0.0
    %3487 = vmatpush1.msra.mxu0 0.0
    %3488 = vmatprep.subr.mxu0 0.0
    %3489 = vmatpush1.msra.mxu0 0.0
    %3490 = vmatprep.subr.mxu0 0.0
    %3491 = vmatpush1.msra.mxu0 0.0
    %3492 = vmatprep.subr.mxu0 0.0
    %3493 = vmatpush1.msra.mxu0 0.0
    %3494 = vmatprep.subr.mxu0 0.0
    %3495 = vmatpush1.msra.mxu0 0.0
    %3496 = vmatprep.subr.mxu0 0.0
    %3497 = vmatpush1.msra.mxu0 0.0
    %3498 = vmatprep.subr.mxu0 0.0
    %3499 = vmatpush1.msra.mxu0 0.0
    %3500 = vmatprep.subr.mxu0 0.0
    %3501 = vmatpush1.msra.mxu0 0.0
    %3502 = vmatprep.subr.mxu0 0.0
    %3503 = vmatpush1.msra.mxu0 0.0
    %3504 = vmatprep.subr.mxu0 0.0
    %3505 = vmatpush1.msra.mxu0 0.0
    %3506 = vmatprep.subr.mxu0 0.0
    %3507 = vmatpush1.msra.mxu0 0.0
    %3508 = vmatprep.subr.mxu0 0.0
    %3509 = vmatpush1.msra.mxu0 0.0
    %3510 = vmatprep.subr.mxu0 0.0
    %3511 = vmatpush1.msra.mxu0 0.0
    %3512 = vmatprep.subr.mxu0 0.0
    %3513 = vmatpush1.msra.mxu0 0.0
    %3514 = vmatprep.subr.mxu0 0.0
    %3515 = vmatpush1.msra.mxu0 0.0
    %3516 = vmatprep.subr.mxu0 0.0
    %3517 = vmatpush1.msra.mxu0 0.0
    %3518 = vmatprep.subr.mxu0 0.0
    %3519 = vmatpush1.msra.mxu0 0.0
    %3520 = vmatprep.mubr.f32.mxu0 0.0
    %3521 = vmatmul.mubr.f32.gmra.mrb[0].mxu0 %v3454
    %v3522 = vpop.f32.mrb[0].mxu0
    %v3523 = vadd.f32 %v3452, %v3522
    %v3524 = vpop.f32.mrb[0].mxu0
    %3525 = vdwg.mxu0
    %3527 = vrot.lane.b32.xlu0 %v3523, 96
    %v3528 = vpop.permute.xlu0 %3527
    %v3529 = vsel %vm440, %v3523, 0
    %v3531 = vsel %vm440, %v3528, 0
    %3533 = vmatprep.subr.mxu0 0.0
    %3534 = vmatpush1.xpose.msra.mxu0 %v3531
    %3535 = vmatprep.subr.mxu0 0.0
    %3536 = vmatpush1.xpose.msra.mxu0 0.0
    %3537 = vmatprep.subr.mxu0 0.0
    %3538 = vmatpush1.xpose.msra.mxu0 0.0
    %3539 = vmatprep.subr.mxu0 0.0
    %3540 = vmatpush1.xpose.msra.mxu0 0.0
    %3541 = vmatprep.subr.mxu0 0.0
    %3542 = vmatpush1.xpose.msra.mxu0 0.0
    %3543 = vmatprep.subr.mxu0 0.0
    %3544 = vmatpush1.xpose.msra.mxu0 0.0
    %3545 = vmatprep.subr.mxu0 0.0
    %3546 = vmatpush1.xpose.msra.mxu0 0.0
    %3547 = vmatprep.subr.mxu0 0.0
    %3548 = vmatpush1.xpose.msra.mxu0 0.0
    %3549 = vmatprep.subr.mxu0 0.0
    %3550 = vmatpush1.xpose.msra.mxu0 0.0
    %3551 = vmatprep.subr.mxu0 0.0
    %3552 = vmatpush1.xpose.msra.mxu0 0.0
    %3553 = vmatprep.subr.mxu0 0.0
    %3554 = vmatpush1.xpose.msra.mxu0 0.0
    %3555 = vmatprep.subr.mxu0 0.0
    %3556 = vmatpush1.xpose.msra.mxu0 0.0
    %3557 = vmatprep.subr.mxu0 0.0
    %3558 = vmatpush1.xpose.msra.mxu0 0.0
    %3559 = vmatprep.subr.mxu0 0.0
    %3560 = vmatpush1.xpose.msra.mxu0 0.0
    %3561 = vmatprep.subr.mxu0 0.0
    %3562 = vmatpush1.xpose.msra.mxu0 0.0
    %3563 = vmatprep.subr.mxu0 0.0
    %3564 = vmatpush1.xpose.msra.mxu0 0.0
    %3565 = vmatprep.subr.mxu0 0.0
    %3566 = vmatpush1.xpose.msra.mxu0 0.0
    %3567 = vmatprep.subr.mxu0 0.0
    %3568 = vmatpush1.xpose.msra.mxu0 0.0
    %3569 = vmatprep.subr.mxu0 0.0
    %3570 = vmatpush1.xpose.msra.mxu0 0.0
    %3571 = vmatprep.subr.mxu0 0.0
    %3572 = vmatpush1.xpose.msra.mxu0 0.0
    %3573 = vmatprep.subr.mxu0 0.0
    %3574 = vmatpush1.xpose.msra.mxu0 0.0
    %3575 = vmatprep.subr.mxu0 0.0
    %3576 = vmatpush1.xpose.msra.mxu0 0.0
    %3577 = vmatprep.subr.mxu0 0.0
    %3578 = vmatpush1.xpose.msra.mxu0 0.0
    %3579 = vmatprep.subr.mxu0 0.0
    %3580 = vmatpush1.xpose.msra.mxu0 0.0
    %3581 = vmatprep.subr.mxu0 0.0
    %3582 = vmatpush1.xpose.msra.mxu0 0.0
    %3583 = vmatprep.subr.mxu0 0.0
    %3584 = vmatpush1.xpose.msra.mxu0 0.0
    %3585 = vmatprep.subr.mxu0 0.0
    %3586 = vmatpush1.xpose.msra.mxu0 0.0
    %3587 = vmatprep.subr.mxu0 0.0
    %3588 = vmatpush1.xpose.msra.mxu0 0.0
    %3589 = vmatprep.subr.mxu0 0.0
    %3590 = vmatpush1.xpose.msra.mxu0 0.0
    %3591 = vmatprep.subr.mxu0 0.0
    %3592 = vmatpush1.xpose.msra.mxu0 0.0
    %3593 = vmatprep.subr.mxu0 0.0
    %3594 = vmatpush1.xpose.msra.mxu0 0.0
    %3595 = vmatprep.subr.mxu0 0.0
    %3596 = vmatpush1.xpose.msra.mxu0 0.0
    %3597 = vmatprep.mubr.f32.mxu0 0.0
    %3598 = vmatmul.mubr.f32.gmra.mrb[0].mxu0 %v3529
    %v3599 = vpop.f32.mrb[0].mxu0
    %v3600 = vadd.f32 %v3421, %v3599
    %v3601 = vpop.f32.mrb[0].mxu0
    %3602 = vdwg.mxu0
    %v3603 = vsel %vm440, %v3600, -inf
    %3604 = vmax.xlane.f32.xlu0 %v3603
    %v3605 = vpop.xlane.xlu0 %3604
    %v3606 = vsub.f32 %v3600, %v3605
    %v3607 = vmul.f32 %v3606, 1.442695
    %v3608 = vpow.pop %v3607
    %v3609 = vsel %vm440, %v3608, 0.0
    %3610 = vadd.xlane.f32.xlu0 %v3609
    %v3611 = vpop.xlane.xlu0 %3610
    %v3612 = vrcp.pop %v3611
    %v3613 = vmul.f32 %v3608, %v3612
    %3614 = vrot.lane.b32.xlu0 %v3523, 64
    %v3615 = vpop.permute.xlu0 %3614
    %v3618 = vsel %vm440, %v3613, 0
    %3620 = vmatprep.subr.mxu0 0.0
    %3621 = vmatpush1.msra.mxu0 %v3615
    %3622 = vmatprep.subr.mxu0 0.0
    %3623 = vmatpush1.msra.mxu0 0.0
    %3624 = vmatprep.subr.mxu0 0.0
    %3625 = vmatpush1.msra.mxu0 0.0
    %3626 = vmatprep.subr.mxu0 0.0
    %3627 = vmatpush1.msra.mxu0 0.0
    %3628 = vmatprep.subr.mxu0 0.0
    %3629 = vmatpush1.msra.mxu0 0.0
    %3630 = vmatprep.subr.mxu0 0.0
    %3631 = vmatpush1.msra.mxu0 0.0
    %3632 = vmatprep.subr.mxu0 0.0
    %3633 = vmatpush1.msra.mxu0 0.0
    %3634 = vmatprep.subr.mxu0 0.0
    %3635 = vmatpush1.msra.mxu0 0.0
    %3636 = vmatprep.subr.mxu0 0.0
    %3637 = vmatpush1.msra.mxu0 0.0
    %3638 = vmatprep.subr.mxu0 0.0
    %3639 = vmatpush1.msra.mxu0 0.0
    %3640 = vmatprep.subr.mxu0 0.0
    %3641 = vmatpush1.msra.mxu0 0.0
    %3642 = vmatprep.subr.mxu0 0.0
    %3643 = vmatpush1.msra.mxu0 0.0
    %3644 = vmatprep.subr.mxu0 0.0
    %3645 = vmatpush1.msra.mxu0 0.0
    %3646 = vmatprep.subr.mxu0 0.0
    %3647 = vmatpush1.msra.mxu0 0.0
    %3648 = vmatprep.subr.mxu0 0.0
    %3649 = vmatpush1.msra.mxu0 0.0
    %3650 = vmatprep.subr.mxu0 0.0
    %3651 = vmatpush1.msra.mxu0 0.0
    %3652 = vmatprep.subr.mxu0 0.0
    %3653 = vmatpush1.msra.mxu0 0.0
    %3654 = vmatprep.subr.mxu0 0.0
    %3655 = vmatpush1.msra.mxu0 0.0
    %3656 = vmatprep.subr.mxu0 0.0
    %3657 = vmatpush1.msra.mxu0 0.0
    %3658 = vmatprep.subr.mxu0 0.0
    %3659 = vmatpush1.msra.mxu0 0.0
    %3660 = vmatprep.subr.mxu0 0.0
    %3661 = vmatpush1.msra.mxu0 0.0
    %3662 = vmatprep.subr.mxu0 0.0
    %3663 = vmatpush1.msra.mxu0 0.0
    %3664 = vmatprep.subr.mxu0 0.0
    %3665 = vmatpush1.msra.mxu0 0.0
    %3666 = vmatprep.subr.mxu0 0.0
    %3667 = vmatpush1.msra.mxu0 0.0
    %3668 = vmatprep.subr.mxu0 0.0
    %3669 = vmatpush1.msra.mxu0 0.0
    %3670 = vmatprep.subr.mxu0 0.0
    %3671 = vmatpush1.msra.mxu0 0.0
    %3672 = vmatprep.subr.mxu0 0.0
    %3673 = vmatpush1.msra.mxu0 0.0
    %3674 = vmatprep.subr.mxu0 0.0
    %3675 = vmatpush1.msra.mxu0 0.0
    %3676 = vmatprep.subr.mxu0 0.0
    %3677 = vmatpush1.msra.mxu0 0.0
    %3678 = vmatprep.subr.mxu0 0.0
    %3679 = vmatpush1.msra.mxu0 0.0
    %3680 = vmatprep.subr.mxu0 0.0
    %3681 = vmatpush1.msra.mxu0 0.0
    %3682 = vmatprep.subr.mxu0 0.0
    %3683 = vmatpush1.msra.mxu0 0.0
    %3684 = vmatprep.mubr.f32.mxu0 0.0
    %3685 = vmatmul.mubr.f32.gmra.mrb[0].mxu0 %v3618
    %v3686 = vpop.f32.mrb[0].mxu0
    %v3687 = vadd.f32 0.0, %v3686
    %v3688 = vpop.f32.mrb[0].mxu0
    %3689 = vdwg.mxu0
    %3691 = vrot.lane.b32.xlu0 %v3396, 32
    %v3692 = vpop.permute.xlu0 %3691
    %v3695 = vsel %vm440, %v3687, 0
    %3697 = vmatprep.subr.mxu0 0.0
    %3698 = vmatpush1.msra.mxu0 %v3692
    %3699 = vmatprep.subr.mxu0 0.0
    %3700 = vmatpush1.msra.mxu0 0.0
    %3701 = vmatprep.subr.mxu0 0.0
    %3702 = vmatpush1.msra.mxu0 0.0
    %3703 = vmatprep.subr.mxu0 0.0
    %3704 = vmatpush1.msra.mxu0 0.0
    %3705 = vmatprep.subr.mxu0 0.0
    %3706 = vmatpush1.msra.mxu0 0.0
    %3707 = vmatprep.subr.mxu0 0.0
    %3708 = vmatpush1.msra.mxu0 0.0
    %3709 = vmatprep.subr.mxu0 0.0
    %3710 = vmatpush1.msra.mxu0 0.0
    %3711 = vmatprep.subr.mxu0 0.0
    %3712 = vmatpush1.msra.mxu0 0.0
    %3713 = vmatprep.subr.mxu0 0.0
    %3714 = vmatpush1.msra.mxu0 0.0
    %3715 = vmatprep.subr.mxu0 0.0
    %3716 = vmatpush1.msra.mxu0 0.0
    %3717 = vmatprep.subr.mxu0 0.0
    %3718 = vmatpush1.msra.mxu0 0.0
    %3719 = vmatprep.subr.mxu0 0.0
    %3720 = vmatpush1.msra.mxu0 0.0
    %3721 = vmatprep.subr.mxu0 0.0
    %3722 = vmatpush1.msra.mxu0 0.0
    %3723 = vmatprep.subr.mxu0 0.0
    %3724 = vmatpush1.msra.mxu0 0.0
    %3725 = vmatprep.subr.mxu0 0.0
    %3726 = vmatpush1.msra.mxu0 0.0
    %3727 = vmatprep.subr.mxu0 0.0
    %3728 = vmatpush1.msra.mxu0 0.0
    %3729 = vmatprep.subr.mxu0 0.0
    %3730 = vmatpush1.msra.mxu0 0.0
    %3731 = vmatprep.subr.mxu0 0.0
    %3732 = vmatpush1.msra.mxu0 0.0
    %3733 = vmatprep.subr.mxu0 0.0
    %3734 = vmatpush1.msra.mxu0 0.0
    %3735 = vmatprep.subr.mxu0 0.0
    %3736 = vmatpush1.msra.mxu0 0.0
    %3737 = vmatprep.subr.mxu0 0.0
    %3738 = vmatpush1.msra.mxu0 0.0
    %3739 = vmatprep.subr.mxu0 0.0
    %3740 = vmatpush1.msra.mxu0 0.0
    %3741 = vmatprep.subr.mxu0 0.0
    %3742 = vmatpush1.msra.mxu0 0.0
    %3743 = vmatprep.subr.mxu0 0.0
    %3744 = vmatpush1.msra.mxu0 0.0
    %3745 = vmatprep.subr.mxu0 0.0
    %3746 = vmatpush1.msra.mxu0 0.0
    %3747 = vmatprep.subr.mxu0 0.0
    %3748 = vmatpush1.msra.mxu0 0.0
    %3749 = vmatprep.subr.mxu0 0.0
    %3750 = vmatpush1.msra.mxu0 0.0
    %3751 = vmatprep.subr.mxu0 0.0
    %3752 = vmatpush1.msra.mxu0 0.0
    %3753 = vmatprep.subr.mxu0 0.0
    %3754 = vmatpush1.msra.mxu0 0.0
    %3755 = vmatprep.subr.mxu0 0.0
    %3756 = vmatpush1.msra.mxu0 0.0
    %3757 = vmatprep.subr.mxu0 0.0
    %3758 = vmatpush1.msra.mxu0 0.0
    %3759 = vmatprep.subr.mxu0 0.0
    %3760 = vmatpush1.msra.mxu0 0.0
    %3761 = vmatprep.mubr.f32.mxu0 0.0
    %3762 = vmatmul.mubr.f32.gmra.mrb[0].mxu0 %v3695
    %v3763 = vpop.f32.mrb[0].mxu0
    %v3764 = vadd.f32 0.0, %v3763
    %v3765 = vpop.f32.mrb[0].mxu0
    %3766 = vdwg.mxu0
    %v3767 = vlaneseq
    %v3768 = vshrl.u32 %v3767, 7
    %v3769 = vsub.s32 3, %v3768
    %v3770 = vrot.slane %v3420, %v3769
    %v3771 = vadd.f32 %v3770, %v3764
    %3772 = vrot.lane.b32.xlu0 %v3523, 120
    %v3773 = vpop.permute.xlu0 %3772
    %3774 = vrot.lane.b32.xlu0 %v3523, 88
    %v3775 = vpop.permute.xlu0 %3774
    %v3776 = vsel %vm440, %v3773, 0
    %v3778 = vsel %vm440, %v3775, 0
    %3780 = vmatprep.subr.mxu0 0.0
    %3781 = vmatpush1.xpose.msra.mxu0 %v3778
    %3782 = vmatprep.subr.mxu0 0.0
    %3783 = vmatpush1.xpose.msra.mxu0 0.0
    %3784 = vmatprep.subr.mxu0 0.0
    %3785 = vmatpush1.xpose.msra.mxu0 0.0
    %3786 = vmatprep.subr.mxu0 0.0
    %3787 = vmatpush1.xpose.msra.mxu0 0.0
    %3788 = vmatprep.subr.mxu0 0.0
    %3789 = vmatpush1.xpose.msra.mxu0 0.0
    %3790 = vmatprep.subr.mxu0 0.0
    %3791 = vmatpush1.xpose.msra.mxu0 0.0
    %3792 = vmatprep.subr.mxu0 0.0
    %3793 = vmatpush1.xpose.msra.mxu0 0.0
    %3794 = vmatprep.subr.mxu0 0.0
    %3795 = vmatpush1.xpose.msra.mxu0 0.0
    %3796 = vmatprep.subr.mxu0 0.0
    %3797 = vmatpush1.xpose.msra.mxu0 0.0
    %3798 = vmatprep.subr.mxu0 0.0
    %3799 = vmatpush1.xpose.msra.mxu0 0.0
    %3800 = vmatprep.subr.mxu0 0.0
    %3801 = vmatpush1.xpose.msra.mxu0 0.0
    %3802 = vmatprep.subr.mxu0 0.0
    %3803 = vmatpush1.xpose.msra.mxu0 0.0
    %3804 = vmatprep.subr.mxu0 0.0
    %3805 = vmatpush1.xpose.msra.mxu0 0.0
    %3806 = vmatprep.subr.mxu0 0.0
    %3807 = vmatpush1.xpose.msra.mxu0 0.0
    %3808 = vmatprep.subr.mxu0 0.0
    %3809 = vmatpush1.xpose.msra.mxu0 0.0
    %3810 = vmatprep.subr.mxu0 0.0
    %3811 = vmatpush1.xpose.msra.mxu0 0.0
    %3812 = vmatprep.subr.mxu0 0.0
    %3813 = vmatpush1.xpose.msra.mxu0 0.0
    %3814 = vmatprep.subr.mxu0 0.0
    %3815 = vmatpush1.xpose.msra.mxu0 0.0
    %3816 = vmatprep.subr.mxu0 0.0
    %3817 = vmatpush1.xpose.msra.mxu0 0.0
    %3818 = vmatprep.subr.mxu0 0.0
    %3819 = vmatpush1.xpose.msra.mxu0 0.0
    %3820 = vmatprep.subr.mxu0 0.0
    %3821 = vmatpush1.xpose.msra.mxu0 0.0
    %3822 = vmatprep.subr.mxu0 0.0
    %3823 = vmatpush1.xpose.msra.mxu0 0.0
    %3824 = vmatprep.subr.mxu0 0.0
    %3825 = vmatpush1.xpose.msra.mxu0 0.0
    %3826 = vmatprep.subr.mxu0 0.0
    %3827 = vmatpush1.xpose.msra.mxu0 0.0
    %3828 = vmatprep.subr.mxu0 0.0
    %3829 = vmatpush1.xpose.msra.mxu0 0.0
    %3830 = vmatprep.subr.mxu0 0.0
    %3831 = vmatpush1.xpose.msra.mxu0 0.0
    %3832 = vmatprep.subr.mxu0 0.0
    %3833 = vmatpush1.xpose.msra.mxu0 0.0
    %3834 = vmatprep.subr.mxu0 0.0
    %3835 = vmatpush1.xpose.msra.mxu0 0.0
    %3836 = vmatprep.subr.mxu0 0.0
    %3837 = vmatpush1.xpose.msra.mxu0 0.0
    %3838 = vmatprep.subr.mxu0 0.0
    %3839 = vmatpush1.xpose.msra.mxu0 0.0
    %3840 = vmatprep.subr.mxu0 0.0
    %3841 = vmatpush1.xpose.msra.mxu0 0.0
    %3842 = vmatprep.subr.mxu0 0.0
    %3843 = vmatpush1.xpose.msra.mxu0 0.0
    %3844 = vmatprep.mubr.f32.mxu0 0.0
    %3845 = vmatmul.mubr.f32.gmra.mrb[0].mxu0 %v3776
    %v3846 = vpop.f32.mrb[0].mxu0
    %v3847 = vadd.f32 %v3422, %v3846
    %v3848 = vpop.f32.mrb[0].mxu0
    %3849 = vdwg.mxu0
    %v3850 = vsel %vm440, %v3847, -inf
    %3851 = vmax.xlane.f32.xlu0 %v3850
    %v3852 = vpop.xlane.xlu0 %3851
    %v3853 = vsub.f32 %v3847, %v3852
    %v3854 = vmul.f32 %v3853, 1.442695
    %v3855 = vpow.pop %v3854
    %v3856 = vsel %vm440, %v3855, 0.0
    %3857 = vadd.xlane.f32.xlu0 %v3856
    %v3858 = vpop.xlane.xlu0 %3857
    %v3859 = vrcp.pop %v3858
    %v3860 = vmul.f32 %v3855, %v3859
    %3861 = vrot.lane.b32.xlu0 %v3523, 56
    %v3862 = vpop.permute.xlu0 %3861
    %v3865 = vsel %vm440, %v3860, 0
    %3867 = vmatprep.subr.mxu0 0.0
    %3868 = vmatpush1.msra.mxu0 %v3862
    %3869 = vmatprep.subr.mxu0 0.0
    %3870 = vmatpush1.msra.mxu0 0.0
    %3871 = vmatprep.subr.mxu0 0.0
    %3872 = vmatpush1.msra.mxu0 0.0
    %3873 = vmatprep.subr.mxu0 0.0
    %3874 = vmatpush1.msra.mxu0 0.0
    %3875 = vmatprep.subr.mxu0 0.0
    %3876 = vmatpush1.msra.mxu0 0.0
    %3877 = vmatprep.subr.mxu0 0.0
    %3878 = vmatpush1.msra.mxu0 0.0
    %3879 = vmatprep.subr.mxu0 0.0
    %3880 = vmatpush1.msra.mxu0 0.0
    %3881 = vmatprep.subr.mxu0 0.0
    %3882 = vmatpush1.msra.mxu0 0.0
    %3883 = vmatprep.subr.mxu0 0.0
    %3884 = vmatpush1.msra.mxu0 0.0
    %3885 = vmatprep.subr.mxu0 0.0
    %3886 = vmatpush1.msra.mxu0 0.0
    %3887 = vmatprep.subr.mxu0 0.0
    %3888 = vmatpush1.msra.mxu0 0.0
    %3889 = vmatprep.subr.mxu0 0.0
    %3890 = vmatpush1.msra.mxu0 0.0
    %3891 = vmatprep.subr.mxu0 0.0
    %3892 = vmatpush1.msra.mxu0 0.0
    %3893 = vmatprep.subr.mxu0 0.0
    %3894 = vmatpush1.msra.mxu0 0.0
    %3895 = vmatprep.subr.mxu0 0.0
    %3896 = vmatpush1.msra.mxu0 0.0
    %3897 = vmatprep.subr.mxu0 0.0
    %3898 = vmatpush1.msra.mxu0 0.0
    %3899 = vmatprep.subr.mxu0 0.0
    %3900 = vmatpush1.msra.mxu0 0.0
    %3901 = vmatprep.subr.mxu0 0.0
    %3902 = vmatpush1.msra.mxu0 0.0
    %3903 = vmatprep.subr.mxu0 0.0
    %3904 = vmatpush1.msra.mxu0 0.0
    %3905 = vmatprep.subr.mxu0 0.0
    %3906 = vmatpush1.msra.mxu0 0.0
    %3907 = vmatprep.subr.mxu0 0.0
    %3908 = vmatpush1.msra.mxu0 0.0
    %3909 = vmatprep.subr.mxu0 0.0
    %3910 = vmatpush1.msra.mxu0 0.0
    %3911 = vmatprep.subr.mxu0 0.0
    %3912 = vmatpush1.msra.mxu0 0.0
    %3913 = vmatprep.subr.mxu0 0.0
    %3914 = vmatpush1.msra.mxu0 0.0
    %3915 = vmatprep.subr.mxu0 0.0
    %3916 = vmatpush1.msra.mxu0 0.0
    %3917 = vmatprep.subr.mxu0 0.0
    %3918 = vmatpush1.msra.mxu0 0.0
    %3919 = vmatprep.subr.mxu0 0.0
    %3920 = vmatpush1.msra.mxu0 0.0
    %3921 = vmatprep.subr.mxu0 0.0
    %3922 = vmatpush1.msra.mxu0 0.0
    %3923 = vmatprep.subr.mxu0 0.0
    %3924 = vmatpush1.msra.mxu0 0.0
    %3925 = vmatprep.subr.mxu0 0.0
    %3926 = vmatpush1.msra.mxu0 0.0
    %3927 = vmatprep.subr.mxu0 0.0
    %3928 = vmatpush1.msra.mxu0 0.0
    %3929 = vmatprep.subr.mxu0 0.0
    %3930 = vmatpush1.msra.mxu0 0.0
    %3931 = vmatprep.mubr.f32.mxu0 0.0
    %3932 = vmatmul.mubr.f32.gmra.mrb[0].mxu0 %v3865
    %v3933 = vpop.f32.mrb[0].mxu0
    %v3934 = vadd.f32 0.0, %v3933
    %v3935 = vpop.f32.mrb[0].mxu0
    %3936 = vdwg.mxu0
    %3938 = vrot.lane.b32.xlu0 %v3398, 32
    %v3939 = vpop.permute.xlu0 %3938
    %v3942 = vsel %vm440, %v3934, 0
    %3944 = vmatprep.subr.mxu0 0.0
    %3945 = vmatpush1.msra.mxu0 %v3939
    %3946 = vmatprep.subr.mxu0 0.0
    %3947 = vmatpush1.msra.mxu0 0.0
    %3948 = vmatprep.subr.mxu0 0.0
    %3949 = vmatpush1.msra.mxu0 0.0
    %3950 = vmatprep.subr.mxu0 0.0
    %3951 = vmatpush1.msra.mxu0 0.0
    %3952 = vmatprep.subr.mxu0 0.0
    %3953 = vmatpush1.msra.mxu0 0.0
    %3954 = vmatprep.subr.mxu0 0.0
    %3955 = vmatpush1.msra.mxu0 0.0
    %3956 = vmatprep.subr.mxu0 0.0
    %3957 = vmatpush1.msra.mxu0 0.0
    %3958 = vmatprep.subr.mxu0 0.0
    %3959 = vmatpush1.msra.mxu0 0.0
    %3960 = vmatprep.subr.mxu0 0.0
    %3961 = vmatpush1.msra.mxu0 0.0
    %3962 = vmatprep.subr.mxu0 0.0
    %3963 = vmatpush1.msra.mxu0 0.0
    %3964 = vmatprep.subr.mxu0 0.0
    %3965 = vmatpush1.msra.mxu0 0.0
    %3966 = vmatprep.subr.mxu0 0.0
    %3967 = vmatpush1.msra.mxu0 0.0
    %3968 = vmatprep.subr.mxu0 0.0
    %3969 = vmatpush1.msra.mxu0 0.0
    %3970 = vmatprep.subr.mxu0 0.0
    %3971 = vmatpush1.msra.mxu0 0.0
    %3972 = vmatprep.subr.mxu0 0.0
    %3973 = vmatpush1.msra.mxu0 0.0
    %3974 = vmatprep.subr.mxu0 0.0
    %3975 = vmatpush1.msra.mxu0 0.0
    %3976 = vmatprep.subr.mxu0 0.0
    %3977 = vmatpush1.msra.mxu0 0.0
    %3978 = vmatprep.subr.mxu0 0.0
    %3979 = vmatpush1.msra.mxu0 0.0
    %3980 = vmatprep.subr.mxu0 0.0
    %3981 = vmatpush1.msra.mxu0 0.0
    %3982 = vmatprep.subr.mxu0 0.0
    %3983 = vmatpush1.msra.mxu0 0.0
    %3984 = vmatprep.subr.mxu0 0.0
    %3985 = vmatpush1.msra.mxu0 0.0
    %3986 = vmatprep.subr.mxu0 0.0
    %3987 = vmatpush1.msra.mxu0 0.0
    %3988 = vmatprep.subr.mxu0 0.0
    %3989 = vmatpush1.msra.mxu0 0.0
    %3990 = vmatprep.subr.mxu0 0.0
    %3991 = vmatpush1.msra.mxu0 0.0
    %3992 = vmatprep.subr.mxu0 0.0
    %3993 = vmatpush1.msra.mxu0 0.0
    %3994 = vmatprep.subr.mxu0 0.0
    %3995 = vmatpush1.msra.mxu0 0.0
    %3996 = vmatprep.subr.mxu0 0.0
    %3997 = vmatpush1.msra.mxu0 0.0
    %3998 = vmatprep.subr.mxu0 0.0
    %3999 = vmatpush1.msra.mxu0 0.0
    %4000 = vmatprep.subr.mxu0 0.0
    %4001 = vmatpush1.msra.mxu0 0.0
    %4002 = vmatprep.subr.mxu0 0.0
    %4003 = vmatpush1.msra.mxu0 0.0
    %4004 = vmatprep.subr.mxu0 0.0
    %4005 = vmatpush1.msra.mxu0 0.0
    %4006 = vmatprep.subr.mxu0 0.0
    %4007 = vmatpush1.msra.mxu0 0.0
    %4008 = vmatprep.mubr.f32.mxu0 0.0
    %4009 = vmatmul.mubr.f32.gmra.mrb[0].mxu0 %v3942
    %v4010 = vpop.f32.mrb[0].mxu0
    %v4011 = vadd.f32 0.0, %v4010
    %v4012 = vpop.f32.mrb[0].mxu0
    %4013 = vdwg.mxu0
    %v4014 = vadd.f32 %v3771, %v4011
    %4015 = vrot.lane.b32.xlu0 %v3523, 112
    %v4016 = vpop.permute.xlu0 %4015
    %4017 = vrot.lane.b32.xlu0 %v3523, 80
    %v4018 = vpop.permute.xlu0 %4017
    %v4019 = vsel %vm440, %v4016, 0
    %v4021 = vsel %vm440, %v4018, 0
    %4023 = vmatprep.subr.mxu0 0.0
    %4024 = vmatpush1.xpose.msra.mxu0 %v4021
    %4025 = vmatprep.subr.mxu0 0.0
    %4026 = vmatpush1.xpose.msra.mxu0 0.0
    %4027 = vmatprep.subr.mxu0 0.0
    %4028 = vmatpush1.xpose.msra.mxu0 0.0
    %4029 = vmatprep.subr.mxu0 0.0
    %4030 = vmatpush1.xpose.msra.mxu0 0.0
    %4031 = vmatprep.subr.mxu0 0.0
    %4032 = vmatpush1.xpose.msra.mxu0 0.0
    %4033 = vmatprep.subr.mxu0 0.0
    %4034 = vmatpush1.xpose.msra.mxu0 0.0
    %4035 = vmatprep.subr.mxu0 0.0
    %4036 = vmatpush1.xpose.msra.mxu0 0.0
    %4037 = vmatprep.subr.mxu0 0.0
    %4038 = vmatpush1.xpose.msra.mxu0 0.0
    %4039 = vmatprep.subr.mxu0 0.0
    %4040 = vmatpush1.xpose.msra.mxu0 0.0
    %4041 = vmatprep.subr.mxu0 0.0
    %4042 = vmatpush1.xpose.msra.mxu0 0.0
    %4043 = vmatprep.subr.mxu0 0.0
    %4044 = vmatpush1.xpose.msra.mxu0 0.0
    %4045 = vmatprep.subr.mxu0 0.0
    %4046 = vmatpush1.xpose.msra.mxu0 0.0
    %4047 = vmatprep.subr.mxu0 0.0
    %4048 = vmatpush1.xpose.msra.mxu0 0.0
    %4049 = vmatprep.subr.mxu0 0.0
    %4050 = vmatpush1.xpose.msra.mxu0 0.0
    %4051 = vmatprep.subr.mxu0 0.0
    %4052 = vmatpush1.xpose.msra.mxu0 0.0
    %4053 = vmatprep.subr.mxu0 0.0
    %4054 = vmatpush1.xpose.msra.mxu0 0.0
    %4055 = vmatprep.subr.mxu0 0.0
    %4056 = vmatpush1.xpose.msra.mxu0 0.0
    %4057 = vmatprep.subr.mxu0 0.0
    %4058 = vmatpush1.xpose.msra.mxu0 0.0
    %4059 = vmatprep.subr.mxu0 0.0
    %4060 = vmatpush1.xpose.msra.mxu0 0.0
    %4061 = vmatprep.subr.mxu0 0.0
    %4062 = vmatpush1.xpose.msra.mxu0 0.0
    %4063 = vmatprep.subr.mxu0 0.0
    %4064 = vmatpush1.xpose.msra.mxu0 0.0
    %4065 = vmatprep.subr.mxu0 0.0
    %4066 = vmatpush1.xpose.msra.mxu0 0.0
    %4067 = vmatprep.subr.mxu0 0.0
    %4068 = vmatpush1.xpose.msra.mxu0 0.0
    %4069 = vmatprep.subr.mxu0 0.0
    %4070 = vmatpush1.xpose.msra.mxu0 0.0
    %4071 = vmatprep.subr.mxu0 0.0
    %4072 = vmatpush1.xpose.msra.mxu0 0.0
    %4073 = vmatprep.subr.mxu0 0.0
    %4074 = vmatpush1.xpose.msra.mxu0 0.0
    %4075 = vmatprep.subr.mxu0 0.0
    %4076 = vmatpush1.xpose.msra.mxu0 0.0
    %4077 = vmatprep.subr.mxu0 0.0
    %4078 = vmatpush1.xpose.msra.mxu0 0.0
    %4079 = vmatprep.subr.mxu0 0.0
    %4080 = vmatpush1.xpose.msra.mxu0 0.0
    %4081 = vmatprep.subr.mxu0 0.0
    %4082 = vmatpush1.xpose.msra.mxu0 0.0
    %4083 = vmatprep.subr.mxu0 0.0
    %4084 = vmatpush1.xpose.msra.mxu0 0.0
    %4085 = vmatprep.subr.mxu0 0.0
    %4086 = vmatpush1.xpose.msra.mxu0 0.0
    %4087 = vmatprep.mubr.f32.mxu0 0.0
    %4088 = vmatmul.mubr.f32.gmra.mrb[0].mxu0 %v4019
    %v4089 = vpop.f32.mrb[0].mxu0
    %v4090 = vadd.f32 %v3423, %v4089
    %v4091 = vpop.f32.mrb[0].mxu0
    %4092 = vdwg.mxu0
    %v4093 = vsel %vm440, %v4090, -inf
    %4094 = vmax.xlane.f32.xlu0 %v4093
    %v4095 = vpop.xlane.xlu0 %4094
    %v4096 = vsub.f32 %v4090, %v4095
    %v4097 = vmul.f32 %v4096, 1.442695
    %v4098 = vpow.pop %v4097
    %v4099 = vsel %vm440, %v4098, 0.0
    %4100 = vadd.xlane.f32.xlu0 %v4099
    %v4101 = vpop.xlane.xlu0 %4100
    %v4102 = vrcp.pop %v4101
    %v4103 = vmul.f32 %v4098, %v4102
    %4104 = vrot.lane.b32.xlu0 %v3523, 48
    %v4105 = vpop.permute.xlu0 %4104
    %v4108 = vsel %vm440, %v4103, 0
    %4110 = vmatprep.subr.mxu0 0.0
    %4111 = vmatpush1.msra.mxu0 %v4105
    %4112 = vmatprep.subr.mxu0 0.0
    %4113 = vmatpush1.msra.mxu0 0.0
    %4114 = vmatprep.subr.mxu0 0.0
    %4115 = vmatpush1.msra.mxu0 0.0
    %4116 = vmatprep.subr.mxu0 0.0
    %4117 = vmatpush1.msra.mxu0 0.0
    %4118 = vmatprep.subr.mxu0 0.0
    %4119 = vmatpush1.msra.mxu0 0.0
    %4120 = vmatprep.subr.mxu0 0.0
    %4121 = vmatpush1.msra.mxu0 0.0
    %4122 = vmatprep.subr.mxu0 0.0
    %4123 = vmatpush1.msra.mxu0 0.0
    %4124 = vmatprep.subr.mxu0 0.0
    %4125 = vmatpush1.msra.mxu0 0.0
    %4126 = vmatprep.subr.mxu0 0.0
    %4127 = vmatpush1.msra.mxu0 0.0
    %4128 = vmatprep.subr.mxu0 0.0
    %4129 = vmatpush1.msra.mxu0 0.0
    %4130 = vmatprep.subr.mxu0 0.0
    %4131 = vmatpush1.msra.mxu0 0.0
    %4132 = vmatprep.subr.mxu0 0.0
    %4133 = vmatpush1.msra.mxu0 0.0
    %4134 = vmatprep.subr.mxu0 0.0
    %4135 = vmatpush1.msra.mxu0 0.0
    %4136 = vmatprep.subr.mxu0 0.0
    %4137 = vmatpush1.msra.mxu0 0.0
    %4138 = vmatprep.subr.mxu0 0.0
    %4139 = vmatpush1.msra.mxu0 0.0
    %4140 = vmatprep.subr.mxu0 0.0
    %4141 = vmatpush1.msra.mxu0 0.0
    %4142 = vmatprep.subr.mxu0 0.0
    %4143 = vmatpush1.msra.mxu0 0.0
    %4144 = vmatprep.subr.mxu0 0.0
    %4145 = vmatpush1.msra.mxu0 0.0
    %4146 = vmatprep.subr.mxu0 0.0
    %4147 = vmatpush1.msra.mxu0 0.0
    %4148 = vmatprep.subr.mxu0 0.0
    %4149 = vmatpush1.msra.mxu0 0.0
    %4150 = vmatprep.subr.mxu0 0.0
    %4151 = vmatpush1.msra.mxu0 0.0
    %4152 = vmatprep.subr.mxu0 0.0
    %4153 = vmatpush1.msra.mxu0 0.0
    %4154 = vmatprep.subr.mxu0 0.0
    %4155 = vmatpush1.msra.mxu0 0.0
    %4156 = vmatprep.subr.mxu0 0.0
    %4157 = vmatpush1.msra.mxu0 0.0
    %4158 = vmatprep.subr.mxu0 0.0
    %4159 = vmatpush1.msra.mxu0 0.0
    %4160 = vmatprep.subr.mxu0 0.0
    %4161 = vmatpush1.msra.mxu0 0.0
    %4162 = vmatprep.subr.mxu0 0.0
    %4163 = vmatpush1.msra.mxu0 0.0
    %4164 = vmatprep.subr.mxu0 0.0
    %4165 = vmatpush1.msra.mxu0 0.0
    %4166 = vmatprep.subr.mxu0 0.0
    %4167 = vmatpush1.msra.mxu0 0.0
    %4168 = vmatprep.subr.mxu0 0.0
    %4169 = vmatpush1.msra.mxu0 0.0
    %4170 = vmatprep.subr.mxu0 0.0
    %4171 = vmatpush1.msra.mxu0 0.0
    %4172 = vmatprep.subr.mxu0 0.0
    %4173 = vmatpush1.msra.mxu0 0.0
    %4174 = vmatprep.mubr.f32.mxu0 0.0
    %4175 = vmatmul.mubr.f32.gmra.mrb[0].mxu0 %v4108
    %v4176 = vpop.f32.mrb[0].mxu0
    %v4177 = vadd.f32 0.0, %v4176
    %v4178 = vpop.f32.mrb[0].mxu0
    %4179 = vdwg.mxu0
    %4181 = vrot.lane.b32.xlu0 %v3400, 32
    %v4182 = vpop.permute.xlu0 %4181
    %v4185 = vsel %vm440, %v4177, 0
    %4187 = vmatprep.subr.mxu0 0.0
    %4188 = vmatpush1.msra.mxu0 %v4182
    %4189 = vmatprep.subr.mxu0 0.0
    %4190 = vmatpush1.msra.mxu0 0.0
    %4191 = vmatprep.subr.mxu0 0.0
    %4192 = vmatpush1.msra.mxu0 0.0
    %4193 = vmatprep.subr.mxu0 0.0
    %4194 = vmatpush1.msra.mxu0 0.0
    %4195 = vmatprep.subr.mxu0 0.0
    %4196 = vmatpush1.msra.mxu0 0.0
    %4197 = vmatprep.subr.mxu0 0.0
    %4198 = vmatpush1.msra.mxu0 0.0
    %4199 = vmatprep.subr.mxu0 0.0
    %4200 = vmatpush1.msra.mxu0 0.0
    %4201 = vmatprep.subr.mxu0 0.0
    %4202 = vmatpush1.msra.mxu0 0.0
    %4203 = vmatprep.subr.mxu0 0.0
    %4204 = vmatpush1.msra.mxu0 0.0
    %4205 = vmatprep.subr.mxu0 0.0
    %4206 = vmatpush1.msra.mxu0 0.0
    %4207 = vmatprep.subr.mxu0 0.0
    %4208 = vmatpush1.msra.mxu0 0.0
    %4209 = vmatprep.subr.mxu0 0.0
    %4210 = vmatpush1.msra.mxu0 0.0
    %4211 = vmatprep.subr.mxu0 0.0
    %4212 = vmatpush1.msra.mxu0 0.0
    %4213 = vmatprep.subr.mxu0 0.0
    %4214 = vmatpush1.msra.mxu0 0.0
    %4215 = vmatprep.subr.mxu0 0.0
    %4216 = vmatpush1.msra.mxu0 0.0
    %4217 = vmatprep.subr.mxu0 0.0
    %4218 = vmatpush1.msra.mxu0 0.0
    %4219 = vmatprep.subr.mxu0 0.0
    %4220 = vmatpush1.msra.mxu0 0.0
    %4221 = vmatprep.subr.mxu0 0.0
    %4222 = vmatpush1.msra.mxu0 0.0
    %4223 = vmatprep.subr.mxu0 0.0
    %4224 = vmatpush1.msra.mxu0 0.0
    %4225 = vmatprep.subr.mxu0 0.0
    %4226 = vmatpush1.msra.mxu0 0.0
    %4227 = vmatprep.subr.mxu0 0.0
    %4228 = vmatpush1.msra.mxu0 0.0
    %4229 = vmatprep.subr.mxu0 0.0
    %4230 = vmatpush1.msra.mxu0 0.0
    %4231 = vmatprep.subr.mxu0 0.0
    %4232 = vmatpush1.msra.mxu0 0.0
    %4233 = vmatprep.subr.mxu0 0.0
    %4234 = vmatpush1.msra.mxu0 0.0
    %4235 = vmatprep.subr.mxu0 0.0
    %4236 = vmatpush1.msra.mxu0 0.0
    %4237 = vmatprep.subr.mxu0 0.0
    %4238 = vmatpush1.msra.mxu0 0.0
    %4239 = vmatprep.subr.mxu0 0.0
    %4240 = vmatpush1.msra.mxu0 0.0
    %4241 = vmatprep.subr.mxu0 0.0
    %4242 = vmatpush1.msra.mxu0 0.0
    %4243 = vmatprep.subr.mxu0 0.0
    %4244 = vmatpush1.msra.mxu0 0.0
    %4245 = vmatprep.subr.mxu0 0.0
    %4246 = vmatpush1.msra.mxu0 0.0
    %4247 = vmatprep.subr.mxu0 0.0
    %4248 = vmatpush1.msra.mxu0 0.0
    %4249 = vmatprep.subr.mxu0 0.0
    %4250 = vmatpush1.msra.mxu0 0.0
    %4251 = vmatprep.mubr.f32.mxu0 0.0
    %4252 = vmatmul.mubr.f32.gmra.mrb[0].mxu0 %v4185
    %v4253 = vpop.f32.mrb[0].mxu0
    %v4254 = vadd.f32 0.0, %v4253
    %v4255 = vpop.f32.mrb[0].mxu0
    %4256 = vdwg.mxu0
    %v4257 = vadd.f32 %v4014, %v4254
    %4258 = vrot.lane.b32.xlu0 %v3523, 104
    %v4259 = vpop.permute.xlu0 %4258
    %4260 = vrot.lane.b32.xlu0 %v3523, 72
    %v4261 = vpop.permute.xlu0 %4260
    %v4262 = vsel %vm440, %v4259, 0
    %v4264 = vsel %vm440, %v4261, 0
    %4266 = vmatprep.subr.mxu0 0.0
    %4267 = vmatpush1.xpose.msra.mxu0 %v4264
    %4268 = vmatprep.subr.mxu0 0.0
    %4269 = vmatpush1.xpose.msra.mxu0 0.0
    %4270 = vmatprep.subr.mxu0 0.0
    %4271 = vmatpush1.xpose.msra.mxu0 0.0
    %4272 = vmatprep.subr.mxu0 0.0
    %4273 = vmatpush1.xpose.msra.mxu0 0.0
    %4274 = vmatprep.subr.mxu0 0.0
    %4275 = vmatpush1.xpose.msra.mxu0 0.0
    %4276 = vmatprep.subr.mxu0 0.0
    %4277 = vmatpush1.xpose.msra.mxu0 0.0
    %4278 = vmatprep.subr.mxu0 0.0
    %4279 = vmatpush1.xpose.msra.mxu0 0.0
    %4280 = vmatprep.subr.mxu0 0.0
    %4281 = vmatpush1.xpose.msra.mxu0 0.0
    %4282 = vmatprep.subr.mxu0 0.0
    %4283 = vmatpush1.xpose.msra.mxu0 0.0
    %4284 = vmatprep.subr.mxu0 0.0
    %4285 = vmatpush1.xpose.msra.mxu0 0.0
    %4286 = vmatprep.subr.mxu0 0.0
    %4287 = vmatpush1.xpose.msra.mxu0 0.0
    %4288 = vmatprep.subr.mxu0 0.0
    %4289 = vmatpush1.xpose.msra.mxu0 0.0
    %4290 = vmatprep.subr.mxu0 0.0
    %4291 = vmatpush1.xpose.msra.mxu0 0.0
    %4292 = vmatprep.subr.mxu0 0.0
    %4293 = vmatpush1.xpose.msra.mxu0 0.0
    %4294 = vmatprep.subr.mxu0 0.0
    %4295 = vmatpush1.xpose.msra.mxu0 0.0
    %4296 = vmatprep.subr.mxu0 0.0
    %4297 = vmatpush1.xpose.msra.mxu0 0.0
    %4298 = vmatprep.subr.mxu0 0.0
    %4299 = vmatpush1.xpose.msra.mxu0 0.0
    %4300 = vmatprep.subr.mxu0 0.0
    %4301 = vmatpush1.xpose.msra.mxu0 0.0
    %4302 = vmatprep.subr.mxu0 0.0
    %4303 = vmatpush1.xpose.msra.mxu0 0.0
    %4304 = vmatprep.subr.mxu0 0.0
    %4305 = vmatpush1.xpose.msra.mxu0 0.0
    %4306 = vmatprep.subr.mxu0 0.0
    %4307 = vmatpush1.xpose.msra.mxu0 0.0
    %4308 = vmatprep.subr.mxu0 0.0
    %4309 = vmatpush1.xpose.msra.mxu0 0.0
    %4310 = vmatprep.subr.mxu0 0.0
    %4311 = vmatpush1.xpose.msra.mxu0 0.0
    %4312 = vmatprep.subr.mxu0 0.0
    %4313 = vmatpush1.xpose.msra.mxu0 0.0
    %4314 = vmatprep.subr.mxu0 0.0
    %4315 = vmatpush1.xpose.msra.mxu0 0.0
    %4316 = vmatprep.subr.mxu0 0.0
    %4317 = vmatpush1.xpose.msra.mxu0 0.0
    %4318 = vmatprep.subr.mxu0 0.0
    %4319 = vmatpush1.xpose.msra.mxu0 0.0
    %4320 = vmatprep.subr.mxu0 0.0
    %4321 = vmatpush1.xpose.msra.mxu0 0.0
    %4322 = vmatprep.subr.mxu0 0.0
    %4323 = vmatpush1.xpose.msra.mxu0 0.0
    %4324 = vmatprep.subr.mxu0 0.0
    %4325 = vmatpush1.xpose.msra.mxu0 0.0
    %4326 = vmatprep.subr.mxu0 0.0
    %4327 = vmatpush1.xpose.msra.mxu0 0.0
    %4328 = vmatprep.subr.mxu0 0.0
    %4329 = vmatpush1.xpose.msra.mxu0 0.0
    %4330 = vmatprep.mubr.f32.mxu0 0.0
    %4331 = vmatmul.mubr.f32.gmra.mrb[0].mxu0 %v4262
    %v4332 = vpop.f32.mrb[0].mxu0
    %v4333 = vadd.f32 %v3424, %v4332
    %v4334 = vpop.f32.mrb[0].mxu0
    %4335 = vdwg.mxu0
    %v4336 = vsel %vm440, %v4333, -inf
    %4337 = vmax.xlane.f32.xlu0 %v4336
    %v4338 = vpop.xlane.xlu0 %4337
    %v4339 = vsub.f32 %v4333, %v4338
    %v4340 = vmul.f32 %v4339, 1.442695
    %v4341 = vpow.pop %v4340
    %v4342 = vsel %vm440, %v4341, 0.0
    %4343 = vadd.xlane.f32.xlu0 %v4342
    %v4344 = vpop.xlane.xlu0 %4343
    %v4345 = vrcp.pop %v4344
    %v4346 = vmul.f32 %v4341, %v4345
    %4347 = vrot.lane.b32.xlu0 %v3523, 40
    %v4348 = vpop.permute.xlu0 %4347
    %v4351 = vsel %vm440, %v4346, 0
    %4353 = vmatprep.subr.mxu0 0.0
    %4354 = vmatpush1.msra.mxu0 %v4348
    %4355 = vmatprep.subr.mxu0 0.0
    %4356 = vmatpush1.msra.mxu0 0.0
    %4357 = vmatprep.subr.mxu0 0.0
    %4358 = vmatpush1.msra.mxu0 0.0
    %4359 = vmatprep.subr.mxu0 0.0
    %4360 = vmatpush1.msra.mxu0 0.0
    %4361 = vmatprep.subr.mxu0 0.0
    %4362 = vmatpush1.msra.mxu0 0.0
    %4363 = vmatprep.subr.mxu0 0.0
    %4364 = vmatpush1.msra.mxu0 0.0
    %4365 = vmatprep.subr.mxu0 0.0
    %4366 = vmatpush1.msra.mxu0 0.0
    %4367 = vmatprep.subr.mxu0 0.0
    %4368 = vmatpush1.msra.mxu0 0.0
    %4369 = vmatprep.subr.mxu0 0.0
    %4370 = vmatpush1.msra.mxu0 0.0
    %4371 = vmatprep.subr.mxu0 0.0
    %4372 = vmatpush1.msra.mxu0 0.0
    %4373 = vmatprep.subr.mxu0 0.0
    %4374 = vmatpush1.msra.mxu0 0.0
    %4375 = vmatprep.subr.mxu0 0.0
    %4376 = vmatpush1.msra.mxu0 0.0
    %4377 = vmatprep.subr.mxu0 0.0
    %4378 = vmatpush1.msra.mxu0 0.0
    %4379 = vmatprep.subr.mxu0 0.0
    %4380 = vmatpush1.msra.mxu0 0.0
    %4381 = vmatprep.subr.mxu0 0.0
    %4382 = vmatpush1.msra.mxu0 0.0
    %4383 = vmatprep.subr.mxu0 0.0
    %4384 = vmatpush1.msra.mxu0 0.0
    %4385 = vmatprep.subr.mxu0 0.0
    %4386 = vmatpush1.msra.mxu0 0.0
    %4387 = vmatprep.subr.mxu0 0.0
    %4388 = vmatpush1.msra.mxu0 0.0
    %4389 = vmatprep.subr.mxu0 0.0
    %4390 = vmatpush1.msra.mxu0 0.0
    %4391 = vmatprep.subr.mxu0 0.0
    %4392 = vmatpush1.msra.mxu0 0.0
    %4393 = vmatprep.subr.mxu0 0.0
    %4394 = vmatpush1.msra.mxu0 0.0
    %4395 = vmatprep.subr.mxu0 0.0
    %4396 = vmatpush1.msra.mxu0 0.0
    %4397 = vmatprep.subr.mxu0 0.0
    %4398 = vmatpush1.msra.mxu0 0.0
    %4399 = vmatprep.subr.mxu0 0.0
    %4400 = vmatpush1.msra.mxu0 0.0
    %4401 = vmatprep.subr.mxu0 0.0
    %4402 = vmatpush1.msra.mxu0 0.0
    %4403 = vmatprep.subr.mxu0 0.0
    %4404 = vmatpush1.msra.mxu0 0.0
    %4405 = vmatprep.subr.mxu0 0.0
    %4406 = vmatpush1.msra.mxu0 0.0
    %4407 = vmatprep.subr.mxu0 0.0
    %4408 = vmatpush1.msra.mxu0 0.0
    %4409 = vmatprep.subr.mxu0 0.0
    %4410 = vmatpush1.msra.mxu0 0.0
    %4411 = vmatprep.subr.mxu0 0.0
    %4412 = vmatpush1.msra.mxu0 0.0
    %4413 = vmatprep.subr.mxu0 0.0
    %4414 = vmatpush1.msra.mxu0 0.0
    %4415 = vmatprep.subr.mxu0 0.0
    %4416 = vmatpush1.msra.mxu0 0.0
    %4417 = vmatprep.mubr.f32.mxu0 0.0
    %4418 = vmatmul.mubr.f32.gmra.mrb[0].mxu0 %v4351
    %v4419 = vpop.f32.mrb[0].mxu0
    %v4420 = vadd.f32 0.0, %v4419
    %v4421 = vpop.f32.mrb[0].mxu0
    %4422 = vdwg.mxu0
    %4424 = vrot.lane.b32.xlu0 %v3402, 32
    %v4425 = vpop.permute.xlu0 %4424
    %v4428 = vsel %vm440, %v4420, 0
    %4430 = vmatprep.subr.mxu0 0.0
    %4431 = vmatpush1.msra.mxu0 %v4425
    %4432 = vmatprep.subr.mxu0 0.0
    %4433 = vmatpush1.msra.mxu0 0.0
    %4434 = vmatprep.subr.mxu0 0.0
    %4435 = vmatpush1.msra.mxu0 0.0
    %4436 = vmatprep.subr.mxu0 0.0
    %4437 = vmatpush1.msra.mxu0 0.0
    %4438 = vmatprep.subr.mxu0 0.0
    %4439 = vmatpush1.msra.mxu0 0.0
    %4440 = vmatprep.subr.mxu0 0.0
    %4441 = vmatpush1.msra.mxu0 0.0
    %4442 = vmatprep.subr.mxu0 0.0
    %4443 = vmatpush1.msra.mxu0 0.0
    %4444 = vmatprep.subr.mxu0 0.0
    %4445 = vmatpush1.msra.mxu0 0.0
    %4446 = vmatprep.subr.mxu0 0.0
    %4447 = vmatpush1.msra.mxu0 0.0
    %4448 = vmatprep.subr.mxu0 0.0
    %4449 = vmatpush1.msra.mxu0 0.0
    %4450 = vmatprep.subr.mxu0 0.0
    %4451 = vmatpush1.msra.mxu0 0.0
    %4452 = vmatprep.subr.mxu0 0.0
    %4453 = vmatpush1.msra.mxu0 0.0
    %4454 = vmatprep.subr.mxu0 0.0
    %4455 = vmatpush1.msra.mxu0 0.0
    %4456 = vmatprep.subr.mxu0 0.0
    %4457 = vmatpush1.msra.mxu0 0.0
    %4458 = vmatprep.subr.mxu0 0.0
    %4459 = vmatpush1.msra.mxu0 0.0
    %4460 = vmatprep.subr.mxu0 0.0
    %4461 = vmatpush1.msra.mxu0 0.0
    %4462 = vmatprep.subr.mxu0 0.0
    %4463 = vmatpush1.msra.mxu0 0.0
    %4464 = vmatprep.subr.mxu0 0.0
    %4465 = vmatpush1.msra.mxu0 0.0
    %4466 = vmatprep.subr.mxu0 0.0
    %4467 = vmatpush1.msra.mxu0 0.0
    %4468 = vmatprep.subr.mxu0 0.0
    %4469 = vmatpush1.msra.mxu0 0.0
    %4470 = vmatprep.subr.mxu0 0.0
    %4471 = vmatpush1.msra.mxu0 0.0
    %4472 = vmatprep.subr.mxu0 0.0
    %4473 = vmatpush1.msra.mxu0 0.0
    %4474 = vmatprep.subr.mxu0 0.0
    %4475 = vmatpush1.msra.mxu0 0.0
    %4476 = vmatprep.subr.mxu0 0.0
    %4477 = vmatpush1.msra.mxu0 0.0
    %4478 = vmatprep.subr.mxu0 0.0
    %4479 = vmatpush1.msra.mxu0 0.0
    %4480 = vmatprep.subr.mxu0 0.0
    %4481 = vmatpush1.msra.mxu0 0.0
    %4482 = vmatprep.subr.mxu0 0.0
    %4483 = vmatpush1.msra.mxu0 0.0
    %4484 = vmatprep.subr.mxu0 0.0
    %4485 = vmatpush1.msra.mxu0 0.0
    %4486 = vmatprep.subr.mxu0 0.0
    %4487 = vmatpush1.msra.mxu0 0.0
    %4488 = vmatprep.subr.mxu0 0.0
    %4489 = vmatpush1.msra.mxu0 0.0
    %4490 = vmatprep.subr.mxu0 0.0
    %4491 = vmatpush1.msra.mxu0 0.0
    %4492 = vmatprep.subr.mxu0 0.0
    %4493 = vmatpush1.msra.mxu0 0.0
    %4494 = vmatprep.mubr.f32.mxu0 0.0
    %4495 = vmatmul.mubr.f32.gmra.mrb[0].mxu0 %v4428
    %v4496 = vpop.f32.mrb[0].mxu0
    %v4497 = vadd.f32 0.0, %v4496
    %v4498 = vpop.f32.mrb[0].mxu0
    %4499 = vdwg.mxu0
    %v4500 = vadd.f32 %v4257, %v4497
    %v4501 = vadd.f32 %v3395, %v4500
    %v4502 = vsel %vm542, %v4501, 0.0
    %4503 = vadd.xlane.f32.xlu0 %v4502
    %v4504 = vpop.xlane.xlu0 %4503
    %v4505 = vmul.f32 %v4504, %v3428
    %v4506 = vsub.f32 %v4501, %v4505
    %v4507 = vmul.f32 %v4506, %v4506
    %v4508 = vsel %vm542, %v4507, 0.0
    %4509 = vadd.xlane.f32.xlu0 %v4508
    %v4510 = vpop.xlane.xlu0 %4509
    %v4511 = vmul.f32 %v4510, %v3428
    %v4512 = vadd.f32 %v4511, 1e-05
    %v4513 = vrsqrt.pop %v4512
    %v4514 = vmul.f32 %v4506, %v4513
    %v4515 = vlaneseq
    %v4516 = vshrl.u32 %v4515, 7
    %v4517 = vsub.s32 4, %v4516
    %v4518 = vrot.slane %v3420, %v4517
    %v4519 = vmul.f32 %v4514, %v4518
    %v4520 = vlaneseq
    %v4521 = vshrl.u32 %v4520, 7
    %v4522 = vsub.s32 5, %v4521
    %v4523 = vrot.slane %v3420, %v4522
    %v4524 = vadd.f32 %v4519, %v4523
    %v4525 = vlaneseq
    %v4526 = vshrl.u32 %v4525, 7
    %v4527 = vsub.s32 6, %v4526
    %v4528 = vrot.slane %v3420, %v4527
    %v4530 = vsel %vm542, %v4524, 0
    %4532 = vmatprep.subr.mxu0 0.0
    %4533 = vmatpush1.msra.mxu0 %v3397
    %4534 = vmatprep.subr.mxu0 0.0
    %4535 = vmatpush1.msra.mxu0 %v3399
    %4536 = vmatprep.subr.mxu0 0.0
    %4537 = vmatpush1.msra.mxu0 %v3401
    %4538 = vmatprep.subr.mxu0 0.0
    %4539 = vmatpush1.msra.mxu0 %v3403
    %4540 = vmatprep.subr.mxu0 0.0
    %4541 = vmatpush1.msra.mxu0 0.0
    %4542 = vmatprep.subr.mxu0 0.0
    %4543 = vmatpush1.msra.mxu0 0.0
    %4544 = vmatprep.subr.mxu0 0.0
    %4545 = vmatpush1.msra.mxu0 0.0
    %4546 = vmatprep.subr.mxu0 0.0
    %4547 = vmatpush1.msra.mxu0 0.0
    %4548 = vmatprep.subr.mxu0 0.0
    %4549 = vmatpush1.msra.mxu0 0.0
    %4550 = vmatprep.subr.mxu0 0.0
    %4551 = vmatpush1.msra.mxu0 0.0
    %4552 = vmatprep.subr.mxu0 0.0
    %4553 = vmatpush1.msra.mxu0 0.0
    %4554 = vmatprep.subr.mxu0 0.0
    %4555 = vmatpush1.msra.mxu0 0.0
    %4556 = vmatprep.subr.mxu0 0.0
    %4557 = vmatpush1.msra.mxu0 0.0
    %4558 = vmatprep.subr.mxu0 0.0
    %4559 = vmatpush1.msra.mxu0 0.0
    %4560 = vmatprep.subr.mxu0 0.0
    %4561 = vmatpush1.msra.mxu0 0.0
    %4562 = vmatprep.subr.mxu0 0.0
    %4563 = vmatpush1.msra.mxu0 0.0
    %4564 = vmatprep.subr.mxu0 0.0
    %4565 = vmatpush1.msra.mxu0 0.0
    %4566 = vmatprep.subr.mxu0 0.0
    %4567 = vmatpush1.msra.mxu0 0.0
    %4568 = vmatprep.subr.mxu0 0.0
    %4569 = vmatpush1.msra.mxu0 0.0
    %4570 = vmatprep.subr.mxu0 0.0
    %4571 = vmatpush1.msra.mxu0 0.0
    %4572 = vmatprep.subr.mxu0 0.0
    %4573 = vmatpush1.msra.mxu0 0.0
    %4574 = vmatprep.subr.mxu0 0.0
    %4575 = vmatpush1.msra.mxu0 0.0
    %4576 = vmatprep.subr.mxu0 0.0
    %4577 = vmatpush1.msra.mxu0 0.0
    %4578 = vmatprep.subr.mxu0 0.0
    %4579 = vmatpush1.msra.mxu0 0.0
    %4580 = vmatprep.subr.mxu0 0.0
    %4581 = vmatpush1.msra.mxu0 0.0
    %4582 = vmatprep.subr.mxu0 0.0
    %4583 = vmatpush1.msra.mxu0 0.0
    %4584 = vmatprep.subr.mxu0 0.0
    %4585 = vmatpush1.msra.mxu0 0.0
    %4586 = vmatprep.subr.mxu0 0.0
    %4587 = vmatpush1.msra.mxu0 0.0
    %4588 = vmatprep.subr.mxu0 0.0
    %4589 = vmatpush1.msra.mxu0 0.0
    %4590 = vmatprep.subr.mxu0 0.0
    %4591 = vmatpush1.msra.mxu0 0.0
    %4592 = vmatprep.subr.mxu0 0.0
    %4593 = vmatpush1.msra.mxu0 0.0
    %4594 = vmatprep.subr.mxu0 0.0
    %4595 = vmatpush1.msra.mxu0 0.0
    %4596 = vmatprep.mubr.f32.mxu0 0.0
    %4597 = vmatmul.mubr.f32.gmra.mrb[0].mxu0 %v4530
    %v4598 = vpop.f32.mrb[0].mxu0
    %v4599 = vadd.f32 %v4528, %v4598
    %v4600 = vpop.f32.mrb[0].mxu0
    %4601 = vdwg.mxu0
    %v4602 = vmul.f32 %v4599, 0.5
    %v4603 = vmul.f32 %v4599, 0.70710677
    %v4604 = vand.u32 2147483647, %v4603
    %v4605 = vmul.f32 %v4604, 0.3275911
    %v4606 = vadd.f32 %v4605, 1.0
    %v4607 = vrcp.pop %v4606
    %v4608 = vmul.f32 1.0, %v4607
    %v4609 = vmul.f32 %v4608, 1.0614054
    %v4610 = vadd.f32 %v4609, -1.4531521
    %v4611 = vmul.f32 %v4610, %v4608
    %v4612 = vadd.f32 %v4611, 1.4214138
    %v4613 = vmul.f32 %v4612, %v4608
    %v4614 = vadd.f32 %v4613, -0.28449672
    %v4615 = vmul.f32 %v4614, %v4608
    %v4616 = vadd.f32 %v4615, 0.2548296
    %v4617 = vmul.f32 %v4616, %v4608
    %v4618 = vsub.f32 0.0, %v4604
    %v4619 = vmul.f32 %v4618, %v4604
    %v4620 = vmul.f32 %v4619, 1.442695
    %v4621 = vpow.pop %v4620
    %v4622 = vmul.f32 %v4617, %v4621
    %v4623 = vsub.f32 1.0, %v4622
    %vm4624 = vcmp.ge.f32.partialorder %v4603, 0.0
    %v4625 = vsub.f32 0.0, %v4623
    %v4626 = vsel %vm4624, %v4623, %v4625
    %v4627 = vadd.f32 %v4626, 1.0
    %v4628 = vmul.f32 %v4602, %v4627
    %v4629 = vlaneseq
    %v4630 = vshrl.u32 %v4629, 7
    %v4631 = vsub.s32 7, %v4630
    %v4632 = vrot.slane %v3420, %v4631
    %4633 = vmatprep.subr.mxu0 0.0
    %4634 = vmatpush1.msra.mxu0 %v3404
    %4635 = vmatprep.subr.mxu0 0.0
    %4636 = vmatpush1.msra.mxu0 %v3405
    %4637 = vmatprep.subr.mxu0 0.0
    %4638 = vmatpush1.msra.mxu0 %v3406
    %4639 = vmatprep.subr.mxu0 0.0
    %4640 = vmatpush1.msra.mxu0 %v3407
    %4641 = vmatprep.subr.mxu0 0.0
    %4642 = vmatpush1.msra.mxu0 %v3408
    %4643 = vmatprep.subr.mxu0 0.0
    %4644 = vmatpush1.msra.mxu0 %v3409
    %4645 = vmatprep.subr.mxu0 0.0
    %4646 = vmatpush1.msra.mxu0 %v3410
    %4647 = vmatprep.subr.mxu0 0.0
    %4648 = vmatpush1.msra.mxu0 %v3411
    %4649 = vmatprep.subr.mxu0 0.0
    %4650 = vmatpush1.msra.mxu0 %v3412
    %4651 = vmatprep.subr.mxu0 0.0
    %4652 = vmatpush1.msra.mxu0 %v3413
    %4653 = vmatprep.subr.mxu0 0.0
    %4654 = vmatpush1.msra.mxu0 %v3414
    %4655 = vmatprep.subr.mxu0 0.0
    %4656 = vmatpush1.msra.mxu0 %v3415
    %4657 = vmatprep.subr.mxu0 0.0
    %4658 = vmatpush1.msra.mxu0 %v3416
    %4659 = vmatprep.subr.mxu0 0.0
    %4660 = vmatpush1.msra.mxu0 %v3417
    %4661 = vmatprep.subr.mxu0 0.0
    %4662 = vmatpush1.msra.mxu0 %v3418
    %4663 = vmatprep.subr.mxu0 0.0
    %4664 = vmatpush1.msra.mxu0 %v3419
    %4665 = vmatprep.subr.mxu0 0.0
    %4666 = vmatpush1.msra.mxu0 0.0
    %4667 = vmatprep.subr.mxu0 0.0
    %4668 = vmatpush1.msra.mxu0 0.0
    %4669 = vmatprep.subr.mxu0 0.0
    %4670 = vmatpush1.msra.mxu0 0.0
    %4671 = vmatprep.subr.mxu0 0.0
    %4672 = vmatpush1.msra.mxu0 0.0
    %4673 = vmatprep.subr.mxu0 0.0
    %4674 = vmatpush1.msra.mxu0 0.0
    %4675 = vmatprep.subr.mxu0 0.0
    %4676 = vmatpush1.msra.mxu0 0.0
    %4677 = vmatprep.subr.mxu0 0.0
    %4678 = vmatpush1.msra.mxu0 0.0
    %4679 = vmatprep.subr.mxu0 0.0
    %4680 = vmatpush1.msra.mxu0 0.0
    %4681 = vmatprep.subr.mxu0 0.0
    %4682 = vmatpush1.msra.mxu0 0.0
    %4683 = vmatprep.subr.mxu0 0.0
    %4684 = vmatpush1.msra.mxu0 0.0
    %4685 = vmatprep.subr.mxu0 0.0
    %4686 = vmatpush1.msra.mxu0 0.0
    %4687 = vmatprep.subr.mxu0 0.0
    %4688 = vmatpush1.msra.mxu0 0.0
    %4689 = vmatprep.subr.mxu0 0.0
    %4690 = vmatpush1.msra.mxu0 0.0
    %4691 = vmatprep.subr.mxu0 0.0
    %4692 = vmatpush1.msra.mxu0 0.0
    %4693 = vmatprep.subr.mxu0 0.0
    %4694 = vmatpush1.msra.mxu0 0.0
    %4695 = vmatprep.subr.mxu0 0.0
    %4696 = vmatpush1.msra.mxu0 0.0
    %4697 = vmatprep.mubr.f32.mxu0 0.0
    %4698 = vmatmul.mubr.f32.gmra.mrb[0].mxu0 %v4628
    %v4699 = vpop.f32.mrb[0].mxu0
    %v4700 = vadd.f32 %v4632, %v4699
    %v4701 = vpop.f32.mrb[0].mxu0
    %4702 = vdwg.mxu0
    %v4703 = vadd.f32 %v4501, %v4700
    %s4704 = scalar_lea.vmem %s10, 64
    %v4705 = vld [vmem:[%s4704] sm:$0xff]
    %v4706 = vld [vmem:[%s4704 + $0x8] sm:$0xff]
    %v4707 = vld [vmem:[%s4704 + $0x10] sm:$0xff]
    %v4708 = vld [vmem:[%s4704 + $0x18] sm:$0xff]
    %v4709 = vld [vmem:[%s4704 + $0x20] sm:$0xff]
    %v4710 = vld [vmem:[%s4704 + $0x28] sm:$0xff]
    %v4711 = vld [vmem:[%s4704 + $0x30] sm:$0xff]
    %v4712 = vld [vmem:[%s4704 + $0x38] sm:$0xff]
    %s4713 = scalar_lea.vmem %s11, 128
    %v4714 = vld [vmem:[%s4713] sm:$0xff]
    %v4715 = vld [vmem:[%s4713 + $0x8] sm:$0xff]
    %v4716 = vld [vmem:[%s4713 + $0x10] sm:$0xff]
    %v4717 = vld [vmem:[%s4713 + $0x18] sm:$0xff]
    %v4718 = vld [vmem:[%s4713 + $0x20] sm:$0xff]
    %v4719 = vld [vmem:[%s4713 + $0x28] sm:$0xff]
    %v4720 = vld [vmem:[%s4713 + $0x30] sm:$0xff]
    %v4721 = vld [vmem:[%s4713 + $0x38] sm:$0xff]
    %v4722 = vld [vmem:[%s4713 + $0x40] sm:$0xff]
    %v4723 = vld [vmem:[%s4713 + $0x48] sm:$0xff]
    %v4724 = vld [vmem:[%s4713 + $0x50] sm:$0xff]
    %v4725 = vld [vmem:[%s4713 + $0x58] sm:$0xff]
    %v4726 = vld [vmem:[%s4713 + $0x60] sm:$0xff]
    %v4727 = vld [vmem:[%s4713 + $0x68] sm:$0xff]
    %v4728 = vld [vmem:[%s4713 + $0x70] sm:$0xff]
    %v4729 = vld [vmem:[%s4713 + $0x78] sm:$0xff]
    %s4730 = scalar_lea.vmem %s12, 8
    %v4731 = vld [vmem:[%s4730] sm:$0xff]
    %s4732 = scalar_lea.vmem %s13, 32
    %v4733 = vld [vmem:[%s4732] sm:$0xff]
    %v4734 = vld [vmem:[%s4732 + $0x8] sm:$0xff]
    %v4735 = vld [vmem:[%s4732 + $0x10] sm:$0xff]
    %v4736 = vld [vmem:[%s4732 + $0x18] sm:$0xff]
    %v4737 = vsel %vm542, %v4703, 0.0
    %4738 = vadd.xlane.f32.xlu0 %v4737
    %v4739 = vpop.xlane.xlu0 %4738
    %v4740 = vmul.f32 %v4739, %v3428
    %v4741 = vsub.f32 %v4703, %v4740
    %v4742 = vmul.f32 %v4741, %v4741
    %v4743 = vsel %vm542, %v4742, 0.0
    %4744 = vadd.xlane.f32.xlu0 %v4743
    %v4745 = vpop.xlane.xlu0 %4744
    %v4746 = vmul.f32 %v4745, %v3428
    %v4747 = vadd.f32 %v4746, 1e-05
    %v4748 = vrsqrt.pop %v4747
    %v4749 = vmul.f32 %v4741, %v4748
    %v4750 = vlaneseq
    %v4751 = vshrl.u32 %v4750, 7
    %v4752 = vsub.s32 0, %v4751
    %v4753 = vrot.slane %v4731, %v4752
    %v4754 = vmul.f32 %v4749, %v4753
    %v4755 = vlaneseq
    %v4756 = vshrl.u32 %v4755, 7
    %v4757 = vsub.s32 1, %v4756
    %v4758 = vrot.slane %v4731, %v4757
    %v4759 = vadd.f32 %v4754, %v4758
    %v4760 = vlaneseq
    %v4761 = vshrl.u32 %v4760, 7
    %v4762 = vsub.s32 2, %v4761
    %v4763 = vrot.slane %v4731, %v4762
    %v4765 = vsel %vm542, %v4759, 0
    %4767 = vmatprep.subr.mxu0 0.0
    %4768 = vmatpush1.msra.mxu0 %v4705
    %4769 = vmatprep.subr.mxu0 0.0
    %4770 = vmatpush1.msra.mxu0 %v4707
    %4771 = vmatprep.subr.mxu0 0.0
    %4772 = vmatpush1.msra.mxu0 %v4709
    %4773 = vmatprep.subr.mxu0 0.0
    %4774 = vmatpush1.msra.mxu0 %v4711
    %4775 = vmatprep.subr.mxu0 0.0
    %4776 = vmatpush1.msra.mxu0 0.0
    %4777 = vmatprep.subr.mxu0 0.0
    %4778 = vmatpush1.msra.mxu0 0.0
    %4779 = vmatprep.subr.mxu0 0.0
    %4780 = vmatpush1.msra.mxu0 0.0
    %4781 = vmatprep.subr.mxu0 0.0
    %4782 = vmatpush1.msra.mxu0 0.0
    %4783 = vmatprep.subr.mxu0 0.0
    %4784 = vmatpush1.msra.mxu0 0.0
    %4785 = vmatprep.subr.mxu0 0.0
    %4786 = vmatpush1.msra.mxu0 0.0
    %4787 = vmatprep.subr.mxu0 0.0
    %4788 = vmatpush1.msra.mxu0 0.0
    %4789 = vmatprep.subr.mxu0 0.0
    %4790 = vmatpush1.msra.mxu0 0.0
    %4791 = vmatprep.subr.mxu0 0.0
    %4792 = vmatpush1.msra.mxu0 0.0
    %4793 = vmatprep.subr.mxu0 0.0
    %4794 = vmatpush1.msra.mxu0 0.0
    %4795 = vmatprep.subr.mxu0 0.0
    %4796 = vmatpush1.msra.mxu0 0.0
    %4797 = vmatprep.subr.mxu0 0.0
    %4798 = vmatpush1.msra.mxu0 0.0
    %4799 = vmatprep.subr.mxu0 0.0
    %4800 = vmatpush1.msra.mxu0 0.0
    %4801 = vmatprep.subr.mxu0 0.0
    %4802 = vmatpush1.msra.mxu0 0.0
    %4803 = vmatprep.subr.mxu0 0.0
    %4804 = vmatpush1.msra.mxu0 0.0
    %4805 = vmatprep.subr.mxu0 0.0
    %4806 = vmatpush1.msra.mxu0 0.0
    %4807 = vmatprep.subr.mxu0 0.0
    %4808 = vmatpush1.msra.mxu0 0.0
    %4809 = vmatprep.subr.mxu0 0.0
    %4810 = vmatpush1.msra.mxu0 0.0
    %4811 = vmatprep.subr.mxu0 0.0
    %4812 = vmatpush1.msra.mxu0 0.0
    %4813 = vmatprep.subr.mxu0 0.0
    %4814 = vmatpush1.msra.mxu0 0.0
    %4815 = vmatprep.subr.mxu0 0.0
    %4816 = vmatpush1.msra.mxu0 0.0
    %4817 = vmatprep.subr.mxu0 0.0
    %4818 = vmatpush1.msra.mxu0 0.0
    %4819 = vmatprep.subr.mxu0 0.0
    %4820 = vmatpush1.msra.mxu0 0.0
    %4821 = vmatprep.subr.mxu0 0.0
    %4822 = vmatpush1.msra.mxu0 0.0
    %4823 = vmatprep.subr.mxu0 0.0
    %4824 = vmatpush1.msra.mxu0 0.0
    %4825 = vmatprep.subr.mxu0 0.0
    %4826 = vmatpush1.msra.mxu0 0.0
    %4827 = vmatprep.subr.mxu0 0.0
    %4828 = vmatpush1.msra.mxu0 0.0
    %4829 = vmatprep.subr.mxu0 0.0
    %4830 = vmatpush1.msra.mxu0 0.0
    %4831 = vmatprep.mubr.f32.mxu0 0.0
    %4832 = vmatmul.mubr.f32.gmra.mrb[0].mxu0 %v4765
    %v4833 = vpop.f32.mrb[0].mxu0
    %v4834 = vadd.f32 %v4763, %v4833
    %v4835 = vpop.f32.mrb[0].mxu0
    %4836 = vdwg.mxu0
    %4838 = vrot.lane.b32.xlu0 %v4834, 96
    %v4839 = vpop.permute.xlu0 %4838
    %v4840 = vsel %vm440, %v4834, 0
    %v4842 = vsel %vm440, %v4839, 0
    %4844 = vmatprep.subr.mxu0 0.0
    %4845 = vmatpush1.xpose.msra.mxu0 %v4842
    %4846 = vmatprep.subr.mxu0 0.0
    %4847 = vmatpush1.xpose.msra.mxu0 0.0
    %4848 = vmatprep.subr.mxu0 0.0
    %4849 = vmatpush1.xpose.msra.mxu0 0.0
    %4850 = vmatprep.subr.mxu0 0.0
    %4851 = vmatpush1.xpose.msra.mxu0 0.0
    %4852 = vmatprep.subr.mxu0 0.0
    %4853 = vmatpush1.xpose.msra.mxu0 0.0
    %4854 = vmatprep.subr.mxu0 0.0
    %4855 = vmatpush1.xpose.msra.mxu0 0.0
    %4856 = vmatprep.subr.mxu0 0.0
    %4857 = vmatpush1.xpose.msra.mxu0 0.0
    %4858 = vmatprep.subr.mxu0 0.0
    %4859 = vmatpush1.xpose.msra.mxu0 0.0
    %4860 = vmatprep.subr.mxu0 0.0
    %4861 = vmatpush1.xpose.msra.mxu0 0.0
    %4862 = vmatprep.subr.mxu0 0.0
    %4863 = vmatpush1.xpose.msra.mxu0 0.0
    %4864 = vmatprep.subr.mxu0 0.0
    %4865 = vmatpush1.xpose.msra.mxu0 0.0
    %4866 = vmatprep.subr.mxu0 0.0
    %4867 = vmatpush1.xpose.msra.mxu0 0.0
    %4868 = vmatprep.subr.mxu0 0.0
    %4869 = vmatpush1.xpose.msra.mxu0 0.0
    %4870 = vmatprep.subr.mxu0 0.0
    %4871 = vmatpush1.xpose.msra.mxu0 0.0
    %4872 = vmatprep.subr.mxu0 0.0
    %4873 = vmatpush1.xpose.msra.mxu0 0.0
    %4874 = vmatprep.subr.mxu0 0.0
    %4875 = vmatpush1.xpose.msra.mxu0 0.0
    %4876 = vmatprep.subr.mxu0 0.0
    %4877 = vmatpush1.xpose.msra.mxu0 0.0
    %4878 = vmatprep.subr.mxu0 0.0
    %4879 = vmatpush1.xpose.msra.mxu0 0.0
    %4880 = vmatprep.subr.mxu0 0.0
    %4881 = vmatpush1.xpose.msra.mxu0 0.0
    %4882 = vmatprep.subr.mxu0 0.0
    %4883 = vmatpush1.xpose.msra.mxu0 0.0
    %4884 = vmatprep.subr.mxu0 0.0
    %4885 = vmatpush1.xpose.msra.mxu0 0.0
    %4886 = vmatprep.subr.mxu0 0.0
    %4887 = vmatpush1.xpose.msra.mxu0 0.0
    %4888 = vmatprep.subr.mxu0 0.0
    %4889 = vmatpush1.xpose.msra.mxu0 0.0
    %4890 = vmatprep.subr.mxu0 0.0
    %4891 = vmatpush1.xpose.msra.mxu0 0.0
    %4892 = vmatprep.subr.mxu0 0.0
    %4893 = vmatpush1.xpose.msra.mxu0 0.0
    %4894 = vmatprep.subr.mxu0 0.0
    %4895 = vmatpush1.xpose.msra.mxu0 0.0
    %4896 = vmatprep.subr.mxu0 0.0
    %4897 = vmatpush1.xpose.msra.mxu0 0.0
    %4898 = vmatprep.subr.mxu0 0.0
    %4899 = vmatpush1.xpose.msra.mxu0 0.0
    %4900 = vmatprep.subr.mxu0 0.0
    %4901 = vmatpush1.xpose.msra.mxu0 0.0
    %4902 = vmatprep.subr.mxu0 0.0
    %4903 = vmatpush1.xpose.msra.mxu0 0.0
    %4904 = vmatprep.subr.mxu0 0.0
    %4905 = vmatpush1.xpose.msra.mxu0 0.0
    %4906 = vmatprep.subr.mxu0 0.0
    %4907 = vmatpush1.xpose.msra.mxu0 0.0
    %4908 = vmatprep.mubr.f32.mxu0 0.0
    %4909 = vmatmul.mubr.f32.gmra.mrb[0].mxu0 %v4840
    %v4910 = vpop.f32.mrb[0].mxu0
    %v4911 = vadd.f32 %v4733, %v4910
    %v4912 = vpop.f32.mrb[0].mxu0
    %4913 = vdwg.mxu0
    %v4914 = vsel %vm440, %v4911, -inf
    %4915 = vmax.xlane.f32.xlu0 %v4914
    %v4916 = vpop.xlane.xlu0 %4915
    %v4917 = vsub.f32 %v4911, %v4916
    %v4918 = vmul.f32 %v4917, 1.442695
    %v4919 = vpow.pop %v4918
    %v4920 = vsel %vm440, %v4919, 0.0
    %4921 = vadd.xlane.f32.xlu0 %v4920
    %v4922 = vpop.xlane.xlu0 %4921
    %v4923 = vrcp.pop %v4922
    %v4924 = vmul.f32 %v4919, %v4923
    %4925 = vrot.lane.b32.xlu0 %v4834, 64
    %v4926 = vpop.permute.xlu0 %4925
    %v4929 = vsel %vm440, %v4924, 0
    %4931 = vmatprep.subr.mxu0 0.0
    %4932 = vmatpush1.msra.mxu0 %v4926
    %4933 = vmatprep.subr.mxu0 0.0
    %4934 = vmatpush1.msra.mxu0 0.0
    %4935 = vmatprep.subr.mxu0 0.0
    %4936 = vmatpush1.msra.mxu0 0.0
    %4937 = vmatprep.subr.mxu0 0.0
    %4938 = vmatpush1.msra.mxu0 0.0
    %4939 = vmatprep.subr.mxu0 0.0
    %4940 = vmatpush1.msra.mxu0 0.0
    %4941 = vmatprep.subr.mxu0 0.0
    %4942 = vmatpush1.msra.mxu0 0.0
    %4943 = vmatprep.subr.mxu0 0.0
    %4944 = vmatpush1.msra.mxu0 0.0
    %4945 = vmatprep.subr.mxu0 0.0
    %4946 = vmatpush1.msra.mxu0 0.0
    %4947 = vmatprep.subr.mxu0 0.0
    %4948 = vmatpush1.msra.mxu0 0.0
    %4949 = vmatprep.subr.mxu0 0.0
    %4950 = vmatpush1.msra.mxu0 0.0
    %4951 = vmatprep.subr.mxu0 0.0
    %4952 = vmatpush1.msra.mxu0 0.0
    %4953 = vmatprep.subr.mxu0 0.0
    %4954 = vmatpush1.msra.mxu0 0.0
    %4955 = vmatprep.subr.mxu0 0.0
    %4956 = vmatpush1.msra.mxu0 0.0
    %4957 = vmatprep.subr.mxu0 0.0
    %4958 = vmatpush1.msra.mxu0 0.0
    %4959 = vmatprep.subr.mxu0 0.0
    %4960 = vmatpush1.msra.mxu0 0.0
    %4961 = vmatprep.subr.mxu0 0.0
    %4962 = vmatpush1.msra.mxu0 0.0
    %4963 = vmatprep.subr.mxu0 0.0
    %4964 = vmatpush1.msra.mxu0 0.0
    %4965 = vmatprep.subr.mxu0 0.0
    %4966 = vmatpush1.msra.mxu0 0.0
    %4967 = vmatprep.subr.mxu0 0.0
    %4968 = vmatpush1.msra.mxu0 0.0
    %4969 = vmatprep.subr.mxu0 0.0
    %4970 = vmatpush1.msra.mxu0 0.0
    %4971 = vmatprep.subr.mxu0 0.0
    %4972 = vmatpush1.msra.mxu0 0.0
    %4973 = vmatprep.subr.mxu0 0.0
    %4974 = vmatpush1.msra.mxu0 0.0
    %4975 = vmatprep.subr.mxu0 0.0
    %4976 = vmatpush1.msra.mxu0 0.0
    %4977 = vmatprep.subr.mxu0 0.0
    %4978 = vmatpush1.msra.mxu0 0.0
    %4979 = vmatprep.subr.mxu0 0.0
    %4980 = vmatpush1.msra.mxu0 0.0
    %4981 = vmatprep.subr.mxu0 0.0
    %4982 = vmatpush1.msra.mxu0 0.0
    %4983 = vmatprep.subr.mxu0 0.0
    %4984 = vmatpush1.msra.mxu0 0.0
    %4985 = vmatprep.subr.mxu0 0.0
    %4986 = vmatpush1.msra.mxu0 0.0
    %4987 = vmatprep.subr.mxu0 0.0
    %4988 = vmatpush1.msra.mxu0 0.0
    %4989 = vmatprep.subr.mxu0 0.0
    %4990 = vmatpush1.msra.mxu0 0.0
    %4991 = vmatprep.subr.mxu0 0.0
    %4992 = vmatpush1.msra.mxu0 0.0
    %4993 = vmatprep.subr.mxu0 0.0
    %4994 = vmatpush1.msra.mxu0 0.0
    %4995 = vmatprep.mubr.f32.mxu0 0.0
    %4996 = vmatmul.mubr.f32.gmra.mrb[0].mxu0 %v4929
    %v4997 = vpop.f32.mrb[0].mxu0
    %v4998 = vadd.f32 0.0, %v4997
    %v4999 = vpop.f32.mrb[0].mxu0
    %5000 = vdwg.mxu0
    %5002 = vrot.lane.b32.xlu0 %v4705, 32
    %v5003 = vpop.permute.xlu0 %5002
    %v5006 = vsel %vm440, %v4998, 0
    %5008 = vmatprep.subr.mxu0 0.0
    %5009 = vmatpush1.msra.mxu0 %v5003
    %5010 = vmatprep.subr.mxu0 0.0
    %5011 = vmatpush1.msra.mxu0 0.0
    %5012 = vmatprep.subr.mxu0 0.0
    %5013 = vmatpush1.msra.mxu0 0.0
    %5014 = vmatprep.subr.mxu0 0.0
    %5015 = vmatpush1.msra.mxu0 0.0
    %5016 = vmatprep.subr.mxu0 0.0
    %5017 = vmatpush1.msra.mxu0 0.0
    %5018 = vmatprep.subr.mxu0 0.0
    %5019 = vmatpush1.msra.mxu0 0.0
    %5020 = vmatprep.subr.mxu0 0.0
    %5021 = vmatpush1.msra.mxu0 0.0
    %5022 = vmatprep.subr.mxu0 0.0
    %5023 = vmatpush1.msra.mxu0 0.0
    %5024 = vmatprep.subr.mxu0 0.0
    %5025 = vmatpush1.msra.mxu0 0.0
    %5026 = vmatprep.subr.mxu0 0.0
    %5027 = vmatpush1.msra.mxu0 0.0
    %5028 = vmatprep.subr.mxu0 0.0
    %5029 = vmatpush1.msra.mxu0 0.0
    %5030 = vmatprep.subr.mxu0 0.0
    %5031 = vmatpush1.msra.mxu0 0.0
    %5032 = vmatprep.subr.mxu0 0.0
    %5033 = vmatpush1.msra.mxu0 0.0
    %5034 = vmatprep.subr.mxu0 0.0
    %5035 = vmatpush1.msra.mxu0 0.0
    %5036 = vmatprep.subr.mxu0 0.0
    %5037 = vmatpush1.msra.mxu0 0.0
    %5038 = vmatprep.subr.mxu0 0.0
    %5039 = vmatpush1.msra.mxu0 0.0
    %5040 = vmatprep.subr.mxu0 0.0
    %5041 = vmatpush1.msra.mxu0 0.0
    %5042 = vmatprep.subr.mxu0 0.0
    %5043 = vmatpush1.msra.mxu0 0.0
    %5044 = vmatprep.subr.mxu0 0.0
    %5045 = vmatpush1.msra.mxu0 0.0
    %5046 = vmatprep.subr.mxu0 0.0
    %5047 = vmatpush1.msra.mxu0 0.0
    %5048 = vmatprep.subr.mxu0 0.0
    %5049 = vmatpush1.msra.mxu0 0.0
    %5050 = vmatprep.subr.mxu0 0.0
    %5051 = vmatpush1.msra.mxu0 0.0
    %5052 = vmatprep.subr.mxu0 0.0
    %5053 = vmatpush1.msra.mxu0 0.0
    %5054 = vmatprep.subr.mxu0 0.0
    %5055 = vmatpush1.msra.mxu0 0.0
    %5056 = vmatprep.subr.mxu0 0.0
    %5057 = vmatpush1.msra.mxu0 0.0
    %5058 = vmatprep.subr.mxu0 0.0
    %5059 = vmatpush1.msra.mxu0 0.0
    %5060 = vmatprep.subr.mxu0 0.0
    %5061 = vmatpush1.msra.mxu0 0.0
    %5062 = vmatprep.subr.mxu0 0.0
    %5063 = vmatpush1.msra.mxu0 0.0
    %5064 = vmatprep.subr.mxu0 0.0
    %5065 = vmatpush1.msra.mxu0 0.0
    %5066 = vmatprep.subr.mxu0 0.0
    %5067 = vmatpush1.msra.mxu0 0.0
    %5068 = vmatprep.subr.mxu0 0.0
    %5069 = vmatpush1.msra.mxu0 0.0
    %5070 = vmatprep.subr.mxu0 0.0
    %5071 = vmatpush1.msra.mxu0 0.0
    %5072 = vmatprep.mubr.f32.mxu0 0.0
    %5073 = vmatmul.mubr.f32.gmra.mrb[0].mxu0 %v5006
    %v5074 = vpop.f32.mrb[0].mxu0
    %v5075 = vadd.f32 0.0, %v5074
    %v5076 = vpop.f32.mrb[0].mxu0
    %5077 = vdwg.mxu0
    %v5078 = vlaneseq
    %v5079 = vshrl.u32 %v5078, 7
    %v5080 = vsub.s32 3, %v5079
    %v5081 = vrot.slane %v4731, %v5080
    %v5082 = vadd.f32 %v5081, %v5075
    %5083 = vrot.lane.b32.xlu0 %v4834, 120
    %v5084 = vpop.permute.xlu0 %5083
    %5085 = vrot.lane.b32.xlu0 %v4834, 88
    %v5086 = vpop.permute.xlu0 %5085
    %v5087 = vsel %vm440, %v5084, 0
    %v5089 = vsel %vm440, %v5086, 0
    %5091 = vmatprep.subr.mxu0 0.0
    %5092 = vmatpush1.xpose.msra.mxu0 %v5089
    %5093 = vmatprep.subr.mxu0 0.0
    %5094 = vmatpush1.xpose.msra.mxu0 0.0
    %5095 = vmatprep.subr.mxu0 0.0
    %5096 = vmatpush1.xpose.msra.mxu0 0.0
    %5097 = vmatprep.subr.mxu0 0.0
    %5098 = vmatpush1.xpose.msra.mxu0 0.0
    %5099 = vmatprep.subr.mxu0 0.0
    %5100 = vmatpush1.xpose.msra.mxu0 0.0
    %5101 = vmatprep.subr.mxu0 0.0
    %5102 = vmatpush1.xpose.msra.mxu0 0.0
    %5103 = vmatprep.subr.mxu0 0.0
    %5104 = vmatpush1.xpose.msra.mxu0 0.0
    %5105 = vmatprep.subr.mxu0 0.0
    %5106 = vmatpush1.xpose.msra.mxu0 0.0
    %5107 = vmatprep.subr.mxu0 0.0
    %5108 = vmatpush1.xpose.msra.mxu0 0.0
    %5109 = vmatprep.subr.mxu0 0.0
    %5110 = vmatpush1.xpose.msra.mxu0 0.0
    %5111 = vmatprep.subr.mxu0 0.0
    %5112 = vmatpush1.xpose.msra.mxu0 0.0
    %5113 = vmatprep.subr.mxu0 0.0
    %5114 = vmatpush1.xpose.msra.mxu0 0.0
    %5115 = vmatprep.subr.mxu0 0.0
    %5116 = vmatpush1.xpose.msra.mxu0 0.0
    %5117 = vmatprep.subr.mxu0 0.0
    %5118 = vmatpush1.xpose.msra.mxu0 0.0
    %5119 = vmatprep.subr.mxu0 0.0
    %5120 = vmatpush1.xpose.msra.mxu0 0.0
    %5121 = vmatprep.subr.mxu0 0.0
    %5122 = vmatpush1.xpose.msra.mxu0 0.0
    %5123 = vmatprep.subr.mxu0 0.0
    %5124 = vmatpush1.xpose.msra.mxu0 0.0
    %5125 = vmatprep.subr.mxu0 0.0
    %5126 = vmatpush1.xpose.msra.mxu0 0.0
    %5127 = vmatprep.subr.mxu0 0.0
    %5128 = vmatpush1.xpose.msra.mxu0 0.0
    %5129 = vmatprep.subr.mxu0 0.0
    %5130 = vmatpush1.xpose.msra.mxu0 0.0
    %5131 = vmatprep.subr.mxu0 0.0
    %5132 = vmatpush1.xpose.msra.mxu0 0.0
    %5133 = vmatprep.subr.mxu0 0.0
    %5134 = vmatpush1.xpose.msra.mxu0 0.0
    %5135 = vmatprep.subr.mxu0 0.0
    %5136 = vmatpush1.xpose.msra.mxu0 0.0
    %5137 = vmatprep.subr.mxu0 0.0
    %5138 = vmatpush1.xpose.msra.mxu0 0.0
    %5139 = vmatprep.subr.mxu0 0.0
    %5140 = vmatpush1.xpose.msra.mxu0 0.0
    %5141 = vmatprep.subr.mxu0 0.0
    %5142 = vmatpush1.xpose.msra.mxu0 0.0
    %5143 = vmatprep.subr.mxu0 0.0
    %5144 = vmatpush1.xpose.msra.mxu0 0.0
    %5145 = vmatprep.subr.mxu0 0.0
    %5146 = vmatpush1.xpose.msra.mxu0 0.0
    %5147 = vmatprep.subr.mxu0 0.0
    %5148 = vmatpush1.xpose.msra.mxu0 0.0
    %5149 = vmatprep.subr.mxu0 0.0
    %5150 = vmatpush1.xpose.msra.mxu0 0.0
    %5151 = vmatprep.subr.mxu0 0.0
    %5152 = vmatpush1.xpose.msra.mxu0 0.0
    %5153 = vmatprep.subr.mxu0 0.0
    %5154 = vmatpush1.xpose.msra.mxu0 0.0
    %5155 = vmatprep.mubr.f32.mxu0 0.0
    %5156 = vmatmul.mubr.f32.gmra.mrb[0].mxu0 %v5087
    %v5157 = vpop.f32.mrb[0].mxu0
    %v5158 = vadd.f32 %v4734, %v5157
    %v5159 = vpop.f32.mrb[0].mxu0
    %5160 = vdwg.mxu0
    %v5161 = vsel %vm440, %v5158, -inf
    %5162 = vmax.xlane.f32.xlu0 %v5161
    %v5163 = vpop.xlane.xlu0 %5162
    %v5164 = vsub.f32 %v5158, %v5163
    %v5165 = vmul.f32 %v5164, 1.442695
    %v5166 = vpow.pop %v5165
    %v5167 = vsel %vm440, %v5166, 0.0
    %5168 = vadd.xlane.f32.xlu0 %v5167
    %v5169 = vpop.xlane.xlu0 %5168
    %v5170 = vrcp.pop %v5169
    %v5171 = vmul.f32 %v5166, %v5170
    %5172 = vrot.lane.b32.xlu0 %v4834, 56
    %v5173 = vpop.permute.xlu0 %5172
    %v5176 = vsel %vm440, %v5171, 0
    %5178 = vmatprep.subr.mxu0 0.0
    %5179 = vmatpush1.msra.mxu0 %v5173
    %5180 = vmatprep.subr.mxu0 0.0
    %5181 = vmatpush1.msra.mxu0 0.0
    %5182 = vmatprep.subr.mxu0 0.0
    %5183 = vmatpush1.msra.mxu0 0.0
    %5184 = vmatprep.subr.mxu0 0.0
    %5185 = vmatpush1.msra.mxu0 0.0
    %5186 = vmatprep.subr.mxu0 0.0
    %5187 = vmatpush1.msra.mxu0 0.0
    %5188 = vmatprep.subr.mxu0 0.0
    %5189 = vmatpush1.msra.mxu0 0.0
    %5190 = vmatprep.subr.mxu0 0.0
    %5191 = vmatpush1.msra.mxu0 0.0
    %5192 = vmatprep.subr.mxu0 0.0
    %5193 = vmatpush1.msra.mxu0 0.0
    %5194 = vmatprep.subr.mxu0 0.0
    %5195 = vmatpush1.msra.mxu0 0.0
    %5196 = vmatprep.subr.mxu0 0.0
    %5197 = vmatpush1.msra.mxu0 0.0
    %5198 = vmatprep.subr.mxu0 0.0
    %5199 = vmatpush1.msra.mxu0 0.0
    %5200 = vmatprep.subr.mxu0 0.0
    %5201 = vmatpush1.msra.mxu0 0.0
    %5202 = vmatprep.subr.mxu0 0.0
    %5203 = vmatpush1.msra.mxu0 0.0
    %5204 = vmatprep.subr.mxu0 0.0
    %5205 = vmatpush1.msra.mxu0 0.0
    %5206 = vmatprep.subr.mxu0 0.0
    %5207 = vmatpush1.msra.mxu0 0.0
    %5208 = vmatprep.subr.mxu0 0.0
    %5209 = vmatpush1.msra.mxu0 0.0
    %5210 = vmatprep.subr.mxu0 0.0
    %5211 = vmatpush1.msra.mxu0 0.0
    %5212 = vmatprep.subr.mxu0 0.0
    %5213 = vmatpush1.msra.mxu0 0.0
    %5214 = vmatprep.subr.mxu0 0.0
    %5215 = vmatpush1.msra.mxu0 0.0
    %5216 = vmatprep.subr.mxu0 0.0
    %5217 = vmatpush1.msra.mxu0 0.0
    %5218 = vmatprep.subr.mxu0 0.0
    %5219 = vmatpush1.msra.mxu0 0.0
    %5220 = vmatprep.subr.mxu0 0.0
    %5221 = vmatpush1.msra.mxu0 0.0
    %5222 = vmatprep.subr.mxu0 0.0
    %5223 = vmatpush1.msra.mxu0 0.0
    %5224 = vmatprep.subr.mxu0 0.0
    %5225 = vmatpush1.msra.mxu0 0.0
    %5226 = vmatprep.subr.mxu0 0.0
    %5227 = vmatpush1.msra.mxu0 0.0
    %5228 = vmatprep.subr.mxu0 0.0
    %5229 = vmatpush1.msra.mxu0 0.0
    %5230 = vmatprep.subr.mxu0 0.0
    %5231 = vmatpush1.msra.mxu0 0.0
    %5232 = vmatprep.subr.mxu0 0.0
    %5233 = vmatpush1.msra.mxu0 0.0
    %5234 = vmatprep.subr.mxu0 0.0
    %5235 = vmatpush1.msra.mxu0 0.0
    %5236 = vmatprep.subr.mxu0 0.0
    %5237 = vmatpush1.msra.mxu0 0.0
    %5238 = vmatprep.subr.mxu0 0.0
    %5239 = vmatpush1.msra.mxu0 0.0
    %5240 = vmatprep.subr.mxu0 0.0
    %5241 = vmatpush1.msra.mxu0 0.0
    %5242 = vmatprep.mubr.f32.mxu0 0.0
    %5243 = vmatmul.mubr.f32.gmra.mrb[0].mxu0 %v5176
    %v5244 = vpop.f32.mrb[0].mxu0
    %v5245 = vadd.f32 0.0, %v5244
    %v5246 = vpop.f32.mrb[0].mxu0
    %5247 = vdwg.mxu0
    %5249 = vrot.lane.b32.xlu0 %v4707, 32
    %v5250 = vpop.permute.xlu0 %5249
    %v5253 = vsel %vm440, %v5245, 0
    %5255 = vmatprep.subr.mxu0 0.0
    %5256 = vmatpush1.msra.mxu0 %v5250
    %5257 = vmatprep.subr.mxu0 0.0
    %5258 = vmatpush1.msra.mxu0 0.0
    %5259 = vmatprep.subr.mxu0 0.0
    %5260 = vmatpush1.msra.mxu0 0.0
    %5261 = vmatprep.subr.mxu0 0.0
    %5262 = vmatpush1.msra.mxu0 0.0
    %5263 = vmatprep.subr.mxu0 0.0
    %5264 = vmatpush1.msra.mxu0 0.0
    %5265 = vmatprep.subr.mxu0 0.0
    %5266 = vmatpush1.msra.mxu0 0.0
    %5267 = vmatprep.subr.mxu0 0.0
    %5268 = vmatpush1.msra.mxu0 0.0
    %5269 = vmatprep.subr.mxu0 0.0
    %5270 = vmatpush1.msra.mxu0 0.0
    %5271 = vmatprep.subr.mxu0 0.0
    %5272 = vmatpush1.msra.mxu0 0.0
    %5273 = vmatprep.subr.mxu0 0.0
    %5274 = vmatpush1.msra.mxu0 0.0
    %5275 = vmatprep.subr.mxu0 0.0
    %5276 = vmatpush1.msra.mxu0 0.0
    %5277 = vmatprep.subr.mxu0 0.0
    %5278 = vmatpush1.msra.mxu0 0.0
    %5279 = vmatprep.subr.mxu0 0.0
    %5280 = vmatpush1.msra.mxu0 0.0
    %5281 = vmatprep.subr.mxu0 0.0
    %5282 = vmatpush1.msra.mxu0 0.0
    %5283 = vmatprep.subr.mxu0 0.0
    %5284 = vmatpush1.msra.mxu0 0.0
    %5285 = vmatprep.subr.mxu0 0.0
    %5286 = vmatpush1.msra.mxu0 0.0
    %5287 = vmatprep.subr.mxu0 0.0
    %5288 = vmatpush1.msra.mxu0 0.0
    %5289 = vmatprep.subr.mxu0 0.0
    %5290 = vmatpush1.msra.mxu0 0.0
    %5291 = vmatprep.subr.mxu0 0.0
    %5292 = vmatpush1.msra.mxu0 0.0
    %5293 = vmatprep.subr.mxu0 0.0
    %5294 = vmatpush1.msra.mxu0 0.0
    %5295 = vmatprep.subr.mxu0 0.0
    %5296 = vmatpush1.msra.mxu0 0.0
    %5297 = vmatprep.subr.mxu0 0.0
    %5298 = vmatpush1.msra.mxu0 0.0
    %5299 = vmatprep.subr.mxu0 0.0
    %5300 = vmatpush1.msra.mxu0 0.0
    %5301 = vmatprep.subr.mxu0 0.0
    %5302 = vmatpush1.msra.mxu0 0.0
    %5303 = vmatprep.subr.mxu0 0.0
    %5304 = vmatpush1.msra.mxu0 0.0
    %5305 = vmatprep.subr.mxu0 0.0
    %5306 = vmatpush1.msra.mxu0 0.0
    %5307 = vmatprep.subr.mxu0 0.0
    %5308 = vmatpush1.msra.mxu0 0.0
    %5309 = vmatprep.subr.mxu0 0.0
    %5310 = vmatpush1.msra.mxu0 0.0
    %5311 = vmatprep.subr.mxu0 0.0
    %5312 = vmatpush1.msra.mxu0 0.0
    %5313 = vmatprep.subr.mxu0 0.0
    %5314 = vmatpush1.msra.mxu0 0.0
    %5315 = vmatprep.subr.mxu0 0.0
    %5316 = vmatpush1.msra.mxu0 0.0
    %5317 = vmatprep.subr.mxu0 0.0
    %5318 = vmatpush1.msra.mxu0 0.0
    %5319 = vmatprep.mubr.f32.mxu0 0.0
    %5320 = vmatmul.mubr.f32.gmra.mrb[0].mxu0 %v5253
    %v5321 = vpop.f32.mrb[0].mxu0
    %v5322 = vadd.f32 0.0, %v5321
    %v5323 = vpop.f32.mrb[0].mxu0
    %5324 = vdwg.mxu0
    %v5325 = vadd.f32 %v5082, %v5322
    %5326 = vrot.lane.b32.xlu0 %v4834, 112
    %v5327 = vpop.permute.xlu0 %5326
    %5328 = vrot.lane.b32.xlu0 %v4834, 80
    %v5329 = vpop.permute.xlu0 %5328
    %v5330 = vsel %vm440, %v5327, 0
    %v5332 = vsel %vm440, %v5329, 0
    %5334 = vmatprep.subr.mxu0 0.0
    %5335 = vmatpush1.xpose.msra.mxu0 %v5332
    %5336 = vmatprep.subr.mxu0 0.0
    %5337 = vmatpush1.xpose.msra.mxu0 0.0
    %5338 = vmatprep.subr.mxu0 0.0
    %5339 = vmatpush1.xpose.msra.mxu0 0.0
    %5340 = vmatprep.subr.mxu0 0.0
    %5341 = vmatpush1.xpose.msra.mxu0 0.0
    %5342 = vmatprep.subr.mxu0 0.0
    %5343 = vmatpush1.xpose.msra.mxu0 0.0
    %5344 = vmatprep.subr.mxu0 0.0
    %5345 = vmatpush1.xpose.msra.mxu0 0.0
    %5346 = vmatprep.subr.mxu0 0.0
    %5347 = vmatpush1.xpose.msra.mxu0 0.0
    %5348 = vmatprep.subr.mxu0 0.0
    %5349 = vmatpush1.xpose.msra.mxu0 0.0
    %5350 = vmatprep.subr.mxu0 0.0
    %5351 = vmatpush1.xpose.msra.mxu0 0.0
    %5352 = vmatprep.subr.mxu0 0.0
    %5353 = vmatpush1.xpose.msra.mxu0 0.0
    %5354 = vmatprep.subr.mxu0 0.0
    %5355 = vmatpush1.xpose.msra.mxu0 0.0
    %5356 = vmatprep.subr.mxu0 0.0
    %5357 = vmatpush1.xpose.msra.mxu0 0.0
    %5358 = vmatprep.subr.mxu0 0.0
    %5359 = vmatpush1.xpose.msra.mxu0 0.0
    %5360 = vmatprep.subr.mxu0 0.0
    %5361 = vmatpush1.xpose.msra.mxu0 0.0
    %5362 = vmatprep.subr.mxu0 0.0
    %5363 = vmatpush1.xpose.msra.mxu0 0.0
    %5364 = vmatprep.subr.mxu0 0.0
    %5365 = vmatpush1.xpose.msra.mxu0 0.0
    %5366 = vmatprep.subr.mxu0 0.0
    %5367 = vmatpush1.xpose.msra.mxu0 0.0
    %5368 = vmatprep.subr.mxu0 0.0
    %5369 = vmatpush1.xpose.msra.mxu0 0.0
    %5370 = vmatprep.subr.mxu0 0.0
    %5371 = vmatpush1.xpose.msra.mxu0 0.0
    %5372 = vmatprep.subr.mxu0 0.0
    %5373 = vmatpush1.xpose.msra.mxu0 0.0
    %5374 = vmatprep.subr.mxu0 0.0
    %5375 = vmatpush1.xpose.msra.mxu0 0.0
    %5376 = vmatprep.subr.mxu0 0.0
    %5377 = vmatpush1.xpose.msra.mxu0 0.0
    %5378 = vmatprep.subr.mxu0 0.0
    %5379 = vmatpush1.xpose.msra.mxu0 0.0
    %5380 = vmatprep.subr.mxu0 0.0
    %5381 = vmatpush1.xpose.msra.mxu0 0.0
    %5382 = vmatprep.subr.mxu0 0.0
    %5383 = vmatpush1.xpose.msra.mxu0 0.0
    %5384 = vmatprep.subr.mxu0 0.0
    %5385 = vmatpush1.xpose.msra.mxu0 0.0
    %5386 = vmatprep.subr.mxu0 0.0
    %5387 = vmatpush1.xpose.msra.mxu0 0.0
    %5388 = vmatprep.subr.mxu0 0.0
    %5389 = vmatpush1.xpose.msra.mxu0 0.0
    %5390 = vmatprep.subr.mxu0 0.0
    %5391 = vmatpush1.xpose.msra.mxu0 0.0
    %5392 = vmatprep.subr.mxu0 0.0
    %5393 = vmatpush1.xpose.msra.mxu0 0.0
    %5394 = vmatprep.subr.mxu0 0.0
    %5395 = vmatpush1.xpose.msra.mxu0 0.0
    %5396 = vmatprep.subr.mxu0 0.0
    %5397 = vmatpush1.xpose.msra.mxu0 0.0
    %5398 = vmatprep.mubr.f32.mxu0 0.0
    %5399 = vmatmul.mubr.f32.gmra.mrb[0].mxu0 %v5330
    %v5400 = vpop.f32.mrb[0].mxu0
    %v5401 = vadd.f32 %v4735, %v5400
    %v5402 = vpop.f32.mrb[0].mxu0
    %5403 = vdwg.mxu0
    %v5404 = vsel %vm440, %v5401, -inf
    %5405 = vmax.xlane.f32.xlu0 %v5404
    %v5406 = vpop.xlane.xlu0 %5405
    %v5407 = vsub.f32 %v5401, %v5406
    %v5408 = vmul.f32 %v5407, 1.442695
    %v5409 = vpow.pop %v5408
    %v5410 = vsel %vm440, %v5409, 0.0
    %5411 = vadd.xlane.f32.xlu0 %v5410
    %v5412 = vpop.xlane.xlu0 %5411
    %v5413 = vrcp.pop %v5412
    %v5414 = vmul.f32 %v5409, %v5413
    %5415 = vrot.lane.b32.xlu0 %v4834, 48
    %v5416 = vpop.permute.xlu0 %5415
    %v5419 = vsel %vm440, %v5414, 0
    %5421 = vmatprep.subr.mxu0 0.0
    %5422 = vmatpush1.msra.mxu0 %v5416
    %5423 = vmatprep.subr.mxu0 0.0
    %5424 = vmatpush1.msra.mxu0 0.0
    %5425 = vmatprep.subr.mxu0 0.0
    %5426 = vmatpush1.msra.mxu0 0.0
    %5427 = vmatprep.subr.mxu0 0.0
    %5428 = vmatpush1.msra.mxu0 0.0
    %5429 = vmatprep.subr.mxu0 0.0
    %5430 = vmatpush1.msra.mxu0 0.0
    %5431 = vmatprep.subr.mxu0 0.0
    %5432 = vmatpush1.msra.mxu0 0.0
    %5433 = vmatprep.subr.mxu0 0.0
    %5434 = vmatpush1.msra.mxu0 0.0
    %5435 = vmatprep.subr.mxu0 0.0
    %5436 = vmatpush1.msra.mxu0 0.0
    %5437 = vmatprep.subr.mxu0 0.0
    %5438 = vmatpush1.msra.mxu0 0.0
    %5439 = vmatprep.subr.mxu0 0.0
    %5440 = vmatpush1.msra.mxu0 0.0
    %5441 = vmatprep.subr.mxu0 0.0
    %5442 = vmatpush1.msra.mxu0 0.0
    %5443 = vmatprep.subr.mxu0 0.0
    %5444 = vmatpush1.msra.mxu0 0.0
    %5445 = vmatprep.subr.mxu0 0.0
    %5446 = vmatpush1.msra.mxu0 0.0
    %5447 = vmatprep.subr.mxu0 0.0
    %5448 = vmatpush1.msra.mxu0 0.0
    %5449 = vmatprep.subr.mxu0 0.0
    %5450 = vmatpush1.msra.mxu0 0.0
    %5451 = vmatprep.subr.mxu0 0.0
    %5452 = vmatpush1.msra.mxu0 0.0
    %5453 = vmatprep.subr.mxu0 0.0
    %5454 = vmatpush1.msra.mxu0 0.0
    %5455 = vmatprep.subr.mxu0 0.0
    %5456 = vmatpush1.msra.mxu0 0.0
    %5457 = vmatprep.subr.mxu0 0.0
    %5458 = vmatpush1.msra.mxu0 0.0
    %5459 = vmatprep.subr.mxu0 0.0
    %5460 = vmatpush1.msra.mxu0 0.0
    %5461 = vmatprep.subr.mxu0 0.0
    %5462 = vmatpush1.msra.mxu0 0.0
    %5463 = vmatprep.subr.mxu0 0.0
    %5464 = vmatpush1.msra.mxu0 0.0
    %5465 = vmatprep.subr.mxu0 0.0
    %5466 = vmatpush1.msra.mxu0 0.0
    %5467 = vmatprep.subr.mxu0 0.0
    %5468 = vmatpush1.msra.mxu0 0.0
    %5469 = vmatprep.subr.mxu0 0.0
    %5470 = vmatpush1.msra.mxu0 0.0
    %5471 = vmatprep.subr.mxu0 0.0
    %5472 = vmatpush1.msra.mxu0 0.0
    %5473 = vmatprep.subr.mxu0 0.0
    %5474 = vmatpush1.msra.mxu0 0.0
    %5475 = vmatprep.subr.mxu0 0.0
    %5476 = vmatpush1.msra.mxu0 0.0
    %5477 = vmatprep.subr.mxu0 0.0
    %5478 = vmatpush1.msra.mxu0 0.0
    %5479 = vmatprep.subr.mxu0 0.0
    %5480 = vmatpush1.msra.mxu0 0.0
    %5481 = vmatprep.subr.mxu0 0.0
    %5482 = vmatpush1.msra.mxu0 0.0
    %5483 = vmatprep.subr.mxu0 0.0
    %5484 = vmatpush1.msra.mxu0 0.0
    %5485 = vmatprep.mubr.f32.mxu0 0.0
    %5486 = vmatmul.mubr.f32.gmra.mrb[0].mxu0 %v5419
    %v5487 = vpop.f32.mrb[0].mxu0
    %v5488 = vadd.f32 0.0, %v5487
    %v5489 = vpop.f32.mrb[0].mxu0
    %5490 = vdwg.mxu0
    %5492 = vrot.lane.b32.xlu0 %v4709, 32
    %v5493 = vpop.permute.xlu0 %5492
    %v5496 = vsel %vm440, %v5488, 0
    %5498 = vmatprep.subr.mxu0 0.0
    %5499 = vmatpush1.msra.mxu0 %v5493
    %5500 = vmatprep.subr.mxu0 0.0
    %5501 = vmatpush1.msra.mxu0 0.0
    %5502 = vmatprep.subr.mxu0 0.0
    %5503 = vmatpush1.msra.mxu0 0.0
    %5504 = vmatprep.subr.mxu0 0.0
    %5505 = vmatpush1.msra.mxu0 0.0
    %5506 = vmatprep.subr.mxu0 0.0
    %5507 = vmatpush1.msra.mxu0 0.0
    %5508 = vmatprep.subr.mxu0 0.0
    %5509 = vmatpush1.msra.mxu0 0.0
    %5510 = vmatprep.subr.mxu0 0.0
    %5511 = vmatpush1.msra.mxu0 0.0
    %5512 = vmatprep.subr.mxu0 0.0
    %5513 = vmatpush1.msra.mxu0 0.0
    %5514 = vmatprep.subr.mxu0 0.0
    %5515 = vmatpush1.msra.mxu0 0.0
    %5516 = vmatprep.subr.mxu0 0.0
    %5517 = vmatpush1.msra.mxu0 0.0
    %5518 = vmatprep.subr.mxu0 0.0
    %5519 = vmatpush1.msra.mxu0 0.0
    %5520 = vmatprep.subr.mxu0 0.0
    %5521 = vmatpush1.msra.mxu0 0.0
    %5522 = vmatprep.subr.mxu0 0.0
    %5523 = vmatpush1.msra.mxu0 0.0
    %5524 = vmatprep.subr.mxu0 0.0
    %5525 = vmatpush1.msra.mxu0 0.0
    %5526 = vmatprep.subr.mxu0 0.0
    %5527 = vmatpush1.msra.mxu0 0.0
    %5528 = vmatprep.subr.mxu0 0.0
    %5529 = vmatpush1.msra.mxu0 0.0
    %5530 = vmatprep.subr.mxu0 0.0
    %5531 = vmatpush1.msra.mxu0 0.0
    %5532 = vmatprep.subr.mxu0 0.0
    %5533 = vmatpush1.msra.mxu0 0.0
    %5534 = vmatprep.subr.mxu0 0.0
    %5535 = vmatpush1.msra.mxu0 0.0
    %5536 = vmatprep.subr.mxu0 0.0
    %5537 = vmatpush1.msra.mxu0 0.0
    %5538 = vmatprep.subr.mxu0 0.0
    %5539 = vmatpush1.msra.mxu0 0.0
    %5540 = vmatprep.subr.mxu0 0.0
    %5541 = vmatpush1.msra.mxu0 0.0
    %5542 = vmatprep.subr.mxu0 0.0
    %5543 = vmatpush1.msra.mxu0 0.0
    %5544 = vmatprep.subr.mxu0 0.0
    %5545 = vmatpush1.msra.mxu0 0.0
    %5546 = vmatprep.subr.mxu0 0.0
    %5547 = vmatpush1.msra.mxu0 0.0
    %5548 = vmatprep.subr.mxu0 0.0
    %5549 = vmatpush1.msra.mxu0 0.0
    %5550 = vmatprep.subr.mxu0 0.0
    %5551 = vmatpush1.msra.mxu0 0.0
    %5552 = vmatprep.subr.mxu0 0.0
    %5553 = vmatpush1.msra.mxu0 0.0
    %5554 = vmatprep.subr.mxu0 0.0
    %5555 = vmatpush1.msra.mxu0 0.0
    %5556 = vmatprep.subr.mxu0 0.0
    %5557 = vmatpush1.msra.mxu0 0.0
    %5558 = vmatprep.subr.mxu0 0.0
    %5559 = vmatpush1.msra.mxu0 0.0
    %5560 = vmatprep.subr.mxu0 0.0
    %5561 = vmatpush1.msra.mxu0 0.0
    %5562 = vmatprep.mubr.f32.mxu0 0.0
    %5563 = vmatmul.mubr.f32.gmra.mrb[0].mxu0 %v5496
    %v5564 = vpop.f32.mrb[0].mxu0
    %v5565 = vadd.f32 0.0, %v5564
    %v5566 = vpop.f32.mrb[0].mxu0
    %5567 = vdwg.mxu0
    %v5568 = vadd.f32 %v5325, %v5565
    %5569 = vrot.lane.b32.xlu0 %v4834, 104
    %v5570 = vpop.permute.xlu0 %5569
    %5571 = vrot.lane.b32.xlu0 %v4834, 72
    %v5572 = vpop.permute.xlu0 %5571
    %v5573 = vsel %vm440, %v5570, 0
    %v5575 = vsel %vm440, %v5572, 0
    %5577 = vmatprep.subr.mxu0 0.0
    %5578 = vmatpush1.xpose.msra.mxu0 %v5575
    %5579 = vmatprep.subr.mxu0 0.0
    %5580 = vmatpush1.xpose.msra.mxu0 0.0
    %5581 = vmatprep.subr.mxu0 0.0
    %5582 = vmatpush1.xpose.msra.mxu0 0.0
    %5583 = vmatprep.subr.mxu0 0.0
    %5584 = vmatpush1.xpose.msra.mxu0 0.0
    %5585 = vmatprep.subr.mxu0 0.0
    %5586 = vmatpush1.xpose.msra.mxu0 0.0
    %5587 = vmatprep.subr.mxu0 0.0
    %5588 = vmatpush1.xpose.msra.mxu0 0.0
    %5589 = vmatprep.subr.mxu0 0.0
    %5590 = vmatpush1.xpose.msra.mxu0 0.0
    %5591 = vmatprep.subr.mxu0 0.0
    %5592 = vmatpush1.xpose.msra.mxu0 0.0
    %5593 = vmatprep.subr.mxu0 0.0
    %5594 = vmatpush1.xpose.msra.mxu0 0.0
    %5595 = vmatprep.subr.mxu0 0.0
    %5596 = vmatpush1.xpose.msra.mxu0 0.0
    %5597 = vmatprep.subr.mxu0 0.0
    %5598 = vmatpush1.xpose.msra.mxu0 0.0
    %5599 = vmatprep.subr.mxu0 0.0
    %5600 = vmatpush1.xpose.msra.mxu0 0.0
    %5601 = vmatprep.subr.mxu0 0.0
    %5602 = vmatpush1.xpose.msra.mxu0 0.0
    %5603 = vmatprep.subr.mxu0 0.0
    %5604 = vmatpush1.xpose.msra.mxu0 0.0
    %5605 = vmatprep.subr.mxu0 0.0
    %5606 = vmatpush1.xpose.msra.mxu0 0.0
    %5607 = vmatprep.subr.mxu0 0.0
    %5608 = vmatpush1.xpose.msra.mxu0 0.0
    %5609 = vmatprep.subr.mxu0 0.0
    %5610 = vmatpush1.xpose.msra.mxu0 0.0
    %5611 = vmatprep.subr.mxu0 0.0
    %5612 = vmatpush1.xpose.msra.mxu0 0.0
    %5613 = vmatprep.subr.mxu0 0.0
    %5614 = vmatpush1.xpose.msra.mxu0 0.0
    %5615 = vmatprep.subr.mxu0 0.0
    %5616 = vmatpush1.xpose.msra.mxu0 0.0
    %5617 = vmatprep.subr.mxu0 0.0
    %5618 = vmatpush1.xpose.msra.mxu0 0.0
    %5619 = vmatprep.subr.mxu0 0.0
    %5620 = vmatpush1.xpose.msra.mxu0 0.0
    %5621 = vmatprep.subr.mxu0 0.0
    %5622 = vmatpush1.xpose.msra.mxu0 0.0
    %5623 = vmatprep.subr.mxu0 0.0
    %5624 = vmatpush1.xpose.msra.mxu0 0.0
    %5625 = vmatprep.subr.mxu0 0.0
    %5626 = vmatpush1.xpose.msra.mxu0 0.0
    %5627 = vmatprep.subr.mxu0 0.0
    %5628 = vmatpush1.xpose.msra.mxu0 0.0
    %5629 = vmatprep.subr.mxu0 0.0
    %5630 = vmatpush1.xpose.msra.mxu0 0.0
    %5631 = vmatprep.subr.mxu0 0.0
    %5632 = vmatpush1.xpose.msra.mxu0 0.0
    %5633 = vmatprep.subr.mxu0 0.0
    %5634 = vmatpush1.xpose.msra.mxu0 0.0
    %5635 = vmatprep.subr.mxu0 0.0
    %5636 = vmatpush1.xpose.msra.mxu0 0.0
    %5637 = vmatprep.subr.mxu0 0.0
    %5638 = vmatpush1.xpose.msra.mxu0 0.0
    %5639 = vmatprep.subr.mxu0 0.0
    %5640 = vmatpush1.xpose.msra.mxu0 0.0
    %5641 = vmatprep.mubr.f32.mxu0 0.0
    %5642 = vmatmul.mubr.f32.gmra.mrb[0].mxu0 %v5573
    %v5643 = vpop.f32.mrb[0].mxu0
    %v5644 = vadd.f32 %v4736, %v5643
    %v5645 = vpop.f32.mrb[0].mxu0
    %5646 = vdwg.mxu0
    %v5647 = vsel %vm440, %v5644, -inf
    %5648 = vmax.xlane.f32.xlu0 %v5647
    %v5649 = vpop.xlane.xlu0 %5648
    %v5650 = vsub.f32 %v5644, %v5649
    %v5651 = vmul.f32 %v5650, 1.442695
    %v5652 = vpow.pop %v5651
    %v5653 = vsel %vm440, %v5652, 0.0
    %5654 = vadd.xlane.f32.xlu0 %v5653
    %v5655 = vpop.xlane.xlu0 %5654
    %v5656 = vrcp.pop %v5655
    %v5657 = vmul.f32 %v5652, %v5656
    %5658 = vrot.lane.b32.xlu0 %v4834, 40
    %v5659 = vpop.permute.xlu0 %5658
    %v5662 = vsel %vm440, %v5657, 0
    %5664 = vmatprep.subr.mxu0 0.0
    %5665 = vmatpush1.msra.mxu0 %v5659
    %5666 = vmatprep.subr.mxu0 0.0
    %5667 = vmatpush1.msra.mxu0 0.0
    %5668 = vmatprep.subr.mxu0 0.0
    %5669 = vmatpush1.msra.mxu0 0.0
    %5670 = vmatprep.subr.mxu0 0.0
    %5671 = vmatpush1.msra.mxu0 0.0
    %5672 = vmatprep.subr.mxu0 0.0
    %5673 = vmatpush1.msra.mxu0 0.0
    %5674 = vmatprep.subr.mxu0 0.0
    %5675 = vmatpush1.msra.mxu0 0.0
    %5676 = vmatprep.subr.mxu0 0.0
    %5677 = vmatpush1.msra.mxu0 0.0
    %5678 = vmatprep.subr.mxu0 0.0
    %5679 = vmatpush1.msra.mxu0 0.0
    %5680 = vmatprep.subr.mxu0 0.0
    %5681 = vmatpush1.msra.mxu0 0.0
    %5682 = vmatprep.subr.mxu0 0.0
    %5683 = vmatpush1.msra.mxu0 0.0
    %5684 = vmatprep.subr.mxu0 0.0
    %5685 = vmatpush1.msra.mxu0 0.0
    %5686 = vmatprep.subr.mxu0 0.0
    %5687 = vmatpush1.msra.mxu0 0.0
    %5688 = vmatprep.subr.mxu0 0.0
    %5689 = vmatpush1.msra.mxu0 0.0
    %5690 = vmatprep.subr.mxu0 0.0
    %5691 = vmatpush1.msra.mxu0 0.0
    %5692 = vmatprep.subr.mxu0 0.0
    %5693 = vmatpush1.msra.mxu0 0.0
    %5694 = vmatprep.subr.mxu0 0.0
    %5695 = vmatpush1.msra.mxu0 0.0
    %5696 = vmatprep.subr.mxu0 0.0
    %5697 = vmatpush1.msra.mxu0 0.0
    %5698 = vmatprep.subr.mxu0 0.0
    %5699 = vmatpush1.msra.mxu0 0.0
    %5700 = vmatprep.subr.mxu0 0.0
    %5701 = vmatpush1.msra.mxu0 0.0
    %5702 = vmatprep.subr.mxu0 0.0
    %5703 = vmatpush1.msra.mxu0 0.0
    %5704 = vmatprep.subr.mxu0 0.0
    %5705 = vmatpush1.msra.mxu0 0.0
    %5706 = vmatprep.subr.mxu0 0.0
    %5707 = vmatpush1.msra.mxu0 0.0
    %5708 = vmatprep.subr.mxu0 0.0
    %5709 = vmatpush1.msra.mxu0 0.0
    %5710 = vmatprep.subr.mxu0 0.0
    %5711 = vmatpush1.msra.mxu0 0.0
    %5712 = vmatprep.subr.mxu0 0.0
    %5713 = vmatpush1.msra.mxu0 0.0
    %5714 = vmatprep.subr.mxu0 0.0
    %5715 = vmatpush1.msra.mxu0 0.0
    %5716 = vmatprep.subr.mxu0 0.0
    %5717 = vmatpush1.msra.mxu0 0.0
    %5718 = vmatprep.subr.mxu0 0.0
    %5719 = vmatpush1.msra.mxu0 0.0
    %5720 = vmatprep.subr.mxu0 0.0
    %5721 = vmatpush1.msra.mxu0 0.0
    %5722 = vmatprep.subr.mxu0 0.0
    %5723 = vmatpush1.msra.mxu0 0.0
    %5724 = vmatprep.subr.mxu0 0.0
    %5725 = vmatpush1.msra.mxu0 0.0
    %5726 = vmatprep.subr.mxu0 0.0
    %5727 = vmatpush1.msra.mxu0 0.0
    %5728 = vmatprep.mubr.f32.mxu0 0.0
    %5729 = vmatmul.mubr.f32.gmra.mrb[0].mxu0 %v5662
    %v5730 = vpop.f32.mrb[0].mxu0
    %v5731 = vadd.f32 0.0, %v5730
    %v5732 = vpop.f32.mrb[0].mxu0
    %5733 = vdwg.mxu0
    %5735 = vrot.lane.b32.xlu0 %v4711, 32
    %v5736 = vpop.permute.xlu0 %5735
    %v5739 = vsel %vm440, %v5731, 0
    %5741 = vmatprep.subr.mxu0 0.0
    %5742 = vmatpush1.msra.mxu0 %v5736
    %5743 = vmatprep.subr.mxu0 0.0
    %5744 = vmatpush1.msra.mxu0 0.0
    %5745 = vmatprep.subr.mxu0 0.0
    %5746 = vmatpush1.msra.mxu0 0.0
    %5747 = vmatprep.subr.mxu0 0.0
    %5748 = vmatpush1.msra.mxu0 0.0
    %5749 = vmatprep.subr.mxu0 0.0
    %5750 = vmatpush1.msra.mxu0 0.0
    %5751 = vmatprep.subr.mxu0 0.0
    %5752 = vmatpush1.msra.mxu0 0.0
    %5753 = vmatprep.subr.mxu0 0.0
    %5754 = vmatpush1.msra.mxu0 0.0
    %5755 = vmatprep.subr.mxu0 0.0
    %5756 = vmatpush1.msra.mxu0 0.0
    %5757 = vmatprep.subr.mxu0 0.0
    %5758 = vmatpush1.msra.mxu0 0.0
    %5759 = vmatprep.subr.mxu0 0.0
    %5760 = vmatpush1.msra.mxu0 0.0
    %5761 = vmatprep.subr.mxu0 0.0
    %5762 = vmatpush1.msra.mxu0 0.0
    %5763 = vmatprep.subr.mxu0 0.0
    %5764 = vmatpush1.msra.mxu0 0.0
    %5765 = vmatprep.subr.mxu0 0.0
    %5766 = vmatpush1.msra.mxu0 0.0
    %5767 = vmatprep.subr.mxu0 0.0
    %5768 = vmatpush1.msra.mxu0 0.0
    %5769 = vmatprep.subr.mxu0 0.0
    %5770 = vmatpush1.msra.mxu0 0.0
    %5771 = vmatprep.subr.mxu0 0.0
    %5772 = vmatpush1.msra.mxu0 0.0
    %5773 = vmatprep.subr.mxu0 0.0
    %5774 = vmatpush1.msra.mxu0 0.0
    %5775 = vmatprep.subr.mxu0 0.0
    %5776 = vmatpush1.msra.mxu0 0.0
    %5777 = vmatprep.subr.mxu0 0.0
    %5778 = vmatpush1.msra.mxu0 0.0
    %5779 = vmatprep.subr.mxu0 0.0
    %5780 = vmatpush1.msra.mxu0 0.0
    %5781 = vmatprep.subr.mxu0 0.0
    %5782 = vmatpush1.msra.mxu0 0.0
    %5783 = vmatprep.subr.mxu0 0.0
    %5784 = vmatpush1.msra.mxu0 0.0
    %5785 = vmatprep.subr.mxu0 0.0
    %5786 = vmatpush1.msra.mxu0 0.0
    %5787 = vmatprep.subr.mxu0 0.0
    %5788 = vmatpush1.msra.mxu0 0.0
    %5789 = vmatprep.subr.mxu0 0.0
    %5790 = vmatpush1.msra.mxu0 0.0
    %5791 = vmatprep.subr.mxu0 0.0
    %5792 = vmatpush1.msra.mxu0 0.0
    %5793 = vmatprep.subr.mxu0 0.0
    %5794 = vmatpush1.msra.mxu0 0.0
    %5795 = vmatprep.subr.mxu0 0.0
    %5796 = vmatpush1.msra.mxu0 0.0
    %5797 = vmatprep.subr.mxu0 0.0
    %5798 = vmatpush1.msra.mxu0 0.0
    %5799 = vmatprep.subr.mxu0 0.0
    %5800 = vmatpush1.msra.mxu0 0.0
    %5801 = vmatprep.subr.mxu0 0.0
    %5802 = vmatpush1.msra.mxu0 0.0
    %5803 = vmatprep.subr.mxu0 0.0
    %5804 = vmatpush1.msra.mxu0 0.0
    %5805 = vmatprep.mubr.f32.mxu0 0.0
    %5806 = vmatmul.mubr.f32.gmra.mrb[0].mxu0 %v5739
    %v5807 = vpop.f32.mrb[0].mxu0
    %v5808 = vadd.f32 0.0, %v5807
    %v5809 = vpop.f32.mrb[0].mxu0
    %5810 = vdwg.mxu0
    %v5811 = vadd.f32 %v5568, %v5808
    %v5812 = vadd.f32 %v4703, %v5811
    %v5813 = vsel %vm542, %v5812, 0.0
    %5814 = vadd.xlane.f32.xlu0 %v5813
    %v5815 = vpop.xlane.xlu0 %5814
    %v5816 = vmul.f32 %v5815, %v3428
    %v5817 = vsub.f32 %v5812, %v5816
    %v5818 = vmul.f32 %v5817, %v5817
    %v5819 = vsel %vm542, %v5818, 0.0
    %5820 = vadd.xlane.f32.xlu0 %v5819
    %v5821 = vpop.xlane.xlu0 %5820
    %v5822 = vmul.f32 %v5821, %v3428
    %v5823 = vadd.f32 %v5822, 1e-05
    %v5824 = vrsqrt.pop %v5823
    %v5825 = vmul.f32 %v5817, %v5824
    %v5826 = vlaneseq
    %v5827 = vshrl.u32 %v5826, 7
    %v5828 = vsub.s32 4, %v5827
    %v5829 = vrot.slane %v4731, %v5828
    %v5830 = vmul.f32 %v5825, %v5829
    %v5831 = vlaneseq
    %v5832 = vshrl.u32 %v5831, 7
    %v5833 = vsub.s32 5, %v5832
    %v5834 = vrot.slane %v4731, %v5833
    %v5835 = vadd.f32 %v5830, %v5834
    %v5836 = vlaneseq
    %v5837 = vshrl.u32 %v5836, 7
    %v5838 = vsub.s32 6, %v5837
    %v5839 = vrot.slane %v4731, %v5838
    %v5841 = vsel %vm542, %v5835, 0
    %5843 = vmatprep.subr.mxu0 0.0
    %5844 = vmatpush1.msra.mxu0 %v4706
    %5845 = vmatprep.subr.mxu0 0.0
    %5846 = vmatpush1.msra.mxu0 %v4708
    %5847 = vmatprep.subr.mxu0 0.0
    %5848 = vmatpush1.msra.mxu0 %v4710
    %5849 = vmatprep.subr.mxu0 0.0
    %5850 = vmatpush1.msra.mxu0 %v4712
    %5851 = vmatprep.subr.mxu0 0.0
    %5852 = vmatpush1.msra.mxu0 0.0
    %5853 = vmatprep.subr.mxu0 0.0
    %5854 = vmatpush1.msra.mxu0 0.0
    %5855 = vmatprep.subr.mxu0 0.0
    %5856 = vmatpush1.msra.mxu0 0.0
    %5857 = vmatprep.subr.mxu0 0.0
    %5858 = vmatpush1.msra.mxu0 0.0
    %5859 = vmatprep.subr.mxu0 0.0
    %5860 = vmatpush1.msra.mxu0 0.0
    %5861 = vmatprep.subr.mxu0 0.0
    %5862 = vmatpush1.msra.mxu0 0.0
    %5863 = vmatprep.subr.mxu0 0.0
    %5864 = vmatpush1.msra.mxu0 0.0
    %5865 = vmatprep.subr.mxu0 0.0
    %5866 = vmatpush1.msra.mxu0 0.0
    %5867 = vmatprep.subr.mxu0 0.0
    %5868 = vmatpush1.msra.mxu0 0.0
    %5869 = vmatprep.subr.mxu0 0.0
    %5870 = vmatpush1.msra.mxu0 0.0
    %5871 = vmatprep.subr.mxu0 0.0
    %5872 = vmatpush1.msra.mxu0 0.0
    %5873 = vmatprep.subr.mxu0 0.0
    %5874 = vmatpush1.msra.mxu0 0.0
    %5875 = vmatprep.subr.mxu0 0.0
    %5876 = vmatpush1.msra.mxu0 0.0
    %5877 = vmatprep.subr.mxu0 0.0
    %5878 = vmatpush1.msra.mxu0 0.0
    %5879 = vmatprep.subr.mxu0 0.0
    %5880 = vmatpush1.msra.mxu0 0.0
    %5881 = vmatprep.subr.mxu0 0.0
    %5882 = vmatpush1.msra.mxu0 0.0
    %5883 = vmatprep.subr.mxu0 0.0
    %5884 = vmatpush1.msra.mxu0 0.0
    %5885 = vmatprep.subr.mxu0 0.0
    %5886 = vmatpush1.msra.mxu0 0.0
    %5887 = vmatprep.subr.mxu0 0.0
    %5888 = vmatpush1.msra.mxu0 0.0
    %5889 = vmatprep.subr.mxu0 0.0
    %5890 = vmatpush1.msra.mxu0 0.0
    %5891 = vmatprep.subr.mxu0 0.0
    %5892 = vmatpush1.msra.mxu0 0.0
    %5893 = vmatprep.subr.mxu0 0.0
    %5894 = vmatpush1.msra.mxu0 0.0
    %5895 = vmatprep.subr.mxu0 0.0
    %5896 = vmatpush1.msra.mxu0 0.0
    %5897 = vmatprep.subr.mxu0 0.0
    %5898 = vmatpush1.msra.mxu0 0.0
    %5899 = vmatprep.subr.mxu0 0.0
    %5900 = vmatpush1.msra.mxu0 0.0
    %5901 = vmatprep.subr.mxu0 0.0
    %5902 = vmatpush1.msra.mxu0 0.0
    %5903 = vmatprep.subr.mxu0 0.0
    %5904 = vmatpush1.msra.mxu0 0.0
    %5905 = vmatprep.subr.mxu0 0.0
    %5906 = vmatpush1.msra.mxu0 0.0
    %5907 = vmatprep.mubr.f32.mxu0 0.0
    %5908 = vmatmul.mubr.f32.gmra.mrb[0].mxu0 %v5841
    %v5909 = vpop.f32.mrb[0].mxu0
    %v5910 = vadd.f32 %v5839, %v5909
    %v5911 = vpop.f32.mrb[0].mxu0
    %5912 = vdwg.mxu0
    %v5913 = vmul.f32 %v5910, 0.5
    %v5914 = vmul.f32 %v5910, 0.70710677
    %v5915 = vand.u32 2147483647, %v5914
    %v5916 = vmul.f32 %v5915, 0.3275911
    %v5917 = vadd.f32 %v5916, 1.0
    %v5918 = vrcp.pop %v5917
    %v5919 = vmul.f32 1.0, %v5918
    %v5920 = vmul.f32 %v5919, 1.0614054
    %v5921 = vadd.f32 %v5920, -1.4531521
    %v5922 = vmul.f32 %v5921, %v5919
    %v5923 = vadd.f32 %v5922, 1.4214138
    %v5924 = vmul.f32 %v5923, %v5919
    %v5925 = vadd.f32 %v5924, -0.28449672
    %v5926 = vmul.f32 %v5925, %v5919
    %v5927 = vadd.f32 %v5926, 0.2548296
    %v5928 = vmul.f32 %v5927, %v5919
    %v5929 = vsub.f32 0.0, %v5915
    %v5930 = vmul.f32 %v5929, %v5915
    %v5931 = vmul.f32 %v5930, 1.442695
    %v5932 = vpow.pop %v5931
    %v5933 = vmul.f32 %v5928, %v5932
    %v5934 = vsub.f32 1.0, %v5933
    %vm5935 = vcmp.ge.f32.partialorder %v5914, 0.0
    %v5936 = vsub.f32 0.0, %v5934
    %v5937 = vsel %vm5935, %v5934, %v5936
    %v5938 = vadd.f32 %v5937, 1.0
    %v5939 = vmul.f32 %v5913, %v5938
    %v5940 = vlaneseq
    %v5941 = vshrl.u32 %v5940, 7
    %v5942 = vsub.s32 7, %v5941
    %v5943 = vrot.slane %v4731, %v5942
    %5944 = vmatprep.subr.mxu0 0.0
    %5945 = vmatpush1.msra.mxu0 %v4714
    %5946 = vmatprep.subr.mxu0 0.0
    %5947 = vmatpush1.msra.mxu0 %v4715
    %5948 = vmatprep.subr.mxu0 0.0
    %5949 = vmatpush1.msra.mxu0 %v4716
    %5950 = vmatprep.subr.mxu0 0.0
    %5951 = vmatpush1.msra.mxu0 %v4717
    %5952 = vmatprep.subr.mxu0 0.0
    %5953 = vmatpush1.msra.mxu0 %v4718
    %5954 = vmatprep.subr.mxu0 0.0
    %5955 = vmatpush1.msra.mxu0 %v4719
    %5956 = vmatprep.subr.mxu0 0.0
    %5957 = vmatpush1.msra.mxu0 %v4720
    %5958 = vmatprep.subr.mxu0 0.0
    %5959 = vmatpush1.msra.mxu0 %v4721
    %5960 = vmatprep.subr.mxu0 0.0
    %5961 = vmatpush1.msra.mxu0 %v4722
    %5962 = vmatprep.subr.mxu0 0.0
    %5963 = vmatpush1.msra.mxu0 %v4723
    %5964 = vmatprep.subr.mxu0 0.0
    %5965 = vmatpush1.msra.mxu0 %v4724
    %5966 = vmatprep.subr.mxu0 0.0
    %5967 = vmatpush1.msra.mxu0 %v4725
    %5968 = vmatprep.subr.mxu0 0.0
    %5969 = vmatpush1.msra.mxu0 %v4726
    %5970 = vmatprep.subr.mxu0 0.0
    %5971 = vmatpush1.msra.mxu0 %v4727
    %5972 = vmatprep.subr.mxu0 0.0
    %5973 = vmatpush1.msra.mxu0 %v4728
    %5974 = vmatprep.subr.mxu0 0.0
    %5975 = vmatpush1.msra.mxu0 %v4729
    %5976 = vmatprep.subr.mxu0 0.0
    %5977 = vmatpush1.msra.mxu0 0.0
    %5978 = vmatprep.subr.mxu0 0.0
    %5979 = vmatpush1.msra.mxu0 0.0
    %5980 = vmatprep.subr.mxu0 0.0
    %5981 = vmatpush1.msra.mxu0 0.0
    %5982 = vmatprep.subr.mxu0 0.0
    %5983 = vmatpush1.msra.mxu0 0.0
    %5984 = vmatprep.subr.mxu0 0.0
    %5985 = vmatpush1.msra.mxu0 0.0
    %5986 = vmatprep.subr.mxu0 0.0
    %5987 = vmatpush1.msra.mxu0 0.0
    %5988 = vmatprep.subr.mxu0 0.0
    %5989 = vmatpush1.msra.mxu0 0.0
    %5990 = vmatprep.subr.mxu0 0.0
    %5991 = vmatpush1.msra.mxu0 0.0
    %5992 = vmatprep.subr.mxu0 0.0
    %5993 = vmatpush1.msra.mxu0 0.0
    %5994 = vmatprep.subr.mxu0 0.0
    %5995 = vmatpush1.msra.mxu0 0.0
    %5996 = vmatprep.subr.mxu0 0.0
    %5997 = vmatpush1.msra.mxu0 0.0
    %5998 = vmatprep.subr.mxu0 0.0
    %5999 = vmatpush1.msra.mxu0 0.0
    %6000 = vmatprep.subr.mxu0 0.0
    %6001 = vmatpush1.msra.mxu0 0.0
    %6002 = vmatprep.subr.mxu0 0.0
    %6003 = vmatpush1.msra.mxu0 0.0
    %6004 = vmatprep.subr.mxu0 0.0
    %6005 = vmatpush1.msra.mxu0 0.0
    %6006 = vmatprep.subr.mxu0 0.0
    %6007 = vmatpush1.msra.mxu0 0.0
    %6008 = vmatprep.mubr.f32.mxu0 0.0
    %6009 = vmatmul.mubr.f32.gmra.mrb[0].mxu0 %v5939
    %v6010 = vpop.f32.mrb[0].mxu0
    %v6011 = vadd.f32 %v5943, %v6010
    %v6012 = vpop.f32.mrb[0].mxu0
    %6013 = vdwg.mxu0
    %v6014 = vadd.f32 %v5812, %v6011
    %v6015 = vld [vmem:[%s15] sm:$0x7]
    %v6016 = vsel %vm542, %v6014, 0.0
    %6017 = vadd.xlane.f32.xlu0 %v6016
    %v6018 = vpop.xlane.xlu0 %6017
    %v6019 = vmul.f32 %v6018, %v3428
    %v6020 = vsub.f32 %v6014, %v6019
    %v6021 = vmul.f32 %v6020, %v6020
    %v6022 = vsel %vm542, %v6021, 0.0
    %6023 = vadd.xlane.f32.xlu0 %v6022
    %v6024 = vpop.xlane.xlu0 %6023
    %v6025 = vmul.f32 %v6024, %v3428
    %v6026 = vadd.f32 %v6025, 1e-05
    %v6027 = vrsqrt.pop %v6026
    %v6028 = vmul.f32 %v6020, %v6027
    %v6029 = vlaneseq
    %v6030 = vshrl.u32 %v6029, 7
    %v6031 = vsub.s32 0, %v6030
    %v6032 = vrot.slane %v6015, %v6031
    %v6033 = vmul.f32 %v6028, %v6032
    %v6034 = vlaneseq
    %v6035 = vshrl.u32 %v6034, 7
    %v6036 = vsub.s32 1, %v6035
    %v6037 = vrot.slane %v6015, %v6036
    %v6038 = vadd.f32 %v6033, %v6037
    %v6039 = vld [vmem:[%s14] sm:$0x3]
    %v6041 = vsel %vm440, %v6039, 0
    %6043 = vmatprep.subr.mxu0 0.0
    %6044 = vmatpush1.msra.mxu0 %v6038
    %6045 = vmatprep.subr.mxu0 0.0
    %6046 = vmatpush1.msra.mxu0 0.0
    %6047 = vmatprep.subr.mxu0 0.0
    %6048 = vmatpush1.msra.mxu0 0.0
    %6049 = vmatprep.subr.mxu0 0.0
    %6050 = vmatpush1.msra.mxu0 0.0
    %6051 = vmatprep.subr.mxu0 0.0
    %6052 = vmatpush1.msra.mxu0 0.0
    %6053 = vmatprep.subr.mxu0 0.0
    %6054 = vmatpush1.msra.mxu0 0.0
    %6055 = vmatprep.subr.mxu0 0.0
    %6056 = vmatpush1.msra.mxu0 0.0
    %6057 = vmatprep.subr.mxu0 0.0
    %6058 = vmatpush1.msra.mxu0 0.0
    %6059 = vmatprep.subr.mxu0 0.0
    %6060 = vmatpush1.msra.mxu0 0.0
    %6061 = vmatprep.subr.mxu0 0.0
    %6062 = vmatpush1.msra.mxu0 0.0
    %6063 = vmatprep.subr.mxu0 0.0
    %6064 = vmatpush1.msra.mxu0 0.0
    %6065 = vmatprep.subr.mxu0 0.0
    %6066 = vmatpush1.msra.mxu0 0.0
    %6067 = vmatprep.subr.mxu0 0.0
    %6068 = vmatpush1.msra.mxu0 0.0
    %6069 = vmatprep.subr.mxu0 0.0
    %6070 = vmatpush1.msra.mxu0 0.0
    %6071 = vmatprep.subr.mxu0 0.0
    %6072 = vmatpush1.msra.mxu0 0.0
    %6073 = vmatprep.subr.mxu0 0.0
    %6074 = vmatpush1.msra.mxu0 0.0
    %6075 = vmatprep.subr.mxu0 0.0
    %6076 = vmatpush1.msra.mxu0 0.0
    %6077 = vmatprep.subr.mxu0 0.0
    %6078 = vmatpush1.msra.mxu0 0.0
    %6079 = vmatprep.subr.mxu0 0.0
    %6080 = vmatpush1.msra.mxu0 0.0
    %6081 = vmatprep.subr.mxu0 0.0
    %6082 = vmatpush1.msra.mxu0 0.0
    %6083 = vmatprep.subr.mxu0 0.0
    %6084 = vmatpush1.msra.mxu0 0.0
    %6085 = vmatprep.subr.mxu0 0.0
    %6086 = vmatpush1.msra.mxu0 0.0
    %6087 = vmatprep.subr.mxu0 0.0
    %6088 = vmatpush1.msra.mxu0 0.0
    %6089 = vmatprep.subr.mxu0 0.0
    %6090 = vmatpush1.msra.mxu0 0.0
    %6091 = vmatprep.subr.mxu0 0.0
    %6092 = vmatpush1.msra.mxu0 0.0
    %6093 = vmatprep.subr.mxu0 0.0
    %6094 = vmatpush1.msra.mxu0 0.0
    %6095 = vmatprep.subr.mxu0 0.0
    %6096 = vmatpush1.msra.mxu0 0.0
    %6097 = vmatprep.subr.mxu0 0.0
    %6098 = vmatpush1.msra.mxu0 0.0
    %6099 = vmatprep.subr.mxu0 0.0
    %6100 = vmatpush1.msra.mxu0 0.0
    %6101 = vmatprep.subr.mxu0 0.0
    %6102 = vmatpush1.msra.mxu0 0.0
    %6103 = vmatprep.subr.mxu0 0.0
    %6104 = vmatpush1.msra.mxu0 0.0
    %6105 = vmatprep.subr.mxu0 0.0
    %6106 = vmatpush1.msra.mxu0 0.0
    %6107 = vmatprep.mubr.f32.mxu0 0.0
    %6108 = vmatmul.mubr.f32.gmra.mrb[0].mxu0 %v6041
    %v6109 = vpop.f32.mrb[0].mxu0
    %v6110 = vadd.f32 0.0, %v6109
    %v6111 = vpop.f32.mrb[0].mxu0
    %6112 = vdwg.mxu0
    %v6113 = vld [vmem:[%s16] sm:$0xff]
    %v6114 = vld [vmem:[%s16 + $0x8] sm:$0xff]
    %v6115 = vld [vmem:[%s16 + $0x10] sm:$0xff]
    %v6116 = vld [vmem:[%s16 + $0x18] sm:$0xff]
    %v6117 = vlaneseq
    %v6118 = vshrl.u32 %v6117, 7
    %v6119 = vsub.s32 2, %v6118
    %v6120 = vrot.slane %v6015, %v6119
    %v6122 = vsel %vm542, %v6110, 0
    %6124 = vmatprep.subr.mxu0 0.0
    %6125 = vmatpush1.msra.mxu0 %v6113
    %6126 = vmatprep.subr.mxu0 0.0
    %6127 = vmatpush1.msra.mxu0 %v6114
    %6128 = vmatprep.subr.mxu0 0.0
    %6129 = vmatpush1.msra.mxu0 %v6115
    %6130 = vmatprep.subr.mxu0 0.0
    %6131 = vmatpush1.msra.mxu0 %v6116
    %6132 = vmatprep.subr.mxu0 0.0
    %6133 = vmatpush1.msra.mxu0 0.0
    %6134 = vmatprep.subr.mxu0 0.0
    %6135 = vmatpush1.msra.mxu0 0.0
    %6136 = vmatprep.subr.mxu0 0.0
    %6137 = vmatpush1.msra.mxu0 0.0
    %6138 = vmatprep.subr.mxu0 0.0
    %6139 = vmatpush1.msra.mxu0 0.0
    %6140 = vmatprep.subr.mxu0 0.0
    %6141 = vmatpush1.msra.mxu0 0.0
    %6142 = vmatprep.subr.mxu0 0.0
    %6143 = vmatpush1.msra.mxu0 0.0
    %6144 = vmatprep.subr.mxu0 0.0
    %6145 = vmatpush1.msra.mxu0 0.0
    %6146 = vmatprep.subr.mxu0 0.0
    %6147 = vmatpush1.msra.mxu0 0.0
    %6148 = vmatprep.subr.mxu0 0.0
    %6149 = vmatpush1.msra.mxu0 0.0
    %6150 = vmatprep.subr.mxu0 0.0
    %6151 = vmatpush1.msra.mxu0 0.0
    %6152 = vmatprep.subr.mxu0 0.0
    %6153 = vmatpush1.msra.mxu0 0.0
    %6154 = vmatprep.subr.mxu0 0.0
    %6155 = vmatpush1.msra.mxu0 0.0
    %6156 = vmatprep.subr.mxu0 0.0
    %6157 = vmatpush1.msra.mxu0 0.0
    %6158 = vmatprep.subr.mxu0 0.0
    %6159 = vmatpush1.msra.mxu0 0.0
    %6160 = vmatprep.subr.mxu0 0.0
    %6161 = vmatpush1.msra.mxu0 0.0
    %6162 = vmatprep.subr.mxu0 0.0
    %6163 = vmatpush1.msra.mxu0 0.0
    %6164 = vmatprep.subr.mxu0 0.0
    %6165 = vmatpush1.msra.mxu0 0.0
    %6166 = vmatprep.subr.mxu0 0.0
    %6167 = vmatpush1.msra.mxu0 0.0
    %6168 = vmatprep.subr.mxu0 0.0
    %6169 = vmatpush1.msra.mxu0 0.0
    %6170 = vmatprep.subr.mxu0 0.0
    %6171 = vmatpush1.msra.mxu0 0.0
    %6172 = vmatprep.subr.mxu0 0.0
    %6173 = vmatpush1.msra.mxu0 0.0
    %6174 = vmatprep.subr.mxu0 0.0
    %6175 = vmatpush1.msra.mxu0 0.0
    %6176 = vmatprep.subr.mxu0 0.0
    %6177 = vmatpush1.msra.mxu0 0.0
    %6178 = vmatprep.subr.mxu0 0.0
    %6179 = vmatpush1.msra.mxu0 0.0
    %6180 = vmatprep.subr.mxu0 0.0
    %6181 = vmatpush1.msra.mxu0 0.0
    %6182 = vmatprep.subr.mxu0 0.0
    %6183 = vmatpush1.msra.mxu0 0.0
    %6184 = vmatprep.subr.mxu0 0.0
    %6185 = vmatpush1.msra.mxu0 0.0
    %6186 = vmatprep.subr.mxu0 0.0
    %6187 = vmatpush1.msra.mxu0 0.0
    %6188 = vmatprep.mubr.f32.mxu0 0.0
    %6189 = vmatmul.mubr.f32.gmra.mrb[0].mxu0 %v6122
    %v6190 = vpop.f32.mrb[0].mxu0
    %v6191 = vadd.f32 %v6120, %v6190
    %v6192 = vpop.f32.mrb[0].mxu0
    %6193 = vdwg.mxu0
    %v6194 = vmul.f32 %v6191, %v6191
    %vm6195 = vcmask 254976
    %v6196 = vsel %vm6195, %v6194, 0.0
    %6197 = vadd.xlane.f32.xlu0 %v6196
    %v6198 = vpop.xlane.xlu0 %6197
    %v6199 = vrsqrt.pop %v6198
    %v6200 = vmul.f32 %v6198, %v6199
    %vm6201 = vcmp.eq.f32.partialorder %v6198, inf
    %v6202 = vsel %vm6201, %v6198, %v6200
    %vm6203 = vcmp.eq.f32.partialorder %v6198, 0.0
    %v6204 = vand.u32 %v6198, 2147483648
    %v6205 = vsel %vm6203, %v6204, %v6202
    %v6206 = vmax.f32 %v6205, 1e-12
    %v6207 = vrcp.pop %v6206
    %v6208 = vmul.f32 %v6191, %v6207
    %6209 = vst.msk [vmem:[#allocation2] sm:$0x3] %vm6195, %v6208
    // Predicated region
    $region70: #{swin_feature_extractor.1} parent=1 // pred_check
      _
    $region71: #{swin_feature_extractor.1} parent=1 // pred_check_branch
      %6211 = sbr.rel (0) target = $region73
    $region72: #{swin_feature_extractor.1} parent=1 // pred_region
      %s6213 = ssub.s32 32, 32
      %6214 = vsyncadd [#allocation3], %s6213
      %s6216 = sshll.u32 [#allocation2], 4
      %s6217 = int_to_ptr.vmem [resolvable:$true] %s6216
      %6219 = dma.vmem_to_hbm [thread:$0]  %s6217, 32, %s17, [#allocation3]
    $region73: #{swin_feature_extractor.1} parent=1 // pred_fallthru
      _
    // Predicated region
    $region74: #{swin_feature_extractor.1} parent=1 // pred_check
      _
    $region75: #{swin_feature_extractor.1} parent=1 // pred_check_branch
      %6221 = sbr.rel (0) target = $region77
    $region76: #{swin_feature_extractor.1} parent=1 // pred_region
      %6222 = dma.done [#allocation3], 32
    $region77: #{swin_feature_extractor.1} parent=1 // pred_fallthru
      _
    %6223 = vsyncpa [#allocation3], 1

</llo_original>
